<compile_context>
chip_gen: v6e
topology: v6e:2x2x1
jax: 0.10.0
libtpu: 0.0.40
codegen_flags: <defaults>
</compile_context>

<pallas_src>
import functools

import jax
import jax.numpy as jnp
from jax.experimental import pallas as pl
from jax.experimental.pallas import tpu as pltpu

BN_EPS = 1e-5
WCOLS = 256   # lane width of the packed weight slab / vec slab

# (ni, no, kernel, stride, pad); ni=None -> branch input channels
RAW_CFG = [(None, 32, 8, 2, 3), (32, 32, 3, 1, 1), (32, 64, 8, 4, 2),
           (64, 64, 3, 1, 1), (64, 128, 8, 4, 2), (128, 128, 3, 1, 1),
           (128, 256, 8, 4, 2)]
FFT_CFG = [(None, 32, 8, 2, 4), (32, 32, 3, 1, 1), (32, 64, 8, 2, 4),
           (64, 64, 3, 1, 1), (64, 128, 8, 4, 4), (128, 128, 8, 4, 4),
           (128, 256, 8, 2, 3)]


def _round_up(x, m):
  return (x + m - 1) // m * m


def build_plan(cfg, c_in, L):
  plan, Lc = [], L
  for (ni, no, K, s, p) in cfg:
    ni = c_in if ni is None else ni
    Lout = (Lc + 2 * p - K) // s + 1
    plan.append(dict(ni=ni, no=no, K=K, s=s, p=p, L_in=Lc, L_out=Lout))
    Lc = Lout
  return plan


# ----------------------------------------------------------------------------
# Parameter init (deterministic, kaiming-style), with depthwise + BN folding
# ----------------------------------------------------------------------------
def init_conv_stage(key, ni, no, K):
  k1, k2, k3, k4 = jax.random.split(key, 4)
  w_dw = jax.random.normal(k1, (ni, K), jnp.float32) * (2.0 / K) ** 0.5
  b_dw = jax.random.normal(k2, (ni,), jnp.float32) * 0.01
  w_pw = jax.random.normal(k3, (ni, no), jnp.float32) * (2.0 / ni) ** 0.5
  b_pw = jax.random.normal(k4, (no,), jnp.float32) * 0.01
  # Fold depthwise into pointwise; rows ordered [tap0 chans..., tap1 chans, ...]
  w = jnp.einsum("ck,co->kco", w_dw, w_pw).reshape(K * ni, no)
  b = b_pw + b_dw @ w_pw
  # Eval-mode BatchNorm fold (gamma=1, beta=0, mean=0, var=1); scale>0 commutes
  # with PReLU, so it can be pre-multiplied into W and b.
  scale = 1.0 / (1.0 + BN_EPS) ** 0.5
  return dict(w=w * scale, bias=b * scale,
              slope=jnp.full((no,), 0.25, jnp.float32),     # nn.PReLU() default
              shift=jnp.zeros((no,), jnp.float32))


def init_dense_stage(key, nin, nout, kind):
  k1, k2 = jax.random.split(key)
  w = jax.random.normal(k1, (nin, nout), jnp.float32) * (2.0 / nin) ** 0.5
  b = jax.random.normal(k2, (nout,), jnp.float32) * 0.01
  if kind == "prelu_bn":
    scale = 1.0 / (1.0 + BN_EPS) ** 0.5
    slope = jnp.full((nout,), 0.25, jnp.float32)
  elif kind == "relu":
    scale, slope = 1.0, jnp.zeros((nout,), jnp.float32)
  else:  # plain linear
    scale, slope = 1.0, jnp.ones((nout,), jnp.float32)
  return dict(w=w * scale, bias=b * scale, slope=slope,
              shift=jnp.zeros((nout,), jnp.float32))


def pack_stages(stages):
  """Pack every stage's weight into one (rows, 256) bf16 slab and every stage's
  (bias, slope, shift) into one (n_stages, 3, 256) f32 array."""
  offsets, w_blocks, vecs, r = [], [], [], 0
  for st in stages:
    w = st["w"]
    rows, cols = w.shape
    offsets.append((r, rows, cols))
    w_blocks.append(jnp.pad(w, ((0, 0), (0, WCOLS - cols))))
    v = jnp.zeros((3, WCOLS), jnp.float32)
    v = v.at[0, :cols].set(st["bias"])
    v = v.at[1, :cols].set(st["slope"])
    v = v.at[2, :cols].set(st["shift"])
    vecs.append(v)
    r += rows
  w_all = jnp.concatenate(w_blocks, axis=0).astype(jnp.bfloat16)
  vec_all = jnp.stack(vecs, axis=0)
  return w_all, vec_all, offsets


def make_model(key, raw_ni, fft_ni, no, L_raw, L_fft):
  raw_plan = build_plan(RAW_CFG, raw_ni, L_raw)
  fft_plan = build_plan(FFT_CFG, fft_ni, L_fft)
  assert raw_plan[-1]["L_out"] == 1 and fft_plan[-1]["L_out"] == 1, \
      "input lengths must reduce to spatial size 1 before Flatten"

  keys = iter(jax.random.split(key, 20))
  stages = []
  for layer in raw_plan:
    stages.append(init_conv_stage(next(keys), layer["ni"], layer["no"], layer["K"]))
  for layer in fft_plan:
    stages.append(init_conv_stage(next(keys), layer["ni"], layer["no"], layer["K"]))
  for _ in range(2):                                   # raw head, then fft head
    stages.append(init_dense_stage(next(keys), 256, 64, "prelu_bn"))
    stages.append(init_dense_stage(next(keys), 64, 64, "prelu_bn"))
  stages.append(init_dense_stage(next(keys), 128, 64, "relu"))     # out MLP
  stages.append(init_dense_stage(next(keys), 64, no, "linear"))

  w_all, vec_all, offsets = pack_stages(stages)
  pad_rows = _round_up(max(l["L_in"] + 2 * l["p"] for l in raw_plan + fft_plan), 8)
  meta = dict(raw_plan=raw_plan, fft_plan=fft_plan, offsets=offsets,
              pad_rows=pad_rows, no=no, L_raw=L_raw, L_fft=L_fft,
              raw_ni=raw_ni, fft_ni=fft_ni)
  return meta, (w_all, vec_all), stages


# ----------------------------------------------------------------------------
# Fused kernel (one sample per grid step; all activations stay in VMEM)
# ----------------------------------------------------------------------------
def make_kernel(meta):
  raw_plan, fft_plan = meta["raw_plan"], meta["fft_plan"]
  offsets = meta["offsets"]
  n_conv = len(raw_plan) + len(fft_plan)

  def kernel(x_raw_ref, x_fft_ref, w_ref, vec_ref, out_ref, pad_ref):

    def dense(x, stage):
      """x @ W + b, PReLU/ReLU/identity, + BN shift (scale pre-folded)."""
      r0, rows, cols = offsets[stage]
      w = w_ref[r0:r0 + rows, :cols]                       # bf16 weight tile
      vec = vec_ref[stage]                                 # (3, 256) f32
      h = jnp.dot(x.astype(jnp.bfloat16), w,
                  preferred_element_type=jnp.float32)
      h = h + vec[0:1, :cols]                              # bias
      h = jnp.where(h >= 0.0, h, vec[1:2, :cols] * h)      # PReLU / ReLU / id
      return h + vec[2:3, :cols]                           # BN shift

    def conv(x, layer, stage):
      """One SepConv1d block: explicit zero-padding in VMEM scratch, strided
      tap extraction, single fat (Lout, K*Cin) @ (K*Cin, Cout) MXU matmul."""
      K, s, p = layer["K"], layer["s"], layer["p"]
      L_in, L_out, ci = layer["L_in"], layer["L_out"], layer["ni"]
      pad_ref[...] = jnp.zeros_like(pad_ref)               # conv zero padding
      pad_ref[p:p + L_in, :ci] = x
      if s == 1:
        taps = [pad_ref[k:k + L_out, :ci] for k in range(K)]
      else:
        taps = [pad_ref[pl.ds(k, L_out, stride=s), :ci] for k in range(K)]
      return dense(jnp.concatenate(taps, axis=1), stage)

    def branch(x, plan, stage0):
      for i, layer in enumerate(plan):
        x = conv(x, layer, stage0 + i)
      return x                       # (1, 256): Lout == 1, row == flattened feats

    raw_f = branch(x_raw_ref[0], raw_plan, 0)
    fft_f = branch(x_fft_ref[0], fft_plan, len(raw_plan))

    raw_o = dense(dense(raw_f, n_conv + 0), n_conv + 1)    # raw FC head
    fft_o = dense(dense(fft_f, n_conv + 2), n_conv + 3)    # fft FC head

    h = jnp.concatenate([raw_o, fft_o], axis=1)            # torch.cat(..., dim=1)
    h = dense(h, n_conv + 4)                               # Linear(128,64) + ReLU
    out_ref[0] = dense(h, n_conv + 5)                      # Linear(64, no)

  return kernel


# ----------------------------------------------------------------------------
# Forward wrapper
# ----------------------------------------------------------------------------
def classifier_forward(meta, params, t_raw, t_fft):
  w_all, vec_all = params
  B = t_raw.shape[0]
  no = meta["no"]
  # NCL -> (B, L, C): rows = positions (sublanes), lanes = channels
  x_raw = jnp.transpose(t_raw, (0, 2, 1)).astype(jnp.float32)
  x_fft = jnp.transpose(t_fft, (0, 2, 1)).astype(jnp.float32)

  n_stages = len(meta["offsets"])
  w_rows = w_all.shape[0]

  out = pl.pallas_call(
      make_kernel(meta),
      grid=(B,),
      in_specs=[
          pl.BlockSpec((1, meta["L_raw"], meta["raw_ni"]), lambda b: (b, 0, 0)),
          pl.BlockSpec((1, meta["L_fft"], meta["fft_ni"]), lambda b: (b, 0, 0)),
          pl.BlockSpec((w_rows, WCOLS), lambda b: (0, 0)),          # resident
          pl.BlockSpec((n_stages, 3, WCOLS), lambda b: (0, 0, 0)),  # resident
      ],
      out_specs=pl.BlockSpec((1, 1, no), lambda b: (b, 0, 0)),
      out_shape=jax.ShapeDtypeStruct((B, 1, no), jnp.float32),
      scratch_shapes=[pltpu.VMEM((meta["pad_rows"], 128), jnp.float32)],
      compiler_params=pltpu.CompilerParams(
          dimension_semantics=("parallel",),
          vmem_limit_bytes=32 * 1024 * 1024),
  )(x_raw, x_fft, w_all, vec_all)
  return out[:, 0, :]


# ----------------------------------------------------------------------------
# Pure-JAX reference (same folded params, f32) for a sanity check
# ----------------------------------------------------------------------------
def reference_forward(meta, stages, t_raw, t_fft):
  raw_plan, fft_plan = meta["raw_plan"], meta["fft_plan"]

  def dense(x, st):
    h = x @ st["w"] + st["bias"]
    h = jnp.where(h >= 0.0, h, st["slope"] * h)
    return h + st["shift"]

  def conv(x, layer, st):
    K, s, p, L_out = layer["K"], layer["s"], layer["p"], layer["L_out"]
    xp = jnp.pad(x, ((0, 0), (p, p), (0, 0)))
    taps = [xp[:, k:k + (L_out - 1) * s + 1:s, :] for k in range(K)]
    return dense(jnp.concatenate(taps, axis=-1), st)

  def branch(x, plan, s0):
    for i, layer in enumerate(plan):
      x = conv(x, layer, stages[s0 + i])
    return x[:, 0, :]

  x_raw = jnp.transpose(t_raw, (0, 2, 1)).astype(jnp.float32)
  x_fft = jnp.transpose(t_fft, (0, 2, 1)).astype(jnp.float32)
  n = len(raw_plan) + len(fft_plan)
  raw_f = branch(x_raw, raw_plan, 0)
  fft_f = branch(x_fft, fft_plan, len(raw_plan))
  raw_o = dense(dense(raw_f, stages[n + 0]), stages[n + 1])
  fft_o = dense(dense(fft_f, stages[n + 2]), stages[n + 3])
  h = jnp.concatenate([raw_o, fft_o], axis=1)
  h = dense(h, stages[n + 4])
  return dense(h, stages[n + 5])


# ----------------------------------------------------------------------------
if __name__ == "__main__":
  B, raw_ni, fft_ni, no = 2, 4, 4, 5
  L_raw, L_fft = 128, 42   # lengths that reduce to spatial size 1 before Flatten

  key = jax.random.PRNGKey(0)
  k_par, k_raw, k_fft = jax.random.split(key, 3)
  meta, params, stages = make_model(k_par, raw_ni, fft_ni, no, L_raw, L_fft)

  t_raw = jax.random.normal(k_raw, (B, raw_ni, L_raw), jnp.float32)  # NCL
  t_fft = jax.random.normal(k_fft, (B, fft_ni, L_fft), jnp.float32)  # NCL

  fwd = jax.jit(functools.partial(classifier_forward, meta))
  out = fwd(params, t_raw, t_fft)
  jax.block_until_ready(out)
  assert out.shape == (B, no), out.shape
  assert bool(jnp.isfinite(out).all())

  ref = reference_forward(meta, stages, t_raw, t_fft)
  err = float(jnp.max(jnp.abs(out - ref)))
  denom = float(jnp.max(jnp.abs(ref))) + 1e-6
  assert err / denom < 0.1, f"kernel vs reference mismatch: rel_err={err / denom:.4f}"

  print("KERNEL_OK")
</pallas_src>

<mosaic_0001>
module attributes {stable_mosaic.version = 11 : i64} {
  func.func @kernel(%arg0: i32, %arg1: memref<1x128x4xf32, #tpu.memory_space<vmem>>, %arg2: memref<1x42x4xf32, #tpu.memory_space<vmem>>, %arg3: memref<6464x256xbf16, #tpu.memory_space<vmem>>, %arg4: memref<20x3x256xf32, #tpu.memory_space<vmem>>, %arg5: memref<1x1x5xf32, #tpu.memory_space<vmem>>, %arg6: memref<136x128xf32, #tpu.memory_space<vmem>>) attributes {dimension_semantics = [#tpu.dimension_semantics<parallel>], iteration_bounds = array<i64: 2>, scalar_prefetch = 0 : i64, scratch_operands = 1 : i64, tpu.core_type = #tpu.core_type<tc>, window_params = [{transform_indices = @transform_0, window_bounds = array<i64: 1, 128, 4>}, {transform_indices = @transform_1, window_bounds = array<i64: 1, 42, 4>}, {pipeline_mode = #tpu.pipeline_mode<synchronous>, transform_indices = @transform_2, window_bounds = array<i64: 6464, 256>}, {pipeline_mode = #tpu.pipeline_mode<synchronous>, transform_indices = @transform_3, window_bounds = array<i64: 20, 3, 256>}, {transform_indices = @transform_4, window_bounds = array<i64: 1, 1, 5>}]} {
    %c0 = arith.constant 0 : index
    %c0_0 = arith.constant 0 : index
    %c0_1 = arith.constant 0 : index
    %0 = vector.load %arg1[%c0, %c0_0, %c0_1] : memref<1x128x4xf32, #tpu.memory_space<vmem>>, vector<1x128x4xf32>
    %1 = vector.shape_cast %0 : vector<1x128x4xf32> to vector<128x4xf32>
    %cst = arith.constant 0.000000e+00 : f32
    %2 = vector.broadcast %cst : f32 to vector<136x128xf32>
    %c0_2 = arith.constant 0 : index
    %c0_3 = arith.constant 0 : index
    %3 = vector.load %arg6[%c0_2, %c0_3] : memref<136x128xf32, #tpu.memory_space<vmem>>, vector<136x128xf32>
    tpu.vector_store %arg6[%c0_2, %c0_3], %2 {strides = array<i32>} : memref<136x128xf32, #tpu.memory_space<vmem>>, vector<136x128xf32>,
    %c3 = arith.constant 3 : index
    %c0_4 = arith.constant 0 : index
    %4 = vector.load %arg6[%c3, %c0_4] : memref<136x128xf32, #tpu.memory_space<vmem>>, vector<128x4xf32>
    tpu.vector_store %arg6[%c3, %c0_4], %1 {strides = array<i32>} : memref<136x128xf32, #tpu.memory_space<vmem>>, vector<128x4xf32>,
    %c0_5 = arith.constant 0 : index
    %c0_6 = arith.constant 0 : index
    %5 = tpu.strided_load %arg6[%c0_5, %c0_6] {strides = array<i32: 2, 1>} : memref<136x128xf32, #tpu.memory_space<vmem>>, vector<64x4xf32>
    %c1 = arith.constant 1 : index
    %c0_7 = arith.constant 0 : index
    %6 = tpu.strided_load %arg6[%c1, %c0_7] {strides = array<i32: 2, 1>} : memref<136x128xf32, #tpu.memory_space<vmem>>, vector<64x4xf32>
    %c2 = arith.constant 2 : index
    %c0_8 = arith.constant 0 : index
    %7 = tpu.strided_load %arg6[%c2, %c0_8] {strides = array<i32: 2, 1>} : memref<136x128xf32, #tpu.memory_space<vmem>>, vector<64x4xf32>
    %c3_9 = arith.constant 3 : index
    %c0_10 = arith.constant 0 : index
    %8 = tpu.strided_load %arg6[%c3_9, %c0_10] {strides = array<i32: 2, 1>} : memref<136x128xf32, #tpu.memory_space<vmem>>, vector<64x4xf32>
    %c4 = arith.constant 4 : index
    %c0_11 = arith.constant 0 : index
    %9 = tpu.strided_load %arg6[%c4, %c0_11] {strides = array<i32: 2, 1>} : memref<136x128xf32, #tpu.memory_space<vmem>>, vector<64x4xf32>
    %c5 = arith.constant 5 : index
    %c0_12 = arith.constant 0 : index
    %10 = tpu.strided_load %arg6[%c5, %c0_12] {strides = array<i32: 2, 1>} : memref<136x128xf32, #tpu.memory_space<vmem>>, vector<64x4xf32>
    %c6 = arith.constant 6 : index
    %c0_13 = arith.constant 0 : index
    %11 = tpu.strided_load %arg6[%c6, %c0_13] {strides = array<i32: 2, 1>} : memref<136x128xf32, #tpu.memory_space<vmem>>, vector<64x4xf32>
    %c7 = arith.constant 7 : index
    %c0_14 = arith.constant 0 : index
    %12 = tpu.strided_load %arg6[%c7, %c0_14] {strides = array<i32: 2, 1>} : memref<136x128xf32, #tpu.memory_space<vmem>>, vector<64x4xf32>
    %13 = tpu.concatenate %5, %6, %7, %8, %9, %10, %11, %12 in 1 : vector<64x4xf32>, vector<64x4xf32>, vector<64x4xf32>, vector<64x4xf32>, vector<64x4xf32>, vector<64x4xf32>, vector<64x4xf32>, vector<64x4xf32> -> vector<64x32xf32>
    %c0_15 = arith.constant 0 : index
    %c0_16 = arith.constant 0 : index
    %14 = vector.load %arg3[%c0_15, %c0_16] : memref<6464x256xbf16, #tpu.memory_space<vmem>>, vector<32x32xbf16>
    %c0_17 = arith.constant 0 : index
    %c0_18 = arith.constant 0 : index
    %c0_19 = arith.constant 0 : index
    %15 = vector.load %arg4[%c0_17, %c0_18, %c0_19] : memref<20x3x256xf32, #tpu.memory_space<vmem>>, vector<1x3x256xf32>
    %16 = vector.shape_cast %15 : vector<1x3x256xf32> to vector<3x256xf32>
    %17 = arith.truncf %13 : vector<64x32xf32> to vector<64x32xbf16>
    %cst_20 = arith.constant dense<0.000000e+00> : vector<64x32xf32>
    %18 = tpu.matmul %17, %14, %cst_20 {dimension_numbers = #tpu.dot_dimension_numbers<[1], [0], [0], [1], [0, 0, 1, 1], [], []>} : vector<64x32xbf16>, vector<32x32xbf16>, vector<64x32xf32> -> vector<64x32xf32>
    %19 = vector.extract_strided_slice %16 {offsets = [0, 0], sizes = [1, 32], strides = [1, 1]} : vector<3x256xf32> to vector<1x32xf32>
    %20 = vector.broadcast %19 : vector<1x32xf32> to vector<64x32xf32>
    %21 = arith.addf %18, %20 : vector<64x32xf32>
    %cst_21 = arith.constant 0.000000e+00 : f32
    %22 = vector.broadcast %cst_21 : f32 to vector<64x32xf32>
    %23 = arith.cmpf oge, %21, %22 : vector<64x32xf32>
    %24 = vector.extract_strided_slice %16 {offsets = [1, 0], sizes = [1, 32], strides = [1, 1]} : vector<3x256xf32> to vector<1x32xf32>
    %25 = vector.broadcast %24 : vector<1x32xf32> to vector<64x32xf32>
    %26 = arith.mulf %25, %21 : vector<64x32xf32>
    %27 = arith.select %23, %21, %26 : vector<64x32xi1>, vector<64x32xf32>
    %28 = vector.extract_strided_slice %16 {offsets = [2, 0], sizes = [1, 32], strides = [1, 1]} : vector<3x256xf32> to vector<1x32xf32>
    %29 = vector.broadcast %28 : vector<1x32xf32> to vector<64x32xf32>
    %30 = arith.addf %27, %29 : vector<64x32xf32>
    %cst_22 = arith.constant 0.000000e+00 : f32
    %31 = vector.broadcast %cst_22 : f32 to vector<136x128xf32>
    %c0_23 = arith.constant 0 : index
    %c0_24 = arith.constant 0 : index
    %32 = vector.load %arg6[%c0_23, %c0_24] : memref<136x128xf32, #tpu.memory_space<vmem>>, vector<136x128xf32>
    tpu.vector_store %arg6[%c0_23, %c0_24], %31 {strides = array<i32>} : memref<136x128xf32, #tpu.memory_space<vmem>>, vector<136x128xf32>,
    %c1_25 = arith.constant 1 : index
    %c0_26 = arith.constant 0 : index
    %33 = vector.load %arg6[%c1_25, %c0_26] : memref<136x128xf32, #tpu.memory_space<vmem>>, vector<64x32xf32>
    tpu.vector_store %arg6[%c1_25, %c0_26], %30 {strides = array<i32>} : memref<136x128xf32, #tpu.memory_space<vmem>>, vector<64x32xf32>,
    %c0_27 = arith.constant 0 : index
    %c0_28 = arith.constant 0 : index
    %34 = vector.load %arg6[%c0_27, %c0_28] : memref<136x128xf32, #tpu.memory_space<vmem>>, vector<64x32xf32>
    %c1_29 = arith.constant 1 : index
    %c0_30 = arith.constant 0 : index
    %35 = vector.load %arg6[%c1_29, %c0_30] : memref<136x128xf32, #tpu.memory_space<vmem>>, vector<64x32xf32>
    %c2_31 = arith.constant 2 : index
    %c0_32 = arith.constant 0 : index
    %36 = vector.load %arg6[%c2_31, %c0_32] : memref<136x128xf32, #tpu.memory_space<vmem>>, vector<64x32xf32>
    %37 = tpu.concatenate %34, %35, %36 in 1 : vector<64x32xf32>, vector<64x32xf32>, vector<64x32xf32> -> vector<64x96xf32>
    %c32 = arith.constant 32 : index
    %c0_33 = arith.constant 0 : index
    %38 = vector.load %arg3[%c32, %c0_33] : memref<6464x256xbf16, #tpu.memory_space<vmem>>, vector<96x32xbf16>
    %c1_34 = arith.constant 1 : index
    %c0_35 = arith.constant 0 : index
    %c0_36 = arith.constant 0 : index
    %39 = vector.load %arg4[%c1_34, %c0_35, %c0_36] : memref<20x3x256xf32, #tpu.memory_space<vmem>>, vector<1x3x256xf32>
    %40 = vector.shape_cast %39 : vector<1x3x256xf32> to vector<3x256xf32>
    %41 = arith.truncf %37 : vector<64x96xf32> to vector<64x96xbf16>
    %cst_37 = arith.constant dense<0.000000e+00> : vector<64x32xf32>
    %42 = tpu.matmul %41, %38, %cst_37 {dimension_numbers = #tpu.dot_dimension_numbers<[1], [0], [0], [1], [0, 0, 1, 1], [], []>} : vector<64x96xbf16>, vector<96x32xbf16>, vector<64x32xf32> -> vector<64x32xf32>
    %43 = vector.extract_strided_slice %40 {offsets = [0, 0], sizes = [1, 32], strides = [1, 1]} : vector<3x256xf32> to vector<1x32xf32>
    %44 = vector.broadcast %43 : vector<1x32xf32> to vector<64x32xf32>
    %45 = arith.addf %42, %44 : vector<64x32xf32>
    %cst_38 = arith.constant 0.000000e+00 : f32
    %46 = vector.broadcast %cst_38 : f32 to vector<64x32xf32>
    %47 = arith.cmpf oge, %45, %46 : vector<64x32xf32>
    %48 = vector.extract_strided_slice %40 {offsets = [1, 0], sizes = [1, 32], strides = [1, 1]} : vector<3x256xf32> to vector<1x32xf32>
    %49 = vector.broadcast %48 : vector<1x32xf32> to vector<64x32xf32>
    %50 = arith.mulf %49, %45 : vector<64x32xf32>
    %51 = arith.select %47, %45, %50 : vector<64x32xi1>, vector<64x32xf32>
    %52 = vector.extract_strided_slice %40 {offsets = [2, 0], sizes = [1, 32], strides = [1, 1]} : vector<3x256xf32> to vector<1x32xf32>
    %53 = vector.broadcast %52 : vector<1x32xf32> to vector<64x32xf32>
    %54 = arith.addf %51, %53 : vector<64x32xf32>
    %cst_39 = arith.constant 0.000000e+00 : f32
    %55 = vector.broadcast %cst_39 : f32 to vector<136x128xf32>
    %c0_40 = arith.constant 0 : index
    %c0_41 = arith.constant 0 : index
    %56 = vector.load %arg6[%c0_40, %c0_41] : memref<136x128xf32, #tpu.memory_space<vmem>>, vector<136x128xf32>
    tpu.vector_store %arg6[%c0_40, %c0_41], %55 {strides = array<i32>} : memref<136x128xf32, #tpu.memory_space<vmem>>, vector<136x128xf32>,
    %c2_42 = arith.constant 2 : index
    %c0_43 = arith.constant 0 : index
    %57 = vector.load %arg6[%c2_42, %c0_43] : memref<136x128xf32, #tpu.memory_space<vmem>>, vector<64x32xf32>
    tpu.vector_store %arg6[%c2_42, %c0_43], %54 {strides = array<i32>} : memref<136x128xf32, #tpu.memory_space<vmem>>, vector<64x32xf32>,
    %c0_44 = arith.constant 0 : index
    %c0_45 = arith.constant 0 : index
    %58 = tpu.strided_load %arg6[%c0_44, %c0_45] {strides = array<i32: 4, 1>} : memref<136x128xf32, #tpu.memory_space<vmem>>, vector<16x32xf32>
    %c1_46 = arith.constant 1 : index
    %c0_47 = arith.constant 0 : index
    %59 = tpu.strided_load %arg6[%c1_46, %c0_47] {strides = array<i32: 4, 1>} : memref<136x128xf32, #tpu.memory_space<vmem>>, vector<16x32xf32>
    %c2_48 = arith.constant 2 : index
    %c0_49 = arith.constant 0 : index
    %60 = tpu.strided_load %arg6[%c2_48, %c0_49] {strides = array<i32: 4, 1>} : memref<136x128xf32, #tpu.memory_space<vmem>>, vector<16x32xf32>
    %c3_50 = arith.constant 3 : index
    %c0_51 = arith.constant 0 : index
    %61 = tpu.strided_load %arg6[%c3_50, %c0_51] {strides = array<i32: 4, 1>} : memref<136x128xf32, #tpu.memory_space<vmem>>, vector<16x32xf32>
    %c4_52 = arith.constant 4 : index
    %c0_53 = arith.constant 0 : index
    %62 = tpu.strided_load %arg6[%c4_52, %c0_53] {strides = array<i32: 4, 1>} : memref<136x128xf32, #tpu.memory_space<vmem>>, vector<16x32xf32>
    %c5_54 = arith.constant 5 : index
    %c0_55 = arith.constant 0 : index
    %63 = tpu.strided_load %arg6[%c5_54, %c0_55] {strides = array<i32: 4, 1>} : memref<136x128xf32, #tpu.memory_space<vmem>>, vector<16x32xf32>
    %c6_56 = arith.constant 6 : index
    %c0_57 = arith.constant 0 : index
    %64 = tpu.strided_load %arg6[%c6_56, %c0_57] {strides = array<i32: 4, 1>} : memref<136x128xf32, #tpu.memory_space<vmem>>, vector<16x32xf32>
    %c7_58 = arith.constant 7 : index
    %c0_59 = arith.constant 0 : index
    %65 = tpu.strided_load %arg6[%c7_58, %c0_59] {strides = array<i32: 4, 1>} : memref<136x128xf32, #tpu.memory_space<vmem>>, vector<16x32xf32>
    %66 = tpu.concatenate %58, %59, %60, %61, %62, %63, %64, %65 in 1 : vector<16x32xf32>, vector<16x32xf32>, vector<16x32xf32>, vector<16x32xf32>, vector<16x32xf32>, vector<16x32xf32>, vector<16x32xf32>, vector<16x32xf32> -> vector<16x256xf32>
    %c128 = arith.constant 128 : index
    %c0_60 = arith.constant 0 : index
    %67 = vector.load %arg3[%c128, %c0_60] : memref<6464x256xbf16, #tpu.memory_space<vmem>>, vector<256x64xbf16>
    %c2_61 = arith.constant 2 : index
    %c0_62 = arith.constant 0 : index
    %c0_63 = arith.constant 0 : index
    %68 = vector.load %arg4[%c2_61, %c0_62, %c0_63] : memref<20x3x256xf32, #tpu.memory_space<vmem>>, vector<1x3x256xf32>
    %69 = vector.shape_cast %68 : vector<1x3x256xf32> to vector<3x256xf32>
    %70 = arith.truncf %66 : vector<16x256xf32> to vector<16x256xbf16>
    %cst_64 = arith.constant dense<0.000000e+00> : vector<16x64xf32>
    %71 = tpu.matmul %70, %67, %cst_64 {dimension_numbers = #tpu.dot_dimension_numbers<[1], [0], [0], [1], [0, 0, 1, 1], [], []>} : vector<16x256xbf16>, vector<256x64xbf16>, vector<16x64xf32> -> vector<16x64xf32>
    %72 = vector.extract_strided_slice %69 {offsets = [0, 0], sizes = [1, 64], strides = [1, 1]} : vector<3x256xf32> to vector<1x64xf32>
    %73 = vector.broadcast %72 : vector<1x64xf32> to vector<16x64xf32>
    %74 = arith.addf %71, %73 : vector<16x64xf32>
    %cst_65 = arith.constant 0.000000e+00 : f32
    %75 = vector.broadcast %cst_65 : f32 to vector<16x64xf32>
    %76 = arith.cmpf oge, %74, %75 : vector<16x64xf32>
    %77 = vector.extract_strided_slice %69 {offsets = [1, 0], sizes = [1, 64], strides = [1, 1]} : vector<3x256xf32> to vector<1x64xf32>
    %78 = vector.broadcast %77 : vector<1x64xf32> to vector<16x64xf32>
    %79 = arith.mulf %78, %74 : vector<16x64xf32>
    %80 = arith.select %76, %74, %79 : vector<16x64xi1>, vector<16x64xf32>
    %81 = vector.extract_strided_slice %69 {offsets = [2, 0], sizes = [1, 64], strides = [1, 1]} : vector<3x256xf32> to vector<1x64xf32>
    %82 = vector.broadcast %81 : vector<1x64xf32> to vector<16x64xf32>
    %83 = arith.addf %80, %82 : vector<16x64xf32>
    %cst_66 = arith.constant 0.000000e+00 : f32
    %84 = vector.broadcast %cst_66 : f32 to vector<136x128xf32>
    %c0_67 = arith.constant 0 : index
    %c0_68 = arith.constant 0 : index
    %85 = vector.load %arg6[%c0_67, %c0_68] : memref<136x128xf32, #tpu.memory_space<vmem>>, vector<136x128xf32>
    tpu.vector_store %arg6[%c0_67, %c0_68], %84 {strides = array<i32>} : memref<136x128xf32, #tpu.memory_space<vmem>>, vector<136x128xf32>,
    %c1_69 = arith.constant 1 : index
    %c0_70 = arith.constant 0 : index
    %86 = vector.load %arg6[%c1_69, %c0_70] : memref<136x128xf32, #tpu.memory_space<vmem>>, vector<16x64xf32>
    tpu.vector_store %arg6[%c1_69, %c0_70], %83 {strides = array<i32>} : memref<136x128xf32, #tpu.memory_space<vmem>>, vector<16x64xf32>,
    %c0_71 = arith.constant 0 : index
    %c0_72 = arith.constant 0 : index
    %87 = vector.load %arg6[%c0_71, %c0_72] : memref<136x128xf32, #tpu.memory_space<vmem>>, vector<16x64xf32>
    %c1_73 = arith.constant 1 : index
    %c0_74 = arith.constant 0 : index
    %88 = vector.load %arg6[%c1_73, %c0_74] : memref<136x128xf32, #tpu.memory_space<vmem>>, vector<16x64xf32>
    %c2_75 = arith.constant 2 : index
    %c0_76 = arith.constant 0 : index
    %89 = vector.load %arg6[%c2_75, %c0_76] : memref<136x128xf32, #tpu.memory_space<vmem>>, vector<16x64xf32>
    %90 = tpu.concatenate %87, %88, %89 in 1 : vector<16x64xf32>, vector<16x64xf32>, vector<16x64xf32> -> vector<16x192xf32>
    %c384 = arith.constant 384 : index
    %c0_77 = arith.constant 0 : index
    %91 = vector.load %arg3[%c384, %c0_77] : memref<6464x256xbf16, #tpu.memory_space<vmem>>, vector<192x64xbf16>
    %c3_78 = arith.constant 3 : index
    %c0_79 = arith.constant 0 : index
    %c0_80 = arith.constant 0 : index
    %92 = vector.load %arg4[%c3_78, %c0_79, %c0_80] : memref<20x3x256xf32, #tpu.memory_space<vmem>>, vector<1x3x256xf32>
    %93 = vector.shape_cast %92 : vector<1x3x256xf32> to vector<3x256xf32>
    %94 = arith.truncf %90 : vector<16x192xf32> to vector<16x192xbf16>
    %cst_81 = arith.constant dense<0.000000e+00> : vector<16x64xf32>
    %95 = tpu.matmul %94, %91, %cst_81 {dimension_numbers = #tpu.dot_dimension_numbers<[1], [0], [0], [1], [0, 0, 1, 1], [], []>} : vector<16x192xbf16>, vector<192x64xbf16>, vector<16x64xf32> -> vector<16x64xf32>
    %96 = vector.extract_strided_slice %93 {offsets = [0, 0], sizes = [1, 64], strides = [1, 1]} : vector<3x256xf32> to vector<1x64xf32>
    %97 = vector.broadcast %96 : vector<1x64xf32> to vector<16x64xf32>
    %98 = arith.addf %95, %97 : vector<16x64xf32>
    %cst_82 = arith.constant 0.000000e+00 : f32
    %99 = vector.broadcast %cst_82 : f32 to vector<16x64xf32>
    %100 = arith.cmpf oge, %98, %99 : vector<16x64xf32>
    %101 = vector.extract_strided_slice %93 {offsets = [1, 0], sizes = [1, 64], strides = [1, 1]} : vector<3x256xf32> to vector<1x64xf32>
    %102 = vector.broadcast %101 : vector<1x64xf32> to vector<16x64xf32>
    %103 = arith.mulf %102, %98 : vector<16x64xf32>
    %104 = arith.select %100, %98, %103 : vector<16x64xi1>, vector<16x64xf32>
    %105 = vector.extract_strided_slice %93 {offsets = [2, 0], sizes = [1, 64], strides = [1, 1]} : vector<3x256xf32> to vector<1x64xf32>
    %106 = vector.broadcast %105 : vector<1x64xf32> to vector<16x64xf32>
    %107 = arith.addf %104, %106 : vector<16x64xf32>
    %cst_83 = arith.constant 0.000000e+00 : f32
    %108 = vector.broadcast %cst_83 : f32 to vector<136x128xf32>
    %c0_84 = arith.constant 0 : index
    %c0_85 = arith.constant 0 : index
    %109 = vector.load %arg6[%c0_84, %c0_85] : memref<136x128xf32, #tpu.memory_space<vmem>>, vector<136x128xf32>
    tpu.vector_store %arg6[%c0_84, %c0_85], %108 {strides = array<i32>} : memref<136x128xf32, #tpu.memory_space<vmem>>, vector<136x128xf32>,
    %c2_86 = arith.constant 2 : index
    %c0_87 = arith.constant 0 : index
    %110 = vector.load %arg6[%c2_86, %c0_87] : memref<136x128xf32, #tpu.memory_space<vmem>>, vector<16x64xf32>
    tpu.vector_store %arg6[%c2_86, %c0_87], %107 {strides = array<i32>} : memref<136x128xf32, #tpu.memory_space<vmem>>, vector<16x64xf32>,
    %c0_88 = arith.constant 0 : index
    %c0_89 = arith.constant 0 : index
    %111 = tpu.strided_load %arg6[%c0_88, %c0_89] {strides = array<i32: 4, 1>} : memref<136x128xf32, #tpu.memory_space<vmem>>, vector<4x64xf32>
    %c1_90 = arith.constant 1 : index
    %c0_91 = arith.constant 0 : index
    %112 = tpu.strided_load %arg6[%c1_90, %c0_91] {strides = array<i32: 4, 1>} : memref<136x128xf32, #tpu.memory_space<vmem>>, vector<4x64xf32>
    %c2_92 = arith.constant 2 : index
    %c0_93 = arith.constant 0 : index
    %113 = tpu.strided_load %arg6[%c2_92, %c0_93] {strides = array<i32: 4, 1>} : memref<136x128xf32, #tpu.memory_space<vmem>>, vector<4x64xf32>
    %c3_94 = arith.constant 3 : index
    %c0_95 = arith.constant 0 : index
    %114 = tpu.strided_load %arg6[%c3_94, %c0_95] {strides = array<i32: 4, 1>} : memref<136x128xf32, #tpu.memory_space<vmem>>, vector<4x64xf32>
    %c4_96 = arith.constant 4 : index
    %c0_97 = arith.constant 0 : index
    %115 = tpu.strided_load %arg6[%c4_96, %c0_97] {strides = array<i32: 4, 1>} : memref<136x128xf32, #tpu.memory_space<vmem>>, vector<4x64xf32>
    %c5_98 = arith.constant 5 : index
    %c0_99 = arith.constant 0 : index
    %116 = tpu.strided_load %arg6[%c5_98, %c0_99] {strides = array<i32: 4, 1>} : memref<136x128xf32, #tpu.memory_space<vmem>>, vector<4x64xf32>
    %c6_100 = arith.constant 6 : index
    %c0_101 = arith.constant 0 : index
    %117 = tpu.strided_load %arg6[%c6_100, %c0_101] {strides = array<i32: 4, 1>} : memref<136x128xf32, #tpu.memory_space<vmem>>, vector<4x64xf32>
    %c7_102 = arith.constant 7 : index
    %c0_103 = arith.constant 0 : index
    %118 = tpu.strided_load %arg6[%c7_102, %c0_103] {strides = array<i32: 4, 1>} : memref<136x128xf32, #tpu.memory_space<vmem>>, vector<4x64xf32>
    %119 = tpu.concatenate %111, %112, %113, %114, %115, %116, %117, %118 in 1 : vector<4x64xf32>, vector<4x64xf32>, vector<4x64xf32>, vector<4x64xf32>, vector<4x64xf32>, vector<4x64xf32>, vector<4x64xf32>, vector<4x64xf32> -> vector<4x512xf32>
    %c576 = arith.constant 576 : index
    %c0_104 = arith.constant 0 : index
    %120 = vector.load %arg3[%c576, %c0_104] : memref<6464x256xbf16, #tpu.memory_space<vmem>>, vector<512x128xbf16>
    %c4_105 = arith.constant 4 : index
    %c0_106 = arith.constant 0 : index
    %c0_107 = arith.constant 0 : index
    %121 = vector.load %arg4[%c4_105, %c0_106, %c0_107] : memref<20x3x256xf32, #tpu.memory_space<vmem>>, vector<1x3x256xf32>
    %122 = vector.shape_cast %121 : vector<1x3x256xf32> to vector<3x256xf32>
    %123 = arith.truncf %119 : vector<4x512xf32> to vector<4x512xbf16>
    %cst_108 = arith.constant dense<0.000000e+00> : vector<4x128xf32>
    %124 = tpu.matmul %123, %120, %cst_108 {dimension_numbers = #tpu.dot_dimension_numbers<[1], [0], [0], [1], [0, 0, 1, 1], [], []>} : vector<4x512xbf16>, vector<512x128xbf16>, vector<4x128xf32> -> vector<4x128xf32>
    %125 = vector.extract_strided_slice %122 {offsets = [0, 0], sizes = [1, 128], strides = [1, 1]} : vector<3x256xf32> to vector<1x128xf32>
    %126 = vector.broadcast %125 : vector<1x128xf32> to vector<4x128xf32>
    %127 = arith.addf %124, %126 : vector<4x128xf32>
    %cst_109 = arith.constant 0.000000e+00 : f32
    %128 = vector.broadcast %cst_109 : f32 to vector<4x128xf32>
    %129 = arith.cmpf oge, %127, %128 : vector<4x128xf32>
    %130 = vector.extract_strided_slice %122 {offsets = [1, 0], sizes = [1, 128], strides = [1, 1]} : vector<3x256xf32> to vector<1x128xf32>
    %131 = vector.broadcast %130 : vector<1x128xf32> to vector<4x128xf32>
    %132 = arith.mulf %131, %127 : vector<4x128xf32>
    %133 = arith.select %129, %127, %132 : vector<4x128xi1>, vector<4x128xf32>
    %134 = vector.extract_strided_slice %122 {offsets = [2, 0], sizes = [1, 128], strides = [1, 1]} : vector<3x256xf32> to vector<1x128xf32>
    %135 = vector.broadcast %134 : vector<1x128xf32> to vector<4x128xf32>
    %136 = arith.addf %133, %135 : vector<4x128xf32>
    %cst_110 = arith.constant 0.000000e+00 : f32
    %137 = vector.broadcast %cst_110 : f32 to vector<136x128xf32>
    %c0_111 = arith.constant 0 : index
    %c0_112 = arith.constant 0 : index
    %138 = vector.load %arg6[%c0_111, %c0_112] : memref<136x128xf32, #tpu.memory_space<vmem>>, vector<136x128xf32>
    tpu.vector_store %arg6[%c0_111, %c0_112], %137 {strides = array<i32>} : memref<136x128xf32, #tpu.memory_space<vmem>>, vector<136x128xf32>,
    %c1_113 = arith.constant 1 : index
    %c0_114 = arith.constant 0 : index
    %139 = vector.load %arg6[%c1_113, %c0_114] : memref<136x128xf32, #tpu.memory_space<vmem>>, vector<4x128xf32>
    tpu.vector_store %arg6[%c1_113, %c0_114], %136 {strides = array<i32>} : memref<136x128xf32, #tpu.memory_space<vmem>>, vector<4x128xf32>,
    %c0_115 = arith.constant 0 : index
    %c0_116 = arith.constant 0 : index
    %140 = vector.load %arg6[%c0_115, %c0_116] : memref<136x128xf32, #tpu.memory_space<vmem>>, vector<4x128xf32>
    %c1_117 = arith.constant 1 : index
    %c0_118 = arith.constant 0 : index
    %141 = vector.load %arg6[%c1_117, %c0_118] : memref<136x128xf32, #tpu.memory_space<vmem>>, vector<4x128xf32>
    %c2_119 = arith.constant 2 : index
    %c0_120 = arith.constant 0 : index
    %142 = vector.load %arg6[%c2_119, %c0_120] : memref<136x128xf32, #tpu.memory_space<vmem>>, vector<4x128xf32>
    %143 = tpu.concatenate %140, %141, %142 in 1 : vector<4x128xf32>, vector<4x128xf32>, vector<4x128xf32> -> vector<4x384xf32>
    %c1088 = arith.constant 1088 : index
    %c0_121 = arith.constant 0 : index
    %144 = vector.load %arg3[%c1088, %c0_121] : memref<6464x256xbf16, #tpu.memory_space<vmem>>, vector<384x128xbf16>
    %c5_122 = arith.constant 5 : index
    %c0_123 = arith.constant 0 : index
    %c0_124 = arith.constant 0 : index
    %145 = vector.load %arg4[%c5_122, %c0_123, %c0_124] : memref<20x3x256xf32, #tpu.memory_space<vmem>>, vector<1x3x256xf32>
    %146 = vector.shape_cast %145 : vector<1x3x256xf32> to vector<3x256xf32>
    %147 = arith.truncf %143 : vector<4x384xf32> to vector<4x384xbf16>
    %cst_125 = arith.constant dense<0.000000e+00> : vector<4x128xf32>
    %148 = tpu.matmul %147, %144, %cst_125 {dimension_numbers = #tpu.dot_dimension_numbers<[1], [0], [0], [1], [0, 0, 1, 1], [], []>} : vector<4x384xbf16>, vector<384x128xbf16>, vector<4x128xf32> -> vector<4x128xf32>
    %149 = vector.extract_strided_slice %146 {offsets = [0, 0], sizes = [1, 128], strides = [1, 1]} : vector<3x256xf32> to vector<1x128xf32>
    %150 = vector.broadcast %149 : vector<1x128xf32> to vector<4x128xf32>
    %151 = arith.addf %148, %150 : vector<4x128xf32>
    %cst_126 = arith.constant 0.000000e+00 : f32
    %152 = vector.broadcast %cst_126 : f32 to vector<4x128xf32>
    %153 = arith.cmpf oge, %151, %152 : vector<4x128xf32>
    %154 = vector.extract_strided_slice %146 {offsets = [1, 0], sizes = [1, 128], strides = [1, 1]} : vector<3x256xf32> to vector<1x128xf32>
    %155 = vector.broadcast %154 : vector<1x128xf32> to vector<4x128xf32>
    %156 = arith.mulf %155, %151 : vector<4x128xf32>
    %157 = arith.select %153, %151, %156 : vector<4x128xi1>, vector<4x128xf32>
    %158 = vector.extract_strided_slice %146 {offsets = [2, 0], sizes = [1, 128], strides = [1, 1]} : vector<3x256xf32> to vector<1x128xf32>
    %159 = vector.broadcast %158 : vector<1x128xf32> to vector<4x128xf32>
    %160 = arith.addf %157, %159 : vector<4x128xf32>
    %cst_127 = arith.constant 0.000000e+00 : f32
    %161 = vector.broadcast %cst_127 : f32 to vector<136x128xf32>
    %c0_128 = arith.constant 0 : index
    %c0_129 = arith.constant 0 : index
    %162 = vector.load %arg6[%c0_128, %c0_129] : memref<136x128xf32, #tpu.memory_space<vmem>>, vector<136x128xf32>
    tpu.vector_store %arg6[%c0_128, %c0_129], %161 {strides = array<i32>} : memref<136x128xf32, #tpu.memory_space<vmem>>, vector<136x128xf32>,
    %c2_130 = arith.constant 2 : index
    %c0_131 = arith.constant 0 : index
    %163 = vector.load %arg6[%c2_130, %c0_131] : memref<136x128xf32, #tpu.memory_space<vmem>>, vector<4x128xf32>
    tpu.vector_store %arg6[%c2_130, %c0_131], %160 {strides = array<i32>} : memref<136x128xf32, #tpu.memory_space<vmem>>, vector<4x128xf32>,
    %c0_132 = arith.constant 0 : index
    %c0_133 = arith.constant 0 : index
    %164 = tpu.strided_load %arg6[%c0_132, %c0_133] {strides = array<i32: 4, 1>} : memref<136x128xf32, #tpu.memory_space<vmem>>, vector<1x128xf32>
    %c1_134 = arith.constant 1 : index
    %c0_135 = arith.constant 0 : index
    %165 = tpu.strided_load %arg6[%c1_134, %c0_135] {strides = array<i32: 4, 1>} : memref<136x128xf32, #tpu.memory_space<vmem>>, vector<1x128xf32>
    %c2_136 = arith.constant 2 : index
    %c0_137 = arith.constant 0 : index
    %166 = tpu.strided_load %arg6[%c2_136, %c0_137] {strides = array<i32: 4, 1>} : memref<136x128xf32, #tpu.memory_space<vmem>>, vector<1x128xf32>
    %c3_138 = arith.constant 3 : index
    %c0_139 = arith.constant 0 : index
    %167 = tpu.strided_load %arg6[%c3_138, %c0_139] {strides = array<i32: 4, 1>} : memref<136x128xf32, #tpu.memory_space<vmem>>, vector<1x128xf32>
    %c4_140 = arith.constant 4 : index
    %c0_141 = arith.constant 0 : index
    %168 = tpu.strided_load %arg6[%c4_140, %c0_141] {strides = array<i32: 4, 1>} : memref<136x128xf32, #tpu.memory_space<vmem>>, vector<1x128xf32>
    %c5_142 = arith.constant 5 : index
    %c0_143 = arith.constant 0 : index
    %169 = tpu.strided_load %arg6[%c5_142, %c0_143] {strides = array<i32: 4, 1>} : memref<136x128xf32, #tpu.memory_space<vmem>>, vector<1x128xf32>
    %c6_144 = arith.constant 6 : index
    %c0_145 = arith.constant 0 : index
    %170 = tpu.strided_load %arg6[%c6_144, %c0_145] {strides = array<i32: 4, 1>} : memref<136x128xf32, #tpu.memory_space<vmem>>, vector<1x128xf32>
    %c7_146 = arith.constant 7 : index
    %c0_147 = arith.constant 0 : index
    %171 = tpu.strided_load %arg6[%c7_146, %c0_147] {strides = array<i32: 4, 1>} : memref<136x128xf32, #tpu.memory_space<vmem>>, vector<1x128xf32>
    %172 = tpu.concatenate %164, %165, %166, %167, %168, %169, %170, %171 in 1 : vector<1x128xf32>, vector<1x128xf32>, vector<1x128xf32>, vector<1x128xf32>, vector<1x128xf32>, vector<1x128xf32>, vector<1x128xf32>, vector<1x128xf32> -> vector<1x1024xf32>
    %c1472 = arith.constant 1472 : index
    %c0_148 = arith.constant 0 : index
    %173 = vector.load %arg3[%c1472, %c0_148] : memref<6464x256xbf16, #tpu.memory_space<vmem>>, vector<1024x256xbf16>
    %c6_149 = arith.constant 6 : index
    %c0_150 = arith.constant 0 : index
    %c0_151 = arith.constant 0 : index
    %174 = vector.load %arg4[%c6_149, %c0_150, %c0_151] : memref<20x3x256xf32, #tpu.memory_space<vmem>>, vector<1x3x256xf32>
    %175 = vector.shape_cast %174 : vector<1x3x256xf32> to vector<3x256xf32>
    %176 = arith.truncf %172 : vector<1x1024xf32> to vector<1x1024xbf16>
    %cst_152 = arith.constant dense<0.000000e+00> : vector<1x256xf32>
    %177 = tpu.matmul %176, %173, %cst_152 {dimension_numbers = #tpu.dot_dimension_numbers<[1], [0], [0], [1], [0, 0, 1, 1], [], []>} : vector<1x1024xbf16>, vector<1024x256xbf16>, vector<1x256xf32> -> vector<1x256xf32>
    %178 = vector.extract_strided_slice %175 {offsets = [0, 0], sizes = [1, 256], strides = [1, 1]} : vector<3x256xf32> to vector<1x256xf32>
    %179 = arith.addf %177, %178 : vector<1x256xf32>
    %cst_153 = arith.constant 0.000000e+00 : f32
    %180 = vector.broadcast %cst_153 : f32 to vector<1x256xf32>
    %181 = arith.cmpf oge, %179, %180 : vector<1x256xf32>
    %182 = vector.extract_strided_slice %175 {offsets = [1, 0], sizes = [1, 256], strides = [1, 1]} : vector<3x256xf32> to vector<1x256xf32>
    %183 = arith.mulf %182, %179 : vector<1x256xf32>
    %184 = arith.select %181, %179, %183 : vector<1x256xi1>, vector<1x256xf32>
    %185 = vector.extract_strided_slice %175 {offsets = [2, 0], sizes = [1, 256], strides = [1, 1]} : vector<3x256xf32> to vector<1x256xf32>
    %186 = arith.addf %184, %185 : vector<1x256xf32>
    %c0_154 = arith.constant 0 : index
    %c0_155 = arith.constant 0 : index
    %c0_156 = arith.constant 0 : index
    %187 = vector.load %arg2[%c0_154, %c0_155, %c0_156] : memref<1x42x4xf32, #tpu.memory_space<vmem>>, vector<1x42x4xf32>
    %188 = vector.shape_cast %187 : vector<1x42x4xf32> to vector<42x4xf32>
    %cst_157 = arith.constant 0.000000e+00 : f32
    %189 = vector.broadcast %cst_157 : f32 to vector<136x128xf32>
    %c0_158 = arith.constant 0 : index
    %c0_159 = arith.constant 0 : index
    %190 = vector.load %arg6[%c0_158, %c0_159] : memref<136x128xf32, #tpu.memory_space<vmem>>, vector<136x128xf32>
    tpu.vector_store %arg6[%c0_158, %c0_159], %189 {strides = array<i32>} : memref<136x128xf32, #tpu.memory_space<vmem>>, vector<136x128xf32>,
    %c4_160 = arith.constant 4 : index
    %c0_161 = arith.constant 0 : index
    %191 = vector.load %arg6[%c4_160, %c0_161] : memref<136x128xf32, #tpu.memory_space<vmem>>, vector<42x4xf32>
    tpu.vector_store %arg6[%c4_160, %c0_161], %188 {strides = array<i32>} : memref<136x128xf32, #tpu.memory_space<vmem>>, vector<42x4xf32>,
    %c0_162 = arith.constant 0 : index
    %c0_163 = arith.constant 0 : index
    %192 = tpu.strided_load %arg6[%c0_162, %c0_163] {strides = array<i32: 2, 1>} : memref<136x128xf32, #tpu.memory_space<vmem>>, vector<22x4xf32>
    %c1_164 = arith.constant 1 : index
    %c0_165 = arith.constant 0 : index
    %193 = tpu.strided_load %arg6[%c1_164, %c0_165] {strides = array<i32: 2, 1>} : memref<136x128xf32, #tpu.memory_space<vmem>>, vector<22x4xf32>
    %c2_166 = arith.constant 2 : index
    %c0_167 = arith.constant 0 : index
    %194 = tpu.strided_load %arg6[%c2_166, %c0_167] {strides = array<i32: 2, 1>} : memref<136x128xf32, #tpu.memory_space<vmem>>, vector<22x4xf32>
    %c3_168 = arith.constant 3 : index
    %c0_169 = arith.constant 0 : index
    %195 = tpu.strided_load %arg6[%c3_168, %c0_169] {strides = array<i32: 2, 1>} : memref<136x128xf32, #tpu.memory_space<vmem>>, vector<22x4xf32>
    %c4_170 = arith.constant 4 : index
    %c0_171 = arith.constant 0 : index
    %196 = tpu.strided_load %arg6[%c4_170, %c0_171] {strides = array<i32: 2, 1>} : memref<136x128xf32, #tpu.memory_space<vmem>>, vector<22x4xf32>
    %c5_172 = arith.constant 5 : index
    %c0_173 = arith.constant 0 : index
    %197 = tpu.strided_load %arg6[%c5_172, %c0_173] {strides = array<i32: 2, 1>} : memref<136x128xf32, #tpu.memory_space<vmem>>, vector<22x4xf32>
    %c6_174 = arith.constant 6 : index
    %c0_175 = arith.constant 0 : index
    %198 = tpu.strided_load %arg6[%c6_174, %c0_175] {strides = array<i32: 2, 1>} : memref<136x128xf32, #tpu.memory_space<vmem>>, vector<22x4xf32>
    %c7_176 = arith.constant 7 : index
    %c0_177 = arith.constant 0 : index
    %199 = tpu.strided_load %arg6[%c7_176, %c0_177] {strides = array<i32: 2, 1>} : memref<136x128xf32, #tpu.memory_space<vmem>>, vector<22x4xf32>
    %200 = tpu.concatenate %192, %193, %194, %195, %196, %197, %198, %199 in 1 : vector<22x4xf32>, vector<22x4xf32>, vector<22x4xf32>, vector<22x4xf32>, vector<22x4xf32>, vector<22x4xf32>, vector<22x4xf32>, vector<22x4xf32> -> vector<22x32xf32>
    %c2496 = arith.constant 2496 : index
    %c0_178 = arith.constant 0 : index
    %201 = vector.load %arg3[%c2496, %c0_178] : memref<6464x256xbf16, #tpu.memory_space<vmem>>, vector<32x32xbf16>
    %c7_179 = arith.constant 7 : index
    %c0_180 = arith.constant 0 : index
    %c0_181 = arith.constant 0 : index
    %202 = vector.load %arg4[%c7_179, %c0_180, %c0_181] : memref<20x3x256xf32, #tpu.memory_space<vmem>>, vector<1x3x256xf32>
    %203 = vector.shape_cast %202 : vector<1x3x256xf32> to vector<3x256xf32>
    %204 = arith.truncf %200 : vector<22x32xf32> to vector<22x32xbf16>
    %cst_182 = arith.constant dense<0.000000e+00> : vector<22x32xf32>
    %205 = tpu.matmul %204, %201, %cst_182 {dimension_numbers = #tpu.dot_dimension_numbers<[1], [0], [0], [1], [0, 0, 1, 1], [], []>} : vector<22x32xbf16>, vector<32x32xbf16>, vector<22x32xf32> -> vector<22x32xf32>
    %206 = vector.extract_strided_slice %203 {offsets = [0, 0], sizes = [1, 32], strides = [1, 1]} : vector<3x256xf32> to vector<1x32xf32>
    %207 = vector.broadcast %206 : vector<1x32xf32> to vector<22x32xf32>
    %208 = arith.addf %205, %207 : vector<22x32xf32>
    %cst_183 = arith.constant 0.000000e+00 : f32
    %209 = vector.broadcast %cst_183 : f32 to vector<22x32xf32>
    %210 = arith.cmpf oge, %208, %209 : vector<22x32xf32>
    %211 = vector.extract_strided_slice %203 {offsets = [1, 0], sizes = [1, 32], strides = [1, 1]} : vector<3x256xf32> to vector<1x32xf32>
    %212 = vector.broadcast %211 : vector<1x32xf32> to vector<22x32xf32>
    %213 = arith.mulf %212, %208 : vector<22x32xf32>
    %214 = arith.select %210, %208, %213 : vector<22x32xi1>, vector<22x32xf32>
    %215 = vector.extract_strided_slice %203 {offsets = [2, 0], sizes = [1, 32], strides = [1, 1]} : vector<3x256xf32> to vector<1x32xf32>
    %216 = vector.broadcast %215 : vector<1x32xf32> to vector<22x32xf32>
    %217 = arith.addf %214, %216 : vector<22x32xf32>
    %cst_184 = arith.constant 0.000000e+00 : f32
    %218 = vector.broadcast %cst_184 : f32 to vector<136x128xf32>
    %c0_185 = arith.constant 0 : index
    %c0_186 = arith.constant 0 : index
    %219 = vector.load %arg6[%c0_185, %c0_186] : memref<136x128xf32, #tpu.memory_space<vmem>>, vector<136x128xf32>
    tpu.vector_store %arg6[%c0_185, %c0_186], %218 {strides = array<i32>} : memref<136x128xf32, #tpu.memory_space<vmem>>, vector<136x128xf32>,
    %c1_187 = arith.constant 1 : index
    %c0_188 = arith.constant 0 : index
    %220 = vector.load %arg6[%c1_187, %c0_188] : memref<136x128xf32, #tpu.memory_space<vmem>>, vector<22x32xf32>
    tpu.vector_store %arg6[%c1_187, %c0_188], %217 {strides = array<i32>} : memref<136x128xf32, #tpu.memory_space<vmem>>, vector<22x32xf32>,
    %c0_189 = arith.constant 0 : index
    %c0_190 = arith.constant 0 : index
    %221 = vector.load %arg6[%c0_189, %c0_190] : memref<136x128xf32, #tpu.memory_space<vmem>>, vector<22x32xf32>
    %c1_191 = arith.constant 1 : index
    %c0_192 = arith.constant 0 : index
    %222 = vector.load %arg6[%c1_191, %c0_192] : memref<136x128xf32, #tpu.memory_space<vmem>>, vector<22x32xf32>
    %c2_193 = arith.constant 2 : index
    %c0_194 = arith.constant 0 : index
    %223 = vector.load %arg6[%c2_193, %c0_194] : memref<136x128xf32, #tpu.memory_space<vmem>>, vector<22x32xf32>
    %224 = tpu.concatenate %221, %222, %223 in 1 : vector<22x32xf32>, vector<22x32xf32>, vector<22x32xf32> -> vector<22x96xf32>
    %c2528 = arith.constant 2528 : index
    %c0_195 = arith.constant 0 : index
    %225 = vector.load %arg3[%c2528, %c0_195] : memref<6464x256xbf16, #tpu.memory_space<vmem>>, vector<96x32xbf16>
    %c8 = arith.constant 8 : index
    %c0_196 = arith.constant 0 : index
    %c0_197 = arith.constant 0 : index
    %226 = vector.load %arg4[%c8, %c0_196, %c0_197] : memref<20x3x256xf32, #tpu.memory_space<vmem>>, vector<1x3x256xf32>
    %227 = vector.shape_cast %226 : vector<1x3x256xf32> to vector<3x256xf32>
    %228 = arith.truncf %224 : vector<22x96xf32> to vector<22x96xbf16>
    %cst_198 = arith.constant dense<0.000000e+00> : vector<22x32xf32>
    %229 = tpu.matmul %228, %225, %cst_198 {dimension_numbers = #tpu.dot_dimension_numbers<[1], [0], [0], [1], [0, 0, 1, 1], [], []>} : vector<22x96xbf16>, vector<96x32xbf16>, vector<22x32xf32> -> vector<22x32xf32>
    %230 = vector.extract_strided_slice %227 {offsets = [0, 0], sizes = [1, 32], strides = [1, 1]} : vector<3x256xf32> to vector<1x32xf32>
    %231 = vector.broadcast %230 : vector<1x32xf32> to vector<22x32xf32>
    %232 = arith.addf %229, %231 : vector<22x32xf32>
    %cst_199 = arith.constant 0.000000e+00 : f32
    %233 = vector.broadcast %cst_199 : f32 to vector<22x32xf32>
    %234 = arith.cmpf oge, %232, %233 : vector<22x32xf32>
    %235 = vector.extract_strided_slice %227 {offsets = [1, 0], sizes = [1, 32], strides = [1, 1]} : vector<3x256xf32> to vector<1x32xf32>
    %236 = vector.broadcast %235 : vector<1x32xf32> to vector<22x32xf32>
    %237 = arith.mulf %236, %232 : vector<22x32xf32>
    %238 = arith.select %234, %232, %237 : vector<22x32xi1>, vector<22x32xf32>
    %239 = vector.extract_strided_slice %227 {offsets = [2, 0], sizes = [1, 32], strides = [1, 1]} : vector<3x256xf32> to vector<1x32xf32>
    %240 = vector.broadcast %239 : vector<1x32xf32> to vector<22x32xf32>
    %241 = arith.addf %238, %240 : vector<22x32xf32>
    %cst_200 = arith.constant 0.000000e+00 : f32
    %242 = vector.broadcast %cst_200 : f32 to vector<136x128xf32>
    %c0_201 = arith.constant 0 : index
    %c0_202 = arith.constant 0 : index
    %243 = vector.load %arg6[%c0_201, %c0_202] : memref<136x128xf32, #tpu.memory_space<vmem>>, vector<136x128xf32>
    tpu.vector_store %arg6[%c0_201, %c0_202], %242 {strides = array<i32>} : memref<136x128xf32, #tpu.memory_space<vmem>>, vector<136x128xf32>,
    %c4_203 = arith.constant 4 : index
    %c0_204 = arith.constant 0 : index
    %244 = vector.load %arg6[%c4_203, %c0_204] : memref<136x128xf32, #tpu.memory_space<vmem>>, vector<22x32xf32>
    tpu.vector_store %arg6[%c4_203, %c0_204], %241 {strides = array<i32>} : memref<136x128xf32, #tpu.memory_space<vmem>>, vector<22x32xf32>,
    %c0_205 = arith.constant 0 : index
    %c0_206 = arith.constant 0 : index
    %245 = tpu.strided_load %arg6[%c0_205, %c0_206] {strides = array<i32: 2, 1>} : memref<136x128xf32, #tpu.memory_space<vmem>>, vector<12x32xf32>
    %c1_207 = arith.constant 1 : index
    %c0_208 = arith.constant 0 : index
    %246 = tpu.strided_load %arg6[%c1_207, %c0_208] {strides = array<i32: 2, 1>} : memref<136x128xf32, #tpu.memory_space<vmem>>, vector<12x32xf32>
    %c2_209 = arith.constant 2 : index
    %c0_210 = arith.constant 0 : index
    %247 = tpu.strided_load %arg6[%c2_209, %c0_210] {strides = array<i32: 2, 1>} : memref<136x128xf32, #tpu.memory_space<vmem>>, vector<12x32xf32>
    %c3_211 = arith.constant 3 : index
    %c0_212 = arith.constant 0 : index
    %248 = tpu.strided_load %arg6[%c3_211, %c0_212] {strides = array<i32: 2, 1>} : memref<136x128xf32, #tpu.memory_space<vmem>>, vector<12x32xf32>
    %c4_213 = arith.constant 4 : index
    %c0_214 = arith.constant 0 : index
    %249 = tpu.strided_load %arg6[%c4_213, %c0_214] {strides = array<i32: 2, 1>} : memref<136x128xf32, #tpu.memory_space<vmem>>, vector<12x32xf32>
    %c5_215 = arith.constant 5 : index
    %c0_216 = arith.constant 0 : index
    %250 = tpu.strided_load %arg6[%c5_215, %c0_216] {strides = array<i32: 2, 1>} : memref<136x128xf32, #tpu.memory_space<vmem>>, vector<12x32xf32>
    %c6_217 = arith.constant 6 : index
    %c0_218 = arith.constant 0 : index
    %251 = tpu.strided_load %arg6[%c6_217, %c0_218] {strides = array<i32: 2, 1>} : memref<136x128xf32, #tpu.memory_space<vmem>>, vector<12x32xf32>
    %c7_219 = arith.constant 7 : index
    %c0_220 = arith.constant 0 : index
    %252 = tpu.strided_load %arg6[%c7_219, %c0_220] {strides = array<i32: 2, 1>} : memref<136x128xf32, #tpu.memory_space<vmem>>, vector<12x32xf32>
    %253 = tpu.concatenate %245, %246, %247, %248, %249, %250, %251, %252 in 1 : vector<12x32xf32>, vector<12x32xf32>, vector<12x32xf32>, vector<12x32xf32>, vector<12x32xf32>, vector<12x32xf32>, vector<12x32xf32>, vector<12x32xf32> -> vector<12x256xf32>
    %c2624 = arith.constant 2624 : index
    %c0_221 = arith.constant 0 : index
    %254 = vector.load %arg3[%c2624, %c0_221] : memref<6464x256xbf16, #tpu.memory_space<vmem>>, vector<256x64xbf16>
    %c9 = arith.constant 9 : index
    %c0_222 = arith.constant 0 : index
    %c0_223 = arith.constant 0 : index
    %255 = vector.load %arg4[%c9, %c0_222, %c0_223] : memref<20x3x256xf32, #tpu.memory_space<vmem>>, vector<1x3x256xf32>
    %256 = vector.shape_cast %255 : vector<1x3x256xf32> to vector<3x256xf32>
    %257 = arith.truncf %253 : vector<12x256xf32> to vector<12x256xbf16>
    %cst_224 = arith.constant dense<0.000000e+00> : vector<12x64xf32>
    %258 = tpu.matmul %257, %254, %cst_224 {dimension_numbers = #tpu.dot_dimension_numbers<[1], [0], [0], [1], [0, 0, 1, 1], [], []>} : vector<12x256xbf16>, vector<256x64xbf16>, vector<12x64xf32> -> vector<12x64xf32>
    %259 = vector.extract_strided_slice %256 {offsets = [0, 0], sizes = [1, 64], strides = [1, 1]} : vector<3x256xf32> to vector<1x64xf32>
    %260 = vector.broadcast %259 : vector<1x64xf32> to vector<12x64xf32>
    %261 = arith.addf %258, %260 : vector<12x64xf32>
    %cst_225 = arith.constant 0.000000e+00 : f32
    %262 = vector.broadcast %cst_225 : f32 to vector<12x64xf32>
    %263 = arith.cmpf oge, %261, %262 : vector<12x64xf32>
    %264 = vector.extract_strided_slice %256 {offsets = [1, 0], sizes = [1, 64], strides = [1, 1]} : vector<3x256xf32> to vector<1x64xf32>
    %265 = vector.broadcast %264 : vector<1x64xf32> to vector<12x64xf32>
    %266 = arith.mulf %265, %261 : vector<12x64xf32>
    %267 = arith.select %263, %261, %266 : vector<12x64xi1>, vector<12x64xf32>
    %268 = vector.extract_strided_slice %256 {offsets = [2, 0], sizes = [1, 64], strides = [1, 1]} : vector<3x256xf32> to vector<1x64xf32>
    %269 = vector.broadcast %268 : vector<1x64xf32> to vector<12x64xf32>
    %270 = arith.addf %267, %269 : vector<12x64xf32>
    %cst_226 = arith.constant 0.000000e+00 : f32
    %271 = vector.broadcast %cst_226 : f32 to vector<136x128xf32>
    %c0_227 = arith.constant 0 : index
    %c0_228 = arith.constant 0 : index
    %272 = vector.load %arg6[%c0_227, %c0_228] : memref<136x128xf32, #tpu.memory_space<vmem>>, vector<136x128xf32>
    tpu.vector_store %arg6[%c0_227, %c0_228], %271 {strides = array<i32>} : memref<136x128xf32, #tpu.memory_space<vmem>>, vector<136x128xf32>,
    %c1_229 = arith.constant 1 : index
    %c0_230 = arith.constant 0 : index
    %273 = vector.load %arg6[%c1_229, %c0_230] : memref<136x128xf32, #tpu.memory_space<vmem>>, vector<12x64xf32>
    tpu.vector_store %arg6[%c1_229, %c0_230], %270 {strides = array<i32>} : memref<136x128xf32, #tpu.memory_space<vmem>>, vector<12x64xf32>,
    %c0_231 = arith.constant 0 : index
    %c0_232 = arith.constant 0 : index
    %274 = vector.load %arg6[%c0_231, %c0_232] : memref<136x128xf32, #tpu.memory_space<vmem>>, vector<12x64xf32>
    %c1_233 = arith.constant 1 : index
    %c0_234 = arith.constant 0 : index
    %275 = vector.load %arg6[%c1_233, %c0_234] : memref<136x128xf32, #tpu.memory_space<vmem>>, vector<12x64xf32>
    %c2_235 = arith.constant 2 : index
    %c0_236 = arith.constant 0 : index
    %276 = vector.load %arg6[%c2_235, %c0_236] : memref<136x128xf32, #tpu.memory_space<vmem>>, vector<12x64xf32>
    %277 = tpu.concatenate %274, %275, %276 in 1 : vector<12x64xf32>, vector<12x64xf32>, vector<12x64xf32> -> vector<12x192xf32>
    %c2880 = arith.constant 2880 : index
    %c0_237 = arith.constant 0 : index
    %278 = vector.load %arg3[%c2880, %c0_237] : memref<6464x256xbf16, #tpu.memory_space<vmem>>, vector<192x64xbf16>
    %c10 = arith.constant 10 : index
    %c0_238 = arith.constant 0 : index
    %c0_239 = arith.constant 0 : index
    %279 = vector.load %arg4[%c10, %c0_238, %c0_239] : memref<20x3x256xf32, #tpu.memory_space<vmem>>, vector<1x3x256xf32>
    %280 = vector.shape_cast %279 : vector<1x3x256xf32> to vector<3x256xf32>
    %281 = arith.truncf %277 : vector<12x192xf32> to vector<12x192xbf16>
    %cst_240 = arith.constant dense<0.000000e+00> : vector<12x64xf32>
    %282 = tpu.matmul %281, %278, %cst_240 {dimension_numbers = #tpu.dot_dimension_numbers<[1], [0], [0], [1], [0, 0, 1, 1], [], []>} : vector<12x192xbf16>, vector<192x64xbf16>, vector<12x64xf32> -> vector<12x64xf32>
    %283 = vector.extract_strided_slice %280 {offsets = [0, 0], sizes = [1, 64], strides = [1, 1]} : vector<3x256xf32> to vector<1x64xf32>
    %284 = vector.broadcast %283 : vector<1x64xf32> to vector<12x64xf32>
    %285 = arith.addf %282, %284 : vector<12x64xf32>
    %cst_241 = arith.constant 0.000000e+00 : f32
    %286 = vector.broadcast %cst_241 : f32 to vector<12x64xf32>
    %287 = arith.cmpf oge, %285, %286 : vector<12x64xf32>
    %288 = vector.extract_strided_slice %280 {offsets = [1, 0], sizes = [1, 64], strides = [1, 1]} : vector<3x256xf32> to vector<1x64xf32>
    %289 = vector.broadcast %288 : vector<1x64xf32> to vector<12x64xf32>
    %290 = arith.mulf %289, %285 : vector<12x64xf32>
    %291 = arith.select %287, %285, %290 : vector<12x64xi1>, vector<12x64xf32>
    %292 = vector.extract_strided_slice %280 {offsets = [2, 0], sizes = [1, 64], strides = [1, 1]} : vector<3x256xf32> to vector<1x64xf32>
    %293 = vector.broadcast %292 : vector<1x64xf32> to vector<12x64xf32>
    %294 = arith.addf %291, %293 : vector<12x64xf32>
    %cst_242 = arith.constant 0.000000e+00 : f32
    %295 = vector.broadcast %cst_242 : f32 to vector<136x128xf32>
    %c0_243 = arith.constant 0 : index
    %c0_244 = arith.constant 0 : index
    %296 = vector.load %arg6[%c0_243, %c0_244] : memref<136x128xf32, #tpu.memory_space<vmem>>, vector<136x128xf32>
    tpu.vector_store %arg6[%c0_243, %c0_244], %295 {strides = array<i32>} : memref<136x128xf32, #tpu.memory_space<vmem>>, vector<136x128xf32>,
    %c4_245 = arith.constant 4 : index
    %c0_246 = arith.constant 0 : index
    %297 = vector.load %arg6[%c4_245, %c0_246] : memref<136x128xf32, #tpu.memory_space<vmem>>, vector<12x64xf32>
    tpu.vector_store %arg6[%c4_245, %c0_246], %294 {strides = array<i32>} : memref<136x128xf32, #tpu.memory_space<vmem>>, vector<12x64xf32>,
    %c0_247 = arith.constant 0 : index
    %c0_248 = arith.constant 0 : index
    %298 = tpu.strided_load %arg6[%c0_247, %c0_248] {strides = array<i32: 4, 1>} : memref<136x128xf32, #tpu.memory_space<vmem>>, vector<4x64xf32>
    %c1_249 = arith.constant 1 : index
    %c0_250 = arith.constant 0 : index
    %299 = tpu.strided_load %arg6[%c1_249, %c0_250] {strides = array<i32: 4, 1>} : memref<136x128xf32, #tpu.memory_space<vmem>>, vector<4x64xf32>
    %c2_251 = arith.constant 2 : index
    %c0_252 = arith.constant 0 : index
    %300 = tpu.strided_load %arg6[%c2_251, %c0_252] {strides = array<i32: 4, 1>} : memref<136x128xf32, #tpu.memory_space<vmem>>, vector<4x64xf32>
    %c3_253 = arith.constant 3 : index
    %c0_254 = arith.constant 0 : index
    %301 = tpu.strided_load %arg6[%c3_253, %c0_254] {strides = array<i32: 4, 1>} : memref<136x128xf32, #tpu.memory_space<vmem>>, vector<4x64xf32>
    %c4_255 = arith.constant 4 : index
    %c0_256 = arith.constant 0 : index
    %302 = tpu.strided_load %arg6[%c4_255, %c0_256] {strides = array<i32: 4, 1>} : memref<136x128xf32, #tpu.memory_space<vmem>>, vector<4x64xf32>
    %c5_257 = arith.constant 5 : index
    %c0_258 = arith.constant 0 : index
    %303 = tpu.strided_load %arg6[%c5_257, %c0_258] {strides = array<i32: 4, 1>} : memref<136x128xf32, #tpu.memory_space<vmem>>, vector<4x64xf32>
    %c6_259 = arith.constant 6 : index
    %c0_260 = arith.constant 0 : index
    %304 = tpu.strided_load %arg6[%c6_259, %c0_260] {strides = array<i32: 4, 1>} : memref<136x128xf32, #tpu.memory_space<vmem>>, vector<4x64xf32>
    %c7_261 = arith.constant 7 : index
    %c0_262 = arith.constant 0 : index
    %305 = tpu.strided_load %arg6[%c7_261, %c0_262] {strides = array<i32: 4, 1>} : memref<136x128xf32, #tpu.memory_space<vmem>>, vector<4x64xf32>
    %306 = tpu.concatenate %298, %299, %300, %301, %302, %303, %304, %305 in 1 : vector<4x64xf32>, vector<4x64xf32>, vector<4x64xf32>, vector<4x64xf32>, vector<4x64xf32>, vector<4x64xf32>, vector<4x64xf32>, vector<4x64xf32> -> vector<4x512xf32>
    %c3072 = arith.constant 3072 : index
    %c0_263 = arith.constant 0 : index
    %307 = vector.load %arg3[%c3072, %c0_263] : memref<6464x256xbf16, #tpu.memory_space<vmem>>, vector<512x128xbf16>
    %c11 = arith.constant 11 : index
    %c0_264 = arith.constant 0 : index
    %c0_265 = arith.constant 0 : index
    %308 = vector.load %arg4[%c11, %c0_264, %c0_265] : memref<20x3x256xf32, #tpu.memory_space<vmem>>, vector<1x3x256xf32>
    %309 = vector.shape_cast %308 : vector<1x3x256xf32> to vector<3x256xf32>
    %310 = arith.truncf %306 : vector<4x512xf32> to vector<4x512xbf16>
    %cst_266 = arith.constant dense<0.000000e+00> : vector<4x128xf32>
    %311 = tpu.matmul %310, %307, %cst_266 {dimension_numbers = #tpu.dot_dimension_numbers<[1], [0], [0], [1], [0, 0, 1, 1], [], []>} : vector<4x512xbf16>, vector<512x128xbf16>, vector<4x128xf32> -> vector<4x128xf32>
    %312 = vector.extract_strided_slice %309 {offsets = [0, 0], sizes = [1, 128], strides = [1, 1]} : vector<3x256xf32> to vector<1x128xf32>
    %313 = vector.broadcast %312 : vector<1x128xf32> to vector<4x128xf32>
    %314 = arith.addf %311, %313 : vector<4x128xf32>
    %cst_267 = arith.constant 0.000000e+00 : f32
    %315 = vector.broadcast %cst_267 : f32 to vector<4x128xf32>
    %316 = arith.cmpf oge, %314, %315 : vector<4x128xf32>
    %317 = vector.extract_strided_slice %309 {offsets = [1, 0], sizes = [1, 128], strides = [1, 1]} : vector<3x256xf32> to vector<1x128xf32>
    %318 = vector.broadcast %317 : vector<1x128xf32> to vector<4x128xf32>
    %319 = arith.mulf %318, %314 : vector<4x128xf32>
    %320 = arith.select %316, %314, %319 : vector<4x128xi1>, vector<4x128xf32>
    %321 = vector.extract_strided_slice %309 {offsets = [2, 0], sizes = [1, 128], strides = [1, 1]} : vector<3x256xf32> to vector<1x128xf32>
    %322 = vector.broadcast %321 : vector<1x128xf32> to vector<4x128xf32>
    %323 = arith.addf %320, %322 : vector<4x128xf32>
    %cst_268 = arith.constant 0.000000e+00 : f32
    %324 = vector.broadcast %cst_268 : f32 to vector<136x128xf32>
    %c0_269 = arith.constant 0 : index
    %c0_270 = arith.constant 0 : index
    %325 = vector.load %arg6[%c0_269, %c0_270] : memref<136x128xf32, #tpu.memory_space<vmem>>, vector<136x128xf32>
    tpu.vector_store %arg6[%c0_269, %c0_270], %324 {strides = array<i32>} : memref<136x128xf32, #tpu.memory_space<vmem>>, vector<136x128xf32>,
    %c4_271 = arith.constant 4 : index
    %c0_272 = arith.constant 0 : index
    %326 = vector.load %arg6[%c4_271, %c0_272] : memref<136x128xf32, #tpu.memory_space<vmem>>, vector<4x128xf32>
    tpu.vector_store %arg6[%c4_271, %c0_272], %323 {strides = array<i32>} : memref<136x128xf32, #tpu.memory_space<vmem>>, vector<4x128xf32>,
    %c0_273 = arith.constant 0 : index
    %c0_274 = arith.constant 0 : index
    %327 = tpu.strided_load %arg6[%c0_273, %c0_274] {strides = array<i32: 4, 1>} : memref<136x128xf32, #tpu.memory_space<vmem>>, vector<2x128xf32>
    %c1_275 = arith.constant 1 : index
    %c0_276 = arith.constant 0 : index
    %328 = tpu.strided_load %arg6[%c1_275, %c0_276] {strides = array<i32: 4, 1>} : memref<136x128xf32, #tpu.memory_space<vmem>>, vector<2x128xf32>
    %c2_277 = arith.constant 2 : index
    %c0_278 = arith.constant 0 : index
    %329 = tpu.strided_load %arg6[%c2_277, %c0_278] {strides = array<i32: 4, 1>} : memref<136x128xf32, #tpu.memory_space<vmem>>, vector<2x128xf32>
    %c3_279 = arith.constant 3 : index
    %c0_280 = arith.constant 0 : index
    %330 = tpu.strided_load %arg6[%c3_279, %c0_280] {strides = array<i32: 4, 1>} : memref<136x128xf32, #tpu.memory_space<vmem>>, vector<2x128xf32>
    %c4_281 = arith.constant 4 : index
    %c0_282 = arith.constant 0 : index
    %331 = tpu.strided_load %arg6[%c4_281, %c0_282] {strides = array<i32: 4, 1>} : memref<136x128xf32, #tpu.memory_space<vmem>>, vector<2x128xf32>
    %c5_283 = arith.constant 5 : index
    %c0_284 = arith.constant 0 : index
    %332 = tpu.strided_load %arg6[%c5_283, %c0_284] {strides = array<i32: 4, 1>} : memref<136x128xf32, #tpu.memory_space<vmem>>, vector<2x128xf32>
    %c6_285 = arith.constant 6 : index
    %c0_286 = arith.constant 0 : index
    %333 = tpu.strided_load %arg6[%c6_285, %c0_286] {strides = array<i32: 4, 1>} : memref<136x128xf32, #tpu.memory_space<vmem>>, vector<2x128xf32>
    %c7_287 = arith.constant 7 : index
    %c0_288 = arith.constant 0 : index
    %334 = tpu.strided_load %arg6[%c7_287, %c0_288] {strides = array<i32: 4, 1>} : memref<136x128xf32, #tpu.memory_space<vmem>>, vector<2x128xf32>
    %335 = tpu.concatenate %327, %328, %329, %330, %331, %332, %333, %334 in 1 : vector<2x128xf32>, vector<2x128xf32>, vector<2x128xf32>, vector<2x128xf32>, vector<2x128xf32>, vector<2x128xf32>, vector<2x128xf32>, vector<2x128xf32> -> vector<2x1024xf32>
    %c3584 = arith.constant 3584 : index
    %c0_289 = arith.constant 0 : index
    %336 = vector.load %arg3[%c3584, %c0_289] : memref<6464x256xbf16, #tpu.memory_space<vmem>>, vector<1024x128xbf16>
    %c12 = arith.constant 12 : index
    %c0_290 = arith.constant 0 : index
    %c0_291 = arith.constant 0 : index
    %337 = vector.load %arg4[%c12, %c0_290, %c0_291] : memref<20x3x256xf32, #tpu.memory_space<vmem>>, vector<1x3x256xf32>
    %338 = vector.shape_cast %337 : vector<1x3x256xf32> to vector<3x256xf32>
    %339 = arith.truncf %335 : vector<2x1024xf32> to vector<2x1024xbf16>
    %cst_292 = arith.constant dense<0.000000e+00> : vector<2x128xf32>
    %340 = tpu.matmul %339, %336, %cst_292 {dimension_numbers = #tpu.dot_dimension_numbers<[1], [0], [0], [1], [0, 0, 1, 1], [], []>} : vector<2x1024xbf16>, vector<1024x128xbf16>, vector<2x128xf32> -> vector<2x128xf32>
    %341 = vector.extract_strided_slice %338 {offsets = [0, 0], sizes = [1, 128], strides = [1, 1]} : vector<3x256xf32> to vector<1x128xf32>
    %342 = vector.broadcast %341 : vector<1x128xf32> to vector<2x128xf32>
    %343 = arith.addf %340, %342 : vector<2x128xf32>
    %cst_293 = arith.constant 0.000000e+00 : f32
    %344 = vector.broadcast %cst_293 : f32 to vector<2x128xf32>
    %345 = arith.cmpf oge, %343, %344 : vector<2x128xf32>
    %346 = vector.extract_strided_slice %338 {offsets = [1, 0], sizes = [1, 128], strides = [1, 1]} : vector<3x256xf32> to vector<1x128xf32>
    %347 = vector.broadcast %346 : vector<1x128xf32> to vector<2x128xf32>
    %348 = arith.mulf %347, %343 : vector<2x128xf32>
    %349 = arith.select %345, %343, %348 : vector<2x128xi1>, vector<2x128xf32>
    %350 = vector.extract_strided_slice %338 {offsets = [2, 0], sizes = [1, 128], strides = [1, 1]} : vector<3x256xf32> to vector<1x128xf32>
    %351 = vector.broadcast %350 : vector<1x128xf32> to vector<2x128xf32>
    %352 = arith.addf %349, %351 : vector<2x128xf32>
    %cst_294 = arith.constant 0.000000e+00 : f32
    %353 = vector.broadcast %cst_294 : f32 to vector<136x128xf32>
    %c0_295 = arith.constant 0 : index
    %c0_296 = arith.constant 0 : index
    %354 = vector.load %arg6[%c0_295, %c0_296] : memref<136x128xf32, #tpu.memory_space<vmem>>, vector<136x128xf32>
    tpu.vector_store %arg6[%c0_295, %c0_296], %353 {strides = array<i32>} : memref<136x128xf32, #tpu.memory_space<vmem>>, vector<136x128xf32>,
    %c3_297 = arith.constant 3 : index
    %c0_298 = arith.constant 0 : index
    %355 = vector.load %arg6[%c3_297, %c0_298] : memref<136x128xf32, #tpu.memory_space<vmem>>, vector<2x128xf32>
    tpu.vector_store %arg6[%c3_297, %c0_298], %352 {strides = array<i32>} : memref<136x128xf32, #tpu.memory_space<vmem>>, vector<2x128xf32>,
    %c0_299 = arith.constant 0 : index
    %c0_300 = arith.constant 0 : index
    %356 = tpu.strided_load %arg6[%c0_299, %c0_300] {strides = array<i32: 2, 1>} : memref<136x128xf32, #tpu.memory_space<vmem>>, vector<1x128xf32>
    %c1_301 = arith.constant 1 : index
    %c0_302 = arith.constant 0 : index
    %357 = tpu.strided_load %arg6[%c1_301, %c0_302] {strides = array<i32: 2, 1>} : memref<136x128xf32, #tpu.memory_space<vmem>>, vector<1x128xf32>
    %c2_303 = arith.constant 2 : index
    %c0_304 = arith.constant 0 : index
    %358 = tpu.strided_load %arg6[%c2_303, %c0_304] {strides = array<i32: 2, 1>} : memref<136x128xf32, #tpu.memory_space<vmem>>, vector<1x128xf32>
    %c3_305 = arith.constant 3 : index
    %c0_306 = arith.constant 0 : index
    %359 = tpu.strided_load %arg6[%c3_305, %c0_306] {strides = array<i32: 2, 1>} : memref<136x128xf32, #tpu.memory_space<vmem>>, vector<1x128xf32>
    %c4_307 = arith.constant 4 : index
    %c0_308 = arith.constant 0 : index
    %360 = tpu.strided_load %arg6[%c4_307, %c0_308] {strides = array<i32: 2, 1>} : memref<136x128xf32, #tpu.memory_space<vmem>>, vector<1x128xf32>
    %c5_309 = arith.constant 5 : index
    %c0_310 = arith.constant 0 : index
    %361 = tpu.strided_load %arg6[%c5_309, %c0_310] {strides = array<i32: 2, 1>} : memref<136x128xf32, #tpu.memory_space<vmem>>, vector<1x128xf32>
    %c6_311 = arith.constant 6 : index
    %c0_312 = arith.constant 0 : index
    %362 = tpu.strided_load %arg6[%c6_311, %c0_312] {strides = array<i32: 2, 1>} : memref<136x128xf32, #tpu.memory_space<vmem>>, vector<1x128xf32>
    %c7_313 = arith.constant 7 : index
    %c0_314 = arith.constant 0 : index
    %363 = tpu.strided_load %arg6[%c7_313, %c0_314] {strides = array<i32: 2, 1>} : memref<136x128xf32, #tpu.memory_space<vmem>>, vector<1x128xf32>
    %364 = tpu.concatenate %356, %357, %358, %359, %360, %361, %362, %363 in 1 : vector<1x128xf32>, vector<1x128xf32>, vector<1x128xf32>, vector<1x128xf32>, vector<1x128xf32>, vector<1x128xf32>, vector<1x128xf32>, vector<1x128xf32> -> vector<1x1024xf32>
    %c4608 = arith.constant 4608 : index
    %c0_315 = arith.constant 0 : index
    %365 = vector.load %arg3[%c4608, %c0_315] : memref<6464x256xbf16, #tpu.memory_space<vmem>>, vector<1024x256xbf16>
    %c13 = arith.constant 13 : index
    %c0_316 = arith.constant 0 : index
    %c0_317 = arith.constant 0 : index
    %366 = vector.load %arg4[%c13, %c0_316, %c0_317] : memref<20x3x256xf32, #tpu.memory_space<vmem>>, vector<1x3x256xf32>
    %367 = vector.shape_cast %366 : vector<1x3x256xf32> to vector<3x256xf32>
    %368 = arith.truncf %364 : vector<1x1024xf32> to vector<1x1024xbf16>
    %cst_318 = arith.constant dense<0.000000e+00> : vector<1x256xf32>
    %369 = tpu.matmul %368, %365, %cst_318 {dimension_numbers = #tpu.dot_dimension_numbers<[1], [0], [0], [1], [0, 0, 1, 1], [], []>} : vector<1x1024xbf16>, vector<1024x256xbf16>, vector<1x256xf32> -> vector<1x256xf32>
    %370 = vector.extract_strided_slice %367 {offsets = [0, 0], sizes = [1, 256], strides = [1, 1]} : vector<3x256xf32> to vector<1x256xf32>
    %371 = arith.addf %369, %370 : vector<1x256xf32>
    %cst_319 = arith.constant 0.000000e+00 : f32
    %372 = vector.broadcast %cst_319 : f32 to vector<1x256xf32>
    %373 = arith.cmpf oge, %371, %372 : vector<1x256xf32>
    %374 = vector.extract_strided_slice %367 {offsets = [1, 0], sizes = [1, 256], strides = [1, 1]} : vector<3x256xf32> to vector<1x256xf32>
    %375 = arith.mulf %374, %371 : vector<1x256xf32>
    %376 = arith.select %373, %371, %375 : vector<1x256xi1>, vector<1x256xf32>
    %377 = vector.extract_strided_slice %367 {offsets = [2, 0], sizes = [1, 256], strides = [1, 1]} : vector<3x256xf32> to vector<1x256xf32>
    %378 = arith.addf %376, %377 : vector<1x256xf32>
    %c5632 = arith.constant 5632 : index
    %c0_320 = arith.constant 0 : index
    %379 = vector.load %arg3[%c5632, %c0_320] : memref<6464x256xbf16, #tpu.memory_space<vmem>>, vector<256x64xbf16>
    %c14 = arith.constant 14 : index
    %c0_321 = arith.constant 0 : index
    %c0_322 = arith.constant 0 : index
    %380 = vector.load %arg4[%c14, %c0_321, %c0_322] : memref<20x3x256xf32, #tpu.memory_space<vmem>>, vector<1x3x256xf32>
    %381 = vector.shape_cast %380 : vector<1x3x256xf32> to vector<3x256xf32>
    %382 = arith.truncf %186 : vector<1x256xf32> to vector<1x256xbf16>
    %cst_323 = arith.constant dense<0.000000e+00> : vector<1x64xf32>
    %383 = tpu.matmul %382, %379, %cst_323 {dimension_numbers = #tpu.dot_dimension_numbers<[1], [0], [0], [1], [0, 0, 1, 1], [], []>} : vector<1x256xbf16>, vector<256x64xbf16>, vector<1x64xf32> -> vector<1x64xf32>
    %384 = vector.extract_strided_slice %381 {offsets = [0, 0], sizes = [1, 64], strides = [1, 1]} : vector<3x256xf32> to vector<1x64xf32>
    %385 = arith.addf %383, %384 : vector<1x64xf32>
    %cst_324 = arith.constant 0.000000e+00 : f32
    %386 = vector.broadcast %cst_324 : f32 to vector<1x64xf32>
    %387 = arith.cmpf oge, %385, %386 : vector<1x64xf32>
    %388 = vector.extract_strided_slice %381 {offsets = [1, 0], sizes = [1, 64], strides = [1, 1]} : vector<3x256xf32> to vector<1x64xf32>
    %389 = arith.mulf %388, %385 : vector<1x64xf32>
    %390 = arith.select %387, %385, %389 : vector<1x64xi1>, vector<1x64xf32>
    %391 = vector.extract_strided_slice %381 {offsets = [2, 0], sizes = [1, 64], strides = [1, 1]} : vector<3x256xf32> to vector<1x64xf32>
    %392 = arith.addf %390, %391 : vector<1x64xf32>
    %c5888 = arith.constant 5888 : index
    %c0_325 = arith.constant 0 : index
    %393 = vector.load %arg3[%c5888, %c0_325] : memref<6464x256xbf16, #tpu.memory_space<vmem>>, vector<64x64xbf16>
    %c15 = arith.constant 15 : index
    %c0_326 = arith.constant 0 : index
    %c0_327 = arith.constant 0 : index
    %394 = vector.load %arg4[%c15, %c0_326, %c0_327] : memref<20x3x256xf32, #tpu.memory_space<vmem>>, vector<1x3x256xf32>
    %395 = vector.shape_cast %394 : vector<1x3x256xf32> to vector<3x256xf32>
    %396 = arith.truncf %392 : vector<1x64xf32> to vector<1x64xbf16>
    %cst_328 = arith.constant dense<0.000000e+00> : vector<1x64xf32>
    %397 = tpu.matmul %396, %393, %cst_328 {dimension_numbers = #tpu.dot_dimension_numbers<[1], [0], [0], [1], [0, 0, 1, 1], [], []>} : vector<1x64xbf16>, vector<64x64xbf16>, vector<1x64xf32> -> vector<1x64xf32>
    %398 = vector.extract_strided_slice %395 {offsets = [0, 0], sizes = [1, 64], strides = [1, 1]} : vector<3x256xf32> to vector<1x64xf32>
    %399 = arith.addf %397, %398 : vector<1x64xf32>
    %cst_329 = arith.constant 0.000000e+00 : f32
    %400 = vector.broadcast %cst_329 : f32 to vector<1x64xf32>
    %401 = arith.cmpf oge, %399, %400 : vector<1x64xf32>
    %402 = vector.extract_strided_slice %395 {offsets = [1, 0], sizes = [1, 64], strides = [1, 1]} : vector<3x256xf32> to vector<1x64xf32>
    %403 = arith.mulf %402, %399 : vector<1x64xf32>
    %404 = arith.select %401, %399, %403 : vector<1x64xi1>, vector<1x64xf32>
    %405 = vector.extract_strided_slice %395 {offsets = [2, 0], sizes = [1, 64], strides = [1, 1]} : vector<3x256xf32> to vector<1x64xf32>
    %406 = arith.addf %404, %405 : vector<1x64xf32>
    %c5952 = arith.constant 5952 : index
    %c0_330 = arith.constant 0 : index
    %407 = vector.load %arg3[%c5952, %c0_330] : memref<6464x256xbf16, #tpu.memory_space<vmem>>, vector<256x64xbf16>
    %c16 = arith.constant 16 : index
    %c0_331 = arith.constant 0 : index
    %c0_332 = arith.constant 0 : index
    %408 = vector.load %arg4[%c16, %c0_331, %c0_332] : memref<20x3x256xf32, #tpu.memory_space<vmem>>, vector<1x3x256xf32>
    %409 = vector.shape_cast %408 : vector<1x3x256xf32> to vector<3x256xf32>
    %410 = arith.truncf %378 : vector<1x256xf32> to vector<1x256xbf16>
    %cst_333 = arith.constant dense<0.000000e+00> : vector<1x64xf32>
    %411 = tpu.matmul %410, %407, %cst_333 {dimension_numbers = #tpu.dot_dimension_numbers<[1], [0], [0], [1], [0, 0, 1, 1], [], []>} : vector<1x256xbf16>, vector<256x64xbf16>, vector<1x64xf32> -> vector<1x64xf32>
    %412 = vector.extract_strided_slice %409 {offsets = [0, 0], sizes = [1, 64], strides = [1, 1]} : vector<3x256xf32> to vector<1x64xf32>
    %413 = arith.addf %411, %412 : vector<1x64xf32>
    %cst_334 = arith.constant 0.000000e+00 : f32
    %414 = vector.broadcast %cst_334 : f32 to vector<1x64xf32>
    %415 = arith.cmpf oge, %413, %414 : vector<1x64xf32>
    %416 = vector.extract_strided_slice %409 {offsets = [1, 0], sizes = [1, 64], strides = [1, 1]} : vector<3x256xf32> to vector<1x64xf32>
    %417 = arith.mulf %416, %413 : vector<1x64xf32>
    %418 = arith.select %415, %413, %417 : vector<1x64xi1>, vector<1x64xf32>
    %419 = vector.extract_strided_slice %409 {offsets = [2, 0], sizes = [1, 64], strides = [1, 1]} : vector<3x256xf32> to vector<1x64xf32>
    %420 = arith.addf %418, %419 : vector<1x64xf32>
    %c6208 = arith.constant 6208 : index
    %c0_335 = arith.constant 0 : index
    %421 = vector.load %arg3[%c6208, %c0_335] : memref<6464x256xbf16, #tpu.memory_space<vmem>>, vector<64x64xbf16>
    %c17 = arith.constant 17 : index
    %c0_336 = arith.constant 0 : index
    %c0_337 = arith.constant 0 : index
    %422 = vector.load %arg4[%c17, %c0_336, %c0_337] : memref<20x3x256xf32, #tpu.memory_space<vmem>>, vector<1x3x256xf32>
    %423 = vector.shape_cast %422 : vector<1x3x256xf32> to vector<3x256xf32>
    %424 = arith.truncf %420 : vector<1x64xf32> to vector<1x64xbf16>
    %cst_338 = arith.constant dense<0.000000e+00> : vector<1x64xf32>
    %425 = tpu.matmul %424, %421, %cst_338 {dimension_numbers = #tpu.dot_dimension_numbers<[1], [0], [0], [1], [0, 0, 1, 1], [], []>} : vector<1x64xbf16>, vector<64x64xbf16>, vector<1x64xf32> -> vector<1x64xf32>
    %426 = vector.extract_strided_slice %423 {offsets = [0, 0], sizes = [1, 64], strides = [1, 1]} : vector<3x256xf32> to vector<1x64xf32>
    %427 = arith.addf %425, %426 : vector<1x64xf32>
    %cst_339 = arith.constant 0.000000e+00 : f32
    %428 = vector.broadcast %cst_339 : f32 to vector<1x64xf32>
    %429 = arith.cmpf oge, %427, %428 : vector<1x64xf32>
    %430 = vector.extract_strided_slice %423 {offsets = [1, 0], sizes = [1, 64], strides = [1, 1]} : vector<3x256xf32> to vector<1x64xf32>
    %431 = arith.mulf %430, %427 : vector<1x64xf32>
    %432 = arith.select %429, %427, %431 : vector<1x64xi1>, vector<1x64xf32>
    %433 = vector.extract_strided_slice %423 {offsets = [2, 0], sizes = [1, 64], strides = [1, 1]} : vector<3x256xf32> to vector<1x64xf32>
    %434 = arith.addf %432, %433 : vector<1x64xf32>
    %435 = tpu.concatenate %406, %434 in 1 : vector<1x64xf32>, vector<1x64xf32> -> vector<1x128xf32>
    %c6272 = arith.constant 6272 : index
    %c0_340 = arith.constant 0 : index
    %436 = vector.load %arg3[%c6272, %c0_340] : memref<6464x256xbf16, #tpu.memory_space<vmem>>, vector<128x64xbf16>
    %c18 = arith.constant 18 : index
    %c0_341 = arith.constant 0 : index
    %c0_342 = arith.constant 0 : index
    %437 = vector.load %arg4[%c18, %c0_341, %c0_342] : memref<20x3x256xf32, #tpu.memory_space<vmem>>, vector<1x3x256xf32>
    %438 = vector.shape_cast %437 : vector<1x3x256xf32> to vector<3x256xf32>
    %439 = arith.truncf %435 : vector<1x128xf32> to vector<1x128xbf16>
    %cst_343 = arith.constant dense<0.000000e+00> : vector<1x64xf32>
    %440 = tpu.matmul %439, %436, %cst_343 {dimension_numbers = #tpu.dot_dimension_numbers<[1], [0], [0], [1], [0, 0, 1, 1], [], []>} : vector<1x128xbf16>, vector<128x64xbf16>, vector<1x64xf32> -> vector<1x64xf32>
    %441 = vector.extract_strided_slice %438 {offsets = [0, 0], sizes = [1, 64], strides = [1, 1]} : vector<3x256xf32> to vector<1x64xf32>
    %442 = arith.addf %440, %441 : vector<1x64xf32>
    %cst_344 = arith.constant 0.000000e+00 : f32
    %443 = vector.broadcast %cst_344 : f32 to vector<1x64xf32>
    %444 = arith.cmpf oge, %442, %443 : vector<1x64xf32>
    %445 = vector.extract_strided_slice %438 {offsets = [1, 0], sizes = [1, 64], strides = [1, 1]} : vector<3x256xf32> to vector<1x64xf32>
    %446 = arith.mulf %445, %442 : vector<1x64xf32>
    %447 = arith.select %444, %442, %446 : vector<1x64xi1>, vector<1x64xf32>
    %448 = vector.extract_strided_slice %438 {offsets = [2, 0], sizes = [1, 64], strides = [1, 1]} : vector<3x256xf32> to vector<1x64xf32>
    %449 = arith.addf %447, %448 : vector<1x64xf32>
    %c6400 = arith.constant 6400 : index
    %c0_345 = arith.constant 0 : index
    %450 = vector.load %arg3[%c6400, %c0_345] : memref<6464x256xbf16, #tpu.memory_space<vmem>>, vector<64x5xbf16>
    %c19 = arith.constant 19 : index
    %c0_346 = arith.constant 0 : index
    %c0_347 = arith.constant 0 : index
    %451 = vector.load %arg4[%c19, %c0_346, %c0_347] : memref<20x3x256xf32, #tpu.memory_space<vmem>>, vector<1x3x256xf32>
    %452 = vector.shape_cast %451 : vector<1x3x256xf32> to vector<3x256xf32>
    %453 = arith.truncf %449 : vector<1x64xf32> to vector<1x64xbf16>
    %cst_348 = arith.constant dense<0.000000e+00> : vector<1x5xf32>
    %454 = tpu.matmul %453, %450, %cst_348 {dimension_numbers = #tpu.dot_dimension_numbers<[1], [0], [0], [1], [0, 0, 1, 1], [], []>} : vector<1x64xbf16>, vector<64x5xbf16>, vector<1x5xf32> -> vector<1x5xf32>
    %455 = vector.extract_strided_slice %452 {offsets = [0, 0], sizes = [1, 5], strides = [1, 1]} : vector<3x256xf32> to vector<1x5xf32>
    %456 = arith.addf %454, %455 : vector<1x5xf32>
    %cst_349 = arith.constant 0.000000e+00 : f32
    %457 = vector.broadcast %cst_349 : f32 to vector<1x5xf32>
    %458 = arith.cmpf oge, %456, %457 : vector<1x5xf32>
    %459 = vector.extract_strided_slice %452 {offsets = [1, 0], sizes = [1, 5], strides = [1, 1]} : vector<3x256xf32> to vector<1x5xf32>
    %460 = arith.mulf %459, %456 : vector<1x5xf32>
    %461 = arith.select %458, %456, %460 : vector<1x5xi1>, vector<1x5xf32>
    %462 = vector.extract_strided_slice %452 {offsets = [2, 0], sizes = [1, 5], strides = [1, 1]} : vector<3x256xf32> to vector<1x5xf32>
    %463 = arith.addf %461, %462 : vector<1x5xf32>
    %c0_350 = arith.constant 0 : index
    %c0_351 = arith.constant 0 : index
    %c0_352 = arith.constant 0 : index
    %464 = vector.load %arg5[%c0_350, %c0_351, %c0_352] : memref<1x1x5xf32, #tpu.memory_space<vmem>>, vector<1x1x5xf32>
    %465 = vector.shape_cast %464 : vector<1x1x5xf32> to vector<1x5xf32>
    %466 = vector.shape_cast %463 : vector<1x5xf32> to vector<1x1x5xf32>
    tpu.vector_store %arg5[%c0_350, %c0_351, %c0_352], %466 {strides = array<i32>} : memref<1x1x5xf32, #tpu.memory_space<vmem>>, vector<1x1x5xf32>,
    return
  }
  func.func @transform_0(%arg0: i32) -> (i32, i32, i32) {
    %c0_i32 = arith.constant 0 : i32
    %c0_i32_0 = arith.constant 0 : i32
    %c0_i32_1 = arith.constant 0 : i32
    return %arg0, %c0_i32, %c0_i32_0 : i32, i32, i32
  }
  func.func @transform_1(%arg0: i32) -> (i32, i32, i32) {
    %c0_i32 = arith.constant 0 : i32
    %c0_i32_0 = arith.constant 0 : i32
    %c0_i32_1 = arith.constant 0 : i32
    return %arg0, %c0_i32, %c0_i32_0 : i32, i32, i32
  }
  func.func @transform_2(%arg0: i32) -> (i32, i32) {
    %c0_i32 = arith.constant 0 : i32
    %c0_i32_0 = arith.constant 0 : i32
    %c0_i32_1 = arith.constant 0 : i32
    return %c0_i32, %c0_i32_0 : i32, i32
  }
  func.func @transform_3(%arg0: i32) -> (i32, i32, i32) {
    %c0_i32 = arith.constant 0 : i32
    %c0_i32_0 = arith.constant 0 : i32
    %c0_i32_1 = arith.constant 0 : i32
    %c0_i32_2 = arith.constant 0 : i32
    return %c0_i32, %c0_i32_0, %c0_i32_1 : i32, i32, i32
  }
  func.func @transform_4(%arg0: i32) -> (i32, i32, i32) {
    %c0_i32 = arith.constant 0 : i32
    %c0_i32_0 = arith.constant 0 : i32
    %c0_i32_1 = arith.constant 0 : i32
    return %arg0, %c0_i32, %c0_i32_0 : i32, i32, i32
  }
}

</mosaic_0001>

<llo_original>
// kernel: classifier_forward.1
$region0: #{classifier_forward.1}
  #allocation0 [shape = 'u32[]', space=smem, size = 0x4, offset = 0x4, fixed_abs, tag = 'smem constant byte address 0x4 - core index']
  #allocation1 [shape = 'u32[144,128]{1,0:T(1,128)}', space=vmem, size = 0x12000, scoped, tag = 'internal scratch']
  #allocation2 [shape = 'f32[136,128]{1,0:T(8,128)}', space=vmem, size = 0x11000, scoped, tag = 'scratch operand']
  %s0 = inlined_call_operand.vmem [shape: f32[2,128,4], index: 0, kind: input, shape index: {}]
  %s1 = inlined_call_operand.vmem [shape: f32[2,42,4], index: 1, kind: input, shape index: {}]
  %s2 = inlined_call_operand.hbm [shape: bf16[6464,256], index: 2, kind: input, shape index: {}]
  %s3 = inlined_call_operand.vmem [shape: f32[20,3,256], index: 3, kind: input, shape index: {}]
  %s4 = inlined_call_operand.hbm [shape: f32[2,1,5], index: 4, kind: output, shape index: {}]
  %s5 = sld [smem:[#allocation0]]
  $region53: #{classifier_forward.1} parent=0
    _
  %s7 = ssub.s32 1, %s5
  %s8 = scalar_select 0, %s7, %s5
  $region1: #{classifier_forward.1} parent=0
    #allocation3 [shape = 'u8[3309568]{0}', space=vmem, size = 0x328000, scoped, tag = 'input window, operand 2, single buffered']
    #allocation4 [shape = 's32[2]{0}', space=sflag, size = 0x8, scoped, tag = 'scoped memory for classifier_forward.1']
    #allocation5 [shape = 's32[2]{0}', space=sflag, size = 0x8, scoped, tag = 'scoped memory for classifier_forward.1']
    #allocation6 [shape = 'u8[1024]{0}', space=vmem, size = 0x400, scoped, tag = 'output window, operand 0']
    %9 = vsyncpa [#allocation4], 0
    %10 = vsyncpa [#allocation5], 0
    %s11 = scalar_lea.sflag [#allocation5], 1
    %12 = vsyncpa %s11, 0
    loop: start=0, step=1, limit=4
    $region2: #{classifier_forward.1} parent=1 // loop_pre_header
      _
    $region3: #{classifier_forward.1} parent=1 // loop_header
      %s14 = sphi 0, %s18
      %p15 = scmp.ge.s32.totalorder %s14, 4
      %s24 = sphi 0, %s26
      %s27 = sphi 0, %s24
      %s28 = sphi 0, %s27
      %s44 = sphi 0, %s28
      %s50 = sphi 0, %s52
      %s53 = sphi 0, %s50
      %s54 = sphi 0, %s53
      %s70 = sphi 0, %s54
      %s74 = sphi 0, %s74
      %s76 = sphi 0, %s74
      %s77 = sphi 0, %s76
      %s91 = sphi 0, %s77
      %s95 = sphi 0, %s95
      %s97 = sphi 0, %s95
      %s98 = sphi 0, %s97
      %s112 = sphi 0, %s98
      %s118 = sphi 0, %s120
      %s121 = sphi 0, %s118
      %s122 = sphi 0, %s121
      %s138 = sphi 0, %s122
    $region4: #{classifier_forward.1} parent=1 // loop_header_branch
      %17 = sbr.rel (%p15) target = $region8
    $region5: #{classifier_forward.1} parent=1 // loop_body
      %s19 = ssub.s32 %s14, 1
      %s20 = ssub.s32 %s14, 2
      %s21 = sadd.s32 %s14, 1
      %s22 = ssub.s32 %s14, %s21
      %p23 = scmp.eq.s32.totalorder %s22, 0
      %s25 = sadd.s32 %s24, 1
      %s26 = scalar_select %p23, %s24, %s25
      %p29 = pneg %p23
      %p30 = scmp.eq.s32.totalorder %s14, 1
      %p31 = por %p29, %p30
      %p32 = scmp.ne.s32.totalorder %s24, %s27
      %p33 = scmp.eq.s32.totalorder %s14, 0
      %p34 = por %p32, %p33
      %p35 = scmp.ne.s32.totalorder %s24, %s27
      %p36 = scmp.eq.s32.totalorder %s19, 1
      %p37 = por %p35, %p36
      %p38 = scmp.ne.s32.totalorder %s27, %s28
      %p39 = scmp.eq.s32.totalorder %s19, 0
      %p40 = por %p38, %p39
      %p41 = scmp.ne.s32.totalorder %s27, %s28
      %p42 = scmp.eq.s32.totalorder %s20, 1
      %p43 = por %p41, %p42
      %p45 = scmp.ne.s32.totalorder %s28, %s44
      %p46 = scmp.eq.s32.totalorder %s20, 0
      %p47 = por %p45, %p46
      %s48 = ssub.s32 %s14, %s21
      %p49 = scmp.eq.s32.totalorder %s48, 0
      %s51 = sadd.s32 %s50, 1
      %s52 = scalar_select %p49, %s50, %s51
      %p55 = pneg %p49
      %p56 = scmp.eq.s32.totalorder %s14, 1
      %p57 = por %p55, %p56
      %p58 = scmp.ne.s32.totalorder %s50, %s53
      %p59 = scmp.eq.s32.totalorder %s14, 0
      %p60 = por %p58, %p59
      %p61 = scmp.ne.s32.totalorder %s50, %s53
      %p62 = scmp.eq.s32.totalorder %s19, 1
      %p63 = por %p61, %p62
      %p64 = scmp.ne.s32.totalorder %s53, %s54
      %p65 = scmp.eq.s32.totalorder %s19, 0
      %p66 = por %p64, %p65
      %p67 = scmp.ne.s32.totalorder %s53, %s54
      %p68 = scmp.eq.s32.totalorder %s20, 1
      %p69 = por %p67, %p68
      %p71 = scmp.ne.s32.totalorder %s54, %s70
      %p72 = scmp.eq.s32.totalorder %s20, 0
      %p73 = por %p71, %p72
      %s75 = sadd.s32 %s74, 1
      %p78 = scmp.eq.s32.totalorder %s14, 1
      %p79 = scmp.ne.s32.totalorder %s74, %s76
      %p80 = scmp.eq.s32.totalorder %s14, 0
      %p81 = por %p79, %p80
      %p82 = scmp.ne.s32.totalorder %s74, %s76
      %p83 = scmp.eq.s32.totalorder %s19, 1
      %p84 = por %p82, %p83
      %p85 = scmp.ne.s32.totalorder %s76, %s77
      %p86 = scmp.eq.s32.totalorder %s19, 0
      %p87 = por %p85, %p86
      %p88 = scmp.ne.s32.totalorder %s76, %s77
      %p89 = scmp.eq.s32.totalorder %s20, 1
      %p90 = por %p88, %p89
      %p92 = scmp.ne.s32.totalorder %s77, %s91
      %p93 = scmp.eq.s32.totalorder %s20, 0
      %p94 = por %p92, %p93
      %s96 = sadd.s32 %s95, 1
      %p99 = scmp.eq.s32.totalorder %s14, 1
      %p100 = scmp.ne.s32.totalorder %s95, %s97
      %p101 = scmp.eq.s32.totalorder %s14, 0
      %p102 = por %p100, %p101
      %p103 = scmp.ne.s32.totalorder %s95, %s97
      %p104 = scmp.eq.s32.totalorder %s19, 1
      %p105 = por %p103, %p104
      %p106 = scmp.ne.s32.totalorder %s97, %s98
      %p107 = scmp.eq.s32.totalorder %s19, 0
      %p108 = por %p106, %p107
      %p109 = scmp.ne.s32.totalorder %s97, %s98
      %p110 = scmp.eq.s32.totalorder %s20, 1
      %p111 = por %p109, %p110
      %p113 = scmp.ne.s32.totalorder %s98, %s112
      %p114 = scmp.eq.s32.totalorder %s20, 0
      %p115 = por %p113, %p114
      %s116 = ssub.s32 %s14, %s21
      %p117 = scmp.eq.s32.totalorder %s116, 0
      %s119 = sadd.s32 %s118, 1
      %s120 = scalar_select %p117, %s118, %s119
      %p123 = pneg %p117
      %p124 = scmp.eq.s32.totalorder %s14, 1
      %p125 = por %p123, %p124
      %p126 = scmp.ne.s32.totalorder %s118, %s121
      %p127 = scmp.eq.s32.totalorder %s14, 0
      %p128 = por %p126, %p127
      %p129 = scmp.ne.s32.totalorder %s118, %s121
      %p130 = scmp.eq.s32.totalorder %s19, 1
      %p131 = por %p129, %p130
      %p132 = scmp.ne.s32.totalorder %s121, %s122
      %p133 = scmp.eq.s32.totalorder %s19, 0
      %p134 = por %p132, %p133
      %p135 = scmp.ne.s32.totalorder %s121, %s122
      %p136 = scmp.eq.s32.totalorder %s20, 1
      %p137 = por %p135, %p136
      %p139 = scmp.ne.s32.totalorder %s122, %s138
      %p140 = scmp.eq.s32.totalorder %s20, 0
      %p141 = por %p139, %p140
      %p142 = scmp.le.s32.totalorder 1, %s14
      %p143 = scmp.lt.s32.totalorder %s14, 3
      %p144 = pnand %p142, %p143
      %p145 = pneg %p144
      // Predicated region
      $region9: #{classifier_forward.1} parent=5 // pred_check
        _
      $region10: #{classifier_forward.1} parent=5 // pred_check_branch
        %147 = sbr.rel (%p144) target = $region12
      $region11: #{classifier_forward.1} parent=5 // pred_region
        %s148 = ssub.s32 %s14, 1
        // Predicated region
        $region13: #{classifier_forward.1} parent=11 // pred_check
          %p149 = pneg %p87
        $region14: #{classifier_forward.1} parent=11 // pred_check_branch
          %151 = sbr.rel (%p149) target = $region16
        $region15: #{classifier_forward.1} parent=11 // pred_region
          %s153 = ssub.s32 103424, 103424
          %154 = vsyncadd [#allocation4], %s153
          %s155 = sshll.u32 [#allocation3], 4
          %s156 = int_to_ptr.vmem [resolvable:$true] %s155
          %161 = dma.hbm_to_vmem [thread:$0]  %s2, 103424, %s156, [#allocation4], 128, 128, 8
        $region16: #{classifier_forward.1} parent=11 // pred_fallthru
          _
        // Predicated region
        $region17: #{classifier_forward.1} parent=11 // pred_check
          %p162 = pneg %p108
        $region18: #{classifier_forward.1} parent=11 // pred_check_branch
          %164 = sbr.rel (%p162) target = $region20
        $region19: #{classifier_forward.1} parent=11 // pred_region
          _
        $region20: #{classifier_forward.1} parent=11 // pred_fallthru
          _
      $region12: #{classifier_forward.1} parent=5 // pred_fallthru
        _
      %p165 = scmp.lt.s32.totalorder %s14, 2
      // Predicated region
      $region21: #{classifier_forward.1} parent=5 // pred_check
        %p166 = pneg %p165
      $region22: #{classifier_forward.1} parent=5 // pred_check_branch
        %168 = sbr.rel (%p166) target = $region24
      $region23: #{classifier_forward.1} parent=5 // pred_region
        // Predicated region
        $region25: #{classifier_forward.1} parent=23 // pred_check
          %p169 = pneg %p34
        $region26: #{classifier_forward.1} parent=23 // pred_check_branch
          %171 = sbr.rel (%p169) target = $region28
        $region27: #{classifier_forward.1} parent=23 // pred_region
          %p172 = scmp.lt.s32.totalorder %s14, 1
          %s173 = scalar_select %p172, %s14, 1
          %s174 = smul.addr %s173, 16
          %s175 = smul.addr %s174, 8
          %s176 = scalar_lea.vmem %s0, %s175
        $region28: #{classifier_forward.1} parent=23 // pred_fallthru
          _
        // Predicated region
        $region29: #{classifier_forward.1} parent=23 // pred_check
          %p177 = pneg %p60
        $region30: #{classifier_forward.1} parent=23 // pred_check_branch
          %179 = sbr.rel (%p177) target = $region32
        $region31: #{classifier_forward.1} parent=23 // pred_region
          %p180 = scmp.lt.s32.totalorder %s14, 1
          %s181 = scalar_select %p180, %s14, 1
          %s182 = smul.addr %s181, 6
          %s183 = smul.addr %s182, 8
          %s184 = scalar_lea.vmem %s1, %s183
        $region32: #{classifier_forward.1} parent=23 // pred_fallthru
          _
      $region24: #{classifier_forward.1} parent=5 // pred_fallthru
        _
      %p185 = scmp.le.s32.totalorder 1, %s14
      %p186 = scmp.lt.s32.totalorder %s14, 3
      %p187 = pnand %p185, %p186
      %p188 = pneg %p187
      // Predicated region
      $region33: #{classifier_forward.1} parent=5 // pred_check
        _
      $region34: #{classifier_forward.1} parent=5 // pred_check_branch
        %190 = sbr.rel (%p187) target = $region36
      $region35: #{classifier_forward.1} parent=5 // pred_region
        %s191 = ssub.s32 %s14, 1
        // Predicated region
        $region37: #{classifier_forward.1} parent=35 // pred_check
          %p192 = pneg %p87
        $region38: #{classifier_forward.1} parent=35 // pred_check_branch
          %194 = sbr.rel (%p192) target = $region40
        $region39: #{classifier_forward.1} parent=35 // pred_region
          %195 = dma.done [#allocation4], 103424
        $region40: #{classifier_forward.1} parent=35 // pred_fallthru
          _
        %p196 = scmp.lt.s32.totalorder %s19, 1
        %s197 = scalar_select %p196, %s19, 1
        %s198 = smul.addr %s197, 16
        %s199 = smul.addr %s198, 8
        %s200 = scalar_lea.vmem %s0, %s199
        %p201 = pneg %p40
        %p202 = pneg %p37
        %p203 = scmp.lt.s32.totalorder %s19, 1
        %s204 = scalar_select %p203, %s19, 1
        %s205 = smul.addr %s204, 6
        %s206 = smul.addr %s205, 8
        %s207 = scalar_lea.vmem %s1, %s206
        %p208 = pneg %p66
        %p209 = pneg %p63
        %p210 = pneg %p87
        %p211 = pneg %p84
        %p212 = pneg %p108
        %p213 = pneg %p105
        %p214 = pneg %p134
        %p215 = pneg %p131
        %s216 = sand.u32 %s121, 1
        %s217 = scalar_lea.sflag [#allocation5], %s216
        %s218 = sand.u32 %s121, 1
        %s219 = scalar_lea.vmem [#allocation6], %s218
        %p220 = scmp.lt.s32.totalorder %s19, 1
        %s221 = scalar_select %p220, %s19, 1
        %s222 = smul.addr %s221, 16
        %s223 = smul.addr %s222, 8
        %s224 = scalar_lea.vmem %s0, %s223
        %p225 = scmp.lt.s32.totalorder %s19, 1
        %s226 = scalar_select %p225, %s19, 1
        %s227 = smul.addr %s226, 6
        %s228 = smul.addr %s227, 8
        %s229 = scalar_lea.vmem %s1, %s228
        %v231 = vld [vmem:[%s224] sm:$0xff]
        %v232 = vld [vmem:[%s224 + $0x8] sm:$0xff]
        %v233 = vld [vmem:[%s224 + $0x10] sm:$0xff]
        %v234 = vld [vmem:[%s224 + $0x18] sm:$0xff]
        %v235 = vld [vmem:[%s224 + $0x20] sm:$0xff]
        %v236 = vld [vmem:[%s224 + $0x28] sm:$0xff]
        %v237 = vld [vmem:[%s224 + $0x30] sm:$0xff]
        %v238 = vld [vmem:[%s224 + $0x38] sm:$0xff]
        %v239 = vld [vmem:[%s224 + $0x40] sm:$0xff]
        %v240 = vld [vmem:[%s224 + $0x48] sm:$0xff]
        %v241 = vld [vmem:[%s224 + $0x50] sm:$0xff]
        %v242 = vld [vmem:[%s224 + $0x58] sm:$0xff]
        %v243 = vld [vmem:[%s224 + $0x60] sm:$0xff]
        %v244 = vld [vmem:[%s224 + $0x68] sm:$0xff]
        %v245 = vld [vmem:[%s224 + $0x70] sm:$0xff]
        %v246 = vld [vmem:[%s224 + $0x78] sm:$0xff]
        %247 = vst [vmem:[#allocation2] sm:$0xff] 0.0
        %248 = vst [vmem:[#allocation2 + $0x8] sm:$0xff] 0.0
        %249 = vst [vmem:[#allocation2 + $0x10] sm:$0xff] 0.0
        %250 = vst [vmem:[#allocation2 + $0x18] sm:$0xff] 0.0
        %251 = vst [vmem:[#allocation2 + $0x20] sm:$0xff] 0.0
        %252 = vst [vmem:[#allocation2 + $0x28] sm:$0xff] 0.0
        %253 = vst [vmem:[#allocation2 + $0x30] sm:$0xff] 0.0
        %254 = vst [vmem:[#allocation2 + $0x38] sm:$0xff] 0.0
        %255 = vst [vmem:[#allocation2 + $0x40] sm:$0xff] 0.0
        %256 = vst [vmem:[#allocation2 + $0x48] sm:$0xff] 0.0
        %257 = vst [vmem:[#allocation2 + $0x50] sm:$0xff] 0.0
        %258 = vst [vmem:[#allocation2 + $0x58] sm:$0xff] 0.0
        %259 = vst [vmem:[#allocation2 + $0x60] sm:$0xff] 0.0
        %260 = vst [vmem:[#allocation2 + $0x68] sm:$0xff] 0.0
        %261 = vst [vmem:[#allocation2 + $0x70] sm:$0xff] 0.0
        %262 = vst [vmem:[#allocation2 + $0x78] sm:$0xff] 0.0
        %263 = vst [vmem:[#allocation2 + $0x80] sm:$0xff] 0.0
        %vm264 = vcmask 31744
        %265 = vst.msk [vmem:[#allocation2 + $0x3] sm:$0xff] %vm264, %v231
        %266 = vst.msk [vmem:[#allocation2 + $0xb] sm:$0xff] %vm264, %v232
        %267 = vst.msk [vmem:[#allocation2 + $0x13] sm:$0xff] %vm264, %v233
        %268 = vst.msk [vmem:[#allocation2 + $0x1b] sm:$0xff] %vm264, %v234
        %269 = vst.msk [vmem:[#allocation2 + $0x23] sm:$0xff] %vm264, %v235
        %270 = vst.msk [vmem:[#allocation2 + $0x2b] sm:$0xff] %vm264, %v236
        %271 = vst.msk [vmem:[#allocation2 + $0x33] sm:$0xff] %vm264, %v237
        %272 = vst.msk [vmem:[#allocation2 + $0x3b] sm:$0xff] %vm264, %v238
        %273 = vst.msk [vmem:[#allocation2 + $0x43] sm:$0xff] %vm264, %v239
        %274 = vst.msk [vmem:[#allocation2 + $0x4b] sm:$0xff] %vm264, %v240
        %275 = vst.msk [vmem:[#allocation2 + $0x53] sm:$0xff] %vm264, %v241
        %276 = vst.msk [vmem:[#allocation2 + $0x5b] sm:$0xff] %vm264, %v242
        %277 = vst.msk [vmem:[#allocation2 + $0x63] sm:$0xff] %vm264, %v243
        %278 = vst.msk [vmem:[#allocation2 + $0x6b] sm:$0xff] %vm264, %v244
        %279 = vst.msk [vmem:[#allocation2 + $0x73] sm:$0xff] %vm264, %v245
        %280 = vst.msk [vmem:[#allocation2 + $0x7b] sm:$0xff] %vm264, %v246
        %v281 = vld [vmem:[#allocation2] ss:$2 sm:$0xff]
        %s282 = scalar_lea.vmem [#allocation2], 16
        %v283 = vld [vmem:[%s282] ss:$2 sm:$0xff]
        %s284 = scalar_lea.vmem [#allocation2], 32
        %v285 = vld [vmem:[%s284] ss:$2 sm:$0xff]
        %s286 = scalar_lea.vmem [#allocation2], 48
        %v287 = vld [vmem:[%s286] ss:$2 sm:$0xff]
        %s288 = scalar_lea.vmem [#allocation2], 64
        %v289 = vld [vmem:[%s288] ss:$2 sm:$0xff]
        %s290 = scalar_lea.vmem [#allocation2], 80
        %v291 = vld [vmem:[%s290] ss:$2 sm:$0xff]
        %s292 = scalar_lea.vmem [#allocation2], 96
        %v293 = vld [vmem:[%s292] ss:$2 sm:$0xff]
        %s294 = scalar_lea.vmem [#allocation2], 112
        %v295 = vld [vmem:[%s294] ss:$2 sm:$0xff]
        %s296 = scalar_lea.vmem [#allocation2], 1
        %v297 = vld [vmem:[%s296] ss:$2 sm:$0xff]
        %s298 = scalar_lea.vmem [#allocation2], 17
        %v299 = vld [vmem:[%s298] ss:$2 sm:$0xff]
        %s300 = scalar_lea.vmem [#allocation2], 33
        %v301 = vld [vmem:[%s300] ss:$2 sm:$0xff]
        %s302 = scalar_lea.vmem [#allocation2], 49
        %v303 = vld [vmem:[%s302] ss:$2 sm:$0xff]
        %s304 = scalar_lea.vmem [#allocation2], 65
        %v305 = vld [vmem:[%s304] ss:$2 sm:$0xff]
        %s306 = scalar_lea.vmem [#allocation2], 81
        %v307 = vld [vmem:[%s306] ss:$2 sm:$0xff]
        %s308 = scalar_lea.vmem [#allocation2], 97
        %v309 = vld [vmem:[%s308] ss:$2 sm:$0xff]
        %s310 = scalar_lea.vmem [#allocation2], 113
        %v311 = vld [vmem:[%s310] ss:$2 sm:$0xff]
        %s312 = scalar_lea.vmem [#allocation2], 2
        %v313 = vld [vmem:[%s312] ss:$2 sm:$0xff]
        %s314 = scalar_lea.vmem [#allocation2], 18
        %v315 = vld [vmem:[%s314] ss:$2 sm:$0xff]
        %s316 = scalar_lea.vmem [#allocation2], 34
        %v317 = vld [vmem:[%s316] ss:$2 sm:$0xff]
        %s318 = scalar_lea.vmem [#allocation2], 50
        %v319 = vld [vmem:[%s318] ss:$2 sm:$0xff]
        %s320 = scalar_lea.vmem [#allocation2], 66
        %v321 = vld [vmem:[%s320] ss:$2 sm:$0xff]
        %s322 = scalar_lea.vmem [#allocation2], 82
        %v323 = vld [vmem:[%s322] ss:$2 sm:$0xff]
        %s324 = scalar_lea.vmem [#allocation2], 98
        %v325 = vld [vmem:[%s324] ss:$2 sm:$0xff]
        %s326 = scalar_lea.vmem [#allocation2], 114
        %v327 = vld [vmem:[%s326] ss:$2 sm:$0xff]
        %s328 = scalar_lea.vmem [#allocation2], 3
        %v329 = vld [vmem:[%s328] ss:$2 sm:$0xff]
        %s330 = scalar_lea.vmem [#allocation2], 19
        %v331 = vld [vmem:[%s330] ss:$2 sm:$0xff]
        %s332 = scalar_lea.vmem [#allocation2], 35
        %v333 = vld [vmem:[%s332] ss:$2 sm:$0xff]
        %s334 = scalar_lea.vmem [#allocation2], 51
        %v335 = vld [vmem:[%s334] ss:$2 sm:$0xff]
        %s336 = scalar_lea.vmem [#allocation2], 67
        %v337 = vld [vmem:[%s336] ss:$2 sm:$0xff]
        %s338 = scalar_lea.vmem [#allocation2], 83
        %v339 = vld [vmem:[%s338] ss:$2 sm:$0xff]
        %s340 = scalar_lea.vmem [#allocation2], 99
        %v341 = vld [vmem:[%s340] ss:$2 sm:$0xff]
        %s342 = scalar_lea.vmem [#allocation2], 115
        %v343 = vld [vmem:[%s342] ss:$2 sm:$0xff]
        %s344 = scalar_lea.vmem [#allocation2], 4
        %v345 = vld [vmem:[%s344] ss:$2 sm:$0xff]
        %s346 = scalar_lea.vmem [#allocation2], 20
        %v347 = vld [vmem:[%s346] ss:$2 sm:$0xff]
        %s348 = scalar_lea.vmem [#allocation2], 36
        %v349 = vld [vmem:[%s348] ss:$2 sm:$0xff]
        %s350 = scalar_lea.vmem [#allocation2], 52
        %v351 = vld [vmem:[%s350] ss:$2 sm:$0xff]
        %s352 = scalar_lea.vmem [#allocation2], 68
        %v353 = vld [vmem:[%s352] ss:$2 sm:$0xff]
        %s354 = scalar_lea.vmem [#allocation2], 84
        %v355 = vld [vmem:[%s354] ss:$2 sm:$0xff]
        %s356 = scalar_lea.vmem [#allocation2], 100
        %v357 = vld [vmem:[%s356] ss:$2 sm:$0xff]
        %s358 = scalar_lea.vmem [#allocation2], 116
        %v359 = vld [vmem:[%s358] ss:$2 sm:$0xff]
        %s360 = scalar_lea.vmem [#allocation2], 5
        %v361 = vld [vmem:[%s360] ss:$2 sm:$0xff]
        %s362 = scalar_lea.vmem [#allocation2], 21
        %v363 = vld [vmem:[%s362] ss:$2 sm:$0xff]
        %s364 = scalar_lea.vmem [#allocation2], 37
        %v365 = vld [vmem:[%s364] ss:$2 sm:$0xff]
        %s366 = scalar_lea.vmem [#allocation2], 53
        %v367 = vld [vmem:[%s366] ss:$2 sm:$0xff]
        %s368 = scalar_lea.vmem [#allocation2], 69
        %v369 = vld [vmem:[%s368] ss:$2 sm:$0xff]
        %s370 = scalar_lea.vmem [#allocation2], 85
        %v371 = vld [vmem:[%s370] ss:$2 sm:$0xff]
        %s372 = scalar_lea.vmem [#allocation2], 101
        %v373 = vld [vmem:[%s372] ss:$2 sm:$0xff]
        %s374 = scalar_lea.vmem [#allocation2], 117
        %v375 = vld [vmem:[%s374] ss:$2 sm:$0xff]
        %s376 = scalar_lea.vmem [#allocation2], 6
        %v377 = vld [vmem:[%s376] ss:$2 sm:$0xff]
        %s378 = scalar_lea.vmem [#allocation2], 22
        %v379 = vld [vmem:[%s378] ss:$2 sm:$0xff]
        %s380 = scalar_lea.vmem [#allocation2], 38
        %v381 = vld [vmem:[%s380] ss:$2 sm:$0xff]
        %s382 = scalar_lea.vmem [#allocation2], 54
        %v383 = vld [vmem:[%s382] ss:$2 sm:$0xff]
        %s384 = scalar_lea.vmem [#allocation2], 70
        %v385 = vld [vmem:[%s384] ss:$2 sm:$0xff]
        %s386 = scalar_lea.vmem [#allocation2], 86
        %v387 = vld [vmem:[%s386] ss:$2 sm:$0xff]
        %s388 = scalar_lea.vmem [#allocation2], 102
        %v389 = vld [vmem:[%s388] ss:$2 sm:$0xff]
        %s390 = scalar_lea.vmem [#allocation2], 118
        %v391 = vld [vmem:[%s390] ss:$2 sm:$0xff]
        %s392 = scalar_lea.vmem [#allocation2], 7
        %v393 = vld [vmem:[%s392] ss:$2 sm:$0xff]
        %s394 = scalar_lea.vmem [#allocation2], 23
        %v395 = vld [vmem:[%s394] ss:$2 sm:$0xff]
        %s396 = scalar_lea.vmem [#allocation2], 39
        %v397 = vld [vmem:[%s396] ss:$2 sm:$0xff]
        %s398 = scalar_lea.vmem [#allocation2], 55
        %v399 = vld [vmem:[%s398] ss:$2 sm:$0xff]
        %s400 = scalar_lea.vmem [#allocation2], 71
        %v401 = vld [vmem:[%s400] ss:$2 sm:$0xff]
        %s402 = scalar_lea.vmem [#allocation2], 87
        %v403 = vld [vmem:[%s402] ss:$2 sm:$0xff]
        %s404 = scalar_lea.vmem [#allocation2], 103
        %v405 = vld [vmem:[%s404] ss:$2 sm:$0xff]
        %s406 = scalar_lea.vmem [#allocation2], 119
        %v407 = vld [vmem:[%s406] ss:$2 sm:$0xff]
        %416 = vrot.lane.b32.xlu0 %v297, 4
        %v417 = vpop.permute.xlu0 %416
        %418 = vrot.lane.b32.xlu0 %v299, 4
        %v419 = vpop.permute.xlu0 %418
        %420 = vrot.lane.b32.xlu0 %v301, 4
        %v421 = vpop.permute.xlu0 %420
        %422 = vrot.lane.b32.xlu0 %v303, 4
        %v423 = vpop.permute.xlu0 %422
        %424 = vrot.lane.b32.xlu0 %v305, 4
        %v425 = vpop.permute.xlu0 %424
        %426 = vrot.lane.b32.xlu0 %v307, 4
        %v427 = vpop.permute.xlu0 %426
        %428 = vrot.lane.b32.xlu0 %v309, 4
        %v429 = vpop.permute.xlu0 %428
        %430 = vrot.lane.b32.xlu0 %v311, 4
        %v431 = vpop.permute.xlu0 %430
        %448 = vrot.lane.b32.xlu0 %v313, 8
        %v449 = vpop.permute.xlu0 %448
        %450 = vrot.lane.b32.xlu0 %v315, 8
        %v451 = vpop.permute.xlu0 %450
        %452 = vrot.lane.b32.xlu0 %v317, 8
        %v453 = vpop.permute.xlu0 %452
        %454 = vrot.lane.b32.xlu0 %v319, 8
        %v455 = vpop.permute.xlu0 %454
        %456 = vrot.lane.b32.xlu0 %v321, 8
        %v457 = vpop.permute.xlu0 %456
        %458 = vrot.lane.b32.xlu0 %v323, 8
        %v459 = vpop.permute.xlu0 %458
        %460 = vrot.lane.b32.xlu0 %v325, 8
        %v461 = vpop.permute.xlu0 %460
        %462 = vrot.lane.b32.xlu0 %v327, 8
        %v463 = vpop.permute.xlu0 %462
        %480 = vrot.lane.b32.xlu0 %v329, 12
        %v481 = vpop.permute.xlu0 %480
        %482 = vrot.lane.b32.xlu0 %v331, 12
        %v483 = vpop.permute.xlu0 %482
        %484 = vrot.lane.b32.xlu0 %v333, 12
        %v485 = vpop.permute.xlu0 %484
        %486 = vrot.lane.b32.xlu0 %v335, 12
        %v487 = vpop.permute.xlu0 %486
        %488 = vrot.lane.b32.xlu0 %v337, 12
        %v489 = vpop.permute.xlu0 %488
        %490 = vrot.lane.b32.xlu0 %v339, 12
        %v491 = vpop.permute.xlu0 %490
        %492 = vrot.lane.b32.xlu0 %v341, 12
        %v493 = vpop.permute.xlu0 %492
        %494 = vrot.lane.b32.xlu0 %v343, 12
        %v495 = vpop.permute.xlu0 %494
        %512 = vrot.lane.b32.xlu0 %v345, 16
        %v513 = vpop.permute.xlu0 %512
        %514 = vrot.lane.b32.xlu0 %v347, 16
        %v515 = vpop.permute.xlu0 %514
        %516 = vrot.lane.b32.xlu0 %v349, 16
        %v517 = vpop.permute.xlu0 %516
        %518 = vrot.lane.b32.xlu0 %v351, 16
        %v519 = vpop.permute.xlu0 %518
        %520 = vrot.lane.b32.xlu0 %v353, 16
        %v521 = vpop.permute.xlu0 %520
        %522 = vrot.lane.b32.xlu0 %v355, 16
        %v523 = vpop.permute.xlu0 %522
        %524 = vrot.lane.b32.xlu0 %v357, 16
        %v525 = vpop.permute.xlu0 %524
        %526 = vrot.lane.b32.xlu0 %v359, 16
        %v527 = vpop.permute.xlu0 %526
        %544 = vrot.lane.b32.xlu0 %v361, 20
        %v545 = vpop.permute.xlu0 %544
        %546 = vrot.lane.b32.xlu0 %v363, 20
        %v547 = vpop.permute.xlu0 %546
        %548 = vrot.lane.b32.xlu0 %v365, 20
        %v549 = vpop.permute.xlu0 %548
        %550 = vrot.lane.b32.xlu0 %v367, 20
        %v551 = vpop.permute.xlu0 %550
        %552 = vrot.lane.b32.xlu0 %v369, 20
        %v553 = vpop.permute.xlu0 %552
        %554 = vrot.lane.b32.xlu0 %v371, 20
        %v555 = vpop.permute.xlu0 %554
        %556 = vrot.lane.b32.xlu0 %v373, 20
        %v557 = vpop.permute.xlu0 %556
        %558 = vrot.lane.b32.xlu0 %v375, 20
        %v559 = vpop.permute.xlu0 %558
        %576 = vrot.lane.b32.xlu0 %v377, 24
        %v577 = vpop.permute.xlu0 %576
        %578 = vrot.lane.b32.xlu0 %v379, 24
        %v579 = vpop.permute.xlu0 %578
        %580 = vrot.lane.b32.xlu0 %v381, 24
        %v581 = vpop.permute.xlu0 %580
        %582 = vrot.lane.b32.xlu0 %v383, 24
        %v583 = vpop.permute.xlu0 %582
        %584 = vrot.lane.b32.xlu0 %v385, 24
        %v585 = vpop.permute.xlu0 %584
        %586 = vrot.lane.b32.xlu0 %v387, 24
        %v587 = vpop.permute.xlu0 %586
        %588 = vrot.lane.b32.xlu0 %v389, 24
        %v589 = vpop.permute.xlu0 %588
        %590 = vrot.lane.b32.xlu0 %v391, 24
        %v591 = vpop.permute.xlu0 %590
        %608 = vrot.lane.b32.xlu0 %v393, 28
        %v609 = vpop.permute.xlu0 %608
        %610 = vrot.lane.b32.xlu0 %v395, 28
        %v611 = vpop.permute.xlu0 %610
        %612 = vrot.lane.b32.xlu0 %v397, 28
        %v613 = vpop.permute.xlu0 %612
        %614 = vrot.lane.b32.xlu0 %v399, 28
        %v615 = vpop.permute.xlu0 %614
        %616 = vrot.lane.b32.xlu0 %v401, 28
        %v617 = vpop.permute.xlu0 %616
        %618 = vrot.lane.b32.xlu0 %v403, 28
        %v619 = vpop.permute.xlu0 %618
        %620 = vrot.lane.b32.xlu0 %v405, 28
        %v621 = vpop.permute.xlu0 %620
        %622 = vrot.lane.b32.xlu0 %v407, 28
        %v623 = vpop.permute.xlu0 %622
        %v632 = vsel %vm264, %v281, %v417
        %v633 = vsel %vm264, %v283, %v419
        %v634 = vsel %vm264, %v285, %v421
        %v635 = vsel %vm264, %v287, %v423
        %v636 = vsel %vm264, %v289, %v425
        %v637 = vsel %vm264, %v291, %v427
        %v638 = vsel %vm264, %v293, %v429
        %v639 = vsel %vm264, %v295, %v431
        %vm640 = vcmask 64512
        %v641 = vsel %vm640, %v632, %v449
        %v642 = vsel %vm640, %v633, %v451
        %v643 = vsel %vm640, %v634, %v453
        %v644 = vsel %vm640, %v635, %v455
        %v645 = vsel %vm640, %v636, %v457
        %v646 = vsel %vm640, %v637, %v459
        %v647 = vsel %vm640, %v638, %v461
        %v648 = vsel %vm640, %v639, %v463
        %vm649 = vcmask 97280
        %v650 = vsel %vm649, %v641, %v481
        %v651 = vsel %vm649, %v642, %v483
        %v652 = vsel %vm649, %v643, %v485
        %v653 = vsel %vm649, %v644, %v487
        %v654 = vsel %vm649, %v645, %v489
        %v655 = vsel %vm649, %v646, %v491
        %v656 = vsel %vm649, %v647, %v493
        %v657 = vsel %vm649, %v648, %v495
        %vm658 = vcmask 130048
        %v659 = vsel %vm658, %v650, %v513
        %v660 = vsel %vm658, %v651, %v515
        %v661 = vsel %vm658, %v652, %v517
        %v662 = vsel %vm658, %v653, %v519
        %v663 = vsel %vm658, %v654, %v521
        %v664 = vsel %vm658, %v655, %v523
        %v665 = vsel %vm658, %v656, %v525
        %v666 = vsel %vm658, %v657, %v527
        %vm667 = vcmask 162816
        %v668 = vsel %vm667, %v659, %v545
        %v669 = vsel %vm667, %v660, %v547
        %v670 = vsel %vm667, %v661, %v549
        %v671 = vsel %vm667, %v662, %v551
        %v672 = vsel %vm667, %v663, %v553
        %v673 = vsel %vm667, %v664, %v555
        %v674 = vsel %vm667, %v665, %v557
        %v675 = vsel %vm667, %v666, %v559
        %vm676 = vcmask 195584
        %v677 = vsel %vm676, %v668, %v577
        %v678 = vsel %vm676, %v669, %v579
        %v679 = vsel %vm676, %v670, %v581
        %v680 = vsel %vm676, %v671, %v583
        %v681 = vsel %vm676, %v672, %v585
        %v682 = vsel %vm676, %v673, %v587
        %v683 = vsel %vm676, %v674, %v589
        %v684 = vsel %vm676, %v675, %v591
        %vm685 = vcmask 228352
        %v686 = vsel %vm685, %v677, %v609
        %v687 = vsel %vm685, %v678, %v611
        %v688 = vsel %vm685, %v679, %v613
        %v689 = vsel %vm685, %v680, %v615
        %v690 = vsel %vm685, %v681, %v617
        %v691 = vsel %vm685, %v682, %v619
        %v692 = vsel %vm685, %v683, %v621
        %v693 = vsel %vm685, %v684, %v623
        %v694 = vld [vmem:[#allocation3] sm:$0xf]
        %v695 = vld [vmem:[#allocation3 + $0x8] sm:$0xf]
        %v696 = vld [vmem:[#allocation3 + $0x10] sm:$0xf]
        %v697 = vld [vmem:[#allocation3 + $0x18] sm:$0xf]
        %v698 = vld [vmem:[%s3] sm:$0x77]
        %v699 = vpack.c.bf16 %v687, %v686
        %v700 = vpack.c.bf16 %v689, %v688
        %v701 = vpack.c.bf16 %v691, %v690
        %v702 = vpack.c.bf16 %v693, %v692
        %v703 = vlaneseq
        %v704 = vshrl.u32 %v703, 7
        %v705 = vsub.s32 0, %v704
        %v706 = vrot.slane %v698, %v705
        %v711 = vunpack.c.l.b16 %v694
        %v712 = vunpack.c.l.b16 %v695
        %v713 = vunpack.c.l.b16 %v696
        %v714 = vunpack.c.l.b16 %v697
        %v715 = vpack.c.b16 %v712, %v711
        %v716 = vpack.c.b16 %v714, %v713
        %vm719 = vcmask 261120
        %v721 = vsel %vm719, %v699, 0
        %v724 = vsel %vm719, %v700, 0
        %v727 = vsel %vm719, %v701, 0
        %v730 = vsel %vm719, %v702, 0
        %732 = vmatprep.subr.bf16.mxu0 0
        %733 = vmatpush1.bf16.msra.mxu0 0
        %734 = vmatprep.subr.bf16.mxu0 0
        %735 = vmatpush1.bf16.msra.mxu0 0
        %736 = vmatprep.subr.bf16.mxu0 0
        %737 = vmatpush1.bf16.msra.mxu0 0
        %738 = vmatprep.subr.bf16.mxu0 0
        %739 = vmatpush1.bf16.msra.mxu0 0
        %740 = vmatprep.subr.bf16.mxu0 0
        %741 = vmatpush1.bf16.msra.mxu0 0
        %742 = vmatprep.subr.bf16.mxu0 0
        %743 = vmatpush1.bf16.msra.mxu0 0
        %744 = vmatprep.subr.bf16.mxu0 0
        %745 = vmatpush1.bf16.msra.mxu0 %v716
        %746 = vmatprep.subr.bf16.mxu0 0
        %747 = vmatpush1.bf16.msra.mxu0 %v715
        %748 = vmatprep.subr.bf16.mxu0 0
        %749 = vmatpush2.bf16.msra.mxu0 0
        %750 = vmatprep.subr.bf16.mxu0 0
        %751 = vmatpush2.bf16.msra.mxu0 0
        %752 = vmatprep.subr.bf16.mxu0 0
        %753 = vmatpush2.bf16.msra.mxu0 0
        %754 = vmatprep.subr.bf16.mxu0 0
        %755 = vmatpush2.bf16.msra.mxu0 0
        %756 = vmatprep.subr.bf16.mxu0 0
        %757 = vmatpush2.bf16.msra.mxu0 0
        %758 = vmatprep.subr.bf16.mxu0 0
        %759 = vmatpush2.bf16.msra.mxu0 0
        %760 = vmatprep.subr.bf16.mxu0 0
        %761 = vmatpush2.bf16.msra.mxu0 0
        %762 = vmatprep.subr.bf16.mxu0 0
        %763 = vmatpush2.bf16.msra.mxu0 0
        %764 = vmatprep.mubr.bf16.mxu0 0
        %765 = vmatmul.mubr.bf16.gmra.mxu0 %v721
        %v766 = vpop.f32.mrf.mxu0
        %v767 = vadd.f32 %v706, %v766
        %v768 = vpop.f32.mrf.mxu0
        %v769 = vpop.f32.mrf.mxu0
        %v770 = vadd.f32 %v706, %v769
        %v771 = vpop.f32.mrf.mxu0
        %772 = vmatprep.mubr.bf16.mxu0 0
        %773 = vmatmul.mubr.bf16.gmra.mxu0 %v724
        %v774 = vpop.f32.mrf.mxu0
        %v775 = vadd.f32 %v706, %v774
        %v776 = vpop.f32.mrf.mxu0
        %v777 = vpop.f32.mrf.mxu0
        %v778 = vadd.f32 %v706, %v777
        %v779 = vpop.f32.mrf.mxu0
        %780 = vmatprep.mubr.bf16.mxu0 0
        %781 = vmatmul.mubr.bf16.gmra.mxu0 %v727
        %v782 = vpop.f32.mrf.mxu0
        %v783 = vadd.f32 %v706, %v782
        %v784 = vpop.f32.mrf.mxu0
        %v785 = vpop.f32.mrf.mxu0
        %v786 = vadd.f32 %v706, %v785
        %v787 = vpop.f32.mrf.mxu0
        %788 = vmatprep.mubr.bf16.mxu0 0
        %789 = vmatmul.mubr.bf16.gmra.mxu0 %v730
        %v790 = vpop.f32.mrf.mxu0
        %v791 = vadd.f32 %v706, %v790
        %v792 = vpop.f32.mrf.mxu0
        %v793 = vpop.f32.mrf.mxu0
        %v794 = vadd.f32 %v706, %v793
        %v795 = vpop.f32.mrf.mxu0
        %796 = vdwg.mxu0
        %vm797 = vcmp.ge.f32.partialorder %v767, 0.0
        %vm798 = vcmp.ge.f32.partialorder %v770, 0.0
        %vm799 = vcmp.ge.f32.partialorder %v775, 0.0
        %vm800 = vcmp.ge.f32.partialorder %v778, 0.0
        %vm801 = vcmp.ge.f32.partialorder %v783, 0.0
        %vm802 = vcmp.ge.f32.partialorder %v786, 0.0
        %vm803 = vcmp.ge.f32.partialorder %v791, 0.0
        %vm804 = vcmp.ge.f32.partialorder %v794, 0.0
        %v805 = vlaneseq
        %v806 = vshrl.u32 %v805, 7
        %v807 = vsub.s32 1, %v806
        %v808 = vrot.slane %v698, %v807
        %v809 = vmul.f32 %v808, %v767
        %v810 = vmul.f32 %v808, %v770
        %v811 = vmul.f32 %v808, %v775
        %v812 = vmul.f32 %v808, %v778
        %v813 = vmul.f32 %v808, %v783
        %v814 = vmul.f32 %v808, %v786
        %v815 = vmul.f32 %v808, %v791
        %v816 = vmul.f32 %v808, %v794
        %v817 = vsel %vm797, %v767, %v809
        %v818 = vsel %vm798, %v770, %v810
        %v819 = vsel %vm799, %v775, %v811
        %v820 = vsel %vm800, %v778, %v812
        %v821 = vsel %vm801, %v783, %v813
        %v822 = vsel %vm802, %v786, %v814
        %v823 = vsel %vm803, %v791, %v815
        %v824 = vsel %vm804, %v794, %v816
        %v825 = vlaneseq
        %v826 = vshrl.u32 %v825, 7
        %v827 = vsub.s32 2, %v826
        %v828 = vrot.slane %v698, %v827
        %v829 = vadd.f32 %v817, %v828
        %v830 = vadd.f32 %v818, %v828
        %v831 = vadd.f32 %v819, %v828
        %v832 = vadd.f32 %v820, %v828
        %v833 = vadd.f32 %v821, %v828
        %v834 = vadd.f32 %v822, %v828
        %v835 = vadd.f32 %v823, %v828
        %v836 = vadd.f32 %v824, %v828
        %837 = vst [vmem:[#allocation2] sm:$0xff] 0.0
        %838 = vst [vmem:[#allocation2 + $0x8] sm:$0xff] 0.0
        %839 = vst [vmem:[#allocation2 + $0x10] sm:$0xff] 0.0
        %840 = vst [vmem:[#allocation2 + $0x18] sm:$0xff] 0.0
        %841 = vst [vmem:[#allocation2 + $0x20] sm:$0xff] 0.0
        %842 = vst [vmem:[#allocation2 + $0x28] sm:$0xff] 0.0
        %843 = vst [vmem:[#allocation2 + $0x30] sm:$0xff] 0.0
        %844 = vst [vmem:[#allocation2 + $0x38] sm:$0xff] 0.0
        %845 = vst [vmem:[#allocation2 + $0x40] sm:$0xff] 0.0
        %846 = vst [vmem:[#allocation2 + $0x48] sm:$0xff] 0.0
        %847 = vst [vmem:[#allocation2 + $0x50] sm:$0xff] 0.0
        %848 = vst [vmem:[#allocation2 + $0x58] sm:$0xff] 0.0
        %849 = vst [vmem:[#allocation2 + $0x60] sm:$0xff] 0.0
        %850 = vst [vmem:[#allocation2 + $0x68] sm:$0xff] 0.0
        %851 = vst [vmem:[#allocation2 + $0x70] sm:$0xff] 0.0
        %852 = vst [vmem:[#allocation2 + $0x78] sm:$0xff] 0.0
        %853 = vst [vmem:[#allocation2 + $0x80] sm:$0xff] 0.0
        %854 = vst.msk [vmem:[#allocation2 + $0x1] sm:$0xff] %vm719, %v829
        %855 = vst.msk [vmem:[#allocation2 + $0x9] sm:$0xff] %vm719, %v830
        %856 = vst.msk [vmem:[#allocation2 + $0x11] sm:$0xff] %vm719, %v831
        %857 = vst.msk [vmem:[#allocation2 + $0x19] sm:$0xff] %vm719, %v832
        %858 = vst.msk [vmem:[#allocation2 + $0x21] sm:$0xff] %vm719, %v833
        %859 = vst.msk [vmem:[#allocation2 + $0x29] sm:$0xff] %vm719, %v834
        %860 = vst.msk [vmem:[#allocation2 + $0x31] sm:$0xff] %vm719, %v835
        %861 = vst.msk [vmem:[#allocation2 + $0x39] sm:$0xff] %vm719, %v836
        %v862 = vld [vmem:[#allocation2] sm:$0xff]
        %v863 = vld [vmem:[#allocation2 + $0x8] sm:$0xff]
        %v864 = vld [vmem:[#allocation2 + $0x10] sm:$0xff]
        %v865 = vld [vmem:[#allocation2 + $0x18] sm:$0xff]
        %v866 = vld [vmem:[#allocation2 + $0x20] sm:$0xff]
        %v867 = vld [vmem:[#allocation2 + $0x28] sm:$0xff]
        %v868 = vld [vmem:[#allocation2 + $0x30] sm:$0xff]
        %v869 = vld [vmem:[#allocation2 + $0x38] sm:$0xff]
        %v870 = vld [vmem:[#allocation2 + $0x1] sm:$0xff]
        %v871 = vld [vmem:[#allocation2 + $0x9] sm:$0xff]
        %v872 = vld [vmem:[#allocation2 + $0x11] sm:$0xff]
        %v873 = vld [vmem:[#allocation2 + $0x19] sm:$0xff]
        %v874 = vld [vmem:[#allocation2 + $0x21] sm:$0xff]
        %v875 = vld [vmem:[#allocation2 + $0x29] sm:$0xff]
        %v876 = vld [vmem:[#allocation2 + $0x31] sm:$0xff]
        %v877 = vld [vmem:[#allocation2 + $0x39] sm:$0xff]
        %v878 = vld [vmem:[#allocation2 + $0x2] sm:$0xff]
        %v879 = vld [vmem:[#allocation2 + $0xa] sm:$0xff]
        %v880 = vld [vmem:[#allocation2 + $0x12] sm:$0xff]
        %v881 = vld [vmem:[#allocation2 + $0x1a] sm:$0xff]
        %v882 = vld [vmem:[#allocation2 + $0x22] sm:$0xff]
        %v883 = vld [vmem:[#allocation2 + $0x2a] sm:$0xff]
        %v884 = vld [vmem:[#allocation2 + $0x32] sm:$0xff]
        %v885 = vld [vmem:[#allocation2 + $0x3a] sm:$0xff]
        %894 = vrot.lane.b32.xlu0 %v870, 32
        %v895 = vpop.permute.xlu0 %894
        %896 = vrot.lane.b32.xlu0 %v871, 32
        %v897 = vpop.permute.xlu0 %896
        %898 = vrot.lane.b32.xlu0 %v872, 32
        %v899 = vpop.permute.xlu0 %898
        %900 = vrot.lane.b32.xlu0 %v873, 32
        %v901 = vpop.permute.xlu0 %900
        %902 = vrot.lane.b32.xlu0 %v874, 32
        %v903 = vpop.permute.xlu0 %902
        %904 = vrot.lane.b32.xlu0 %v875, 32
        %v905 = vpop.permute.xlu0 %904
        %906 = vrot.lane.b32.xlu0 %v876, 32
        %v907 = vpop.permute.xlu0 %906
        %908 = vrot.lane.b32.xlu0 %v877, 32
        %v909 = vpop.permute.xlu0 %908
        %926 = vrot.lane.b32.xlu0 %v878, 64
        %v927 = vpop.permute.xlu0 %926
        %928 = vrot.lane.b32.xlu0 %v879, 64
        %v929 = vpop.permute.xlu0 %928
        %930 = vrot.lane.b32.xlu0 %v880, 64
        %v931 = vpop.permute.xlu0 %930
        %932 = vrot.lane.b32.xlu0 %v881, 64
        %v933 = vpop.permute.xlu0 %932
        %934 = vrot.lane.b32.xlu0 %v882, 64
        %v935 = vpop.permute.xlu0 %934
        %936 = vrot.lane.b32.xlu0 %v883, 64
        %v937 = vpop.permute.xlu0 %936
        %938 = vrot.lane.b32.xlu0 %v884, 64
        %v939 = vpop.permute.xlu0 %938
        %940 = vrot.lane.b32.xlu0 %v885, 64
        %v941 = vpop.permute.xlu0 %940
        %v950 = vsel %vm719, %v862, %v895
        %v951 = vsel %vm719, %v863, %v897
        %v952 = vsel %vm719, %v864, %v899
        %v953 = vsel %vm719, %v865, %v901
        %v954 = vsel %vm719, %v866, %v903
        %v955 = vsel %vm719, %v867, %v905
        %v956 = vsel %vm719, %v868, %v907
        %v957 = vsel %vm719, %v869, %v909
        %vm958 = vcmask 523264
        %v959 = vsel %vm958, %v950, %v927
        %v960 = vsel %vm958, %v951, %v929
        %v961 = vsel %vm958, %v952, %v931
        %v962 = vsel %vm958, %v953, %v933
        %v963 = vsel %vm958, %v954, %v935
        %v964 = vsel %vm958, %v955, %v937
        %v965 = vsel %vm958, %v956, %v939
        %v966 = vsel %vm958, %v957, %v941
        %v967 = vld [vmem:[#allocation3 + $0x20] sm:$0xf]
        %v968 = vld [vmem:[#allocation3 + $0x28] sm:$0xf]
        %v969 = vld [vmem:[#allocation3 + $0x30] sm:$0xf]
        %v970 = vld [vmem:[#allocation3 + $0x38] sm:$0xf]
        %v971 = vld [vmem:[#allocation3 + $0x40] sm:$0xf]
        %v972 = vld [vmem:[#allocation3 + $0x48] sm:$0xf]
        %v973 = vld [vmem:[#allocation3 + $0x50] sm:$0xf]
        %v974 = vld [vmem:[#allocation3 + $0x58] sm:$0xf]
        %v975 = vld [vmem:[#allocation3 + $0x60] sm:$0xf]
        %v976 = vld [vmem:[#allocation3 + $0x68] sm:$0xf]
        %v977 = vld [vmem:[#allocation3 + $0x70] sm:$0xf]
        %v978 = vld [vmem:[#allocation3 + $0x78] sm:$0xf]
        %s979 = scalar_lea.vmem %s3, 8
        %v980 = vld [vmem:[%s979] sm:$0x77]
        %v981 = vpack.c.bf16 %v960, %v959
        %v982 = vpack.c.bf16 %v962, %v961
        %v983 = vpack.c.bf16 %v964, %v963
        %v984 = vpack.c.bf16 %v966, %v965
        %v985 = vlaneseq
        %v986 = vshrl.u32 %v985, 7
        %v987 = vsub.s32 0, %v986
        %v988 = vrot.slane %v980, %v987
        %v1001 = vunpack.c.l.b16 %v967
        %v1002 = vunpack.c.l.b16 %v968
        %v1003 = vunpack.c.l.b16 %v969
        %v1004 = vunpack.c.l.b16 %v970
        %v1005 = vunpack.c.l.b16 %v971
        %v1006 = vunpack.c.l.b16 %v972
        %v1007 = vunpack.c.l.b16 %v973
        %v1008 = vunpack.c.l.b16 %v974
        %v1009 = vunpack.c.l.b16 %v975
        %v1010 = vunpack.c.l.b16 %v976
        %v1011 = vunpack.c.l.b16 %v977
        %v1012 = vunpack.c.l.b16 %v978
        %v1013 = vpack.c.b16 %v1002, %v1001
        %v1014 = vpack.c.b16 %v1004, %v1003
        %v1015 = vpack.c.b16 %v1006, %v1005
        %v1016 = vpack.c.b16 %v1008, %v1007
        %v1017 = vpack.c.b16 %v1010, %v1009
        %v1018 = vpack.c.b16 %v1012, %v1011
        %vm1025 = vcmask 785408
        %v1027 = vsel %vm1025, %v981, 0
        %v1030 = vsel %vm1025, %v982, 0
        %v1033 = vsel %vm1025, %v983, 0
        %v1036 = vsel %vm1025, %v984, 0
        %1038 = vmatprep.subr.bf16.mxu0 0
        %1039 = vmatpush1.bf16.msra.mxu0 0
        %1040 = vmatprep.subr.bf16.mxu0 0
        %1041 = vmatpush1.bf16.msra.mxu0 0
        %1042 = vmatprep.subr.bf16.mxu0 0
        %1043 = vmatpush1.bf16.msra.mxu0 %v1018
        %1044 = vmatprep.subr.bf16.mxu0 0
        %1045 = vmatpush1.bf16.msra.mxu0 %v1017
        %1046 = vmatprep.subr.bf16.mxu0 0
        %1047 = vmatpush1.bf16.msra.mxu0 %v1016
        %1048 = vmatprep.subr.bf16.mxu0 0
        %1049 = vmatpush1.bf16.msra.mxu0 %v1015
        %1050 = vmatprep.subr.bf16.mxu0 0
        %1051 = vmatpush1.bf16.msra.mxu0 %v1014
        %1052 = vmatprep.subr.bf16.mxu0 0
        %1053 = vmatpush1.bf16.msra.mxu0 %v1013
        %1054 = vmatprep.subr.bf16.mxu0 0
        %1055 = vmatpush2.bf16.msra.mxu0 0
        %1056 = vmatprep.subr.bf16.mxu0 0
        %1057 = vmatpush2.bf16.msra.mxu0 0
        %1058 = vmatprep.subr.bf16.mxu0 0
        %1059 = vmatpush2.bf16.msra.mxu0 0
        %1060 = vmatprep.subr.bf16.mxu0 0
        %1061 = vmatpush2.bf16.msra.mxu0 0
        %1062 = vmatprep.subr.bf16.mxu0 0
        %1063 = vmatpush2.bf16.msra.mxu0 0
        %1064 = vmatprep.subr.bf16.mxu0 0
        %1065 = vmatpush2.bf16.msra.mxu0 0
        %1066 = vmatprep.subr.bf16.mxu0 0
        %1067 = vmatpush2.bf16.msra.mxu0 0
        %1068 = vmatprep.subr.bf16.mxu0 0
        %1069 = vmatpush2.bf16.msra.mxu0 0
        %1070 = vmatprep.mubr.bf16.mxu0 0
        %1071 = vmatmul.mubr.bf16.gmra.mxu0 %v1027
        %v1072 = vpop.f32.mrf.mxu0
        %v1073 = vadd.f32 %v988, %v1072
        %v1074 = vpop.f32.mrf.mxu0
        %v1075 = vpop.f32.mrf.mxu0
        %v1076 = vadd.f32 %v988, %v1075
        %v1077 = vpop.f32.mrf.mxu0
        %1078 = vmatprep.mubr.bf16.mxu0 0
        %1079 = vmatmul.mubr.bf16.gmra.mxu0 %v1030
        %v1080 = vpop.f32.mrf.mxu0
        %v1081 = vadd.f32 %v988, %v1080
        %v1082 = vpop.f32.mrf.mxu0
        %v1083 = vpop.f32.mrf.mxu0
        %v1084 = vadd.f32 %v988, %v1083
        %v1085 = vpop.f32.mrf.mxu0
        %1086 = vmatprep.mubr.bf16.mxu0 0
        %1087 = vmatmul.mubr.bf16.gmra.mxu0 %v1033
        %v1088 = vpop.f32.mrf.mxu0
        %v1089 = vadd.f32 %v988, %v1088
        %v1090 = vpop.f32.mrf.mxu0
        %v1091 = vpop.f32.mrf.mxu0
        %v1092 = vadd.f32 %v988, %v1091
        %v1093 = vpop.f32.mrf.mxu0
        %1094 = vmatprep.mubr.bf16.mxu0 0
        %1095 = vmatmul.mubr.bf16.gmra.mxu0 %v1036
        %v1096 = vpop.f32.mrf.mxu0
        %v1097 = vadd.f32 %v988, %v1096
        %v1098 = vpop.f32.mrf.mxu0
        %v1099 = vpop.f32.mrf.mxu0
        %v1100 = vadd.f32 %v988, %v1099
        %v1101 = vpop.f32.mrf.mxu0
        %1102 = vdwg.mxu0
        %vm1103 = vcmp.ge.f32.partialorder %v1073, 0.0
        %vm1104 = vcmp.ge.f32.partialorder %v1076, 0.0
        %vm1105 = vcmp.ge.f32.partialorder %v1081, 0.0
        %vm1106 = vcmp.ge.f32.partialorder %v1084, 0.0
        %vm1107 = vcmp.ge.f32.partialorder %v1089, 0.0
        %vm1108 = vcmp.ge.f32.partialorder %v1092, 0.0
        %vm1109 = vcmp.ge.f32.partialorder %v1097, 0.0
        %vm1110 = vcmp.ge.f32.partialorder %v1100, 0.0
        %v1111 = vlaneseq
        %v1112 = vshrl.u32 %v1111, 7
        %v1113 = vsub.s32 1, %v1112
        %v1114 = vrot.slane %v980, %v1113
        %v1115 = vmul.f32 %v1114, %v1073
        %v1116 = vmul.f32 %v1114, %v1076
        %v1117 = vmul.f32 %v1114, %v1081
        %v1118 = vmul.f32 %v1114, %v1084
        %v1119 = vmul.f32 %v1114, %v1089
        %v1120 = vmul.f32 %v1114, %v1092
        %v1121 = vmul.f32 %v1114, %v1097
        %v1122 = vmul.f32 %v1114, %v1100
        %v1123 = vsel %vm1103, %v1073, %v1115
        %v1124 = vsel %vm1104, %v1076, %v1116
        %v1125 = vsel %vm1105, %v1081, %v1117
        %v1126 = vsel %vm1106, %v1084, %v1118
        %v1127 = vsel %vm1107, %v1089, %v1119
        %v1128 = vsel %vm1108, %v1092, %v1120
        %v1129 = vsel %vm1109, %v1097, %v1121
        %v1130 = vsel %vm1110, %v1100, %v1122
        %v1131 = vlaneseq
        %v1132 = vshrl.u32 %v1131, 7
        %v1133 = vsub.s32 2, %v1132
        %v1134 = vrot.slane %v980, %v1133
        %v1135 = vadd.f32 %v1123, %v1134
        %v1136 = vadd.f32 %v1124, %v1134
        %v1137 = vadd.f32 %v1125, %v1134
        %v1138 = vadd.f32 %v1126, %v1134
        %v1139 = vadd.f32 %v1127, %v1134
        %v1140 = vadd.f32 %v1128, %v1134
        %v1141 = vadd.f32 %v1129, %v1134
        %v1142 = vadd.f32 %v1130, %v1134
        %1143 = vst [vmem:[#allocation2] sm:$0xff] 0.0
        %1144 = vst [vmem:[#allocation2 + $0x8] sm:$0xff] 0.0
        %1145 = vst [vmem:[#allocation2 + $0x10] sm:$0xff] 0.0
        %1146 = vst [vmem:[#allocation2 + $0x18] sm:$0xff] 0.0
        %1147 = vst [vmem:[#allocation2 + $0x20] sm:$0xff] 0.0
        %1148 = vst [vmem:[#allocation2 + $0x28] sm:$0xff] 0.0
        %1149 = vst [vmem:[#allocation2 + $0x30] sm:$0xff] 0.0
        %1150 = vst [vmem:[#allocation2 + $0x38] sm:$0xff] 0.0
        %1151 = vst [vmem:[#allocation2 + $0x40] sm:$0xff] 0.0
        %1152 = vst [vmem:[#allocation2 + $0x48] sm:$0xff] 0.0
        %1153 = vst [vmem:[#allocation2 + $0x50] sm:$0xff] 0.0
        %1154 = vst [vmem:[#allocation2 + $0x58] sm:$0xff] 0.0
        %1155 = vst [vmem:[#allocation2 + $0x60] sm:$0xff] 0.0
        %1156 = vst [vmem:[#allocation2 + $0x68] sm:$0xff] 0.0
        %1157 = vst [vmem:[#allocation2 + $0x70] sm:$0xff] 0.0
        %1158 = vst [vmem:[#allocation2 + $0x78] sm:$0xff] 0.0
        %1159 = vst [vmem:[#allocation2 + $0x80] sm:$0xff] 0.0
        %1160 = vst.msk [vmem:[#allocation2 + $0x2] sm:$0xff] %vm719, %v1135
        %1161 = vst.msk [vmem:[#allocation2 + $0xa] sm:$0xff] %vm719, %v1136
        %1162 = vst.msk [vmem:[#allocation2 + $0x12] sm:$0xff] %vm719, %v1137
        %1163 = vst.msk [vmem:[#allocation2 + $0x1a] sm:$0xff] %vm719, %v1138
        %1164 = vst.msk [vmem:[#allocation2 + $0x22] sm:$0xff] %vm719, %v1139
        %1165 = vst.msk [vmem:[#allocation2 + $0x2a] sm:$0xff] %vm719, %v1140
        %1166 = vst.msk [vmem:[#allocation2 + $0x32] sm:$0xff] %vm719, %v1141
        %1167 = vst.msk [vmem:[#allocation2 + $0x3a] sm:$0xff] %vm719, %v1142
        %v1168 = vld [vmem:[#allocation2] ss:$4 sm:$0xff]
        %v1169 = vld [vmem:[%s284] ss:$4 sm:$0xff]
        %v1170 = vld [vmem:[%s296] ss:$4 sm:$0xff]
        %v1171 = vld [vmem:[%s300] ss:$4 sm:$0xff]
        %v1172 = vld [vmem:[%s312] ss:$4 sm:$0xff]
        %v1173 = vld [vmem:[%s316] ss:$4 sm:$0xff]
        %v1174 = vld [vmem:[%s328] ss:$4 sm:$0xff]
        %v1175 = vld [vmem:[%s332] ss:$4 sm:$0xff]
        %v1176 = vld [vmem:[%s344] ss:$4 sm:$0xff]
        %v1177 = vld [vmem:[%s348] ss:$4 sm:$0xff]
        %v1178 = vld [vmem:[%s360] ss:$4 sm:$0xff]
        %v1179 = vld [vmem:[%s364] ss:$4 sm:$0xff]
        %v1180 = vld [vmem:[%s376] ss:$4 sm:$0xff]
        %v1181 = vld [vmem:[%s380] ss:$4 sm:$0xff]
        %v1182 = vld [vmem:[%s392] ss:$4 sm:$0xff]
        %v1183 = vld [vmem:[%s396] ss:$4 sm:$0xff]
        %1186 = vrot.lane.b32.xlu0 %v1170, 32
        %v1187 = vpop.permute.xlu0 %1186
        %1188 = vrot.lane.b32.xlu0 %v1171, 32
        %v1189 = vpop.permute.xlu0 %1188
        %1194 = vrot.lane.b32.xlu0 %v1172, 64
        %v1195 = vpop.permute.xlu0 %1194
        %1196 = vrot.lane.b32.xlu0 %v1173, 64
        %v1197 = vpop.permute.xlu0 %1196
        %1202 = vrot.lane.b32.xlu0 %v1174, 96
        %v1203 = vpop.permute.xlu0 %1202
        %1204 = vrot.lane.b32.xlu0 %v1175, 96
        %v1205 = vpop.permute.xlu0 %1204
        %1210 = vrot.lane.b32.xlu0 %v1178, 32
        %v1211 = vpop.permute.xlu0 %1210
        %1212 = vrot.lane.b32.xlu0 %v1179, 32
        %v1213 = vpop.permute.xlu0 %1212
        %1218 = vrot.lane.b32.xlu0 %v1180, 64
        %v1219 = vpop.permute.xlu0 %1218
        %1220 = vrot.lane.b32.xlu0 %v1181, 64
        %v1221 = vpop.permute.xlu0 %1220
        %1226 = vrot.lane.b32.xlu0 %v1182, 96
        %v1227 = vpop.permute.xlu0 %1226
        %1228 = vrot.lane.b32.xlu0 %v1183, 96
        %v1229 = vpop.permute.xlu0 %1228
        %v1232 = vsel %vm719, %v1168, %v1187
        %v1233 = vsel %vm719, %v1169, %v1189
        %v1234 = vsel %vm958, %v1232, %v1195
        %v1235 = vsel %vm958, %v1233, %v1197
        %v1236 = vsel %vm1025, %v1234, %v1203
        %v1237 = vsel %vm1025, %v1235, %v1205
        %v1238 = vsel %vm719, %v1176, %v1211
        %v1239 = vsel %vm719, %v1177, %v1213
        %v1240 = vsel %vm958, %v1238, %v1219
        %v1241 = vsel %vm958, %v1239, %v1221
        %v1242 = vsel %vm1025, %v1240, %v1227
        %v1243 = vsel %vm1025, %v1241, %v1229
        %v1244 = vld [vmem:[#allocation3 + $0x80] sm:$0xf]
        %v1245 = vld [vmem:[#allocation3 + $0x88] sm:$0xf]
        %v1246 = vld [vmem:[#allocation3 + $0x90] sm:$0xf]
        %v1247 = vld [vmem:[#allocation3 + $0x98] sm:$0xf]
        %v1248 = vld [vmem:[#allocation3 + $0xa0] sm:$0xf]
        %v1249 = vld [vmem:[#allocation3 + $0xa8] sm:$0xf]
        %v1250 = vld [vmem:[#allocation3 + $0xb0] sm:$0xf]
        %v1251 = vld [vmem:[#allocation3 + $0xb8] sm:$0xf]
        %v1252 = vld [vmem:[#allocation3 + $0xc0] sm:$0xf]
        %v1253 = vld [vmem:[#allocation3 + $0xc8] sm:$0xf]
        %v1254 = vld [vmem:[#allocation3 + $0xd0] sm:$0xf]
        %v1255 = vld [vmem:[#allocation3 + $0xd8] sm:$0xf]
        %v1256 = vld [vmem:[#allocation3 + $0xe0] sm:$0xf]
        %v1257 = vld [vmem:[#allocation3 + $0xe8] sm:$0xf]
        %v1258 = vld [vmem:[#allocation3 + $0xf0] sm:$0xf]
        %v1259 = vld [vmem:[#allocation3 + $0xf8] sm:$0xf]
        %v1260 = vld [vmem:[#allocation3 + $0x100] sm:$0xf]
        %v1261 = vld [vmem:[#allocation3 + $0x108] sm:$0xf]
        %v1262 = vld [vmem:[#allocation3 + $0x110] sm:$0xf]
        %v1263 = vld [vmem:[#allocation3 + $0x118] sm:$0xf]
        %v1264 = vld [vmem:[#allocation3 + $0x120] sm:$0xf]
        %v1265 = vld [vmem:[#allocation3 + $0x128] sm:$0xf]
        %v1266 = vld [vmem:[#allocation3 + $0x130] sm:$0xf]
        %v1267 = vld [vmem:[#allocation3 + $0x138] sm:$0xf]
        %v1268 = vld [vmem:[#allocation3 + $0x140] sm:$0xf]
        %v1269 = vld [vmem:[#allocation3 + $0x148] sm:$0xf]
        %v1270 = vld [vmem:[#allocation3 + $0x150] sm:$0xf]
        %v1271 = vld [vmem:[#allocation3 + $0x158] sm:$0xf]
        %v1272 = vld [vmem:[#allocation3 + $0x160] sm:$0xf]
        %v1273 = vld [vmem:[#allocation3 + $0x168] sm:$0xf]
        %v1274 = vld [vmem:[#allocation3 + $0x170] sm:$0xf]
        %v1275 = vld [vmem:[#allocation3 + $0x178] sm:$0xf]
        %s1276 = scalar_lea.vmem %s3, 16
        %v1277 = vld [vmem:[%s1276] sm:$0x77]
        %v1278 = vpack.c.bf16 %v1237, %v1236
        %v1279 = vpack.c.bf16 %v1243, %v1242
        %v1280 = vlaneseq
        %v1281 = vshrl.u32 %v1280, 7
        %v1282 = vsub.s32 0, %v1281
        %v1283 = vrot.slane %v1277, %v1282
        %v1316 = vunpack.c.l.b16 %v1244
        %v1317 = vunpack.c.l.b16 %v1245
        %v1318 = vunpack.c.l.b16 %v1246
        %v1319 = vunpack.c.l.b16 %v1247
        %v1320 = vunpack.c.l.b16 %v1248
        %v1321 = vunpack.c.l.b16 %v1249
        %v1322 = vunpack.c.l.b16 %v1250
        %v1323 = vunpack.c.l.b16 %v1251
        %v1324 = vunpack.c.l.b16 %v1252
        %v1325 = vunpack.c.l.b16 %v1253
        %v1326 = vunpack.c.l.b16 %v1254
        %v1327 = vunpack.c.l.b16 %v1255
        %v1328 = vunpack.c.l.b16 %v1256
        %v1329 = vunpack.c.l.b16 %v1257
        %v1330 = vunpack.c.l.b16 %v1258
        %v1331 = vunpack.c.l.b16 %v1259
        %v1332 = vunpack.c.l.b16 %v1260
        %v1333 = vunpack.c.l.b16 %v1261
        %v1334 = vunpack.c.l.b16 %v1262
        %v1335 = vunpack.c.l.b16 %v1263
        %v1336 = vunpack.c.l.b16 %v1264
        %v1337 = vunpack.c.l.b16 %v1265
        %v1338 = vunpack.c.l.b16 %v1266
        %v1339 = vunpack.c.l.b16 %v1267
        %v1340 = vunpack.c.l.b16 %v1268
        %v1341 = vunpack.c.l.b16 %v1269
        %v1342 = vunpack.c.l.b16 %v1270
        %v1343 = vunpack.c.l.b16 %v1271
        %v1344 = vunpack.c.l.b16 %v1272
        %v1345 = vunpack.c.l.b16 %v1273
        %v1346 = vunpack.c.l.b16 %v1274
        %v1347 = vunpack.c.l.b16 %v1275
        %v1348 = vpack.c.b16 %v1317, %v1316
        %v1349 = vpack.c.b16 %v1319, %v1318
        %v1350 = vpack.c.b16 %v1321, %v1320
        %v1351 = vpack.c.b16 %v1323, %v1322
        %v1352 = vpack.c.b16 %v1325, %v1324
        %v1353 = vpack.c.b16 %v1327, %v1326
        %v1354 = vpack.c.b16 %v1329, %v1328
        %v1355 = vpack.c.b16 %v1331, %v1330
        %v1356 = vpack.c.b16 %v1333, %v1332
        %v1357 = vpack.c.b16 %v1335, %v1334
        %v1358 = vpack.c.b16 %v1337, %v1336
        %v1359 = vpack.c.b16 %v1339, %v1338
        %v1360 = vpack.c.b16 %v1341, %v1340
        %v1361 = vpack.c.b16 %v1343, %v1342
        %v1362 = vpack.c.b16 %v1345, %v1344
        %v1363 = vpack.c.b16 %v1347, %v1346
        %1380 = vmatprep.subr.bf16.mxu0 0
        %1381 = vmatpush1.bf16.msra.mxu0 %v1355
        %1382 = vmatprep.subr.bf16.mxu0 0
        %1383 = vmatpush1.bf16.msra.mxu0 %v1354
        %1384 = vmatprep.subr.bf16.mxu0 0
        %1385 = vmatpush1.bf16.msra.mxu0 %v1353
        %1386 = vmatprep.subr.bf16.mxu0 0
        %1387 = vmatpush1.bf16.msra.mxu0 %v1352
        %1388 = vmatprep.subr.bf16.mxu0 0
        %1389 = vmatpush1.bf16.msra.mxu0 %v1351
        %1390 = vmatprep.subr.bf16.mxu0 0
        %1391 = vmatpush1.bf16.msra.mxu0 %v1350
        %1392 = vmatprep.subr.bf16.mxu0 0
        %1393 = vmatpush1.bf16.msra.mxu0 %v1349
        %1394 = vmatprep.subr.bf16.mxu0 0
        %1395 = vmatpush1.bf16.msra.mxu0 %v1348
        %1396 = vmatprep.subr.bf16.mxu0 0
        %1397 = vmatpush2.bf16.msra.mxu0 %v1363
        %1398 = vmatprep.subr.bf16.mxu0 0
        %1399 = vmatpush2.bf16.msra.mxu0 %v1362
        %1400 = vmatprep.subr.bf16.mxu0 0
        %1401 = vmatpush2.bf16.msra.mxu0 %v1361
        %1402 = vmatprep.subr.bf16.mxu0 0
        %1403 = vmatpush2.bf16.msra.mxu0 %v1360
        %1404 = vmatprep.subr.bf16.mxu0 0
        %1405 = vmatpush2.bf16.msra.mxu0 %v1359
        %1406 = vmatprep.subr.bf16.mxu0 0
        %1407 = vmatpush2.bf16.msra.mxu0 %v1358
        %1408 = vmatprep.subr.bf16.mxu0 0
        %1409 = vmatpush2.bf16.msra.mxu0 %v1357
        %1410 = vmatprep.subr.bf16.mxu0 0
        %1411 = vmatpush2.bf16.msra.mxu0 %v1356
        %1412 = vmatprep.mubr.bf16.mxu0 %v1279
        %1413 = vmatmul.mubr.bf16.gmra.mxu0 %v1278
        %v1414 = vpop.f32.mrf.mxu0
        %v1415 = vadd.f32 %v1283, %v1414
        %v1416 = vpop.f32.mrf.mxu0
        %v1417 = vpop.f32.mrf.mxu0
        %v1418 = vadd.f32 %v1283, %v1417
        %v1419 = vpop.f32.mrf.mxu0
        %1420 = vdwg.mxu0
        %vm1421 = vcmp.ge.f32.partialorder %v1415, 0.0
        %vm1422 = vcmp.ge.f32.partialorder %v1418, 0.0
        %v1423 = vlaneseq
        %v1424 = vshrl.u32 %v1423, 7
        %v1425 = vsub.s32 1, %v1424
        %v1426 = vrot.slane %v1277, %v1425
        %v1427 = vmul.f32 %v1426, %v1415
        %v1428 = vmul.f32 %v1426, %v1418
        %v1429 = vsel %vm1421, %v1415, %v1427
        %v1430 = vsel %vm1422, %v1418, %v1428
        %v1431 = vlaneseq
        %v1432 = vshrl.u32 %v1431, 7
        %v1433 = vsub.s32 2, %v1432
        %v1434 = vrot.slane %v1277, %v1433
        %v1435 = vadd.f32 %v1429, %v1434
        %v1436 = vadd.f32 %v1430, %v1434
        %1437 = vst [vmem:[#allocation2] sm:$0xff] 0.0
        %1438 = vst [vmem:[#allocation2 + $0x8] sm:$0xff] 0.0
        %1439 = vst [vmem:[#allocation2 + $0x10] sm:$0xff] 0.0
        %1440 = vst [vmem:[#allocation2 + $0x18] sm:$0xff] 0.0
        %1441 = vst [vmem:[#allocation2 + $0x20] sm:$0xff] 0.0
        %1442 = vst [vmem:[#allocation2 + $0x28] sm:$0xff] 0.0
        %1443 = vst [vmem:[#allocation2 + $0x30] sm:$0xff] 0.0
        %1444 = vst [vmem:[#allocation2 + $0x38] sm:$0xff] 0.0
        %1445 = vst [vmem:[#allocation2 + $0x40] sm:$0xff] 0.0
        %1446 = vst [vmem:[#allocation2 + $0x48] sm:$0xff] 0.0
        %1447 = vst [vmem:[#allocation2 + $0x50] sm:$0xff] 0.0
        %1448 = vst [vmem:[#allocation2 + $0x58] sm:$0xff] 0.0
        %1449 = vst [vmem:[#allocation2 + $0x60] sm:$0xff] 0.0
        %1450 = vst [vmem:[#allocation2 + $0x68] sm:$0xff] 0.0
        %1451 = vst [vmem:[#allocation2 + $0x70] sm:$0xff] 0.0
        %1452 = vst [vmem:[#allocation2 + $0x78] sm:$0xff] 0.0
        %1453 = vst [vmem:[#allocation2 + $0x80] sm:$0xff] 0.0
        %1454 = vst.msk [vmem:[#allocation2 + $0x1] sm:$0xff] %vm958, %v1435
        %1455 = vst.msk [vmem:[#allocation2 + $0x9] sm:$0xff] %vm958, %v1436
        %v1456 = vld [vmem:[#allocation2] sm:$0xff]
        %v1457 = vld [vmem:[#allocation2 + $0x8] sm:$0xff]
        %v1458 = vld [vmem:[#allocation2 + $0x1] sm:$0xff]
        %v1459 = vld [vmem:[#allocation2 + $0x9] sm:$0xff]
        %v1460 = vld [vmem:[#allocation2 + $0x2] sm:$0xff]
        %v1461 = vld [vmem:[#allocation2 + $0xa] sm:$0xff]
        %1464 = vrot.lane.b32.xlu0 %v1458, 64
        %v1465 = vpop.permute.xlu0 %1464
        %1466 = vrot.lane.b32.xlu0 %v1459, 64
        %v1467 = vpop.permute.xlu0 %1466
        %v1470 = vsel %vm958, %v1456, %v1465
        %v1471 = vsel %vm958, %v1457, %v1467
        %v1472 = vld [vmem:[#allocation3 + $0x180] sm:$0xf]
        %v1473 = vld [vmem:[#allocation3 + $0x188] sm:$0xf]
        %v1474 = vld [vmem:[#allocation3 + $0x190] sm:$0xf]
        %v1475 = vld [vmem:[#allocation3 + $0x198] sm:$0xf]
        %v1476 = vld [vmem:[#allocation3 + $0x1a0] sm:$0xf]
        %v1477 = vld [vmem:[#allocation3 + $0x1a8] sm:$0xf]
        %v1478 = vld [vmem:[#allocation3 + $0x1b0] sm:$0xf]
        %v1479 = vld [vmem:[#allocation3 + $0x1b8] sm:$0xf]
        %v1480 = vld [vmem:[#allocation3 + $0x1c0] sm:$0xf]
        %v1481 = vld [vmem:[#allocation3 + $0x1c8] sm:$0xf]
        %v1482 = vld [vmem:[#allocation3 + $0x1d0] sm:$0xf]
        %v1483 = vld [vmem:[#allocation3 + $0x1d8] sm:$0xf]
        %v1484 = vld [vmem:[#allocation3 + $0x1e0] sm:$0xf]
        %v1485 = vld [vmem:[#allocation3 + $0x1e8] sm:$0xf]
        %v1486 = vld [vmem:[#allocation3 + $0x1f0] sm:$0xf]
        %v1487 = vld [vmem:[#allocation3 + $0x1f8] sm:$0xf]
        %v1488 = vld [vmem:[#allocation3 + $0x200] sm:$0xf]
        %v1489 = vld [vmem:[#allocation3 + $0x208] sm:$0xf]
        %v1490 = vld [vmem:[#allocation3 + $0x210] sm:$0xf]
        %v1491 = vld [vmem:[#allocation3 + $0x218] sm:$0xf]
        %v1492 = vld [vmem:[#allocation3 + $0x220] sm:$0xf]
        %v1493 = vld [vmem:[#allocation3 + $0x228] sm:$0xf]
        %v1494 = vld [vmem:[#allocation3 + $0x230] sm:$0xf]
        %v1495 = vld [vmem:[#allocation3 + $0x238] sm:$0xf]
        %s1496 = scalar_lea.vmem %s3, 24
        %v1497 = vld [vmem:[%s1496] sm:$0x77]
        %v1498 = vpack.c.bf16 %v1471, %v1470
        %v1499 = vpack.c.bf16 %v1461, %v1460
        %v1500 = vlaneseq
        %v1501 = vshrl.u32 %v1500, 7
        %v1502 = vsub.s32 0, %v1501
        %v1503 = vrot.slane %v1497, %v1502
        %v1528 = vunpack.c.l.b16 %v1472
        %v1529 = vunpack.c.l.b16 %v1473
        %v1530 = vunpack.c.l.b16 %v1474
        %v1531 = vunpack.c.l.b16 %v1475
        %v1532 = vunpack.c.l.b16 %v1476
        %v1533 = vunpack.c.l.b16 %v1477
        %v1534 = vunpack.c.l.b16 %v1478
        %v1535 = vunpack.c.l.b16 %v1479
        %v1536 = vunpack.c.l.b16 %v1480
        %v1537 = vunpack.c.l.b16 %v1481
        %v1538 = vunpack.c.l.b16 %v1482
        %v1539 = vunpack.c.l.b16 %v1483
        %v1540 = vunpack.c.l.b16 %v1484
        %v1541 = vunpack.c.l.b16 %v1485
        %v1542 = vunpack.c.l.b16 %v1486
        %v1543 = vunpack.c.l.b16 %v1487
        %v1544 = vunpack.c.l.b16 %v1488
        %v1545 = vunpack.c.l.b16 %v1489
        %v1546 = vunpack.c.l.b16 %v1490
        %v1547 = vunpack.c.l.b16 %v1491
        %v1548 = vunpack.c.l.b16 %v1492
        %v1549 = vunpack.c.l.b16 %v1493
        %v1550 = vunpack.c.l.b16 %v1494
        %v1551 = vunpack.c.l.b16 %v1495
        %v1552 = vpack.c.b16 %v1529, %v1528
        %v1553 = vpack.c.b16 %v1531, %v1530
        %v1554 = vpack.c.b16 %v1533, %v1532
        %v1555 = vpack.c.b16 %v1535, %v1534
        %v1556 = vpack.c.b16 %v1537, %v1536
        %v1557 = vpack.c.b16 %v1539, %v1538
        %v1558 = vpack.c.b16 %v1541, %v1540
        %v1559 = vpack.c.b16 %v1543, %v1542
        %v1560 = vpack.c.b16 %v1545, %v1544
        %v1561 = vpack.c.b16 %v1547, %v1546
        %v1562 = vpack.c.b16 %v1549, %v1548
        %v1563 = vpack.c.b16 %v1551, %v1550
        %v1577 = vsel %vm958, %v1499, 0
        %1579 = vmatprep.subr.bf16.mxu0 0
        %1580 = vmatpush1.bf16.msra.mxu0 %v1559
        %1581 = vmatprep.subr.bf16.mxu0 0
        %1582 = vmatpush1.bf16.msra.mxu0 %v1558
        %1583 = vmatprep.subr.bf16.mxu0 0
        %1584 = vmatpush1.bf16.msra.mxu0 %v1557
        %1585 = vmatprep.subr.bf16.mxu0 0
        %1586 = vmatpush1.bf16.msra.mxu0 %v1556
        %1587 = vmatprep.subr.bf16.mxu0 0
        %1588 = vmatpush1.bf16.msra.mxu0 %v1555
        %1589 = vmatprep.subr.bf16.mxu0 0
        %1590 = vmatpush1.bf16.msra.mxu0 %v1554
        %1591 = vmatprep.subr.bf16.mxu0 0
        %1592 = vmatpush1.bf16.msra.mxu0 %v1553
        %1593 = vmatprep.subr.bf16.mxu0 0
        %1594 = vmatpush1.bf16.msra.mxu0 %v1552
        %1595 = vmatprep.subr.bf16.mxu0 0
        %1596 = vmatpush2.bf16.msra.mxu0 0
        %1597 = vmatprep.subr.bf16.mxu0 0
        %1598 = vmatpush2.bf16.msra.mxu0 0
        %1599 = vmatprep.subr.bf16.mxu0 0
        %1600 = vmatpush2.bf16.msra.mxu0 0
        %1601 = vmatprep.subr.bf16.mxu0 0
        %1602 = vmatpush2.bf16.msra.mxu0 0
        %1603 = vmatprep.subr.bf16.mxu0 0
        %1604 = vmatpush2.bf16.msra.mxu0 %v1563
        %1605 = vmatprep.subr.bf16.mxu0 0
        %1606 = vmatpush2.bf16.msra.mxu0 %v1562
        %1607 = vmatprep.subr.bf16.mxu0 0
        %1608 = vmatpush2.bf16.msra.mxu0 %v1561
        %1609 = vmatprep.subr.bf16.mxu0 0
        %1610 = vmatpush2.bf16.msra.mxu0 %v1560
        %1611 = vmatprep.mubr.bf16.mxu0 %v1577
        %1612 = vmatmul.mubr.bf16.gmra.mxu0 %v1498
        %v1613 = vpop.f32.mrf.mxu0
        %v1614 = vadd.f32 %v1503, %v1613
        %v1615 = vpop.f32.mrf.mxu0
        %v1616 = vpop.f32.mrf.mxu0
        %v1617 = vadd.f32 %v1503, %v1616
        %v1618 = vpop.f32.mrf.mxu0
        %1619 = vdwg.mxu0
        %vm1620 = vcmp.ge.f32.partialorder %v1614, 0.0
        %vm1621 = vcmp.ge.f32.partialorder %v1617, 0.0
        %v1622 = vlaneseq
        %v1623 = vshrl.u32 %v1622, 7
        %v1624 = vsub.s32 1, %v1623
        %v1625 = vrot.slane %v1497, %v1624
        %v1626 = vmul.f32 %v1625, %v1614
        %v1627 = vmul.f32 %v1625, %v1617
        %v1628 = vsel %vm1620, %v1614, %v1626
        %v1629 = vsel %vm1621, %v1617, %v1627
        %v1630 = vlaneseq
        %v1631 = vshrl.u32 %v1630, 7
        %v1632 = vsub.s32 2, %v1631
        %v1633 = vrot.slane %v1497, %v1632
        %v1634 = vadd.f32 %v1628, %v1633
        %v1635 = vadd.f32 %v1629, %v1633
        %1636 = vst [vmem:[#allocation2] sm:$0xff] 0.0
        %1637 = vst [vmem:[#allocation2 + $0x8] sm:$0xff] 0.0
        %1638 = vst [vmem:[#allocation2 + $0x10] sm:$0xff] 0.0
        %1639 = vst [vmem:[#allocation2 + $0x18] sm:$0xff] 0.0
        %1640 = vst [vmem:[#allocation2 + $0x20] sm:$0xff] 0.0
        %1641 = vst [vmem:[#allocation2 + $0x28] sm:$0xff] 0.0
        %1642 = vst [vmem:[#allocation2 + $0x30] sm:$0xff] 0.0
        %1643 = vst [vmem:[#allocation2 + $0x38] sm:$0xff] 0.0
        %1644 = vst [vmem:[#allocation2 + $0x40] sm:$0xff] 0.0
        %1645 = vst [vmem:[#allocation2 + $0x48] sm:$0xff] 0.0
        %1646 = vst [vmem:[#allocation2 + $0x50] sm:$0xff] 0.0
        %1647 = vst [vmem:[#allocation2 + $0x58] sm:$0xff] 0.0
        %1648 = vst [vmem:[#allocation2 + $0x60] sm:$0xff] 0.0
        %1649 = vst [vmem:[#allocation2 + $0x68] sm:$0xff] 0.0
        %1650 = vst [vmem:[#allocation2 + $0x70] sm:$0xff] 0.0
        %1651 = vst [vmem:[#allocation2 + $0x78] sm:$0xff] 0.0
        %1652 = vst [vmem:[#allocation2 + $0x80] sm:$0xff] 0.0
        %1653 = vst.msk [vmem:[#allocation2 + $0x2] sm:$0xff] %vm958, %v1634
        %1654 = vst.msk [vmem:[#allocation2 + $0xa] sm:$0xff] %vm958, %v1635
        %v1655 = vld [vmem:[#allocation2] ss:$4 sm:$0xf]
        %v1656 = vld [vmem:[%s296] ss:$4 sm:$0xf]
        %v1657 = vld [vmem:[%s312] ss:$4 sm:$0xf]
        %v1658 = vld [vmem:[%s328] ss:$4 sm:$0xf]
        %v1659 = vld [vmem:[%s344] ss:$4 sm:$0xf]
        %v1660 = vld [vmem:[%s360] ss:$4 sm:$0xf]
        %v1661 = vld [vmem:[%s376] ss:$4 sm:$0xf]
        %v1662 = vld [vmem:[%s392] ss:$4 sm:$0xf]
        %1664 = vrot.lane.b32.xlu0 %v1656, 64
        %v1665 = vpop.permute.xlu0 %1664
        %1668 = vrot.lane.b32.xlu0 %v1658, 64
        %v1669 = vpop.permute.xlu0 %1668
        %1672 = vrot.lane.b32.xlu0 %v1660, 64
        %v1673 = vpop.permute.xlu0 %1672
        %1676 = vrot.lane.b32.xlu0 %v1662, 64
        %v1677 = vpop.permute.xlu0 %1676
        %v1679 = vsel %vm958, %v1655, %v1665
        %v1680 = vsel %vm958, %v1657, %v1669
        %v1681 = vsel %vm958, %v1659, %v1673
        %v1682 = vsel %vm958, %v1661, %v1677
        %v1683 = vld [vmem:[#allocation3 + $0x240] sm:$0xf]
        %v1684 = vld [vmem:[#allocation3 + $0x248] sm:$0xf]
        %v1685 = vld [vmem:[#allocation3 + $0x250] sm:$0xf]
        %v1686 = vld [vmem:[#allocation3 + $0x258] sm:$0xf]
        %v1687 = vld [vmem:[#allocation3 + $0x260] sm:$0xf]
        %v1688 = vld [vmem:[#allocation3 + $0x268] sm:$0xf]
        %v1689 = vld [vmem:[#allocation3 + $0x270] sm:$0xf]
        %v1690 = vld [vmem:[#allocation3 + $0x278] sm:$0xf]
        %v1691 = vld [vmem:[#allocation3 + $0x280] sm:$0xf]
        %v1692 = vld [vmem:[#allocation3 + $0x288] sm:$0xf]
        %v1693 = vld [vmem:[#allocation3 + $0x290] sm:$0xf]
        %v1694 = vld [vmem:[#allocation3 + $0x298] sm:$0xf]
        %v1695 = vld [vmem:[#allocation3 + $0x2a0] sm:$0xf]
        %v1696 = vld [vmem:[#allocation3 + $0x2a8] sm:$0xf]
        %v1697 = vld [vmem:[#allocation3 + $0x2b0] sm:$0xf]
        %v1698 = vld [vmem:[#allocation3 + $0x2b8] sm:$0xf]
        %v1699 = vld [vmem:[#allocation3 + $0x2c0] sm:$0xf]
        %v1700 = vld [vmem:[#allocation3 + $0x2c8] sm:$0xf]
        %v1701 = vld [vmem:[#allocation3 + $0x2d0] sm:$0xf]
        %v1702 = vld [vmem:[#allocation3 + $0x2d8] sm:$0xf]
        %v1703 = vld [vmem:[#allocation3 + $0x2e0] sm:$0xf]
        %v1704 = vld [vmem:[#allocation3 + $0x2e8] sm:$0xf]
        %v1705 = vld [vmem:[#allocation3 + $0x2f0] sm:$0xf]
        %v1706 = vld [vmem:[#allocation3 + $0x2f8] sm:$0xf]
        %v1707 = vld [vmem:[#allocation3 + $0x300] sm:$0xf]
        %v1708 = vld [vmem:[#allocation3 + $0x308] sm:$0xf]
        %v1709 = vld [vmem:[#allocation3 + $0x310] sm:$0xf]
        %v1710 = vld [vmem:[#allocation3 + $0x318] sm:$0xf]
        %v1711 = vld [vmem:[#allocation3 + $0x320] sm:$0xf]
        %v1712 = vld [vmem:[#allocation3 + $0x328] sm:$0xf]
        %v1713 = vld [vmem:[#allocation3 + $0x330] sm:$0xf]
        %v1714 = vld [vmem:[#allocation3 + $0x338] sm:$0xf]
        %v1715 = vld [vmem:[#allocation3 + $0x340] sm:$0xf]
        %v1716 = vld [vmem:[#allocation3 + $0x348] sm:$0xf]
        %v1717 = vld [vmem:[#allocation3 + $0x350] sm:$0xf]
        %v1718 = vld [vmem:[#allocation3 + $0x358] sm:$0xf]
        %v1719 = vld [vmem:[#allocation3 + $0x360] sm:$0xf]
        %v1720 = vld [vmem:[#allocation3 + $0x368] sm:$0xf]
        %v1721 = vld [vmem:[#allocation3 + $0x370] sm:$0xf]
        %v1722 = vld [vmem:[#allocation3 + $0x378] sm:$0xf]
        %v1723 = vld [vmem:[#allocation3 + $0x380] sm:$0xf]
        %v1724 = vld [vmem:[#allocation3 + $0x388] sm:$0xf]
        %v1725 = vld [vmem:[#allocation3 + $0x390] sm:$0xf]
        %v1726 = vld [vmem:[#allocation3 + $0x398] sm:$0xf]
        %v1727 = vld [vmem:[#allocation3 + $0x3a0] sm:$0xf]
        %v1728 = vld [vmem:[#allocation3 + $0x3a8] sm:$0xf]
        %v1729 = vld [vmem:[#allocation3 + $0x3b0] sm:$0xf]
        %v1730 = vld [vmem:[#allocation3 + $0x3b8] sm:$0xf]
        %v1731 = vld [vmem:[#allocation3 + $0x3c0] sm:$0xf]
        %v1732 = vld [vmem:[#allocation3 + $0x3c8] sm:$0xf]
        %v1733 = vld [vmem:[#allocation3 + $0x3d0] sm:$0xf]
        %v1734 = vld [vmem:[#allocation3 + $0x3d8] sm:$0xf]
        %v1735 = vld [vmem:[#allocation3 + $0x3e0] sm:$0xf]
        %v1736 = vld [vmem:[#allocation3 + $0x3e8] sm:$0xf]
        %v1737 = vld [vmem:[#allocation3 + $0x3f0] sm:$0xf]
        %v1738 = vld [vmem:[#allocation3 + $0x3f8] sm:$0xf]
        %v1739 = vld [vmem:[#allocation3 + $0x400] sm:$0xf]
        %v1740 = vld [vmem:[#allocation3 + $0x408] sm:$0xf]
        %v1741 = vld [vmem:[#allocation3 + $0x410] sm:$0xf]
        %v1742 = vld [vmem:[#allocation3 + $0x418] sm:$0xf]
        %v1743 = vld [vmem:[#allocation3 + $0x420] sm:$0xf]
        %v1744 = vld [vmem:[#allocation3 + $0x428] sm:$0xf]
        %v1745 = vld [vmem:[#allocation3 + $0x430] sm:$0xf]
        %v1746 = vld [vmem:[#allocation3 + $0x438] sm:$0xf]
        %s1747 = scalar_lea.vmem %s3, 32
        %v1748 = vld [vmem:[%s1747] sm:$0x77]
        %v1749 = vpack.c.bf16 %v1679, %v1679
        %v1750 = vpack.c.bf16 %v1680, %v1680
        %v1751 = vpack.c.bf16 %v1681, %v1681
        %v1752 = vpack.c.bf16 %v1682, %v1682
        %v1753 = vlaneseq
        %v1754 = vshrl.u32 %v1753, 7
        %v1755 = vsub.s32 0, %v1754
        %v1756 = vrot.slane %v1748, %v1755
        %v1821 = vunpack.c.l.b16 %v1683
        %v1822 = vunpack.c.l.b16 %v1684
        %v1823 = vunpack.c.l.b16 %v1685
        %v1824 = vunpack.c.l.b16 %v1686
        %v1825 = vunpack.c.l.b16 %v1687
        %v1826 = vunpack.c.l.b16 %v1688
        %v1827 = vunpack.c.l.b16 %v1689
        %v1828 = vunpack.c.l.b16 %v1690
        %v1829 = vunpack.c.l.b16 %v1691
        %v1830 = vunpack.c.l.b16 %v1692
        %v1831 = vunpack.c.l.b16 %v1693
        %v1832 = vunpack.c.l.b16 %v1694
        %v1833 = vunpack.c.l.b16 %v1695
        %v1834 = vunpack.c.l.b16 %v1696
        %v1835 = vunpack.c.l.b16 %v1697
        %v1836 = vunpack.c.l.b16 %v1698
        %v1837 = vunpack.c.l.b16 %v1699
        %v1838 = vunpack.c.l.b16 %v1700
        %v1839 = vunpack.c.l.b16 %v1701
        %v1840 = vunpack.c.l.b16 %v1702
        %v1841 = vunpack.c.l.b16 %v1703
        %v1842 = vunpack.c.l.b16 %v1704
        %v1843 = vunpack.c.l.b16 %v1705
        %v1844 = vunpack.c.l.b16 %v1706
        %v1845 = vunpack.c.l.b16 %v1707
        %v1846 = vunpack.c.l.b16 %v1708
        %v1847 = vunpack.c.l.b16 %v1709
        %v1848 = vunpack.c.l.b16 %v1710
        %v1849 = vunpack.c.l.b16 %v1711
        %v1850 = vunpack.c.l.b16 %v1712
        %v1851 = vunpack.c.l.b16 %v1713
        %v1852 = vunpack.c.l.b16 %v1714
        %v1853 = vunpack.c.l.b16 %v1715
        %v1854 = vunpack.c.l.b16 %v1716
        %v1855 = vunpack.c.l.b16 %v1717
        %v1856 = vunpack.c.l.b16 %v1718
        %v1857 = vunpack.c.l.b16 %v1719
        %v1858 = vunpack.c.l.b16 %v1720
        %v1859 = vunpack.c.l.b16 %v1721
        %v1860 = vunpack.c.l.b16 %v1722
        %v1861 = vunpack.c.l.b16 %v1723
        %v1862 = vunpack.c.l.b16 %v1724
        %v1863 = vunpack.c.l.b16 %v1725
        %v1864 = vunpack.c.l.b16 %v1726
        %v1865 = vunpack.c.l.b16 %v1727
        %v1866 = vunpack.c.l.b16 %v1728
        %v1867 = vunpack.c.l.b16 %v1729
        %v1868 = vunpack.c.l.b16 %v1730
        %v1869 = vunpack.c.l.b16 %v1731
        %v1870 = vunpack.c.l.b16 %v1732
        %v1871 = vunpack.c.l.b16 %v1733
        %v1872 = vunpack.c.l.b16 %v1734
        %v1873 = vunpack.c.l.b16 %v1735
        %v1874 = vunpack.c.l.b16 %v1736
        %v1875 = vunpack.c.l.b16 %v1737
        %v1876 = vunpack.c.l.b16 %v1738
        %v1877 = vunpack.c.l.b16 %v1739
        %v1878 = vunpack.c.l.b16 %v1740
        %v1879 = vunpack.c.l.b16 %v1741
        %v1880 = vunpack.c.l.b16 %v1742
        %v1881 = vunpack.c.l.b16 %v1743
        %v1882 = vunpack.c.l.b16 %v1744
        %v1883 = vunpack.c.l.b16 %v1745
        %v1884 = vunpack.c.l.b16 %v1746
        %v1885 = vpack.c.b16 %v1822, %v1821
        %v1886 = vpack.c.b16 %v1824, %v1823
        %v1887 = vpack.c.b16 %v1826, %v1825
        %v1888 = vpack.c.b16 %v1828, %v1827
        %v1889 = vpack.c.b16 %v1830, %v1829
        %v1890 = vpack.c.b16 %v1832, %v1831
        %v1891 = vpack.c.b16 %v1834, %v1833
        %v1892 = vpack.c.b16 %v1836, %v1835
        %v1893 = vpack.c.b16 %v1838, %v1837
        %v1894 = vpack.c.b16 %v1840, %v1839
        %v1895 = vpack.c.b16 %v1842, %v1841
        %v1896 = vpack.c.b16 %v1844, %v1843
        %v1897 = vpack.c.b16 %v1846, %v1845
        %v1898 = vpack.c.b16 %v1848, %v1847
        %v1899 = vpack.c.b16 %v1850, %v1849
        %v1900 = vpack.c.b16 %v1852, %v1851
        %v1901 = vpack.c.b16 %v1854, %v1853
        %v1902 = vpack.c.b16 %v1856, %v1855
        %v1903 = vpack.c.b16 %v1858, %v1857
        %v1904 = vpack.c.b16 %v1860, %v1859
        %v1905 = vpack.c.b16 %v1862, %v1861
        %v1906 = vpack.c.b16 %v1864, %v1863
        %v1907 = vpack.c.b16 %v1866, %v1865
        %v1908 = vpack.c.b16 %v1868, %v1867
        %v1909 = vpack.c.b16 %v1870, %v1869
        %v1910 = vpack.c.b16 %v1872, %v1871
        %v1911 = vpack.c.b16 %v1874, %v1873
        %v1912 = vpack.c.b16 %v1876, %v1875
        %v1913 = vpack.c.b16 %v1878, %v1877
        %v1914 = vpack.c.b16 %v1880, %v1879
        %v1915 = vpack.c.b16 %v1882, %v1881
        %v1916 = vpack.c.b16 %v1884, %v1883
        %1949 = vmatprep.subr.bf16.mxu0 0
        %1950 = vmatpush1.bf16.msra.mxu0 %v1892
        %1951 = vmatprep.subr.bf16.mxu0 0
        %1952 = vmatpush1.bf16.msra.mxu0 %v1891
        %1953 = vmatprep.subr.bf16.mxu0 0
        %1954 = vmatpush1.bf16.msra.mxu0 %v1890
        %1955 = vmatprep.subr.bf16.mxu0 0
        %1956 = vmatpush1.bf16.msra.mxu0 %v1889
        %1957 = vmatprep.subr.bf16.mxu0 0
        %1958 = vmatpush1.bf16.msra.mxu0 %v1888
        %1959 = vmatprep.subr.bf16.mxu0 0
        %1960 = vmatpush1.bf16.msra.mxu0 %v1887
        %1961 = vmatprep.subr.bf16.mxu0 0
        %1962 = vmatpush1.bf16.msra.mxu0 %v1886
        %1963 = vmatprep.subr.bf16.mxu0 0
        %1964 = vmatpush1.bf16.msra.mxu0 %v1885
        %1965 = vmatprep.subr.bf16.mxu0 0
        %1966 = vmatpush2.bf16.msra.mxu0 %v1900
        %1967 = vmatprep.subr.bf16.mxu0 0
        %1968 = vmatpush2.bf16.msra.mxu0 %v1899
        %1969 = vmatprep.subr.bf16.mxu0 0
        %1970 = vmatpush2.bf16.msra.mxu0 %v1898
        %1971 = vmatprep.subr.bf16.mxu0 0
        %1972 = vmatpush2.bf16.msra.mxu0 %v1897
        %1973 = vmatprep.subr.bf16.mxu0 0
        %1974 = vmatpush2.bf16.msra.mxu0 %v1896
        %1975 = vmatprep.subr.bf16.mxu0 0
        %1976 = vmatpush2.bf16.msra.mxu0 %v1895
        %1977 = vmatprep.subr.bf16.mxu0 0
        %1978 = vmatpush2.bf16.msra.mxu0 %v1894
        %1979 = vmatprep.subr.bf16.mxu0 0
        %1980 = vmatpush2.bf16.msra.mxu0 %v1893
        %1981 = vmatprep.mubr.bf16.mxu0 %v1750
        %1982 = vmatmul.mubr.bf16.gmra.mxu0 %v1749
        %v1983 = vpop.f32.mrf.mxu0
        %v1984 = vadd.f32 %v1756, %v1983
        %v1985 = vpop.f32.mrf.mxu0
        %v1986 = vpop.f32.mrf.mxu0
        %v1987 = vpop.f32.mrf.mxu0
        %1988 = vdwg.mxu0
        %1989 = vmatprep.subr.bf16.mxu0 0
        %1990 = vmatpush1.bf16.msra.mxu0 %v1908
        %1991 = vmatprep.subr.bf16.mxu0 0
        %1992 = vmatpush1.bf16.msra.mxu0 %v1907
        %1993 = vmatprep.subr.bf16.mxu0 0
        %1994 = vmatpush1.bf16.msra.mxu0 %v1906
        %1995 = vmatprep.subr.bf16.mxu0 0
        %1996 = vmatpush1.bf16.msra.mxu0 %v1905
        %1997 = vmatprep.subr.bf16.mxu0 0
        %1998 = vmatpush1.bf16.msra.mxu0 %v1904
        %1999 = vmatprep.subr.bf16.mxu0 0
        %2000 = vmatpush1.bf16.msra.mxu0 %v1903
        %2001 = vmatprep.subr.bf16.mxu0 0
        %2002 = vmatpush1.bf16.msra.mxu0 %v1902
        %2003 = vmatprep.subr.bf16.mxu0 0
        %2004 = vmatpush1.bf16.msra.mxu0 %v1901
        %2005 = vmatprep.subr.bf16.mxu0 0
        %2006 = vmatpush2.bf16.msra.mxu0 %v1916
        %2007 = vmatprep.subr.bf16.mxu0 0
        %2008 = vmatpush2.bf16.msra.mxu0 %v1915
        %2009 = vmatprep.subr.bf16.mxu0 0
        %2010 = vmatpush2.bf16.msra.mxu0 %v1914
        %2011 = vmatprep.subr.bf16.mxu0 0
        %2012 = vmatpush2.bf16.msra.mxu0 %v1913
        %2013 = vmatprep.subr.bf16.mxu0 0
        %2014 = vmatpush2.bf16.msra.mxu0 %v1912
        %2015 = vmatprep.subr.bf16.mxu0 0
        %2016 = vmatpush2.bf16.msra.mxu0 %v1911
        %2017 = vmatprep.subr.bf16.mxu0 0
        %2018 = vmatpush2.bf16.msra.mxu0 %v1910
        %2019 = vmatprep.subr.bf16.mxu0 0
        %2020 = vmatpush2.bf16.msra.mxu0 %v1909
        %2021 = vmatprep.mubr.bf16.mxu0 %v1752
        %2022 = vmatmul.mubr.bf16.gmra.mxu0 %v1751
        %v2023 = vpop.f32.mrf.mxu0
        %v2024 = vadd.f32 %v1984, %v2023
        %v2025 = vpop.f32.mrf.mxu0
        %v2026 = vpop.f32.mrf.mxu0
        %v2027 = vpop.f32.mrf.mxu0
        %2028 = vdwg.mxu0
        %vm2029 = vcmp.ge.f32.partialorder %v2024, 0.0
        %v2030 = vlaneseq
        %v2031 = vshrl.u32 %v2030, 7
        %v2032 = vsub.s32 1, %v2031
        %v2033 = vrot.slane %v1748, %v2032
        %v2034 = vmul.f32 %v2033, %v2024
        %v2035 = vsel %vm2029, %v2024, %v2034
        %v2036 = vlaneseq
        %v2037 = vshrl.u32 %v2036, 7
        %v2038 = vsub.s32 2, %v2037
        %v2039 = vrot.slane %v1748, %v2038
        %v2040 = vadd.f32 %v2035, %v2039
        %2041 = vst [vmem:[#allocation2] sm:$0xff] 0.0
        %2042 = vst [vmem:[#allocation2 + $0x8] sm:$0xff] 0.0
        %2043 = vst [vmem:[#allocation2 + $0x10] sm:$0xff] 0.0
        %2044 = vst [vmem:[#allocation2 + $0x18] sm:$0xff] 0.0
        %2045 = vst [vmem:[#allocation2 + $0x20] sm:$0xff] 0.0
        %2046 = vst [vmem:[#allocation2 + $0x28] sm:$0xff] 0.0
        %2047 = vst [vmem:[#allocation2 + $0x30] sm:$0xff] 0.0
        %2048 = vst [vmem:[#allocation2 + $0x38] sm:$0xff] 0.0
        %2049 = vst [vmem:[#allocation2 + $0x40] sm:$0xff] 0.0
        %2050 = vst [vmem:[#allocation2 + $0x48] sm:$0xff] 0.0
        %2051 = vst [vmem:[#allocation2 + $0x50] sm:$0xff] 0.0
        %2052 = vst [vmem:[#allocation2 + $0x58] sm:$0xff] 0.0
        %2053 = vst [vmem:[#allocation2 + $0x60] sm:$0xff] 0.0
        %2054 = vst [vmem:[#allocation2 + $0x68] sm:$0xff] 0.0
        %2055 = vst [vmem:[#allocation2 + $0x70] sm:$0xff] 0.0
        %2056 = vst [vmem:[#allocation2 + $0x78] sm:$0xff] 0.0
        %2057 = vst [vmem:[#allocation2 + $0x80] sm:$0xff] 0.0
        %2058 = vst [vmem:[#allocation2 + $0x1] sm:$0xf] %v2040
        %v2059 = vld [vmem:[#allocation2] sm:$0xf]
        %v2060 = vld [vmem:[#allocation2 + $0x1] sm:$0xf]
        %v2061 = vld [vmem:[#allocation2 + $0x2] sm:$0xf]
        %v2062 = vld [vmem:[#allocation3 + $0x440] sm:$0xf]
        %v2063 = vld [vmem:[#allocation3 + $0x448] sm:$0xf]
        %v2064 = vld [vmem:[#allocation3 + $0x450] sm:$0xf]
        %v2065 = vld [vmem:[#allocation3 + $0x458] sm:$0xf]
        %v2066 = vld [vmem:[#allocation3 + $0x460] sm:$0xf]
        %v2067 = vld [vmem:[#allocation3 + $0x468] sm:$0xf]
        %v2068 = vld [vmem:[#allocation3 + $0x470] sm:$0xf]
        %v2069 = vld [vmem:[#allocation3 + $0x478] sm:$0xf]
        %v2070 = vld [vmem:[#allocation3 + $0x480] sm:$0xf]
        %v2071 = vld [vmem:[#allocation3 + $0x488] sm:$0xf]
        %v2072 = vld [vmem:[#allocation3 + $0x490] sm:$0xf]
        %v2073 = vld [vmem:[#allocation3 + $0x498] sm:$0xf]
        %v2074 = vld [vmem:[#allocation3 + $0x4a0] sm:$0xf]
        %v2075 = vld [vmem:[#allocation3 + $0x4a8] sm:$0xf]
        %v2076 = vld [vmem:[#allocation3 + $0x4b0] sm:$0xf]
        %v2077 = vld [vmem:[#allocation3 + $0x4b8] sm:$0xf]
        %v2078 = vld [vmem:[#allocation3 + $0x4c0] sm:$0xf]
        %v2079 = vld [vmem:[#allocation3 + $0x4c8] sm:$0xf]
        %v2080 = vld [vmem:[#allocation3 + $0x4d0] sm:$0xf]
        %v2081 = vld [vmem:[#allocation3 + $0x4d8] sm:$0xf]
        %v2082 = vld [vmem:[#allocation3 + $0x4e0] sm:$0xf]
        %v2083 = vld [vmem:[#allocation3 + $0x4e8] sm:$0xf]
        %v2084 = vld [vmem:[#allocation3 + $0x4f0] sm:$0xf]
        %v2085 = vld [vmem:[#allocation3 + $0x4f8] sm:$0xf]
        %v2086 = vld [vmem:[#allocation3 + $0x500] sm:$0xf]
        %v2087 = vld [vmem:[#allocation3 + $0x508] sm:$0xf]
        %v2088 = vld [vmem:[#allocation3 + $0x510] sm:$0xf]
        %v2089 = vld [vmem:[#allocation3 + $0x518] sm:$0xf]
        %v2090 = vld [vmem:[#allocation3 + $0x520] sm:$0xf]
        %v2091 = vld [vmem:[#allocation3 + $0x528] sm:$0xf]
        %v2092 = vld [vmem:[#allocation3 + $0x530] sm:$0xf]
        %v2093 = vld [vmem:[#allocation3 + $0x538] sm:$0xf]
        %v2094 = vld [vmem:[#allocation3 + $0x540] sm:$0xf]
        %v2095 = vld [vmem:[#allocation3 + $0x548] sm:$0xf]
        %v2096 = vld [vmem:[#allocation3 + $0x550] sm:$0xf]
        %v2097 = vld [vmem:[#allocation3 + $0x558] sm:$0xf]
        %v2098 = vld [vmem:[#allocation3 + $0x560] sm:$0xf]
        %v2099 = vld [vmem:[#allocation3 + $0x568] sm:$0xf]
        %v2100 = vld [vmem:[#allocation3 + $0x570] sm:$0xf]
        %v2101 = vld [vmem:[#allocation3 + $0x578] sm:$0xf]
        %v2102 = vld [vmem:[#allocation3 + $0x580] sm:$0xf]
        %v2103 = vld [vmem:[#allocation3 + $0x588] sm:$0xf]
        %v2104 = vld [vmem:[#allocation3 + $0x590] sm:$0xf]
        %v2105 = vld [vmem:[#allocation3 + $0x598] sm:$0xf]
        %v2106 = vld [vmem:[#allocation3 + $0x5a0] sm:$0xf]
        %v2107 = vld [vmem:[#allocation3 + $0x5a8] sm:$0xf]
        %v2108 = vld [vmem:[#allocation3 + $0x5b0] sm:$0xf]
        %v2109 = vld [vmem:[#allocation3 + $0x5b8] sm:$0xf]
        %s2110 = scalar_lea.vmem %s3, 40
        %v2111 = vld [vmem:[%s2110] sm:$0x77]
        %v2112 = vpack.c.bf16 %v2059, %v2059
        %v2113 = vpack.c.bf16 %v2060, %v2060
        %v2114 = vpack.c.bf16 %v2061, %v2061
        %v2115 = vlaneseq
        %v2116 = vshrl.u32 %v2115, 7
        %v2117 = vsub.s32 0, %v2116
        %v2118 = vrot.slane %v2111, %v2117
        %v2167 = vunpack.c.l.b16 %v2062
        %v2168 = vunpack.c.l.b16 %v2063
        %v2169 = vunpack.c.l.b16 %v2064
        %v2170 = vunpack.c.l.b16 %v2065
        %v2171 = vunpack.c.l.b16 %v2066
        %v2172 = vunpack.c.l.b16 %v2067
        %v2173 = vunpack.c.l.b16 %v2068
        %v2174 = vunpack.c.l.b16 %v2069
        %v2175 = vunpack.c.l.b16 %v2070
        %v2176 = vunpack.c.l.b16 %v2071
        %v2177 = vunpack.c.l.b16 %v2072
        %v2178 = vunpack.c.l.b16 %v2073
        %v2179 = vunpack.c.l.b16 %v2074
        %v2180 = vunpack.c.l.b16 %v2075
        %v2181 = vunpack.c.l.b16 %v2076
        %v2182 = vunpack.c.l.b16 %v2077
        %v2183 = vunpack.c.l.b16 %v2078
        %v2184 = vunpack.c.l.b16 %v2079
        %v2185 = vunpack.c.l.b16 %v2080
        %v2186 = vunpack.c.l.b16 %v2081
        %v2187 = vunpack.c.l.b16 %v2082
        %v2188 = vunpack.c.l.b16 %v2083
        %v2189 = vunpack.c.l.b16 %v2084
        %v2190 = vunpack.c.l.b16 %v2085
        %v2191 = vunpack.c.l.b16 %v2086
        %v2192 = vunpack.c.l.b16 %v2087
        %v2193 = vunpack.c.l.b16 %v2088
        %v2194 = vunpack.c.l.b16 %v2089
        %v2195 = vunpack.c.l.b16 %v2090
        %v2196 = vunpack.c.l.b16 %v2091
        %v2197 = vunpack.c.l.b16 %v2092
        %v2198 = vunpack.c.l.b16 %v2093
        %v2199 = vunpack.c.l.b16 %v2094
        %v2200 = vunpack.c.l.b16 %v2095
        %v2201 = vunpack.c.l.b16 %v2096
        %v2202 = vunpack.c.l.b16 %v2097
        %v2203 = vunpack.c.l.b16 %v2098
        %v2204 = vunpack.c.l.b16 %v2099
        %v2205 = vunpack.c.l.b16 %v2100
        %v2206 = vunpack.c.l.b16 %v2101
        %v2207 = vunpack.c.l.b16 %v2102
        %v2208 = vunpack.c.l.b16 %v2103
        %v2209 = vunpack.c.l.b16 %v2104
        %v2210 = vunpack.c.l.b16 %v2105
        %v2211 = vunpack.c.l.b16 %v2106
        %v2212 = vunpack.c.l.b16 %v2107
        %v2213 = vunpack.c.l.b16 %v2108
        %v2214 = vunpack.c.l.b16 %v2109
        %v2215 = vpack.c.b16 %v2168, %v2167
        %v2216 = vpack.c.b16 %v2170, %v2169
        %v2217 = vpack.c.b16 %v2172, %v2171
        %v2218 = vpack.c.b16 %v2174, %v2173
        %v2219 = vpack.c.b16 %v2176, %v2175
        %v2220 = vpack.c.b16 %v2178, %v2177
        %v2221 = vpack.c.b16 %v2180, %v2179
        %v2222 = vpack.c.b16 %v2182, %v2181
        %v2223 = vpack.c.b16 %v2184, %v2183
        %v2224 = vpack.c.b16 %v2186, %v2185
        %v2225 = vpack.c.b16 %v2188, %v2187
        %v2226 = vpack.c.b16 %v2190, %v2189
        %v2227 = vpack.c.b16 %v2192, %v2191
        %v2228 = vpack.c.b16 %v2194, %v2193
        %v2229 = vpack.c.b16 %v2196, %v2195
        %v2230 = vpack.c.b16 %v2198, %v2197
        %v2231 = vpack.c.b16 %v2200, %v2199
        %v2232 = vpack.c.b16 %v2202, %v2201
        %v2233 = vpack.c.b16 %v2204, %v2203
        %v2234 = vpack.c.b16 %v2206, %v2205
        %v2235 = vpack.c.b16 %v2208, %v2207
        %v2236 = vpack.c.b16 %v2210, %v2209
        %v2237 = vpack.c.b16 %v2212, %v2211
        %v2238 = vpack.c.b16 %v2214, %v2213
        %2263 = vmatprep.subr.bf16.mxu0 0
        %2264 = vmatpush1.bf16.msra.mxu0 %v2222
        %2265 = vmatprep.subr.bf16.mxu0 0
        %2266 = vmatpush1.bf16.msra.mxu0 %v2221
        %2267 = vmatprep.subr.bf16.mxu0 0
        %2268 = vmatpush1.bf16.msra.mxu0 %v2220
        %2269 = vmatprep.subr.bf16.mxu0 0
        %2270 = vmatpush1.bf16.msra.mxu0 %v2219
        %2271 = vmatprep.subr.bf16.mxu0 0
        %2272 = vmatpush1.bf16.msra.mxu0 %v2218
        %2273 = vmatprep.subr.bf16.mxu0 0
        %2274 = vmatpush1.bf16.msra.mxu0 %v2217
        %2275 = vmatprep.subr.bf16.mxu0 0
        %2276 = vmatpush1.bf16.msra.mxu0 %v2216
        %2277 = vmatprep.subr.bf16.mxu0 0
        %2278 = vmatpush1.bf16.msra.mxu0 %v2215
        %2279 = vmatprep.subr.bf16.mxu0 0
        %2280 = vmatpush2.bf16.msra.mxu0 %v2230
        %2281 = vmatprep.subr.bf16.mxu0 0
        %2282 = vmatpush2.bf16.msra.mxu0 %v2229
        %2283 = vmatprep.subr.bf16.mxu0 0
        %2284 = vmatpush2.bf16.msra.mxu0 %v2228
        %2285 = vmatprep.subr.bf16.mxu0 0
        %2286 = vmatpush2.bf16.msra.mxu0 %v2227
        %2287 = vmatprep.subr.bf16.mxu0 0
        %2288 = vmatpush2.bf16.msra.mxu0 %v2226
        %2289 = vmatprep.subr.bf16.mxu0 0
        %2290 = vmatpush2.bf16.msra.mxu0 %v2225
        %2291 = vmatprep.subr.bf16.mxu0 0
        %2292 = vmatpush2.bf16.msra.mxu0 %v2224
        %2293 = vmatprep.subr.bf16.mxu0 0
        %2294 = vmatpush2.bf16.msra.mxu0 %v2223
        %2295 = vmatprep.mubr.bf16.mxu0 %v2113
        %2296 = vmatmul.mubr.bf16.gmra.mxu0 %v2112
        %v2297 = vpop.f32.mrf.mxu0
        %v2298 = vadd.f32 %v2118, %v2297
        %v2299 = vpop.f32.mrf.mxu0
        %v2300 = vpop.f32.mrf.mxu0
        %v2301 = vpop.f32.mrf.mxu0
        %2302 = vdwg.mxu0
        %2303 = vmatprep.subr.bf16.mxu0 0
        %2304 = vmatpush1.bf16.msra.mxu0 %v2238
        %2305 = vmatprep.subr.bf16.mxu0 0
        %2306 = vmatpush1.bf16.msra.mxu0 %v2237
        %2307 = vmatprep.subr.bf16.mxu0 0
        %2308 = vmatpush1.bf16.msra.mxu0 %v2236
        %2309 = vmatprep.subr.bf16.mxu0 0
        %2310 = vmatpush1.bf16.msra.mxu0 %v2235
        %2311 = vmatprep.subr.bf16.mxu0 0
        %2312 = vmatpush1.bf16.msra.mxu0 %v2234
        %2313 = vmatprep.subr.bf16.mxu0 0
        %2314 = vmatpush1.bf16.msra.mxu0 %v2233
        %2315 = vmatprep.subr.bf16.mxu0 0
        %2316 = vmatpush1.bf16.msra.mxu0 %v2232
        %2317 = vmatprep.subr.bf16.mxu0 0
        %2318 = vmatpush1.bf16.msra.mxu0 %v2231
        %2319 = vmatprep.subr.bf16.mxu0 0
        %2320 = vmatpush2.bf16.msra.mxu0 0
        %2321 = vmatprep.subr.bf16.mxu0 0
        %2322 = vmatpush2.bf16.msra.mxu0 0
        %2323 = vmatprep.subr.bf16.mxu0 0
        %2324 = vmatpush2.bf16.msra.mxu0 0
        %2325 = vmatprep.subr.bf16.mxu0 0
        %2326 = vmatpush2.bf16.msra.mxu0 0
        %2327 = vmatprep.subr.bf16.mxu0 0
        %2328 = vmatpush2.bf16.msra.mxu0 0
        %2329 = vmatprep.subr.bf16.mxu0 0
        %2330 = vmatpush2.bf16.msra.mxu0 0
        %2331 = vmatprep.subr.bf16.mxu0 0
        %2332 = vmatpush2.bf16.msra.mxu0 0
        %2333 = vmatprep.subr.bf16.mxu0 0
        %2334 = vmatpush2.bf16.msra.mxu0 0
        %2335 = vmatprep.mubr.bf16.mxu0 0
        %2336 = vmatmul.mubr.bf16.gmra.mxu0 %v2114
        %v2337 = vpop.f32.mrf.mxu0
        %v2338 = vadd.f32 %v2298, %v2337
        %v2339 = vpop.f32.mrf.mxu0
        %v2340 = vpop.f32.mrf.mxu0
        %v2341 = vpop.f32.mrf.mxu0
        %2342 = vdwg.mxu0
        %vm2343 = vcmp.ge.f32.partialorder %v2338, 0.0
        %v2344 = vlaneseq
        %v2345 = vshrl.u32 %v2344, 7
        %v2346 = vsub.s32 1, %v2345
        %v2347 = vrot.slane %v2111, %v2346
        %v2348 = vmul.f32 %v2347, %v2338
        %v2349 = vsel %vm2343, %v2338, %v2348
        %v2350 = vlaneseq
        %v2351 = vshrl.u32 %v2350, 7
        %v2352 = vsub.s32 2, %v2351
        %v2353 = vrot.slane %v2111, %v2352
        %v2354 = vadd.f32 %v2349, %v2353
        %2355 = vst [vmem:[#allocation2] sm:$0xff] 0.0
        %2356 = vst [vmem:[#allocation2 + $0x8] sm:$0xff] 0.0
        %2357 = vst [vmem:[#allocation2 + $0x10] sm:$0xff] 0.0
        %2358 = vst [vmem:[#allocation2 + $0x18] sm:$0xff] 0.0
        %2359 = vst [vmem:[#allocation2 + $0x20] sm:$0xff] 0.0
        %2360 = vst [vmem:[#allocation2 + $0x28] sm:$0xff] 0.0
        %2361 = vst [vmem:[#allocation2 + $0x30] sm:$0xff] 0.0
        %2362 = vst [vmem:[#allocation2 + $0x38] sm:$0xff] 0.0
        %2363 = vst [vmem:[#allocation2 + $0x40] sm:$0xff] 0.0
        %2364 = vst [vmem:[#allocation2 + $0x48] sm:$0xff] 0.0
        %2365 = vst [vmem:[#allocation2 + $0x50] sm:$0xff] 0.0
        %2366 = vst [vmem:[#allocation2 + $0x58] sm:$0xff] 0.0
        %2367 = vst [vmem:[#allocation2 + $0x60] sm:$0xff] 0.0
        %2368 = vst [vmem:[#allocation2 + $0x68] sm:$0xff] 0.0
        %2369 = vst [vmem:[#allocation2 + $0x70] sm:$0xff] 0.0
        %2370 = vst [vmem:[#allocation2 + $0x78] sm:$0xff] 0.0
        %2371 = vst [vmem:[#allocation2 + $0x80] sm:$0xff] 0.0
        %2372 = vst [vmem:[#allocation2 + $0x2] sm:$0xf] %v2354
        %v2373 = vld [vmem:[#allocation2] ss:$4 sm:$0x1]
        %v2374 = vld [vmem:[%s296] ss:$4 sm:$0x1]
        %v2375 = vld [vmem:[%s312] ss:$4 sm:$0x1]
        %v2376 = vld [vmem:[%s328] ss:$4 sm:$0x1]
        %v2377 = vld [vmem:[%s344] ss:$4 sm:$0x1]
        %v2378 = vld [vmem:[%s360] ss:$4 sm:$0x1]
        %v2379 = vld [vmem:[%s376] ss:$4 sm:$0x1]
        %v2380 = vld [vmem:[%s392] ss:$4 sm:$0x1]
        %v2381 = vld [vmem:[#allocation3 + $0x5c0] sm:$0xff]
        %v2382 = vld [vmem:[#allocation3 + $0x5c8] sm:$0xff]
        %v2383 = vld [vmem:[#allocation3 + $0x5d0] sm:$0xff]
        %v2384 = vld [vmem:[#allocation3 + $0x5d8] sm:$0xff]
        %v2385 = vld [vmem:[#allocation3 + $0x5e0] sm:$0xff]
        %v2386 = vld [vmem:[#allocation3 + $0x5e8] sm:$0xff]
        %v2387 = vld [vmem:[#allocation3 + $0x5f0] sm:$0xff]
        %v2388 = vld [vmem:[#allocation3 + $0x5f8] sm:$0xff]
        %v2389 = vld [vmem:[#allocation3 + $0x600] sm:$0xff]
        %v2390 = vld [vmem:[#allocation3 + $0x608] sm:$0xff]
        %v2391 = vld [vmem:[#allocation3 + $0x610] sm:$0xff]
        %v2392 = vld [vmem:[#allocation3 + $0x618] sm:$0xff]
        %v2393 = vld [vmem:[#allocation3 + $0x620] sm:$0xff]
        %v2394 = vld [vmem:[#allocation3 + $0x628] sm:$0xff]
        %v2395 = vld [vmem:[#allocation3 + $0x630] sm:$0xff]
        %v2396 = vld [vmem:[#allocation3 + $0x638] sm:$0xff]
        %v2397 = vld [vmem:[#allocation3 + $0x640] sm:$0xff]
        %v2398 = vld [vmem:[#allocation3 + $0x648] sm:$0xff]
        %v2399 = vld [vmem:[#allocation3 + $0x650] sm:$0xff]
        %v2400 = vld [vmem:[#allocation3 + $0x658] sm:$0xff]
        %v2401 = vld [vmem:[#allocation3 + $0x660] sm:$0xff]
        %v2402 = vld [vmem:[#allocation3 + $0x668] sm:$0xff]
        %v2403 = vld [vmem:[#allocation3 + $0x670] sm:$0xff]
        %v2404 = vld [vmem:[#allocation3 + $0x678] sm:$0xff]
        %v2405 = vld [vmem:[#allocation3 + $0x680] sm:$0xff]
        %v2406 = vld [vmem:[#allocation3 + $0x688] sm:$0xff]
        %v2407 = vld [vmem:[#allocation3 + $0x690] sm:$0xff]
        %v2408 = vld [vmem:[#allocation3 + $0x698] sm:$0xff]
        %v2409 = vld [vmem:[#allocation3 + $0x6a0] sm:$0xff]
        %v2410 = vld [vmem:[#allocation3 + $0x6a8] sm:$0xff]
        %v2411 = vld [vmem:[#allocation3 + $0x6b0] sm:$0xff]
        %v2412 = vld [vmem:[#allocation3 + $0x6b8] sm:$0xff]
        %v2413 = vld [vmem:[#allocation3 + $0x6c0] sm:$0xff]
        %v2414 = vld [vmem:[#allocation3 + $0x6c8] sm:$0xff]
        %v2415 = vld [vmem:[#allocation3 + $0x6d0] sm:$0xff]
        %v2416 = vld [vmem:[#allocation3 + $0x6d8] sm:$0xff]
        %v2417 = vld [vmem:[#allocation3 + $0x6e0] sm:$0xff]
        %v2418 = vld [vmem:[#allocation3 + $0x6e8] sm:$0xff]
        %v2419 = vld [vmem:[#allocation3 + $0x6f0] sm:$0xff]
        %v2420 = vld [vmem:[#allocation3 + $0x6f8] sm:$0xff]
        %v2421 = vld [vmem:[#allocation3 + $0x700] sm:$0xff]
        %v2422 = vld [vmem:[#allocation3 + $0x708] sm:$0xff]
        %v2423 = vld [vmem:[#allocation3 + $0x710] sm:$0xff]
        %v2424 = vld [vmem:[#allocation3 + $0x718] sm:$0xff]
        %v2425 = vld [vmem:[#allocation3 + $0x720] sm:$0xff]
        %v2426 = vld [vmem:[#allocation3 + $0x728] sm:$0xff]
        %v2427 = vld [vmem:[#allocation3 + $0x730] sm:$0xff]
        %v2428 = vld [vmem:[#allocation3 + $0x738] sm:$0xff]
        %v2429 = vld [vmem:[#allocation3 + $0x740] sm:$0xff]
        %v2430 = vld [vmem:[#allocation3 + $0x748] sm:$0xff]
        %v2431 = vld [vmem:[#allocation3 + $0x750] sm:$0xff]
        %v2432 = vld [vmem:[#allocation3 + $0x758] sm:$0xff]
        %v2433 = vld [vmem:[#allocation3 + $0x760] sm:$0xff]
        %v2434 = vld [vmem:[#allocation3 + $0x768] sm:$0xff]
        %v2435 = vld [vmem:[#allocation3 + $0x770] sm:$0xff]
        %v2436 = vld [vmem:[#allocation3 + $0x778] sm:$0xff]
        %v2437 = vld [vmem:[#allocation3 + $0x780] sm:$0xff]
        %v2438 = vld [vmem:[#allocation3 + $0x788] sm:$0xff]
        %v2439 = vld [vmem:[#allocation3 + $0x790] sm:$0xff]
        %v2440 = vld [vmem:[#allocation3 + $0x798] sm:$0xff]
        %v2441 = vld [vmem:[#allocation3 + $0x7a0] sm:$0xff]
        %v2442 = vld [vmem:[#allocation3 + $0x7a8] sm:$0xff]
        %v2443 = vld [vmem:[#allocation3 + $0x7b0] sm:$0xff]
        %v2444 = vld [vmem:[#allocation3 + $0x7b8] sm:$0xff]
        %v2445 = vld [vmem:[#allocation3 + $0x7c0] sm:$0xff]
        %v2446 = vld [vmem:[#allocation3 + $0x7c8] sm:$0xff]
        %v2447 = vld [vmem:[#allocation3 + $0x7d0] sm:$0xff]
        %v2448 = vld [vmem:[#allocation3 + $0x7d8] sm:$0xff]
        %v2449 = vld [vmem:[#allocation3 + $0x7e0] sm:$0xff]
        %v2450 = vld [vmem:[#allocation3 + $0x7e8] sm:$0xff]
        %v2451 = vld [vmem:[#allocation3 + $0x7f0] sm:$0xff]
        %v2452 = vld [vmem:[#allocation3 + $0x7f8] sm:$0xff]
        %v2453 = vld [vmem:[#allocation3 + $0x800] sm:$0xff]
        %v2454 = vld [vmem:[#allocation3 + $0x808] sm:$0xff]
        %v2455 = vld [vmem:[#allocation3 + $0x810] sm:$0xff]
        %v2456 = vld [vmem:[#allocation3 + $0x818] sm:$0xff]
        %v2457 = vld [vmem:[#allocation3 + $0x820] sm:$0xff]
        %v2458 = vld [vmem:[#allocation3 + $0x828] sm:$0xff]
        %v2459 = vld [vmem:[#allocation3 + $0x830] sm:$0xff]
        %v2460 = vld [vmem:[#allocation3 + $0x838] sm:$0xff]
        %v2461 = vld [vmem:[#allocation3 + $0x840] sm:$0xff]
        %v2462 = vld [vmem:[#allocation3 + $0x848] sm:$0xff]
        %v2463 = vld [vmem:[#allocation3 + $0x850] sm:$0xff]
        %v2464 = vld [vmem:[#allocation3 + $0x858] sm:$0xff]
        %v2465 = vld [vmem:[#allocation3 + $0x860] sm:$0xff]
        %v2466 = vld [vmem:[#allocation3 + $0x868] sm:$0xff]
        %v2467 = vld [vmem:[#allocation3 + $0x870] sm:$0xff]
        %v2468 = vld [vmem:[#allocation3 + $0x878] sm:$0xff]
        %v2469 = vld [vmem:[#allocation3 + $0x880] sm:$0xff]
        %v2470 = vld [vmem:[#allocation3 + $0x888] sm:$0xff]
        %v2471 = vld [vmem:[#allocation3 + $0x890] sm:$0xff]
        %v2472 = vld [vmem:[#allocation3 + $0x898] sm:$0xff]
        %v2473 = vld [vmem:[#allocation3 + $0x8a0] sm:$0xff]
        %v2474 = vld [vmem:[#allocation3 + $0x8a8] sm:$0xff]
        %v2475 = vld [vmem:[#allocation3 + $0x8b0] sm:$0xff]
        %v2476 = vld [vmem:[#allocation3 + $0x8b8] sm:$0xff]
        %v2477 = vld [vmem:[#allocation3 + $0x8c0] sm:$0xff]
        %v2478 = vld [vmem:[#allocation3 + $0x8c8] sm:$0xff]
        %v2479 = vld [vmem:[#allocation3 + $0x8d0] sm:$0xff]
        %v2480 = vld [vmem:[#allocation3 + $0x8d8] sm:$0xff]
        %v2481 = vld [vmem:[#allocation3 + $0x8e0] sm:$0xff]
        %v2482 = vld [vmem:[#allocation3 + $0x8e8] sm:$0xff]
        %v2483 = vld [vmem:[#allocation3 + $0x8f0] sm:$0xff]
        %v2484 = vld [vmem:[#allocation3 + $0x8f8] sm:$0xff]
        %v2485 = vld [vmem:[#allocation3 + $0x900] sm:$0xff]
        %v2486 = vld [vmem:[#allocation3 + $0x908] sm:$0xff]
        %v2487 = vld [vmem:[#allocation3 + $0x910] sm:$0xff]
        %v2488 = vld [vmem:[#allocation3 + $0x918] sm:$0xff]
        %v2489 = vld [vmem:[#allocation3 + $0x920] sm:$0xff]
        %v2490 = vld [vmem:[#allocation3 + $0x928] sm:$0xff]
        %v2491 = vld [vmem:[#allocation3 + $0x930] sm:$0xff]
        %v2492 = vld [vmem:[#allocation3 + $0x938] sm:$0xff]
        %v2493 = vld [vmem:[#allocation3 + $0x940] sm:$0xff]
        %v2494 = vld [vmem:[#allocation3 + $0x948] sm:$0xff]
        %v2495 = vld [vmem:[#allocation3 + $0x950] sm:$0xff]
        %v2496 = vld [vmem:[#allocation3 + $0x958] sm:$0xff]
        %v2497 = vld [vmem:[#allocation3 + $0x960] sm:$0xff]
        %v2498 = vld [vmem:[#allocation3 + $0x968] sm:$0xff]
        %v2499 = vld [vmem:[#allocation3 + $0x970] sm:$0xff]
        %v2500 = vld [vmem:[#allocation3 + $0x978] sm:$0xff]
        %v2501 = vld [vmem:[#allocation3 + $0x980] sm:$0xff]
        %v2502 = vld [vmem:[#allocation3 + $0x988] sm:$0xff]
        %v2503 = vld [vmem:[#allocation3 + $0x990] sm:$0xff]
        %v2504 = vld [vmem:[#allocation3 + $0x998] sm:$0xff]
        %v2505 = vld [vmem:[#allocation3 + $0x9a0] sm:$0xff]
        %v2506 = vld [vmem:[#allocation3 + $0x9a8] sm:$0xff]
        %v2507 = vld [vmem:[#allocation3 + $0x9b0] sm:$0xff]
        %v2508 = vld [vmem:[#allocation3 + $0x9b8] sm:$0xff]
        %s2509 = scalar_lea.vmem %s3, 48
        %v2510 = vld [vmem:[%s2509] sm:$0x77]
        %v2511 = vpack.c.bf16 %v2373, %v2373
        %v2512 = vpack.c.bf16 %v2374, %v2374
        %v2513 = vpack.c.bf16 %v2375, %v2375
        %v2514 = vpack.c.bf16 %v2376, %v2376
        %v2515 = vpack.c.bf16 %v2377, %v2377
        %v2516 = vpack.c.bf16 %v2378, %v2378
        %v2517 = vpack.c.bf16 %v2379, %v2379
        %v2518 = vpack.c.bf16 %v2380, %v2380
        %v2647 = vunpack.c.l.b16 %v2381
        %v2648 = vunpack.c.h.b16 %v2381
        %v2649 = vunpack.c.l.b16 %v2382
        %v2650 = vunpack.c.h.b16 %v2382
        %v2651 = vunpack.c.l.b16 %v2383
        %v2652 = vunpack.c.h.b16 %v2383
        %v2653 = vunpack.c.l.b16 %v2384
        %v2654 = vunpack.c.h.b16 %v2384
        %v2655 = vunpack.c.l.b16 %v2385
        %v2656 = vunpack.c.h.b16 %v2385
        %v2657 = vunpack.c.l.b16 %v2386
        %v2658 = vunpack.c.h.b16 %v2386
        %v2659 = vunpack.c.l.b16 %v2387
        %v2660 = vunpack.c.h.b16 %v2387
        %v2661 = vunpack.c.l.b16 %v2388
        %v2662 = vunpack.c.h.b16 %v2388
        %v2663 = vunpack.c.l.b16 %v2389
        %v2664 = vunpack.c.h.b16 %v2389
        %v2665 = vunpack.c.l.b16 %v2390
        %v2666 = vunpack.c.h.b16 %v2390
        %v2667 = vunpack.c.l.b16 %v2391
        %v2668 = vunpack.c.h.b16 %v2391
        %v2669 = vunpack.c.l.b16 %v2392
        %v2670 = vunpack.c.h.b16 %v2392
        %v2671 = vunpack.c.l.b16 %v2393
        %v2672 = vunpack.c.h.b16 %v2393
        %v2673 = vunpack.c.l.b16 %v2394
        %v2674 = vunpack.c.h.b16 %v2394
        %v2675 = vunpack.c.l.b16 %v2395
        %v2676 = vunpack.c.h.b16 %v2395
        %v2677 = vunpack.c.l.b16 %v2396
        %v2678 = vunpack.c.h.b16 %v2396
        %v2679 = vunpack.c.l.b16 %v2397
        %v2680 = vunpack.c.h.b16 %v2397
        %v2681 = vunpack.c.l.b16 %v2398
        %v2682 = vunpack.c.h.b16 %v2398
        %v2683 = vunpack.c.l.b16 %v2399
        %v2684 = vunpack.c.h.b16 %v2399
        %v2685 = vunpack.c.l.b16 %v2400
        %v2686 = vunpack.c.h.b16 %v2400
        %v2687 = vunpack.c.l.b16 %v2401
        %v2688 = vunpack.c.h.b16 %v2401
        %v2689 = vunpack.c.l.b16 %v2402
        %v2690 = vunpack.c.h.b16 %v2402
        %v2691 = vunpack.c.l.b16 %v2403
        %v2692 = vunpack.c.h.b16 %v2403
        %v2693 = vunpack.c.l.b16 %v2404
        %v2694 = vunpack.c.h.b16 %v2404
        %v2695 = vunpack.c.l.b16 %v2405
        %v2696 = vunpack.c.h.b16 %v2405
        %v2697 = vunpack.c.l.b16 %v2406
        %v2698 = vunpack.c.h.b16 %v2406
        %v2699 = vunpack.c.l.b16 %v2407
        %v2700 = vunpack.c.h.b16 %v2407
        %v2701 = vunpack.c.l.b16 %v2408
        %v2702 = vunpack.c.h.b16 %v2408
        %v2703 = vunpack.c.l.b16 %v2409
        %v2704 = vunpack.c.h.b16 %v2409
        %v2705 = vunpack.c.l.b16 %v2410
        %v2706 = vunpack.c.h.b16 %v2410
        %v2707 = vunpack.c.l.b16 %v2411
        %v2708 = vunpack.c.h.b16 %v2411
        %v2709 = vunpack.c.l.b16 %v2412
        %v2710 = vunpack.c.h.b16 %v2412
        %v2711 = vunpack.c.l.b16 %v2413
        %v2712 = vunpack.c.h.b16 %v2413
        %v2713 = vunpack.c.l.b16 %v2414
        %v2714 = vunpack.c.h.b16 %v2414
        %v2715 = vunpack.c.l.b16 %v2415
        %v2716 = vunpack.c.h.b16 %v2415
        %v2717 = vunpack.c.l.b16 %v2416
        %v2718 = vunpack.c.h.b16 %v2416
        %v2719 = vunpack.c.l.b16 %v2417
        %v2720 = vunpack.c.h.b16 %v2417
        %v2721 = vunpack.c.l.b16 %v2418
        %v2722 = vunpack.c.h.b16 %v2418
        %v2723 = vunpack.c.l.b16 %v2419
        %v2724 = vunpack.c.h.b16 %v2419
        %v2725 = vunpack.c.l.b16 %v2420
        %v2726 = vunpack.c.h.b16 %v2420
        %v2727 = vunpack.c.l.b16 %v2421
        %v2728 = vunpack.c.h.b16 %v2421
        %v2729 = vunpack.c.l.b16 %v2422
        %v2730 = vunpack.c.h.b16 %v2422
        %v2731 = vunpack.c.l.b16 %v2423
        %v2732 = vunpack.c.h.b16 %v2423
        %v2733 = vunpack.c.l.b16 %v2424
        %v2734 = vunpack.c.h.b16 %v2424
        %v2735 = vunpack.c.l.b16 %v2425
        %v2736 = vunpack.c.h.b16 %v2425
        %v2737 = vunpack.c.l.b16 %v2426
        %v2738 = vunpack.c.h.b16 %v2426
        %v2739 = vunpack.c.l.b16 %v2427
        %v2740 = vunpack.c.h.b16 %v2427
        %v2741 = vunpack.c.l.b16 %v2428
        %v2742 = vunpack.c.h.b16 %v2428
        %v2743 = vunpack.c.l.b16 %v2429
        %v2744 = vunpack.c.h.b16 %v2429
        %v2745 = vunpack.c.l.b16 %v2430
        %v2746 = vunpack.c.h.b16 %v2430
        %v2747 = vunpack.c.l.b16 %v2431
        %v2748 = vunpack.c.h.b16 %v2431
        %v2749 = vunpack.c.l.b16 %v2432
        %v2750 = vunpack.c.h.b16 %v2432
        %v2751 = vunpack.c.l.b16 %v2433
        %v2752 = vunpack.c.h.b16 %v2433
        %v2753 = vunpack.c.l.b16 %v2434
        %v2754 = vunpack.c.h.b16 %v2434
        %v2755 = vunpack.c.l.b16 %v2435
        %v2756 = vunpack.c.h.b16 %v2435
        %v2757 = vunpack.c.l.b16 %v2436
        %v2758 = vunpack.c.h.b16 %v2436
        %v2759 = vunpack.c.l.b16 %v2437
        %v2760 = vunpack.c.h.b16 %v2437
        %v2761 = vunpack.c.l.b16 %v2438
        %v2762 = vunpack.c.h.b16 %v2438
        %v2763 = vunpack.c.l.b16 %v2439
        %v2764 = vunpack.c.h.b16 %v2439
        %v2765 = vunpack.c.l.b16 %v2440
        %v2766 = vunpack.c.h.b16 %v2440
        %v2767 = vunpack.c.l.b16 %v2441
        %v2768 = vunpack.c.h.b16 %v2441
        %v2769 = vunpack.c.l.b16 %v2442
        %v2770 = vunpack.c.h.b16 %v2442
        %v2771 = vunpack.c.l.b16 %v2443
        %v2772 = vunpack.c.h.b16 %v2443
        %v2773 = vunpack.c.l.b16 %v2444
        %v2774 = vunpack.c.h.b16 %v2444
        %v2775 = vunpack.c.l.b16 %v2445
        %v2776 = vunpack.c.h.b16 %v2445
        %v2777 = vunpack.c.l.b16 %v2446
        %v2778 = vunpack.c.h.b16 %v2446
        %v2779 = vunpack.c.l.b16 %v2447
        %v2780 = vunpack.c.h.b16 %v2447
        %v2781 = vunpack.c.l.b16 %v2448
        %v2782 = vunpack.c.h.b16 %v2448
        %v2783 = vunpack.c.l.b16 %v2449
        %v2784 = vunpack.c.h.b16 %v2449
        %v2785 = vunpack.c.l.b16 %v2450
        %v2786 = vunpack.c.h.b16 %v2450
        %v2787 = vunpack.c.l.b16 %v2451
        %v2788 = vunpack.c.h.b16 %v2451
        %v2789 = vunpack.c.l.b16 %v2452
        %v2790 = vunpack.c.h.b16 %v2452
        %v2791 = vunpack.c.l.b16 %v2453
        %v2792 = vunpack.c.h.b16 %v2453
        %v2793 = vunpack.c.l.b16 %v2454
        %v2794 = vunpack.c.h.b16 %v2454
        %v2795 = vunpack.c.l.b16 %v2455
        %v2796 = vunpack.c.h.b16 %v2455
        %v2797 = vunpack.c.l.b16 %v2456
        %v2798 = vunpack.c.h.b16 %v2456
        %v2799 = vunpack.c.l.b16 %v2457
        %v2800 = vunpack.c.h.b16 %v2457
        %v2801 = vunpack.c.l.b16 %v2458
        %v2802 = vunpack.c.h.b16 %v2458
        %v2803 = vunpack.c.l.b16 %v2459
        %v2804 = vunpack.c.h.b16 %v2459
        %v2805 = vunpack.c.l.b16 %v2460
        %v2806 = vunpack.c.h.b16 %v2460
        %v2807 = vunpack.c.l.b16 %v2461
        %v2808 = vunpack.c.h.b16 %v2461
        %v2809 = vunpack.c.l.b16 %v2462
        %v2810 = vunpack.c.h.b16 %v2462
        %v2811 = vunpack.c.l.b16 %v2463
        %v2812 = vunpack.c.h.b16 %v2463
        %v2813 = vunpack.c.l.b16 %v2464
        %v2814 = vunpack.c.h.b16 %v2464
        %v2815 = vunpack.c.l.b16 %v2465
        %v2816 = vunpack.c.h.b16 %v2465
        %v2817 = vunpack.c.l.b16 %v2466
        %v2818 = vunpack.c.h.b16 %v2466
        %v2819 = vunpack.c.l.b16 %v2467
        %v2820 = vunpack.c.h.b16 %v2467
        %v2821 = vunpack.c.l.b16 %v2468
        %v2822 = vunpack.c.h.b16 %v2468
        %v2823 = vunpack.c.l.b16 %v2469
        %v2824 = vunpack.c.h.b16 %v2469
        %v2825 = vunpack.c.l.b16 %v2470
        %v2826 = vunpack.c.h.b16 %v2470
        %v2827 = vunpack.c.l.b16 %v2471
        %v2828 = vunpack.c.h.b16 %v2471
        %v2829 = vunpack.c.l.b16 %v2472
        %v2830 = vunpack.c.h.b16 %v2472
        %v2831 = vunpack.c.l.b16 %v2473
        %v2832 = vunpack.c.h.b16 %v2473
        %v2833 = vunpack.c.l.b16 %v2474
        %v2834 = vunpack.c.h.b16 %v2474
        %v2835 = vunpack.c.l.b16 %v2475
        %v2836 = vunpack.c.h.b16 %v2475
        %v2837 = vunpack.c.l.b16 %v2476
        %v2838 = vunpack.c.h.b16 %v2476
        %v2839 = vunpack.c.l.b16 %v2477
        %v2840 = vunpack.c.h.b16 %v2477
        %v2841 = vunpack.c.l.b16 %v2478
        %v2842 = vunpack.c.h.b16 %v2478
        %v2843 = vunpack.c.l.b16 %v2479
        %v2844 = vunpack.c.h.b16 %v2479
        %v2845 = vunpack.c.l.b16 %v2480
        %v2846 = vunpack.c.h.b16 %v2480
        %v2847 = vunpack.c.l.b16 %v2481
        %v2848 = vunpack.c.h.b16 %v2481
        %v2849 = vunpack.c.l.b16 %v2482
        %v2850 = vunpack.c.h.b16 %v2482
        %v2851 = vunpack.c.l.b16 %v2483
        %v2852 = vunpack.c.h.b16 %v2483
        %v2853 = vunpack.c.l.b16 %v2484
        %v2854 = vunpack.c.h.b16 %v2484
        %v2855 = vunpack.c.l.b16 %v2485
        %v2856 = vunpack.c.h.b16 %v2485
        %v2857 = vunpack.c.l.b16 %v2486
        %v2858 = vunpack.c.h.b16 %v2486
        %v2859 = vunpack.c.l.b16 %v2487
        %v2860 = vunpack.c.h.b16 %v2487
        %v2861 = vunpack.c.l.b16 %v2488
        %v2862 = vunpack.c.h.b16 %v2488
        %v2863 = vunpack.c.l.b16 %v2489
        %v2864 = vunpack.c.h.b16 %v2489
        %v2865 = vunpack.c.l.b16 %v2490
        %v2866 = vunpack.c.h.b16 %v2490
        %v2867 = vunpack.c.l.b16 %v2491
        %v2868 = vunpack.c.h.b16 %v2491
        %v2869 = vunpack.c.l.b16 %v2492
        %v2870 = vunpack.c.h.b16 %v2492
        %v2871 = vunpack.c.l.b16 %v2493
        %v2872 = vunpack.c.h.b16 %v2493
        %v2873 = vunpack.c.l.b16 %v2494
        %v2874 = vunpack.c.h.b16 %v2494
        %v2875 = vunpack.c.l.b16 %v2495
        %v2876 = vunpack.c.h.b16 %v2495
        %v2877 = vunpack.c.l.b16 %v2496
        %v2878 = vunpack.c.h.b16 %v2496
        %v2879 = vunpack.c.l.b16 %v2497
        %v2880 = vunpack.c.h.b16 %v2497
        %v2881 = vunpack.c.l.b16 %v2498
        %v2882 = vunpack.c.h.b16 %v2498
        %v2883 = vunpack.c.l.b16 %v2499
        %v2884 = vunpack.c.h.b16 %v2499
        %v2885 = vunpack.c.l.b16 %v2500
        %v2886 = vunpack.c.h.b16 %v2500
        %v2887 = vunpack.c.l.b16 %v2501
        %v2888 = vunpack.c.h.b16 %v2501
        %v2889 = vunpack.c.l.b16 %v2502
        %v2890 = vunpack.c.h.b16 %v2502
        %v2891 = vunpack.c.l.b16 %v2503
        %v2892 = vunpack.c.h.b16 %v2503
        %v2893 = vunpack.c.l.b16 %v2504
        %v2894 = vunpack.c.h.b16 %v2504
        %v2895 = vunpack.c.l.b16 %v2505
        %v2896 = vunpack.c.h.b16 %v2505
        %v2897 = vunpack.c.l.b16 %v2506
        %v2898 = vunpack.c.h.b16 %v2506
        %v2899 = vunpack.c.l.b16 %v2507
        %v2900 = vunpack.c.h.b16 %v2507
        %v2901 = vunpack.c.l.b16 %v2508
        %v2902 = vunpack.c.h.b16 %v2508
        %v2903 = vpack.c.b16 %v2649, %v2647
        %v2904 = vpack.c.b16 %v2650, %v2648
        %v2905 = vpack.c.b16 %v2653, %v2651
        %v2906 = vpack.c.b16 %v2654, %v2652
        %v2907 = vpack.c.b16 %v2657, %v2655
        %v2908 = vpack.c.b16 %v2658, %v2656
        %v2909 = vpack.c.b16 %v2661, %v2659
        %v2910 = vpack.c.b16 %v2662, %v2660
        %v2911 = vpack.c.b16 %v2665, %v2663
        %v2912 = vpack.c.b16 %v2666, %v2664
        %v2913 = vpack.c.b16 %v2669, %v2667
        %v2914 = vpack.c.b16 %v2670, %v2668
        %v2915 = vpack.c.b16 %v2673, %v2671
        %v2916 = vpack.c.b16 %v2674, %v2672
        %v2917 = vpack.c.b16 %v2677, %v2675
        %v2918 = vpack.c.b16 %v2678, %v2676
        %v2919 = vpack.c.b16 %v2681, %v2679
        %v2920 = vpack.c.b16 %v2682, %v2680
        %v2921 = vpack.c.b16 %v2685, %v2683
        %v2922 = vpack.c.b16 %v2686, %v2684
        %v2923 = vpack.c.b16 %v2689, %v2687
        %v2924 = vpack.c.b16 %v2690, %v2688
        %v2925 = vpack.c.b16 %v2693, %v2691
        %v2926 = vpack.c.b16 %v2694, %v2692
        %v2927 = vpack.c.b16 %v2697, %v2695
        %v2928 = vpack.c.b16 %v2698, %v2696
        %v2929 = vpack.c.b16 %v2701, %v2699
        %v2930 = vpack.c.b16 %v2702, %v2700
        %v2931 = vpack.c.b16 %v2705, %v2703
        %v2932 = vpack.c.b16 %v2706, %v2704
        %v2933 = vpack.c.b16 %v2709, %v2707
        %v2934 = vpack.c.b16 %v2710, %v2708
        %v2935 = vpack.c.b16 %v2713, %v2711
        %v2936 = vpack.c.b16 %v2714, %v2712
        %v2937 = vpack.c.b16 %v2717, %v2715
        %v2938 = vpack.c.b16 %v2718, %v2716
        %v2939 = vpack.c.b16 %v2721, %v2719
        %v2940 = vpack.c.b16 %v2722, %v2720
        %v2941 = vpack.c.b16 %v2725, %v2723
        %v2942 = vpack.c.b16 %v2726, %v2724
        %v2943 = vpack.c.b16 %v2729, %v2727
        %v2944 = vpack.c.b16 %v2730, %v2728
        %v2945 = vpack.c.b16 %v2733, %v2731
        %v2946 = vpack.c.b16 %v2734, %v2732
        %v2947 = vpack.c.b16 %v2737, %v2735
        %v2948 = vpack.c.b16 %v2738, %v2736
        %v2949 = vpack.c.b16 %v2741, %v2739
        %v2950 = vpack.c.b16 %v2742, %v2740
        %v2951 = vpack.c.b16 %v2745, %v2743
        %v2952 = vpack.c.b16 %v2746, %v2744
        %v2953 = vpack.c.b16 %v2749, %v2747
        %v2954 = vpack.c.b16 %v2750, %v2748
        %v2955 = vpack.c.b16 %v2753, %v2751
        %v2956 = vpack.c.b16 %v2754, %v2752
        %v2957 = vpack.c.b16 %v2757, %v2755
        %v2958 = vpack.c.b16 %v2758, %v2756
        %v2959 = vpack.c.b16 %v2761, %v2759
        %v2960 = vpack.c.b16 %v2762, %v2760
        %v2961 = vpack.c.b16 %v2765, %v2763
        %v2962 = vpack.c.b16 %v2766, %v2764
        %v2963 = vpack.c.b16 %v2769, %v2767
        %v2964 = vpack.c.b16 %v2770, %v2768
        %v2965 = vpack.c.b16 %v2773, %v2771
        %v2966 = vpack.c.b16 %v2774, %v2772
        %v2967 = vpack.c.b16 %v2777, %v2775
        %v2968 = vpack.c.b16 %v2778, %v2776
        %v2969 = vpack.c.b16 %v2781, %v2779
        %v2970 = vpack.c.b16 %v2782, %v2780
        %v2971 = vpack.c.b16 %v2785, %v2783
        %v2972 = vpack.c.b16 %v2786, %v2784
        %v2973 = vpack.c.b16 %v2789, %v2787
        %v2974 = vpack.c.b16 %v2790, %v2788
        %v2975 = vpack.c.b16 %v2793, %v2791
        %v2976 = vpack.c.b16 %v2794, %v2792
        %v2977 = vpack.c.b16 %v2797, %v2795
        %v2978 = vpack.c.b16 %v2798, %v2796
        %v2979 = vpack.c.b16 %v2801, %v2799
        %v2980 = vpack.c.b16 %v2802, %v2800
        %v2981 = vpack.c.b16 %v2805, %v2803
        %v2982 = vpack.c.b16 %v2806, %v2804
        %v2983 = vpack.c.b16 %v2809, %v2807
        %v2984 = vpack.c.b16 %v2810, %v2808
        %v2985 = vpack.c.b16 %v2813, %v2811
        %v2986 = vpack.c.b16 %v2814, %v2812
        %v2987 = vpack.c.b16 %v2817, %v2815
        %v2988 = vpack.c.b16 %v2818, %v2816
        %v2989 = vpack.c.b16 %v2821, %v2819
        %v2990 = vpack.c.b16 %v2822, %v2820
        %v2991 = vpack.c.b16 %v2825, %v2823
        %v2992 = vpack.c.b16 %v2826, %v2824
        %v2993 = vpack.c.b16 %v2829, %v2827
        %v2994 = vpack.c.b16 %v2830, %v2828
        %v2995 = vpack.c.b16 %v2833, %v2831
        %v2996 = vpack.c.b16 %v2834, %v2832
        %v2997 = vpack.c.b16 %v2837, %v2835
        %v2998 = vpack.c.b16 %v2838, %v2836
        %v2999 = vpack.c.b16 %v2841, %v2839
        %v3000 = vpack.c.b16 %v2842, %v2840
        %v3001 = vpack.c.b16 %v2845, %v2843
        %v3002 = vpack.c.b16 %v2846, %v2844
        %v3003 = vpack.c.b16 %v2849, %v2847
        %v3004 = vpack.c.b16 %v2850, %v2848
        %v3005 = vpack.c.b16 %v2853, %v2851
        %v3006 = vpack.c.b16 %v2854, %v2852
        %v3007 = vpack.c.b16 %v2857, %v2855
        %v3008 = vpack.c.b16 %v2858, %v2856
        %v3009 = vpack.c.b16 %v2861, %v2859
        %v3010 = vpack.c.b16 %v2862, %v2860
        %v3011 = vpack.c.b16 %v2865, %v2863
        %v3012 = vpack.c.b16 %v2866, %v2864
        %v3013 = vpack.c.b16 %v2869, %v2867
        %v3014 = vpack.c.b16 %v2870, %v2868
        %v3015 = vpack.c.b16 %v2873, %v2871
        %v3016 = vpack.c.b16 %v2874, %v2872
        %v3017 = vpack.c.b16 %v2877, %v2875
        %v3018 = vpack.c.b16 %v2878, %v2876
        %v3019 = vpack.c.b16 %v2881, %v2879
        %v3020 = vpack.c.b16 %v2882, %v2880
        %v3021 = vpack.c.b16 %v2885, %v2883
        %v3022 = vpack.c.b16 %v2886, %v2884
        %v3023 = vpack.c.b16 %v2889, %v2887
        %v3024 = vpack.c.b16 %v2890, %v2888
        %v3025 = vpack.c.b16 %v2893, %v2891
        %v3026 = vpack.c.b16 %v2894, %v2892
        %v3027 = vpack.c.b16 %v2897, %v2895
        %v3028 = vpack.c.b16 %v2898, %v2896
        %v3029 = vpack.c.b16 %v2901, %v2899
        %v3030 = vpack.c.b16 %v2902, %v2900
        %v3160 = vlaneseq
        %v3161 = vshrl.u32 %v3160, 7
        %v3162 = vsub.s32 0, %v3161
        %v3163 = vrot.slane %v2510, %v3162
        %v3164 = vlaneseq
        %v3165 = vshrl.u32 %v3164, 7
        %v3166 = vsub.s32 4, %v3165
        %v3167 = vrot.slane %v2510, %v3166
        %3170 = vmatprep.subr.bf16.mxu0 %v2918
        %3171 = vmatpush1.bf16.msra.mxu0 %v2917
        %3172 = vmatprep.subr.bf16.mxu0 %v2916
        %3173 = vmatpush1.bf16.msra.mxu0 %v2915
        %3174 = vmatprep.subr.bf16.mxu0 %v2914
        %3175 = vmatpush1.bf16.msra.mxu0 %v2913
        %3176 = vmatprep.subr.bf16.mxu0 %v2912
        %3177 = vmatpush1.bf16.msra.mxu0 %v2911
        %3178 = vmatprep.subr.bf16.mxu0 %v2910
        %3179 = vmatpush1.bf16.msra.mxu0 %v2909
        %3180 = vmatprep.subr.bf16.mxu0 %v2908
        %3181 = vmatpush1.bf16.msra.mxu0 %v2907
        %3182 = vmatprep.subr.bf16.mxu0 %v2906
        %3183 = vmatpush1.bf16.msra.mxu0 %v2905
        %3184 = vmatprep.subr.bf16.mxu0 %v2904
        %3185 = vmatpush1.bf16.msra.mxu0 %v2903
        %3186 = vmatprep.subr.bf16.mxu0 %v2934
        %3187 = vmatpush2.bf16.msra.mxu0 %v2933
        %3188 = vmatprep.subr.bf16.mxu0 %v2932
        %3189 = vmatpush2.bf16.msra.mxu0 %v2931
        %3190 = vmatprep.subr.bf16.mxu0 %v2930
        %3191 = vmatpush2.bf16.msra.mxu0 %v2929
        %3192 = vmatprep.subr.bf16.mxu0 %v2928
        %3193 = vmatpush2.bf16.msra.mxu0 %v2927
        %3194 = vmatprep.subr.bf16.mxu0 %v2926
        %3195 = vmatpush2.bf16.msra.mxu0 %v2925
        %3196 = vmatprep.subr.bf16.mxu0 %v2924
        %3197 = vmatpush2.bf16.msra.mxu0 %v2923
        %3198 = vmatprep.subr.bf16.mxu0 %v2922
        %3199 = vmatpush2.bf16.msra.mxu0 %v2921
        %3200 = vmatprep.subr.bf16.mxu0 %v2920
        %3201 = vmatpush2.bf16.msra.mxu0 %v2919
        %3202 = vmatprep.mubr.bf16.mxu0 %v2512
        %3203 = vmatmul.mubr.bf16.gmra.mxu0 %v2511
        %v3204 = vpop.f32.mrf.mxu0
        %v3205 = vadd.f32 %v3163, %v3204
        %v3206 = vpop.f32.mrf.mxu0
        %v3207 = vadd.f32 %v3167, %v3206
        %v3208 = vpop.f32.mrf.mxu0
        %v3209 = vpop.f32.mrf.mxu0
        %3210 = vdwg.mxu0
        %3211 = vmatprep.subr.bf16.mxu0 %v2950
        %3212 = vmatpush1.bf16.msra.mxu0 %v2949
        %3213 = vmatprep.subr.bf16.mxu0 %v2948
        %3214 = vmatpush1.bf16.msra.mxu0 %v2947
        %3215 = vmatprep.subr.bf16.mxu0 %v2946
        %3216 = vmatpush1.bf16.msra.mxu0 %v2945
        %3217 = vmatprep.subr.bf16.mxu0 %v2944
        %3218 = vmatpush1.bf16.msra.mxu0 %v2943
        %3219 = vmatprep.subr.bf16.mxu0 %v2942
        %3220 = vmatpush1.bf16.msra.mxu0 %v2941
        %3221 = vmatprep.subr.bf16.mxu0 %v2940
        %3222 = vmatpush1.bf16.msra.mxu0 %v2939
        %3223 = vmatprep.subr.bf16.mxu0 %v2938
        %3224 = vmatpush1.bf16.msra.mxu0 %v2937
        %3225 = vmatprep.subr.bf16.mxu0 %v2936
        %3226 = vmatpush1.bf16.msra.mxu0 %v2935
        %3227 = vmatprep.subr.bf16.mxu0 %v2966
        %3228 = vmatpush2.bf16.msra.mxu0 %v2965
        %3229 = vmatprep.subr.bf16.mxu0 %v2964
        %3230 = vmatpush2.bf16.msra.mxu0 %v2963
        %3231 = vmatprep.subr.bf16.mxu0 %v2962
        %3232 = vmatpush2.bf16.msra.mxu0 %v2961
        %3233 = vmatprep.subr.bf16.mxu0 %v2960
        %3234 = vmatpush2.bf16.msra.mxu0 %v2959
        %3235 = vmatprep.subr.bf16.mxu0 %v2958
        %3236 = vmatpush2.bf16.msra.mxu0 %v2957
        %3237 = vmatprep.subr.bf16.mxu0 %v2956
        %3238 = vmatpush2.bf16.msra.mxu0 %v2955
        %3239 = vmatprep.subr.bf16.mxu0 %v2954
        %3240 = vmatpush2.bf16.msra.mxu0 %v2953
        %3241 = vmatprep.subr.bf16.mxu0 %v2952
        %3242 = vmatpush2.bf16.msra.mxu0 %v2951
        %3243 = vmatprep.mubr.bf16.mxu0 %v2514
        %3244 = vmatmul.mubr.bf16.gmra.mxu0 %v2513
        %v3245 = vpop.f32.mrf.mxu0
        %v3246 = vadd.f32 %v3205, %v3245
        %v3247 = vpop.f32.mrf.mxu0
        %v3248 = vadd.f32 %v3207, %v3247
        %v3249 = vpop.f32.mrf.mxu0
        %v3250 = vpop.f32.mrf.mxu0
        %3251 = vdwg.mxu0
        %3252 = vmatprep.subr.bf16.mxu0 %v2982
        %3253 = vmatpush1.bf16.msra.mxu0 %v2981
        %3254 = vmatprep.subr.bf16.mxu0 %v2980
        %3255 = vmatpush1.bf16.msra.mxu0 %v2979
        %3256 = vmatprep.subr.bf16.mxu0 %v2978
        %3257 = vmatpush1.bf16.msra.mxu0 %v2977
        %3258 = vmatprep.subr.bf16.mxu0 %v2976
        %3259 = vmatpush1.bf16.msra.mxu0 %v2975
        %3260 = vmatprep.subr.bf16.mxu0 %v2974
        %3261 = vmatpush1.bf16.msra.mxu0 %v2973
        %3262 = vmatprep.subr.bf16.mxu0 %v2972
        %3263 = vmatpush1.bf16.msra.mxu0 %v2971
        %3264 = vmatprep.subr.bf16.mxu0 %v2970
        %3265 = vmatpush1.bf16.msra.mxu0 %v2969
        %3266 = vmatprep.subr.bf16.mxu0 %v2968
        %3267 = vmatpush1.bf16.msra.mxu0 %v2967
        %3268 = vmatprep.subr.bf16.mxu0 %v2998
        %3269 = vmatpush2.bf16.msra.mxu0 %v2997
        %3270 = vmatprep.subr.bf16.mxu0 %v2996
        %3271 = vmatpush2.bf16.msra.mxu0 %v2995
        %3272 = vmatprep.subr.bf16.mxu0 %v2994
        %3273 = vmatpush2.bf16.msra.mxu0 %v2993
        %3274 = vmatprep.subr.bf16.mxu0 %v2992
        %3275 = vmatpush2.bf16.msra.mxu0 %v2991
        %3276 = vmatprep.subr.bf16.mxu0 %v2990
        %3277 = vmatpush2.bf16.msra.mxu0 %v2989
        %3278 = vmatprep.subr.bf16.mxu0 %v2988
        %3279 = vmatpush2.bf16.msra.mxu0 %v2987
        %3280 = vmatprep.subr.bf16.mxu0 %v2986
        %3281 = vmatpush2.bf16.msra.mxu0 %v2985
        %3282 = vmatprep.subr.bf16.mxu0 %v2984
        %3283 = vmatpush2.bf16.msra.mxu0 %v2983
        %3284 = vmatprep.mubr.bf16.mxu0 %v2516
        %3285 = vmatmul.mubr.bf16.gmra.mxu0 %v2515
        %v3286 = vpop.f32.mrf.mxu0
        %v3287 = vadd.f32 %v3246, %v3286
        %v3288 = vpop.f32.mrf.mxu0
        %v3289 = vadd.f32 %v3248, %v3288
        %v3290 = vpop.f32.mrf.mxu0
        %v3291 = vpop.f32.mrf.mxu0
        %3292 = vdwg.mxu0
        %3293 = vmatprep.subr.bf16.mxu0 %v3014
        %3294 = vmatpush1.bf16.msra.mxu0 %v3013
        %3295 = vmatprep.subr.bf16.mxu0 %v3012
        %3296 = vmatpush1.bf16.msra.mxu0 %v3011
        %3297 = vmatprep.subr.bf16.mxu0 %v3010
        %3298 = vmatpush1.bf16.msra.mxu0 %v3009
        %3299 = vmatprep.subr.bf16.mxu0 %v3008
        %3300 = vmatpush1.bf16.msra.mxu0 %v3007
        %3301 = vmatprep.subr.bf16.mxu0 %v3006
        %3302 = vmatpush1.bf16.msra.mxu0 %v3005
        %3303 = vmatprep.subr.bf16.mxu0 %v3004
        %3304 = vmatpush1.bf16.msra.mxu0 %v3003
        %3305 = vmatprep.subr.bf16.mxu0 %v3002
        %3306 = vmatpush1.bf16.msra.mxu0 %v3001
        %3307 = vmatprep.subr.bf16.mxu0 %v3000
        %3308 = vmatpush1.bf16.msra.mxu0 %v2999
        %3309 = vmatprep.subr.bf16.mxu0 %v3030
        %3310 = vmatpush2.bf16.msra.mxu0 %v3029
        %3311 = vmatprep.subr.bf16.mxu0 %v3028
        %3312 = vmatpush2.bf16.msra.mxu0 %v3027
        %3313 = vmatprep.subr.bf16.mxu0 %v3026
        %3314 = vmatpush2.bf16.msra.mxu0 %v3025
        %3315 = vmatprep.subr.bf16.mxu0 %v3024
        %3316 = vmatpush2.bf16.msra.mxu0 %v3023
        %3317 = vmatprep.subr.bf16.mxu0 %v3022
        %3318 = vmatpush2.bf16.msra.mxu0 %v3021
        %3319 = vmatprep.subr.bf16.mxu0 %v3020
        %3320 = vmatpush2.bf16.msra.mxu0 %v3019
        %3321 = vmatprep.subr.bf16.mxu0 %v3018
        %3322 = vmatpush2.bf16.msra.mxu0 %v3017
        %3323 = vmatprep.subr.bf16.mxu0 %v3016
        %3324 = vmatpush2.bf16.msra.mxu0 %v3015
        %3325 = vmatprep.mubr.bf16.mxu0 %v2518
        %3326 = vmatmul.mubr.bf16.gmra.mxu0 %v2517
        %v3327 = vpop.f32.mrf.mxu0
        %v3328 = vadd.f32 %v3287, %v3327
        %v3329 = vpop.f32.mrf.mxu0
        %v3330 = vadd.f32 %v3289, %v3329
        %v3331 = vpop.f32.mrf.mxu0
        %v3332 = vpop.f32.mrf.mxu0
        %3333 = vdwg.mxu0
        %vm3334 = vcmp.ge.f32.partialorder %v3328, 0.0
        %vm3335 = vcmp.ge.f32.partialorder %v3330, 0.0
        %v3338 = vcombine.low %v3328, %v3330
        %v3339 = vrot.slane %v3338, 7
        %v3341 = vmul.f32 %v2510, %v3339
        %v3343 = vlaneseq
        %v3344 = vshrl.u32 %v3343, 7
        %v3345 = vsub.s32 1, %v3344
        %v3346 = vrot.slane %v3341, %v3345
        %v3347 = vlaneseq
        %v3348 = vshrl.u32 %v3347, 7
        %v3349 = vsub.s32 5, %v3348
        %v3350 = vrot.slane %v3341, %v3349
        %v3353 = vsel %vm3334, %v3328, %v3346
        %v3354 = vsel %vm3335, %v3330, %v3350
        %v3355 = vlaneseq
        %v3356 = vshrl.u32 %v3355, 7
        %v3357 = vsub.s32 2, %v3356
        %v3358 = vrot.slane %v2510, %v3357
        %v3359 = vlaneseq
        %v3360 = vshrl.u32 %v3359, 7
        %v3361 = vsub.s32 6, %v3360
        %v3362 = vrot.slane %v2510, %v3361
        %v3365 = vadd.f32 %v3353, %v3358
        %v3366 = vadd.f32 %v3354, %v3362
        %v3367 = vld [vmem:[%s229] sm:$0xff]
        %v3368 = vld [vmem:[%s229 + $0x8] sm:$0xff]
        %v3369 = vld [vmem:[%s229 + $0x10] sm:$0xff]
        %v3370 = vld [vmem:[%s229 + $0x18] sm:$0xff]
        %v3371 = vld [vmem:[%s229 + $0x20] sm:$0xff]
        %v3372 = vld [vmem:[%s229 + $0x28] sm:$0x3]
        %3373 = vst [vmem:[#allocation2] sm:$0xff] 0.0
        %3374 = vst [vmem:[#allocation2 + $0x8] sm:$0xff] 0.0
        %3375 = vst [vmem:[#allocation2 + $0x10] sm:$0xff] 0.0
        %3376 = vst [vmem:[#allocation2 + $0x18] sm:$0xff] 0.0
        %3377 = vst [vmem:[#allocation2 + $0x20] sm:$0xff] 0.0
        %3378 = vst [vmem:[#allocation2 + $0x28] sm:$0xff] 0.0
        %3379 = vst [vmem:[#allocation2 + $0x30] sm:$0xff] 0.0
        %3380 = vst [vmem:[#allocation2 + $0x38] sm:$0xff] 0.0
        %3381 = vst [vmem:[#allocation2 + $0x40] sm:$0xff] 0.0
        %3382 = vst [vmem:[#allocation2 + $0x48] sm:$0xff] 0.0
        %3383 = vst [vmem:[#allocation2 + $0x50] sm:$0xff] 0.0
        %3384 = vst [vmem:[#allocation2 + $0x58] sm:$0xff] 0.0
        %3385 = vst [vmem:[#allocation2 + $0x60] sm:$0xff] 0.0
        %3386 = vst [vmem:[#allocation2 + $0x68] sm:$0xff] 0.0
        %3387 = vst [vmem:[#allocation2 + $0x70] sm:$0xff] 0.0
        %3388 = vst [vmem:[#allocation2 + $0x78] sm:$0xff] 0.0
        %3389 = vst [vmem:[#allocation2 + $0x80] sm:$0xff] 0.0
        %3390 = vst.msk [vmem:[#allocation2 + $0x4] sm:$0xff] %vm264, %v3367
        %3391 = vst.msk [vmem:[#allocation2 + $0xc] sm:$0xff] %vm264, %v3368
        %3392 = vst.msk [vmem:[#allocation2 + $0x14] sm:$0xff] %vm264, %v3369
        %3393 = vst.msk [vmem:[#allocation2 + $0x1c] sm:$0xff] %vm264, %v3370
        %3394 = vst.msk [vmem:[#allocation2 + $0x24] sm:$0xff] %vm264, %v3371
        %vm3395 = vcmask 25600
        %3396 = vst.msk [vmem:[#allocation2 + $0x2c] sm:$0x3] %vm3395, %v3372
        %v3397 = vld [vmem:[#allocation2] ss:$2 sm:$0xff]
        %v3398 = vld [vmem:[%s282] ss:$2 sm:$0xff]
        %v3399 = vld [vmem:[%s284] ss:$2 sm:$0x3f]
        %v3400 = vld [vmem:[%s296] ss:$2 sm:$0xff]
        %v3401 = vld [vmem:[%s298] ss:$2 sm:$0xff]
        %v3402 = vld [vmem:[%s300] ss:$2 sm:$0x3f]
        %v3403 = vld [vmem:[%s312] ss:$2 sm:$0xff]
        %v3404 = vld [vmem:[%s314] ss:$2 sm:$0xff]
        %v3405 = vld [vmem:[%s316] ss:$2 sm:$0x3f]
        %v3406 = vld [vmem:[%s328] ss:$2 sm:$0xff]
        %v3407 = vld [vmem:[%s330] ss:$2 sm:$0xff]
        %v3408 = vld [vmem:[%s332] ss:$2 sm:$0x3f]
        %v3409 = vld [vmem:[%s344] ss:$2 sm:$0xff]
        %v3410 = vld [vmem:[%s346] ss:$2 sm:$0xff]
        %v3411 = vld [vmem:[%s348] ss:$2 sm:$0x3f]
        %v3412 = vld [vmem:[%s360] ss:$2 sm:$0xff]
        %v3413 = vld [vmem:[%s362] ss:$2 sm:$0xff]
        %v3414 = vld [vmem:[%s364] ss:$2 sm:$0x3f]
        %v3415 = vld [vmem:[%s376] ss:$2 sm:$0xff]
        %v3416 = vld [vmem:[%s378] ss:$2 sm:$0xff]
        %v3417 = vld [vmem:[%s380] ss:$2 sm:$0x3f]
        %v3418 = vld [vmem:[%s392] ss:$2 sm:$0xff]
        %v3419 = vld [vmem:[%s394] ss:$2 sm:$0xff]
        %v3420 = vld [vmem:[%s396] ss:$2 sm:$0x3f]
        %3424 = vrot.lane.b32.xlu0 %v3400, 4
        %v3425 = vpop.permute.xlu0 %3424
        %3426 = vrot.lane.b32.xlu0 %v3401, 4
        %v3427 = vpop.permute.xlu0 %3426
        %3428 = vrot.lane.b32.xlu0 %v3402, 4
        %v3429 = vpop.permute.xlu0 %3428
        %3436 = vrot.lane.b32.xlu0 %v3403, 8
        %v3437 = vpop.permute.xlu0 %3436
        %3438 = vrot.lane.b32.xlu0 %v3404, 8
        %v3439 = vpop.permute.xlu0 %3438
        %3440 = vrot.lane.b32.xlu0 %v3405, 8
        %v3441 = vpop.permute.xlu0 %3440
        %3448 = vrot.lane.b32.xlu0 %v3406, 12
        %v3449 = vpop.permute.xlu0 %3448
        %3450 = vrot.lane.b32.xlu0 %v3407, 12
        %v3451 = vpop.permute.xlu0 %3450
        %3452 = vrot.lane.b32.xlu0 %v3408, 12
        %v3453 = vpop.permute.xlu0 %3452
        %3460 = vrot.lane.b32.xlu0 %v3409, 16
        %v3461 = vpop.permute.xlu0 %3460
        %3462 = vrot.lane.b32.xlu0 %v3410, 16
        %v3463 = vpop.permute.xlu0 %3462
        %3464 = vrot.lane.b32.xlu0 %v3411, 16
        %v3465 = vpop.permute.xlu0 %3464
        %3472 = vrot.lane.b32.xlu0 %v3412, 20
        %v3473 = vpop.permute.xlu0 %3472
        %3474 = vrot.lane.b32.xlu0 %v3413, 20
        %v3475 = vpop.permute.xlu0 %3474
        %3476 = vrot.lane.b32.xlu0 %v3414, 20
        %v3477 = vpop.permute.xlu0 %3476
        %3484 = vrot.lane.b32.xlu0 %v3415, 24
        %v3485 = vpop.permute.xlu0 %3484
        %3486 = vrot.lane.b32.xlu0 %v3416, 24
        %v3487 = vpop.permute.xlu0 %3486
        %3488 = vrot.lane.b32.xlu0 %v3417, 24
        %v3489 = vpop.permute.xlu0 %3488
        %3496 = vrot.lane.b32.xlu0 %v3418, 28
        %v3497 = vpop.permute.xlu0 %3496
        %3498 = vrot.lane.b32.xlu0 %v3419, 28
        %v3499 = vpop.permute.xlu0 %3498
        %3500 = vrot.lane.b32.xlu0 %v3420, 28
        %v3501 = vpop.permute.xlu0 %3500
        %v3505 = vsel %vm264, %v3397, %v3425
        %v3506 = vsel %vm264, %v3398, %v3427
        %v3507 = vsel %vm264, %v3399, %v3429
        %v3508 = vsel %vm640, %v3505, %v3437
        %v3509 = vsel %vm640, %v3506, %v3439
        %v3510 = vsel %vm640, %v3507, %v3441
        %v3511 = vsel %vm649, %v3508, %v3449
        %v3512 = vsel %vm649, %v3509, %v3451
        %v3513 = vsel %vm649, %v3510, %v3453
        %v3514 = vsel %vm658, %v3511, %v3461
        %v3515 = vsel %vm658, %v3512, %v3463
        %v3516 = vsel %vm658, %v3513, %v3465
        %v3517 = vsel %vm667, %v3514, %v3473
        %v3518 = vsel %vm667, %v3515, %v3475
        %v3519 = vsel %vm667, %v3516, %v3477
        %v3520 = vsel %vm676, %v3517, %v3485
        %v3521 = vsel %vm676, %v3518, %v3487
        %v3522 = vsel %vm676, %v3519, %v3489
        %v3523 = vsel %vm685, %v3520, %v3497
        %v3524 = vsel %vm685, %v3521, %v3499
        %v3525 = vsel %vm685, %v3522, %v3501
        %v3526 = vld [vmem:[#allocation3 + $0x9c0] sm:$0xf]
        %v3527 = vld [vmem:[#allocation3 + $0x9c8] sm:$0xf]
        %v3528 = vld [vmem:[#allocation3 + $0x9d0] sm:$0xf]
        %v3529 = vld [vmem:[#allocation3 + $0x9d8] sm:$0xf]
        %s3530 = scalar_lea.vmem %s3, 56
        %v3531 = vld [vmem:[%s3530] sm:$0x77]
        %v3532 = vpack.c.bf16 %v3524, %v3523
        %v3533 = vpack.c.bf16 %v3525, %v3525
        %v3534 = vlaneseq
        %v3535 = vshrl.u32 %v3534, 7
        %v3536 = vsub.s32 0, %v3535
        %v3537 = vrot.slane %v3531, %v3536
        %v3542 = vunpack.c.l.b16 %v3526
        %v3543 = vunpack.c.l.b16 %v3527
        %v3544 = vunpack.c.l.b16 %v3528
        %v3545 = vunpack.c.l.b16 %v3529
        %v3546 = vpack.c.b16 %v3543, %v3542
        %v3547 = vpack.c.b16 %v3545, %v3544
        %v3551 = vsel %vm719, %v3532, 0
        %v3554 = vsel %vm719, %v3533, 0
        %3556 = vmatprep.subr.bf16.mxu0 0
        %3557 = vmatpush1.bf16.msra.mxu0 0
        %3558 = vmatprep.subr.bf16.mxu0 0
        %3559 = vmatpush1.bf16.msra.mxu0 0
        %3560 = vmatprep.subr.bf16.mxu0 0
        %3561 = vmatpush1.bf16.msra.mxu0 0
        %3562 = vmatprep.subr.bf16.mxu0 0
        %3563 = vmatpush1.bf16.msra.mxu0 0
        %3564 = vmatprep.subr.bf16.mxu0 0
        %3565 = vmatpush1.bf16.msra.mxu0 0
        %3566 = vmatprep.subr.bf16.mxu0 0
        %3567 = vmatpush1.bf16.msra.mxu0 0
        %3568 = vmatprep.subr.bf16.mxu0 0
        %3569 = vmatpush1.bf16.msra.mxu0 %v3547
        %3570 = vmatprep.subr.bf16.mxu0 0
        %3571 = vmatpush1.bf16.msra.mxu0 %v3546
        %3572 = vmatprep.subr.bf16.mxu0 0
        %3573 = vmatpush2.bf16.msra.mxu0 0
        %3574 = vmatprep.subr.bf16.mxu0 0
        %3575 = vmatpush2.bf16.msra.mxu0 0
        %3576 = vmatprep.subr.bf16.mxu0 0
        %3577 = vmatpush2.bf16.msra.mxu0 0
        %3578 = vmatprep.subr.bf16.mxu0 0
        %3579 = vmatpush2.bf16.msra.mxu0 0
        %3580 = vmatprep.subr.bf16.mxu0 0
        %3581 = vmatpush2.bf16.msra.mxu0 0
        %3582 = vmatprep.subr.bf16.mxu0 0
        %3583 = vmatpush2.bf16.msra.mxu0 0
        %3584 = vmatprep.subr.bf16.mxu0 0
        %3585 = vmatpush2.bf16.msra.mxu0 0
        %3586 = vmatprep.subr.bf16.mxu0 0
        %3587 = vmatpush2.bf16.msra.mxu0 0
        %3588 = vmatprep.mubr.bf16.mxu0 0
        %3589 = vmatmul.mubr.bf16.gmra.mxu0 %v3551
        %v3590 = vpop.f32.mrf.mxu0
        %v3591 = vadd.f32 %v3537, %v3590
        %v3592 = vpop.f32.mrf.mxu0
        %v3593 = vpop.f32.mrf.mxu0
        %v3594 = vadd.f32 %v3537, %v3593
        %v3595 = vpop.f32.mrf.mxu0
        %3596 = vmatprep.mubr.bf16.mxu0 0
        %3597 = vmatmul.mubr.bf16.gmra.mxu0 %v3554
        %v3598 = vpop.f32.mrf.mxu0
        %v3599 = vadd.f32 %v3537, %v3598
        %v3600 = vpop.f32.mrf.mxu0
        %v3601 = vpop.f32.mrf.mxu0
        %v3602 = vpop.f32.mrf.mxu0
        %3603 = vdwg.mxu0
        %vm3604 = vcmp.ge.f32.partialorder %v3591, 0.0
        %vm3605 = vcmp.ge.f32.partialorder %v3594, 0.0
        %vm3606 = vcmp.ge.f32.partialorder %v3599, 0.0
        %v3607 = vlaneseq
        %v3608 = vshrl.u32 %v3607, 7
        %v3609 = vsub.s32 1, %v3608
        %v3610 = vrot.slane %v3531, %v3609
        %v3611 = vmul.f32 %v3610, %v3591
        %v3612 = vmul.f32 %v3610, %v3594
        %v3613 = vmul.f32 %v3610, %v3599
        %v3614 = vsel %vm3604, %v3591, %v3611
        %v3615 = vsel %vm3605, %v3594, %v3612
        %v3616 = vsel %vm3606, %v3599, %v3613
        %v3617 = vlaneseq
        %v3618 = vshrl.u32 %v3617, 7
        %v3619 = vsub.s32 2, %v3618
        %v3620 = vrot.slane %v3531, %v3619
        %v3621 = vadd.f32 %v3614, %v3620
        %v3622 = vadd.f32 %v3615, %v3620
        %v3623 = vadd.f32 %v3616, %v3620
        %3624 = vst [vmem:[#allocation2] sm:$0xff] 0.0
        %3625 = vst [vmem:[#allocation2 + $0x8] sm:$0xff] 0.0
        %3626 = vst [vmem:[#allocation2 + $0x10] sm:$0xff] 0.0
        %3627 = vst [vmem:[#allocation2 + $0x18] sm:$0xff] 0.0
        %3628 = vst [vmem:[#allocation2 + $0x20] sm:$0xff] 0.0
        %3629 = vst [vmem:[#allocation2 + $0x28] sm:$0xff] 0.0
        %3630 = vst [vmem:[#allocation2 + $0x30] sm:$0xff] 0.0
        %3631 = vst [vmem:[#allocation2 + $0x38] sm:$0xff] 0.0
        %3632 = vst [vmem:[#allocation2 + $0x40] sm:$0xff] 0.0
        %3633 = vst [vmem:[#allocation2 + $0x48] sm:$0xff] 0.0
        %3634 = vst [vmem:[#allocation2 + $0x50] sm:$0xff] 0.0
        %3635 = vst [vmem:[#allocation2 + $0x58] sm:$0xff] 0.0
        %3636 = vst [vmem:[#allocation2 + $0x60] sm:$0xff] 0.0
        %3637 = vst [vmem:[#allocation2 + $0x68] sm:$0xff] 0.0
        %3638 = vst [vmem:[#allocation2 + $0x70] sm:$0xff] 0.0
        %3639 = vst [vmem:[#allocation2 + $0x78] sm:$0xff] 0.0
        %3640 = vst [vmem:[#allocation2 + $0x80] sm:$0xff] 0.0
        %3641 = vst.msk [vmem:[#allocation2 + $0x1] sm:$0xff] %vm719, %v3621
        %3642 = vst.msk [vmem:[#allocation2 + $0x9] sm:$0xff] %vm719, %v3622
        %vm3643 = vcmask 259072
        %3644 = vst.msk [vmem:[#allocation2 + $0x11] sm:$0x3f] %vm3643, %v3623
        %v3645 = vld [vmem:[#allocation2] sm:$0xff]
        %v3646 = vld [vmem:[#allocation2 + $0x8] sm:$0xff]
        %v3647 = vld [vmem:[#allocation2 + $0x10] sm:$0x3f]
        %v3648 = vld [vmem:[#allocation2 + $0x1] sm:$0xff]
        %v3649 = vld [vmem:[#allocation2 + $0x9] sm:$0xff]
        %v3650 = vld [vmem:[#allocation2 + $0x11] sm:$0x3f]
        %v3651 = vld [vmem:[#allocation2 + $0x2] sm:$0xff]
        %v3652 = vld [vmem:[#allocation2 + $0xa] sm:$0xff]
        %v3653 = vld [vmem:[#allocation2 + $0x12] sm:$0x3f]
        %3657 = vrot.lane.b32.xlu0 %v3648, 32
        %v3658 = vpop.permute.xlu0 %3657
        %3659 = vrot.lane.b32.xlu0 %v3649, 32
        %v3660 = vpop.permute.xlu0 %3659
        %3661 = vrot.lane.b32.xlu0 %v3650, 32
        %v3662 = vpop.permute.xlu0 %3661
        %3669 = vrot.lane.b32.xlu0 %v3651, 64
        %v3670 = vpop.permute.xlu0 %3669
        %3671 = vrot.lane.b32.xlu0 %v3652, 64
        %v3672 = vpop.permute.xlu0 %3671
        %3673 = vrot.lane.b32.xlu0 %v3653, 64
        %v3674 = vpop.permute.xlu0 %3673
        %v3678 = vsel %vm719, %v3645, %v3658
        %v3679 = vsel %vm719, %v3646, %v3660
        %v3680 = vsel %vm719, %v3647, %v3662
        %v3681 = vsel %vm958, %v3678, %v3670
        %v3682 = vsel %vm958, %v3679, %v3672
        %v3683 = vsel %vm958, %v3680, %v3674
        %v3684 = vld [vmem:[#allocation3 + $0x9e0] sm:$0xf]
        %v3685 = vld [vmem:[#allocation3 + $0x9e8] sm:$0xf]
        %v3686 = vld [vmem:[#allocation3 + $0x9f0] sm:$0xf]
        %v3687 = vld [vmem:[#allocation3 + $0x9f8] sm:$0xf]
        %v3688 = vld [vmem:[#allocation3 + $0xa00] sm:$0xf]
        %v3689 = vld [vmem:[#allocation3 + $0xa08] sm:$0xf]
        %v3690 = vld [vmem:[#allocation3 + $0xa10] sm:$0xf]
        %v3691 = vld [vmem:[#allocation3 + $0xa18] sm:$0xf]
        %v3692 = vld [vmem:[#allocation3 + $0xa20] sm:$0xf]
        %v3693 = vld [vmem:[#allocation3 + $0xa28] sm:$0xf]
        %v3694 = vld [vmem:[#allocation3 + $0xa30] sm:$0xf]
        %v3695 = vld [vmem:[#allocation3 + $0xa38] sm:$0xf]
        %s3696 = scalar_lea.vmem %s3, 64
        %v3697 = vld [vmem:[%s3696] sm:$0x77]
        %v3698 = vpack.c.bf16 %v3682, %v3681
        %v3699 = vpack.c.bf16 %v3683, %v3683
        %v3700 = vlaneseq
        %v3701 = vshrl.u32 %v3700, 7
        %v3702 = vsub.s32 0, %v3701
        %v3703 = vrot.slane %v3697, %v3702
        %v3716 = vunpack.c.l.b16 %v3684
        %v3717 = vunpack.c.l.b16 %v3685
        %v3718 = vunpack.c.l.b16 %v3686
        %v3719 = vunpack.c.l.b16 %v3687
        %v3720 = vunpack.c.l.b16 %v3688
        %v3721 = vunpack.c.l.b16 %v3689
        %v3722 = vunpack.c.l.b16 %v3690
        %v3723 = vunpack.c.l.b16 %v3691
        %v3724 = vunpack.c.l.b16 %v3692
        %v3725 = vunpack.c.l.b16 %v3693
        %v3726 = vunpack.c.l.b16 %v3694
        %v3727 = vunpack.c.l.b16 %v3695
        %v3728 = vpack.c.b16 %v3717, %v3716
        %v3729 = vpack.c.b16 %v3719, %v3718
        %v3730 = vpack.c.b16 %v3721, %v3720
        %v3731 = vpack.c.b16 %v3723, %v3722
        %v3732 = vpack.c.b16 %v3725, %v3724
        %v3733 = vpack.c.b16 %v3727, %v3726
        %v3741 = vsel %vm1025, %v3698, 0
        %v3744 = vsel %vm1025, %v3699, 0
        %3746 = vmatprep.subr.bf16.mxu0 0
        %3747 = vmatpush1.bf16.msra.mxu0 0
        %3748 = vmatprep.subr.bf16.mxu0 0
        %3749 = vmatpush1.bf16.msra.mxu0 0
        %3750 = vmatprep.subr.bf16.mxu0 0
        %3751 = vmatpush1.bf16.msra.mxu0 %v3733
        %3752 = vmatprep.subr.bf16.mxu0 0
        %3753 = vmatpush1.bf16.msra.mxu0 %v3732
        %3754 = vmatprep.subr.bf16.mxu0 0
        %3755 = vmatpush1.bf16.msra.mxu0 %v3731
        %3756 = vmatprep.subr.bf16.mxu0 0
        %3757 = vmatpush1.bf16.msra.mxu0 %v3730
        %3758 = vmatprep.subr.bf16.mxu0 0
        %3759 = vmatpush1.bf16.msra.mxu0 %v3729
        %3760 = vmatprep.subr.bf16.mxu0 0
        %3761 = vmatpush1.bf16.msra.mxu0 %v3728
        %3762 = vmatprep.subr.bf16.mxu0 0
        %3763 = vmatpush2.bf16.msra.mxu0 0
        %3764 = vmatprep.subr.bf16.mxu0 0
        %3765 = vmatpush2.bf16.msra.mxu0 0
        %3766 = vmatprep.subr.bf16.mxu0 0
        %3767 = vmatpush2.bf16.msra.mxu0 0
        %3768 = vmatprep.subr.bf16.mxu0 0
        %3769 = vmatpush2.bf16.msra.mxu0 0
        %3770 = vmatprep.subr.bf16.mxu0 0
        %3771 = vmatpush2.bf16.msra.mxu0 0
        %3772 = vmatprep.subr.bf16.mxu0 0
        %3773 = vmatpush2.bf16.msra.mxu0 0
        %3774 = vmatprep.subr.bf16.mxu0 0
        %3775 = vmatpush2.bf16.msra.mxu0 0
        %3776 = vmatprep.subr.bf16.mxu0 0
        %3777 = vmatpush2.bf16.msra.mxu0 0
        %3778 = vmatprep.mubr.bf16.mxu0 0
        %3779 = vmatmul.mubr.bf16.gmra.mxu0 %v3741
        %v3780 = vpop.f32.mrf.mxu0
        %v3781 = vadd.f32 %v3703, %v3780
        %v3782 = vpop.f32.mrf.mxu0
        %v3783 = vpop.f32.mrf.mxu0
        %v3784 = vadd.f32 %v3703, %v3783
        %v3785 = vpop.f32.mrf.mxu0
        %3786 = vmatprep.mubr.bf16.mxu0 0
        %3787 = vmatmul.mubr.bf16.gmra.mxu0 %v3744
        %v3788 = vpop.f32.mrf.mxu0
        %v3789 = vadd.f32 %v3703, %v3788
        %v3790 = vpop.f32.mrf.mxu0
        %v3791 = vpop.f32.mrf.mxu0
        %v3792 = vpop.f32.mrf.mxu0
        %3793 = vdwg.mxu0
        %vm3794 = vcmp.ge.f32.partialorder %v3781, 0.0
        %vm3795 = vcmp.ge.f32.partialorder %v3784, 0.0
        %vm3796 = vcmp.ge.f32.partialorder %v3789, 0.0
        %v3797 = vlaneseq
        %v3798 = vshrl.u32 %v3797, 7
        %v3799 = vsub.s32 1, %v3798
        %v3800 = vrot.slane %v3697, %v3799
        %v3801 = vmul.f32 %v3800, %v3781
        %v3802 = vmul.f32 %v3800, %v3784
        %v3803 = vmul.f32 %v3800, %v3789
        %v3804 = vsel %vm3794, %v3781, %v3801
        %v3805 = vsel %vm3795, %v3784, %v3802
        %v3806 = vsel %vm3796, %v3789, %v3803
        %v3807 = vlaneseq
        %v3808 = vshrl.u32 %v3807, 7
        %v3809 = vsub.s32 2, %v3808
        %v3810 = vrot.slane %v3697, %v3809
        %v3811 = vadd.f32 %v3804, %v3810
        %v3812 = vadd.f32 %v3805, %v3810
        %v3813 = vadd.f32 %v3806, %v3810
        %3814 = vst [vmem:[#allocation2] sm:$0xff] 0.0
        %3815 = vst [vmem:[#allocation2 + $0x8] sm:$0xff] 0.0
        %3816 = vst [vmem:[#allocation2 + $0x10] sm:$0xff] 0.0
        %3817 = vst [vmem:[#allocation2 + $0x18] sm:$0xff] 0.0
        %3818 = vst [vmem:[#allocation2 + $0x20] sm:$0xff] 0.0
        %3819 = vst [vmem:[#allocation2 + $0x28] sm:$0xff] 0.0
        %3820 = vst [vmem:[#allocation2 + $0x30] sm:$0xff] 0.0
        %3821 = vst [vmem:[#allocation2 + $0x38] sm:$0xff] 0.0
        %3822 = vst [vmem:[#allocation2 + $0x40] sm:$0xff] 0.0
        %3823 = vst [vmem:[#allocation2 + $0x48] sm:$0xff] 0.0
        %3824 = vst [vmem:[#allocation2 + $0x50] sm:$0xff] 0.0
        %3825 = vst [vmem:[#allocation2 + $0x58] sm:$0xff] 0.0
        %3826 = vst [vmem:[#allocation2 + $0x60] sm:$0xff] 0.0
        %3827 = vst [vmem:[#allocation2 + $0x68] sm:$0xff] 0.0
        %3828 = vst [vmem:[#allocation2 + $0x70] sm:$0xff] 0.0
        %3829 = vst [vmem:[#allocation2 + $0x78] sm:$0xff] 0.0
        %3830 = vst [vmem:[#allocation2 + $0x80] sm:$0xff] 0.0
        %3831 = vst.msk [vmem:[#allocation2 + $0x4] sm:$0xff] %vm719, %v3811
        %3832 = vst.msk [vmem:[#allocation2 + $0xc] sm:$0xff] %vm719, %v3812
        %3833 = vst.msk [vmem:[#allocation2 + $0x14] sm:$0x3f] %vm3643, %v3813
        %v3834 = vld [vmem:[#allocation2] ss:$2 sm:$0xff]
        %v3835 = vld [vmem:[%s282] ss:$2 sm:$0xf]
        %v3836 = vld [vmem:[%s296] ss:$2 sm:$0xff]
        %v3837 = vld [vmem:[%s298] ss:$2 sm:$0xf]
        %v3838 = vld [vmem:[%s312] ss:$2 sm:$0xff]
        %v3839 = vld [vmem:[%s314] ss:$2 sm:$0xf]
        %v3840 = vld [vmem:[%s328] ss:$2 sm:$0xff]
        %v3841 = vld [vmem:[%s330] ss:$2 sm:$0xf]
        %v3842 = vld [vmem:[%s344] ss:$2 sm:$0xff]
        %v3843 = vld [vmem:[%s346] ss:$2 sm:$0xf]
        %v3844 = vld [vmem:[%s360] ss:$2 sm:$0xff]
        %v3845 = vld [vmem:[%s362] ss:$2 sm:$0xf]
        %v3846 = vld [vmem:[%s376] ss:$2 sm:$0xff]
        %v3847 = vld [vmem:[%s378] ss:$2 sm:$0xf]
        %v3848 = vld [vmem:[%s392] ss:$2 sm:$0xff]
        %v3849 = vld [vmem:[%s394] ss:$2 sm:$0xf]
        %3852 = vrot.lane.b32.xlu0 %v3836, 32
        %v3853 = vpop.permute.xlu0 %3852
        %3854 = vrot.lane.b32.xlu0 %v3837, 32
        %v3855 = vpop.permute.xlu0 %3854
        %3860 = vrot.lane.b32.xlu0 %v3838, 64
        %v3861 = vpop.permute.xlu0 %3860
        %3862 = vrot.lane.b32.xlu0 %v3839, 64
        %v3863 = vpop.permute.xlu0 %3862
        %3868 = vrot.lane.b32.xlu0 %v3840, 96
        %v3869 = vpop.permute.xlu0 %3868
        %3870 = vrot.lane.b32.xlu0 %v3841, 96
        %v3871 = vpop.permute.xlu0 %3870
        %3876 = vrot.lane.b32.xlu0 %v3844, 32
        %v3877 = vpop.permute.xlu0 %3876
        %3878 = vrot.lane.b32.xlu0 %v3845, 32
        %v3879 = vpop.permute.xlu0 %3878
        %3884 = vrot.lane.b32.xlu0 %v3846, 64
        %v3885 = vpop.permute.xlu0 %3884
        %3886 = vrot.lane.b32.xlu0 %v3847, 64
        %v3887 = vpop.permute.xlu0 %3886
        %3892 = vrot.lane.b32.xlu0 %v3848, 96
        %v3893 = vpop.permute.xlu0 %3892
        %3894 = vrot.lane.b32.xlu0 %v3849, 96
        %v3895 = vpop.permute.xlu0 %3894
        %v3898 = vsel %vm719, %v3834, %v3853
        %v3899 = vsel %vm719, %v3835, %v3855
        %v3900 = vsel %vm958, %v3898, %v3861
        %v3901 = vsel %vm958, %v3899, %v3863
        %v3902 = vsel %vm1025, %v3900, %v3869
        %v3903 = vsel %vm1025, %v3901, %v3871
        %v3904 = vsel %vm719, %v3842, %v3877
        %v3905 = vsel %vm719, %v3843, %v3879
        %v3906 = vsel %vm958, %v3904, %v3885
        %v3907 = vsel %vm958, %v3905, %v3887
        %v3908 = vsel %vm1025, %v3906, %v3893
        %v3909 = vsel %vm1025, %v3907, %v3895
        %v3910 = vld [vmem:[#allocation3 + $0xa40] sm:$0xf]
        %v3911 = vld [vmem:[#allocation3 + $0xa48] sm:$0xf]
        %v3912 = vld [vmem:[#allocation3 + $0xa50] sm:$0xf]
        %v3913 = vld [vmem:[#allocation3 + $0xa58] sm:$0xf]
        %v3914 = vld [vmem:[#allocation3 + $0xa60] sm:$0xf]
        %v3915 = vld [vmem:[#allocation3 + $0xa68] sm:$0xf]
        %v3916 = vld [vmem:[#allocation3 + $0xa70] sm:$0xf]
        %v3917 = vld [vmem:[#allocation3 + $0xa78] sm:$0xf]
        %v3918 = vld [vmem:[#allocation3 + $0xa80] sm:$0xf]
        %v3919 = vld [vmem:[#allocation3 + $0xa88] sm:$0xf]
        %v3920 = vld [vmem:[#allocation3 + $0xa90] sm:$0xf]
        %v3921 = vld [vmem:[#allocation3 + $0xa98] sm:$0xf]
        %v3922 = vld [vmem:[#allocation3 + $0xaa0] sm:$0xf]
        %v3923 = vld [vmem:[#allocation3 + $0xaa8] sm:$0xf]
        %v3924 = vld [vmem:[#allocation3 + $0xab0] sm:$0xf]
        %v3925 = vld [vmem:[#allocation3 + $0xab8] sm:$0xf]
        %v3926 = vld [vmem:[#allocation3 + $0xac0] sm:$0xf]
        %v3927 = vld [vmem:[#allocation3 + $0xac8] sm:$0xf]
        %v3928 = vld [vmem:[#allocation3 + $0xad0] sm:$0xf]
        %v3929 = vld [vmem:[#allocation3 + $0xad8] sm:$0xf]
        %v3930 = vld [vmem:[#allocation3 + $0xae0] sm:$0xf]
        %v3931 = vld [vmem:[#allocation3 + $0xae8] sm:$0xf]
        %v3932 = vld [vmem:[#allocation3 + $0xaf0] sm:$0xf]
        %v3933 = vld [vmem:[#allocation3 + $0xaf8] sm:$0xf]
        %v3934 = vld [vmem:[#allocation3 + $0xb00] sm:$0xf]
        %v3935 = vld [vmem:[#allocation3 + $0xb08] sm:$0xf]
        %v3936 = vld [vmem:[#allocation3 + $0xb10] sm:$0xf]
        %v3937 = vld [vmem:[#allocation3 + $0xb18] sm:$0xf]
        %v3938 = vld [vmem:[#allocation3 + $0xb20] sm:$0xf]
        %v3939 = vld [vmem:[#allocation3 + $0xb28] sm:$0xf]
        %v3940 = vld [vmem:[#allocation3 + $0xb30] sm:$0xf]
        %v3941 = vld [vmem:[#allocation3 + $0xb38] sm:$0xf]
        %s3942 = scalar_lea.vmem %s3, 72
        %v3943 = vld [vmem:[%s3942] sm:$0x77]
        %v3944 = vpack.c.bf16 %v3903, %v3902
        %v3945 = vpack.c.bf16 %v3909, %v3908
        %v3946 = vlaneseq
        %v3947 = vshrl.u32 %v3946, 7
        %v3948 = vsub.s32 0, %v3947
        %v3949 = vrot.slane %v3943, %v3948
        %v3982 = vunpack.c.l.b16 %v3910
        %v3983 = vunpack.c.l.b16 %v3911
        %v3984 = vunpack.c.l.b16 %v3912
        %v3985 = vunpack.c.l.b16 %v3913
        %v3986 = vunpack.c.l.b16 %v3914
        %v3987 = vunpack.c.l.b16 %v3915
        %v3988 = vunpack.c.l.b16 %v3916
        %v3989 = vunpack.c.l.b16 %v3917
        %v3990 = vunpack.c.l.b16 %v3918
        %v3991 = vunpack.c.l.b16 %v3919
        %v3992 = vunpack.c.l.b16 %v3920
        %v3993 = vunpack.c.l.b16 %v3921
        %v3994 = vunpack.c.l.b16 %v3922
        %v3995 = vunpack.c.l.b16 %v3923
        %v3996 = vunpack.c.l.b16 %v3924
        %v3997 = vunpack.c.l.b16 %v3925
        %v3998 = vunpack.c.l.b16 %v3926
        %v3999 = vunpack.c.l.b16 %v3927
        %v4000 = vunpack.c.l.b16 %v3928
        %v4001 = vunpack.c.l.b16 %v3929
        %v4002 = vunpack.c.l.b16 %v3930
        %v4003 = vunpack.c.l.b16 %v3931
        %v4004 = vunpack.c.l.b16 %v3932
        %v4005 = vunpack.c.l.b16 %v3933
        %v4006 = vunpack.c.l.b16 %v3934
        %v4007 = vunpack.c.l.b16 %v3935
        %v4008 = vunpack.c.l.b16 %v3936
        %v4009 = vunpack.c.l.b16 %v3937
        %v4010 = vunpack.c.l.b16 %v3938
        %v4011 = vunpack.c.l.b16 %v3939
        %v4012 = vunpack.c.l.b16 %v3940
        %v4013 = vunpack.c.l.b16 %v3941
        %v4014 = vpack.c.b16 %v3983, %v3982
        %v4015 = vpack.c.b16 %v3985, %v3984
        %v4016 = vpack.c.b16 %v3987, %v3986
        %v4017 = vpack.c.b16 %v3989, %v3988
        %v4018 = vpack.c.b16 %v3991, %v3990
        %v4019 = vpack.c.b16 %v3993, %v3992
        %v4020 = vpack.c.b16 %v3995, %v3994
        %v4021 = vpack.c.b16 %v3997, %v3996
        %v4022 = vpack.c.b16 %v3999, %v3998
        %v4023 = vpack.c.b16 %v4001, %v4000
        %v4024 = vpack.c.b16 %v4003, %v4002
        %v4025 = vpack.c.b16 %v4005, %v4004
        %v4026 = vpack.c.b16 %v4007, %v4006
        %v4027 = vpack.c.b16 %v4009, %v4008
        %v4028 = vpack.c.b16 %v4011, %v4010
        %v4029 = vpack.c.b16 %v4013, %v4012
        %4046 = vmatprep.subr.bf16.mxu0 0
        %4047 = vmatpush1.bf16.msra.mxu0 %v4021
        %4048 = vmatprep.subr.bf16.mxu0 0
        %4049 = vmatpush1.bf16.msra.mxu0 %v4020
        %4050 = vmatprep.subr.bf16.mxu0 0
        %4051 = vmatpush1.bf16.msra.mxu0 %v4019
        %4052 = vmatprep.subr.bf16.mxu0 0
        %4053 = vmatpush1.bf16.msra.mxu0 %v4018
        %4054 = vmatprep.subr.bf16.mxu0 0
        %4055 = vmatpush1.bf16.msra.mxu0 %v4017
        %4056 = vmatprep.subr.bf16.mxu0 0
        %4057 = vmatpush1.bf16.msra.mxu0 %v4016
        %4058 = vmatprep.subr.bf16.mxu0 0
        %4059 = vmatpush1.bf16.msra.mxu0 %v4015
        %4060 = vmatprep.subr.bf16.mxu0 0
        %4061 = vmatpush1.bf16.msra.mxu0 %v4014
        %4062 = vmatprep.subr.bf16.mxu0 0
        %4063 = vmatpush2.bf16.msra.mxu0 %v4029
        %4064 = vmatprep.subr.bf16.mxu0 0
        %4065 = vmatpush2.bf16.msra.mxu0 %v4028
        %4066 = vmatprep.subr.bf16.mxu0 0
        %4067 = vmatpush2.bf16.msra.mxu0 %v4027
        %4068 = vmatprep.subr.bf16.mxu0 0
        %4069 = vmatpush2.bf16.msra.mxu0 %v4026
        %4070 = vmatprep.subr.bf16.mxu0 0
        %4071 = vmatpush2.bf16.msra.mxu0 %v4025
        %4072 = vmatprep.subr.bf16.mxu0 0
        %4073 = vmatpush2.bf16.msra.mxu0 %v4024
        %4074 = vmatprep.subr.bf16.mxu0 0
        %4075 = vmatpush2.bf16.msra.mxu0 %v4023
        %4076 = vmatprep.subr.bf16.mxu0 0
        %4077 = vmatpush2.bf16.msra.mxu0 %v4022
        %4078 = vmatprep.mubr.bf16.mxu0 %v3945
        %4079 = vmatmul.mubr.bf16.gmra.mxu0 %v3944
        %v4080 = vpop.f32.mrf.mxu0
        %v4081 = vadd.f32 %v3949, %v4080
        %v4082 = vpop.f32.mrf.mxu0
        %v4083 = vpop.f32.mrf.mxu0
        %v4084 = vadd.f32 %v3949, %v4083
        %v4085 = vpop.f32.mrf.mxu0
        %4086 = vdwg.mxu0
        %vm4087 = vcmp.ge.f32.partialorder %v4081, 0.0
        %vm4088 = vcmp.ge.f32.partialorder %v4084, 0.0
        %v4089 = vlaneseq
        %v4090 = vshrl.u32 %v4089, 7
        %v4091 = vsub.s32 1, %v4090
        %v4092 = vrot.slane %v3943, %v4091
        %v4093 = vmul.f32 %v4092, %v4081
        %v4094 = vmul.f32 %v4092, %v4084
        %v4095 = vsel %vm4087, %v4081, %v4093
        %v4096 = vsel %vm4088, %v4084, %v4094
        %v4097 = vlaneseq
        %v4098 = vshrl.u32 %v4097, 7
        %v4099 = vsub.s32 2, %v4098
        %v4100 = vrot.slane %v3943, %v4099
        %v4101 = vadd.f32 %v4095, %v4100
        %v4102 = vadd.f32 %v4096, %v4100
        %4103 = vst [vmem:[#allocation2] sm:$0xff] 0.0
        %4104 = vst [vmem:[#allocation2 + $0x8] sm:$0xff] 0.0
        %4105 = vst [vmem:[#allocation2 + $0x10] sm:$0xff] 0.0
        %4106 = vst [vmem:[#allocation2 + $0x18] sm:$0xff] 0.0
        %4107 = vst [vmem:[#allocation2 + $0x20] sm:$0xff] 0.0
        %4108 = vst [vmem:[#allocation2 + $0x28] sm:$0xff] 0.0
        %4109 = vst [vmem:[#allocation2 + $0x30] sm:$0xff] 0.0
        %4110 = vst [vmem:[#allocation2 + $0x38] sm:$0xff] 0.0
        %4111 = vst [vmem:[#allocation2 + $0x40] sm:$0xff] 0.0
        %4112 = vst [vmem:[#allocation2 + $0x48] sm:$0xff] 0.0
        %4113 = vst [vmem:[#allocation2 + $0x50] sm:$0xff] 0.0
        %4114 = vst [vmem:[#allocation2 + $0x58] sm:$0xff] 0.0
        %4115 = vst [vmem:[#allocation2 + $0x60] sm:$0xff] 0.0
        %4116 = vst [vmem:[#allocation2 + $0x68] sm:$0xff] 0.0
        %4117 = vst [vmem:[#allocation2 + $0x70] sm:$0xff] 0.0
        %4118 = vst [vmem:[#allocation2 + $0x78] sm:$0xff] 0.0
        %4119 = vst [vmem:[#allocation2 + $0x80] sm:$0xff] 0.0
        %4120 = vst.msk [vmem:[#allocation2 + $0x1] sm:$0xff] %vm958, %v4101
        %vm4121 = vcmask 519168
        %4122 = vst.msk [vmem:[#allocation2 + $0x9] sm:$0xf] %vm4121, %v4102
        %v4123 = vld [vmem:[#allocation2] sm:$0xff]
        %v4124 = vld [vmem:[#allocation2 + $0x8] sm:$0xf]
        %v4125 = vld [vmem:[#allocation2 + $0x1] sm:$0xff]
        %v4126 = vld [vmem:[#allocation2 + $0x9] sm:$0xf]
        %v4127 = vld [vmem:[#allocation2 + $0x2] sm:$0xff]
        %v4128 = vld [vmem:[#allocation2 + $0xa] sm:$0xf]
        %4131 = vrot.lane.b32.xlu0 %v4125, 64
        %v4132 = vpop.permute.xlu0 %4131
        %4133 = vrot.lane.b32.xlu0 %v4126, 64
        %v4134 = vpop.permute.xlu0 %4133
        %v4137 = vsel %vm958, %v4123, %v4132
        %v4138 = vsel %vm958, %v4124, %v4134
        %v4139 = vld [vmem:[#allocation3 + $0xb40] sm:$0xf]
        %v4140 = vld [vmem:[#allocation3 + $0xb48] sm:$0xf]
        %v4141 = vld [vmem:[#allocation3 + $0xb50] sm:$0xf]
        %v4142 = vld [vmem:[#allocation3 + $0xb58] sm:$0xf]
        %v4143 = vld [vmem:[#allocation3 + $0xb60] sm:$0xf]
        %v4144 = vld [vmem:[#allocation3 + $0xb68] sm:$0xf]
        %v4145 = vld [vmem:[#allocation3 + $0xb70] sm:$0xf]
        %v4146 = vld [vmem:[#allocation3 + $0xb78] sm:$0xf]
        %v4147 = vld [vmem:[#allocation3 + $0xb80] sm:$0xf]
        %v4148 = vld [vmem:[#allocation3 + $0xb88] sm:$0xf]
        %v4149 = vld [vmem:[#allocation3 + $0xb90] sm:$0xf]
        %v4150 = vld [vmem:[#allocation3 + $0xb98] sm:$0xf]
        %v4151 = vld [vmem:[#allocation3 + $0xba0] sm:$0xf]
        %v4152 = vld [vmem:[#allocation3 + $0xba8] sm:$0xf]
        %v4153 = vld [vmem:[#allocation3 + $0xbb0] sm:$0xf]
        %v4154 = vld [vmem:[#allocation3 + $0xbb8] sm:$0xf]
        %v4155 = vld [vmem:[#allocation3 + $0xbc0] sm:$0xf]
        %v4156 = vld [vmem:[#allocation3 + $0xbc8] sm:$0xf]
        %v4157 = vld [vmem:[#allocation3 + $0xbd0] sm:$0xf]
        %v4158 = vld [vmem:[#allocation3 + $0xbd8] sm:$0xf]
        %v4159 = vld [vmem:[#allocation3 + $0xbe0] sm:$0xf]
        %v4160 = vld [vmem:[#allocation3 + $0xbe8] sm:$0xf]
        %v4161 = vld [vmem:[#allocation3 + $0xbf0] sm:$0xf]
        %v4162 = vld [vmem:[#allocation3 + $0xbf8] sm:$0xf]
        %s4163 = scalar_lea.vmem %s3, 80
        %v4164 = vld [vmem:[%s4163] sm:$0x77]
        %v4165 = vpack.c.bf16 %v4138, %v4137
        %v4166 = vpack.c.bf16 %v4128, %v4127
        %v4167 = vlaneseq
        %v4168 = vshrl.u32 %v4167, 7
        %v4169 = vsub.s32 0, %v4168
        %v4170 = vrot.slane %v4164, %v4169
        %v4195 = vunpack.c.l.b16 %v4139
        %v4196 = vunpack.c.l.b16 %v4140
        %v4197 = vunpack.c.l.b16 %v4141
        %v4198 = vunpack.c.l.b16 %v4142
        %v4199 = vunpack.c.l.b16 %v4143
        %v4200 = vunpack.c.l.b16 %v4144
        %v4201 = vunpack.c.l.b16 %v4145
        %v4202 = vunpack.c.l.b16 %v4146
        %v4203 = vunpack.c.l.b16 %v4147
        %v4204 = vunpack.c.l.b16 %v4148
        %v4205 = vunpack.c.l.b16 %v4149
        %v4206 = vunpack.c.l.b16 %v4150
        %v4207 = vunpack.c.l.b16 %v4151
        %v4208 = vunpack.c.l.b16 %v4152
        %v4209 = vunpack.c.l.b16 %v4153
        %v4210 = vunpack.c.l.b16 %v4154
        %v4211 = vunpack.c.l.b16 %v4155
        %v4212 = vunpack.c.l.b16 %v4156
        %v4213 = vunpack.c.l.b16 %v4157
        %v4214 = vunpack.c.l.b16 %v4158
        %v4215 = vunpack.c.l.b16 %v4159
        %v4216 = vunpack.c.l.b16 %v4160
        %v4217 = vunpack.c.l.b16 %v4161
        %v4218 = vunpack.c.l.b16 %v4162
        %v4219 = vpack.c.b16 %v4196, %v4195
        %v4220 = vpack.c.b16 %v4198, %v4197
        %v4221 = vpack.c.b16 %v4200, %v4199
        %v4222 = vpack.c.b16 %v4202, %v4201
        %v4223 = vpack.c.b16 %v4204, %v4203
        %v4224 = vpack.c.b16 %v4206, %v4205
        %v4225 = vpack.c.b16 %v4208, %v4207
        %v4226 = vpack.c.b16 %v4210, %v4209
        %v4227 = vpack.c.b16 %v4212, %v4211
        %v4228 = vpack.c.b16 %v4214, %v4213
        %v4229 = vpack.c.b16 %v4216, %v4215
        %v4230 = vpack.c.b16 %v4218, %v4217
        %v4244 = vsel %vm958, %v4166, 0
        %4246 = vmatprep.subr.bf16.mxu0 0
        %4247 = vmatpush1.bf16.msra.mxu0 %v4226
        %4248 = vmatprep.subr.bf16.mxu0 0
        %4249 = vmatpush1.bf16.msra.mxu0 %v4225
        %4250 = vmatprep.subr.bf16.mxu0 0
        %4251 = vmatpush1.bf16.msra.mxu0 %v4224
        %4252 = vmatprep.subr.bf16.mxu0 0
        %4253 = vmatpush1.bf16.msra.mxu0 %v4223
        %4254 = vmatprep.subr.bf16.mxu0 0
        %4255 = vmatpush1.bf16.msra.mxu0 %v4222
        %4256 = vmatprep.subr.bf16.mxu0 0
        %4257 = vmatpush1.bf16.msra.mxu0 %v4221
        %4258 = vmatprep.subr.bf16.mxu0 0
        %4259 = vmatpush1.bf16.msra.mxu0 %v4220
        %4260 = vmatprep.subr.bf16.mxu0 0
        %4261 = vmatpush1.bf16.msra.mxu0 %v4219
        %4262 = vmatprep.subr.bf16.mxu0 0
        %4263 = vmatpush2.bf16.msra.mxu0 0
        %4264 = vmatprep.subr.bf16.mxu0 0
        %4265 = vmatpush2.bf16.msra.mxu0 0
        %4266 = vmatprep.subr.bf16.mxu0 0
        %4267 = vmatpush2.bf16.msra.mxu0 0
        %4268 = vmatprep.subr.bf16.mxu0 0
        %4269 = vmatpush2.bf16.msra.mxu0 0
        %4270 = vmatprep.subr.bf16.mxu0 0
        %4271 = vmatpush2.bf16.msra.mxu0 %v4230
        %4272 = vmatprep.subr.bf16.mxu0 0
        %4273 = vmatpush2.bf16.msra.mxu0 %v4229
        %4274 = vmatprep.subr.bf16.mxu0 0
        %4275 = vmatpush2.bf16.msra.mxu0 %v4228
        %4276 = vmatprep.subr.bf16.mxu0 0
        %4277 = vmatpush2.bf16.msra.mxu0 %v4227
        %4278 = vmatprep.mubr.bf16.mxu0 %v4244
        %4279 = vmatmul.mubr.bf16.gmra.mxu0 %v4165
        %v4280 = vpop.f32.mrf.mxu0
        %v4281 = vadd.f32 %v4170, %v4280
        %v4282 = vpop.f32.mrf.mxu0
        %v4283 = vpop.f32.mrf.mxu0
        %v4284 = vadd.f32 %v4170, %v4283
        %v4285 = vpop.f32.mrf.mxu0
        %4286 = vdwg.mxu0
        %vm4287 = vcmp.ge.f32.partialorder %v4281, 0.0
        %vm4288 = vcmp.ge.f32.partialorder %v4284, 0.0
        %v4289 = vlaneseq
        %v4290 = vshrl.u32 %v4289, 7
        %v4291 = vsub.s32 1, %v4290
        %v4292 = vrot.slane %v4164, %v4291
        %v4293 = vmul.f32 %v4292, %v4281
        %v4294 = vmul.f32 %v4292, %v4284
        %v4295 = vsel %vm4287, %v4281, %v4293
        %v4296 = vsel %vm4288, %v4284, %v4294
        %v4297 = vlaneseq
        %v4298 = vshrl.u32 %v4297, 7
        %v4299 = vsub.s32 2, %v4298
        %v4300 = vrot.slane %v4164, %v4299
        %v4301 = vadd.f32 %v4295, %v4300
        %v4302 = vadd.f32 %v4296, %v4300
        %4303 = vst [vmem:[#allocation2] sm:$0xff] 0.0
        %4304 = vst [vmem:[#allocation2 + $0x8] sm:$0xff] 0.0
        %4305 = vst [vmem:[#allocation2 + $0x10] sm:$0xff] 0.0
        %4306 = vst [vmem:[#allocation2 + $0x18] sm:$0xff] 0.0
        %4307 = vst [vmem:[#allocation2 + $0x20] sm:$0xff] 0.0
        %4308 = vst [vmem:[#allocation2 + $0x28] sm:$0xff] 0.0
        %4309 = vst [vmem:[#allocation2 + $0x30] sm:$0xff] 0.0
        %4310 = vst [vmem:[#allocation2 + $0x38] sm:$0xff] 0.0
        %4311 = vst [vmem:[#allocation2 + $0x40] sm:$0xff] 0.0
        %4312 = vst [vmem:[#allocation2 + $0x48] sm:$0xff] 0.0
        %4313 = vst [vmem:[#allocation2 + $0x50] sm:$0xff] 0.0
        %4314 = vst [vmem:[#allocation2 + $0x58] sm:$0xff] 0.0
        %4315 = vst [vmem:[#allocation2 + $0x60] sm:$0xff] 0.0
        %4316 = vst [vmem:[#allocation2 + $0x68] sm:$0xff] 0.0
        %4317 = vst [vmem:[#allocation2 + $0x70] sm:$0xff] 0.0
        %4318 = vst [vmem:[#allocation2 + $0x78] sm:$0xff] 0.0
        %4319 = vst [vmem:[#allocation2 + $0x80] sm:$0xff] 0.0
        %4320 = vst.msk [vmem:[#allocation2 + $0x4] sm:$0xff] %vm958, %v4301
        %4321 = vst.msk [vmem:[#allocation2 + $0xc] sm:$0xf] %vm4121, %v4302
        %v4322 = vld [vmem:[#allocation2] ss:$4 sm:$0xf]
        %v4323 = vld [vmem:[%s296] ss:$4 sm:$0xf]
        %v4324 = vld [vmem:[%s312] ss:$4 sm:$0xf]
        %v4325 = vld [vmem:[%s328] ss:$4 sm:$0xf]
        %v4326 = vld [vmem:[%s344] ss:$4 sm:$0xf]
        %v4327 = vld [vmem:[%s360] ss:$4 sm:$0xf]
        %v4328 = vld [vmem:[%s376] ss:$4 sm:$0xf]
        %v4329 = vld [vmem:[%s392] ss:$4 sm:$0xf]
        %4331 = vrot.lane.b32.xlu0 %v4323, 64
        %v4332 = vpop.permute.xlu0 %4331
        %4335 = vrot.lane.b32.xlu0 %v4325, 64
        %v4336 = vpop.permute.xlu0 %4335
        %4339 = vrot.lane.b32.xlu0 %v4327, 64
        %v4340 = vpop.permute.xlu0 %4339
        %4343 = vrot.lane.b32.xlu0 %v4329, 64
        %v4344 = vpop.permute.xlu0 %4343
        %v4346 = vsel %vm958, %v4322, %v4332
        %v4347 = vsel %vm958, %v4324, %v4336
        %v4348 = vsel %vm958, %v4326, %v4340
        %v4349 = vsel %vm958, %v4328, %v4344
        %v4350 = vld [vmem:[#allocation3 + $0xc00] sm:$0xf]
        %v4351 = vld [vmem:[#allocation3 + $0xc08] sm:$0xf]
        %v4352 = vld [vmem:[#allocation3 + $0xc10] sm:$0xf]
        %v4353 = vld [vmem:[#allocation3 + $0xc18] sm:$0xf]
        %v4354 = vld [vmem:[#allocation3 + $0xc20] sm:$0xf]
        %v4355 = vld [vmem:[#allocation3 + $0xc28] sm:$0xf]
        %v4356 = vld [vmem:[#allocation3 + $0xc30] sm:$0xf]
        %v4357 = vld [vmem:[#allocation3 + $0xc38] sm:$0xf]
        %v4358 = vld [vmem:[#allocation3 + $0xc40] sm:$0xf]
        %v4359 = vld [vmem:[#allocation3 + $0xc48] sm:$0xf]
        %v4360 = vld [vmem:[#allocation3 + $0xc50] sm:$0xf]
        %v4361 = vld [vmem:[#allocation3 + $0xc58] sm:$0xf]
        %v4362 = vld [vmem:[#allocation3 + $0xc60] sm:$0xf]
        %v4363 = vld [vmem:[#allocation3 + $0xc68] sm:$0xf]
        %v4364 = vld [vmem:[#allocation3 + $0xc70] sm:$0xf]
        %v4365 = vld [vmem:[#allocation3 + $0xc78] sm:$0xf]
        %v4366 = vld [vmem:[#allocation3 + $0xc80] sm:$0xf]
        %v4367 = vld [vmem:[#allocation3 + $0xc88] sm:$0xf]
        %v4368 = vld [vmem:[#allocation3 + $0xc90] sm:$0xf]
        %v4369 = vld [vmem:[#allocation3 + $0xc98] sm:$0xf]
        %v4370 = vld [vmem:[#allocation3 + $0xca0] sm:$0xf]
        %v4371 = vld [vmem:[#allocation3 + $0xca8] sm:$0xf]
        %v4372 = vld [vmem:[#allocation3 + $0xcb0] sm:$0xf]
        %v4373 = vld [vmem:[#allocation3 + $0xcb8] sm:$0xf]
        %v4374 = vld [vmem:[#allocation3 + $0xcc0] sm:$0xf]
        %v4375 = vld [vmem:[#allocation3 + $0xcc8] sm:$0xf]
        %v4376 = vld [vmem:[#allocation3 + $0xcd0] sm:$0xf]
        %v4377 = vld [vmem:[#allocation3 + $0xcd8] sm:$0xf]
        %v4378 = vld [vmem:[#allocation3 + $0xce0] sm:$0xf]
        %v4379 = vld [vmem:[#allocation3 + $0xce8] sm:$0xf]
        %v4380 = vld [vmem:[#allocation3 + $0xcf0] sm:$0xf]
        %v4381 = vld [vmem:[#allocation3 + $0xcf8] sm:$0xf]
        %v4382 = vld [vmem:[#allocation3 + $0xd00] sm:$0xf]
        %v4383 = vld [vmem:[#allocation3 + $0xd08] sm:$0xf]
        %v4384 = vld [vmem:[#allocation3 + $0xd10] sm:$0xf]
        %v4385 = vld [vmem:[#allocation3 + $0xd18] sm:$0xf]
        %v4386 = vld [vmem:[#allocation3 + $0xd20] sm:$0xf]
        %v4387 = vld [vmem:[#allocation3 + $0xd28] sm:$0xf]
        %v4388 = vld [vmem:[#allocation3 + $0xd30] sm:$0xf]
        %v4389 = vld [vmem:[#allocation3 + $0xd38] sm:$0xf]
        %v4390 = vld [vmem:[#allocation3 + $0xd40] sm:$0xf]
        %v4391 = vld [vmem:[#allocation3 + $0xd48] sm:$0xf]
        %v4392 = vld [vmem:[#allocation3 + $0xd50] sm:$0xf]
        %v4393 = vld [vmem:[#allocation3 + $0xd58] sm:$0xf]
        %v4394 = vld [vmem:[#allocation3 + $0xd60] sm:$0xf]
        %v4395 = vld [vmem:[#allocation3 + $0xd68] sm:$0xf]
        %v4396 = vld [vmem:[#allocation3 + $0xd70] sm:$0xf]
        %v4397 = vld [vmem:[#allocation3 + $0xd78] sm:$0xf]
        %v4398 = vld [vmem:[#allocation3 + $0xd80] sm:$0xf]
        %v4399 = vld [vmem:[#allocation3 + $0xd88] sm:$0xf]
        %v4400 = vld [vmem:[#allocation3 + $0xd90] sm:$0xf]
        %v4401 = vld [vmem:[#allocation3 + $0xd98] sm:$0xf]
        %v4402 = vld [vmem:[#allocation3 + $0xda0] sm:$0xf]
        %v4403 = vld [vmem:[#allocation3 + $0xda8] sm:$0xf]
        %v4404 = vld [vmem:[#allocation3 + $0xdb0] sm:$0xf]
        %v4405 = vld [vmem:[#allocation3 + $0xdb8] sm:$0xf]
        %v4406 = vld [vmem:[#allocation3 + $0xdc0] sm:$0xf]
        %v4407 = vld [vmem:[#allocation3 + $0xdc8] sm:$0xf]
        %v4408 = vld [vmem:[#allocation3 + $0xdd0] sm:$0xf]
        %v4409 = vld [vmem:[#allocation3 + $0xdd8] sm:$0xf]
        %v4410 = vld [vmem:[#allocation3 + $0xde0] sm:$0xf]
        %v4411 = vld [vmem:[#allocation3 + $0xde8] sm:$0xf]
        %v4412 = vld [vmem:[#allocation3 + $0xdf0] sm:$0xf]
        %v4413 = vld [vmem:[#allocation3 + $0xdf8] sm:$0xf]
        %s4414 = scalar_lea.vmem %s3, 88
        %v4415 = vld [vmem:[%s4414] sm:$0x77]
        %v4416 = vpack.c.bf16 %v4346, %v4346
        %v4417 = vpack.c.bf16 %v4347, %v4347
        %v4418 = vpack.c.bf16 %v4348, %v4348
        %v4419 = vpack.c.bf16 %v4349, %v4349
        %v4420 = vlaneseq
        %v4421 = vshrl.u32 %v4420, 7
        %v4422 = vsub.s32 0, %v4421
        %v4423 = vrot.slane %v4415, %v4422
        %v4488 = vunpack.c.l.b16 %v4350
        %v4489 = vunpack.c.l.b16 %v4351
        %v4490 = vunpack.c.l.b16 %v4352
        %v4491 = vunpack.c.l.b16 %v4353
        %v4492 = vunpack.c.l.b16 %v4354
        %v4493 = vunpack.c.l.b16 %v4355
        %v4494 = vunpack.c.l.b16 %v4356
        %v4495 = vunpack.c.l.b16 %v4357
        %v4496 = vunpack.c.l.b16 %v4358
        %v4497 = vunpack.c.l.b16 %v4359
        %v4498 = vunpack.c.l.b16 %v4360
        %v4499 = vunpack.c.l.b16 %v4361
        %v4500 = vunpack.c.l.b16 %v4362
        %v4501 = vunpack.c.l.b16 %v4363
        %v4502 = vunpack.c.l.b16 %v4364
        %v4503 = vunpack.c.l.b16 %v4365
        %v4504 = vunpack.c.l.b16 %v4366
        %v4505 = vunpack.c.l.b16 %v4367
        %v4506 = vunpack.c.l.b16 %v4368
        %v4507 = vunpack.c.l.b16 %v4369
        %v4508 = vunpack.c.l.b16 %v4370
        %v4509 = vunpack.c.l.b16 %v4371
        %v4510 = vunpack.c.l.b16 %v4372
        %v4511 = vunpack.c.l.b16 %v4373
        %v4512 = vunpack.c.l.b16 %v4374
        %v4513 = vunpack.c.l.b16 %v4375
        %v4514 = vunpack.c.l.b16 %v4376
        %v4515 = vunpack.c.l.b16 %v4377
        %v4516 = vunpack.c.l.b16 %v4378
        %v4517 = vunpack.c.l.b16 %v4379
        %v4518 = vunpack.c.l.b16 %v4380
        %v4519 = vunpack.c.l.b16 %v4381
        %v4520 = vunpack.c.l.b16 %v4382
        %v4521 = vunpack.c.l.b16 %v4383
        %v4522 = vunpack.c.l.b16 %v4384
        %v4523 = vunpack.c.l.b16 %v4385
        %v4524 = vunpack.c.l.b16 %v4386
        %v4525 = vunpack.c.l.b16 %v4387
        %v4526 = vunpack.c.l.b16 %v4388
        %v4527 = vunpack.c.l.b16 %v4389
        %v4528 = vunpack.c.l.b16 %v4390
        %v4529 = vunpack.c.l.b16 %v4391
        %v4530 = vunpack.c.l.b16 %v4392
        %v4531 = vunpack.c.l.b16 %v4393
        %v4532 = vunpack.c.l.b16 %v4394
        %v4533 = vunpack.c.l.b16 %v4395
        %v4534 = vunpack.c.l.b16 %v4396
        %v4535 = vunpack.c.l.b16 %v4397
        %v4536 = vunpack.c.l.b16 %v4398
        %v4537 = vunpack.c.l.b16 %v4399
        %v4538 = vunpack.c.l.b16 %v4400
        %v4539 = vunpack.c.l.b16 %v4401
        %v4540 = vunpack.c.l.b16 %v4402
        %v4541 = vunpack.c.l.b16 %v4403
        %v4542 = vunpack.c.l.b16 %v4404
        %v4543 = vunpack.c.l.b16 %v4405
        %v4544 = vunpack.c.l.b16 %v4406
        %v4545 = vunpack.c.l.b16 %v4407
        %v4546 = vunpack.c.l.b16 %v4408
        %v4547 = vunpack.c.l.b16 %v4409
        %v4548 = vunpack.c.l.b16 %v4410
        %v4549 = vunpack.c.l.b16 %v4411
        %v4550 = vunpack.c.l.b16 %v4412
        %v4551 = vunpack.c.l.b16 %v4413
        %v4552 = vpack.c.b16 %v4489, %v4488
        %v4553 = vpack.c.b16 %v4491, %v4490
        %v4554 = vpack.c.b16 %v4493, %v4492
        %v4555 = vpack.c.b16 %v4495, %v4494
        %v4556 = vpack.c.b16 %v4497, %v4496
        %v4557 = vpack.c.b16 %v4499, %v4498
        %v4558 = vpack.c.b16 %v4501, %v4500
        %v4559 = vpack.c.b16 %v4503, %v4502
        %v4560 = vpack.c.b16 %v4505, %v4504
        %v4561 = vpack.c.b16 %v4507, %v4506
        %v4562 = vpack.c.b16 %v4509, %v4508
        %v4563 = vpack.c.b16 %v4511, %v4510
        %v4564 = vpack.c.b16 %v4513, %v4512
        %v4565 = vpack.c.b16 %v4515, %v4514
        %v4566 = vpack.c.b16 %v4517, %v4516
        %v4567 = vpack.c.b16 %v4519, %v4518
        %v4568 = vpack.c.b16 %v4521, %v4520
        %v4569 = vpack.c.b16 %v4523, %v4522
        %v4570 = vpack.c.b16 %v4525, %v4524
        %v4571 = vpack.c.b16 %v4527, %v4526
        %v4572 = vpack.c.b16 %v4529, %v4528
        %v4573 = vpack.c.b16 %v4531, %v4530
        %v4574 = vpack.c.b16 %v4533, %v4532
        %v4575 = vpack.c.b16 %v4535, %v4534
        %v4576 = vpack.c.b16 %v4537, %v4536
        %v4577 = vpack.c.b16 %v4539, %v4538
        %v4578 = vpack.c.b16 %v4541, %v4540
        %v4579 = vpack.c.b16 %v4543, %v4542
        %v4580 = vpack.c.b16 %v4545, %v4544
        %v4581 = vpack.c.b16 %v4547, %v4546
        %v4582 = vpack.c.b16 %v4549, %v4548
        %v4583 = vpack.c.b16 %v4551, %v4550
        %4616 = vmatprep.subr.bf16.mxu0 0
        %4617 = vmatpush1.bf16.msra.mxu0 %v4559
        %4618 = vmatprep.subr.bf16.mxu0 0
        %4619 = vmatpush1.bf16.msra.mxu0 %v4558
        %4620 = vmatprep.subr.bf16.mxu0 0
        %4621 = vmatpush1.bf16.msra.mxu0 %v4557
        %4622 = vmatprep.subr.bf16.mxu0 0
        %4623 = vmatpush1.bf16.msra.mxu0 %v4556
        %4624 = vmatprep.subr.bf16.mxu0 0
        %4625 = vmatpush1.bf16.msra.mxu0 %v4555
        %4626 = vmatprep.subr.bf16.mxu0 0
        %4627 = vmatpush1.bf16.msra.mxu0 %v4554
        %4628 = vmatprep.subr.bf16.mxu0 0
        %4629 = vmatpush1.bf16.msra.mxu0 %v4553
        %4630 = vmatprep.subr.bf16.mxu0 0
        %4631 = vmatpush1.bf16.msra.mxu0 %v4552
        %4632 = vmatprep.subr.bf16.mxu0 0
        %4633 = vmatpush2.bf16.msra.mxu0 %v4567
        %4634 = vmatprep.subr.bf16.mxu0 0
        %4635 = vmatpush2.bf16.msra.mxu0 %v4566
        %4636 = vmatprep.subr.bf16.mxu0 0
        %4637 = vmatpush2.bf16.msra.mxu0 %v4565
        %4638 = vmatprep.subr.bf16.mxu0 0
        %4639 = vmatpush2.bf16.msra.mxu0 %v4564
        %4640 = vmatprep.subr.bf16.mxu0 0
        %4641 = vmatpush2.bf16.msra.mxu0 %v4563
        %4642 = vmatprep.subr.bf16.mxu0 0
        %4643 = vmatpush2.bf16.msra.mxu0 %v4562
        %4644 = vmatprep.subr.bf16.mxu0 0
        %4645 = vmatpush2.bf16.msra.mxu0 %v4561
        %4646 = vmatprep.subr.bf16.mxu0 0
        %4647 = vmatpush2.bf16.msra.mxu0 %v4560
        %4648 = vmatprep.mubr.bf16.mxu0 %v4417
        %4649 = vmatmul.mubr.bf16.gmra.mxu0 %v4416
        %v4650 = vpop.f32.mrf.mxu0
        %v4651 = vadd.f32 %v4423, %v4650
        %v4652 = vpop.f32.mrf.mxu0
        %v4653 = vpop.f32.mrf.mxu0
        %v4654 = vpop.f32.mrf.mxu0
        %4655 = vdwg.mxu0
        %4656 = vmatprep.subr.bf16.mxu0 0
        %4657 = vmatpush1.bf16.msra.mxu0 %v4575
        %4658 = vmatprep.subr.bf16.mxu0 0
        %4659 = vmatpush1.bf16.msra.mxu0 %v4574
        %4660 = vmatprep.subr.bf16.mxu0 0
        %4661 = vmatpush1.bf16.msra.mxu0 %v4573
        %4662 = vmatprep.subr.bf16.mxu0 0
        %4663 = vmatpush1.bf16.msra.mxu0 %v4572
        %4664 = vmatprep.subr.bf16.mxu0 0
        %4665 = vmatpush1.bf16.msra.mxu0 %v4571
        %4666 = vmatprep.subr.bf16.mxu0 0
        %4667 = vmatpush1.bf16.msra.mxu0 %v4570
        %4668 = vmatprep.subr.bf16.mxu0 0
        %4669 = vmatpush1.bf16.msra.mxu0 %v4569
        %4670 = vmatprep.subr.bf16.mxu0 0
        %4671 = vmatpush1.bf16.msra.mxu0 %v4568
        %4672 = vmatprep.subr.bf16.mxu0 0
        %4673 = vmatpush2.bf16.msra.mxu0 %v4583
        %4674 = vmatprep.subr.bf16.mxu0 0
        %4675 = vmatpush2.bf16.msra.mxu0 %v4582
        %4676 = vmatprep.subr.bf16.mxu0 0
        %4677 = vmatpush2.bf16.msra.mxu0 %v4581
        %4678 = vmatprep.subr.bf16.mxu0 0
        %4679 = vmatpush2.bf16.msra.mxu0 %v4580
        %4680 = vmatprep.subr.bf16.mxu0 0
        %4681 = vmatpush2.bf16.msra.mxu0 %v4579
        %4682 = vmatprep.subr.bf16.mxu0 0
        %4683 = vmatpush2.bf16.msra.mxu0 %v4578
        %4684 = vmatprep.subr.bf16.mxu0 0
        %4685 = vmatpush2.bf16.msra.mxu0 %v4577
        %4686 = vmatprep.subr.bf16.mxu0 0
        %4687 = vmatpush2.bf16.msra.mxu0 %v4576
        %4688 = vmatprep.mubr.bf16.mxu0 %v4419
        %4689 = vmatmul.mubr.bf16.gmra.mxu0 %v4418
        %v4690 = vpop.f32.mrf.mxu0
        %v4691 = vadd.f32 %v4651, %v4690
        %v4692 = vpop.f32.mrf.mxu0
        %v4693 = vpop.f32.mrf.mxu0
        %v4694 = vpop.f32.mrf.mxu0
        %4695 = vdwg.mxu0
        %vm4696 = vcmp.ge.f32.partialorder %v4691, 0.0
        %v4697 = vlaneseq
        %v4698 = vshrl.u32 %v4697, 7
        %v4699 = vsub.s32 1, %v4698
        %v4700 = vrot.slane %v4415, %v4699
        %v4701 = vmul.f32 %v4700, %v4691
        %v4702 = vsel %vm4696, %v4691, %v4701
        %v4703 = vlaneseq
        %v4704 = vshrl.u32 %v4703, 7
        %v4705 = vsub.s32 2, %v4704
        %v4706 = vrot.slane %v4415, %v4705
        %v4707 = vadd.f32 %v4702, %v4706
        %4708 = vst [vmem:[#allocation2] sm:$0xff] 0.0
        %4709 = vst [vmem:[#allocation2 + $0x8] sm:$0xff] 0.0
        %4710 = vst [vmem:[#allocation2 + $0x10] sm:$0xff] 0.0
        %4711 = vst [vmem:[#allocation2 + $0x18] sm:$0xff] 0.0
        %4712 = vst [vmem:[#allocation2 + $0x20] sm:$0xff] 0.0
        %4713 = vst [vmem:[#allocation2 + $0x28] sm:$0xff] 0.0
        %4714 = vst [vmem:[#allocation2 + $0x30] sm:$0xff] 0.0
        %4715 = vst [vmem:[#allocation2 + $0x38] sm:$0xff] 0.0
        %4716 = vst [vmem:[#allocation2 + $0x40] sm:$0xff] 0.0
        %4717 = vst [vmem:[#allocation2 + $0x48] sm:$0xff] 0.0
        %4718 = vst [vmem:[#allocation2 + $0x50] sm:$0xff] 0.0
        %4719 = vst [vmem:[#allocation2 + $0x58] sm:$0xff] 0.0
        %4720 = vst [vmem:[#allocation2 + $0x60] sm:$0xff] 0.0
        %4721 = vst [vmem:[#allocation2 + $0x68] sm:$0xff] 0.0
        %4722 = vst [vmem:[#allocation2 + $0x70] sm:$0xff] 0.0
        %4723 = vst [vmem:[#allocation2 + $0x78] sm:$0xff] 0.0
        %4724 = vst [vmem:[#allocation2 + $0x80] sm:$0xff] 0.0
        %4725 = vst [vmem:[#allocation2 + $0x4] sm:$0xf] %v4707
        %v4726 = vld [vmem:[#allocation2] ss:$4 sm:$0x3]
        %v4727 = vld [vmem:[%s296] ss:$4 sm:$0x3]
        %v4728 = vld [vmem:[%s312] ss:$4 sm:$0x3]
        %v4729 = vld [vmem:[%s328] ss:$4 sm:$0x3]
        %v4730 = vld [vmem:[%s344] ss:$4 sm:$0x3]
        %v4731 = vld [vmem:[%s360] ss:$4 sm:$0x3]
        %v4732 = vld [vmem:[%s376] ss:$4 sm:$0x3]
        %v4733 = vld [vmem:[%s392] ss:$4 sm:$0x3]
        %v4734 = vld [vmem:[#allocation3 + $0xe00] sm:$0xf]
        %v4735 = vld [vmem:[#allocation3 + $0xe08] sm:$0xf]
        %v4736 = vld [vmem:[#allocation3 + $0xe10] sm:$0xf]
        %v4737 = vld [vmem:[#allocation3 + $0xe18] sm:$0xf]
        %v4738 = vld [vmem:[#allocation3 + $0xe20] sm:$0xf]
        %v4739 = vld [vmem:[#allocation3 + $0xe28] sm:$0xf]
        %v4740 = vld [vmem:[#allocation3 + $0xe30] sm:$0xf]
        %v4741 = vld [vmem:[#allocation3 + $0xe38] sm:$0xf]
        %v4742 = vld [vmem:[#allocation3 + $0xe40] sm:$0xf]
        %v4743 = vld [vmem:[#allocation3 + $0xe48] sm:$0xf]
        %v4744 = vld [vmem:[#allocation3 + $0xe50] sm:$0xf]
        %v4745 = vld [vmem:[#allocation3 + $0xe58] sm:$0xf]
        %v4746 = vld [vmem:[#allocation3 + $0xe60] sm:$0xf]
        %v4747 = vld [vmem:[#allocation3 + $0xe68] sm:$0xf]
        %v4748 = vld [vmem:[#allocation3 + $0xe70] sm:$0xf]
        %v4749 = vld [vmem:[#allocation3 + $0xe78] sm:$0xf]
        %v4750 = vld [vmem:[#allocation3 + $0xe80] sm:$0xf]
        %v4751 = vld [vmem:[#allocation3 + $0xe88] sm:$0xf]
        %v4752 = vld [vmem:[#allocation3 + $0xe90] sm:$0xf]
        %v4753 = vld [vmem:[#allocation3 + $0xe98] sm:$0xf]
        %v4754 = vld [vmem:[#allocation3 + $0xea0] sm:$0xf]
        %v4755 = vld [vmem:[#allocation3 + $0xea8] sm:$0xf]
        %v4756 = vld [vmem:[#allocation3 + $0xeb0] sm:$0xf]
        %v4757 = vld [vmem:[#allocation3 + $0xeb8] sm:$0xf]
        %v4758 = vld [vmem:[#allocation3 + $0xec0] sm:$0xf]
        %v4759 = vld [vmem:[#allocation3 + $0xec8] sm:$0xf]
        %v4760 = vld [vmem:[#allocation3 + $0xed0] sm:$0xf]
        %v4761 = vld [vmem:[#allocation3 + $0xed8] sm:$0xf]
        %v4762 = vld [vmem:[#allocation3 + $0xee0] sm:$0xf]
        %v4763 = vld [vmem:[#allocation3 + $0xee8] sm:$0xf]
        %v4764 = vld [vmem:[#allocation3 + $0xef0] sm:$0xf]
        %v4765 = vld [vmem:[#allocation3 + $0xef8] sm:$0xf]
        %v4766 = vld [vmem:[#allocation3 + $0xf00] sm:$0xf]
        %v4767 = vld [vmem:[#allocation3 + $0xf08] sm:$0xf]
        %v4768 = vld [vmem:[#allocation3 + $0xf10] sm:$0xf]
        %v4769 = vld [vmem:[#allocation3 + $0xf18] sm:$0xf]
        %v4770 = vld [vmem:[#allocation3 + $0xf20] sm:$0xf]
        %v4771 = vld [vmem:[#allocation3 + $0xf28] sm:$0xf]
        %v4772 = vld [vmem:[#allocation3 + $0xf30] sm:$0xf]
        %v4773 = vld [vmem:[#allocation3 + $0xf38] sm:$0xf]
        %v4774 = vld [vmem:[#allocation3 + $0xf40] sm:$0xf]
        %v4775 = vld [vmem:[#allocation3 + $0xf48] sm:$0xf]
        %v4776 = vld [vmem:[#allocation3 + $0xf50] sm:$0xf]
        %v4777 = vld [vmem:[#allocation3 + $0xf58] sm:$0xf]
        %v4778 = vld [vmem:[#allocation3 + $0xf60] sm:$0xf]
        %v4779 = vld [vmem:[#allocation3 + $0xf68] sm:$0xf]
        %v4780 = vld [vmem:[#allocation3 + $0xf70] sm:$0xf]
        %v4781 = vld [vmem:[#allocation3 + $0xf78] sm:$0xf]
        %v4782 = vld [vmem:[#allocation3 + $0xf80] sm:$0xf]
        %v4783 = vld [vmem:[#allocation3 + $0xf88] sm:$0xf]
        %v4784 = vld [vmem:[#allocation3 + $0xf90] sm:$0xf]
        %v4785 = vld [vmem:[#allocation3 + $0xf98] sm:$0xf]
        %v4786 = vld [vmem:[#allocation3 + $0xfa0] sm:$0xf]
        %v4787 = vld [vmem:[#allocation3 + $0xfa8] sm:$0xf]
        %v4788 = vld [vmem:[#allocation3 + $0xfb0] sm:$0xf]
        %v4789 = vld [vmem:[#allocation3 + $0xfb8] sm:$0xf]
        %v4790 = vld [vmem:[#allocation3 + $0xfc0] sm:$0xf]
        %v4791 = vld [vmem:[#allocation3 + $0xfc8] sm:$0xf]
        %v4792 = vld [vmem:[#allocation3 + $0xfd0] sm:$0xf]
        %v4793 = vld [vmem:[#allocation3 + $0xfd8] sm:$0xf]
        %v4794 = vld [vmem:[#allocation3 + $0xfe0] sm:$0xf]
        %v4795 = vld [vmem:[#allocation3 + $0xfe8] sm:$0xf]
        %v4796 = vld [vmem:[#allocation3 + $0xff0] sm:$0xf]
        %v4797 = vld [vmem:[#allocation3 + $0xff8] sm:$0xf]
        %v4798 = vld [vmem:[#allocation3 + $0x1000] sm:$0xf]
        %v4799 = vld [vmem:[#allocation3 + $0x1008] sm:$0xf]
        %v4800 = vld [vmem:[#allocation3 + $0x1010] sm:$0xf]
        %v4801 = vld [vmem:[#allocation3 + $0x1018] sm:$0xf]
        %v4802 = vld [vmem:[#allocation3 + $0x1020] sm:$0xf]
        %v4803 = vld [vmem:[#allocation3 + $0x1028] sm:$0xf]
        %v4804 = vld [vmem:[#allocation3 + $0x1030] sm:$0xf]
        %v4805 = vld [vmem:[#allocation3 + $0x1038] sm:$0xf]
        %v4806 = vld [vmem:[#allocation3 + $0x1040] sm:$0xf]
        %v4807 = vld [vmem:[#allocation3 + $0x1048] sm:$0xf]
        %v4808 = vld [vmem:[#allocation3 + $0x1050] sm:$0xf]
        %v4809 = vld [vmem:[#allocation3 + $0x1058] sm:$0xf]
        %v4810 = vld [vmem:[#allocation3 + $0x1060] sm:$0xf]
        %v4811 = vld [vmem:[#allocation3 + $0x1068] sm:$0xf]
        %v4812 = vld [vmem:[#allocation3 + $0x1070] sm:$0xf]
        %v4813 = vld [vmem:[#allocation3 + $0x1078] sm:$0xf]
        %v4814 = vld [vmem:[#allocation3 + $0x1080] sm:$0xf]
        %v4815 = vld [vmem:[#allocation3 + $0x1088] sm:$0xf]
        %v4816 = vld [vmem:[#allocation3 + $0x1090] sm:$0xf]
        %v4817 = vld [vmem:[#allocation3 + $0x1098] sm:$0xf]
        %v4818 = vld [vmem:[#allocation3 + $0x10a0] sm:$0xf]
        %v4819 = vld [vmem:[#allocation3 + $0x10a8] sm:$0xf]
        %v4820 = vld [vmem:[#allocation3 + $0x10b0] sm:$0xf]
        %v4821 = vld [vmem:[#allocation3 + $0x10b8] sm:$0xf]
        %v4822 = vld [vmem:[#allocation3 + $0x10c0] sm:$0xf]
        %v4823 = vld [vmem:[#allocation3 + $0x10c8] sm:$0xf]
        %v4824 = vld [vmem:[#allocation3 + $0x10d0] sm:$0xf]
        %v4825 = vld [vmem:[#allocation3 + $0x10d8] sm:$0xf]
        %v4826 = vld [vmem:[#allocation3 + $0x10e0] sm:$0xf]
        %v4827 = vld [vmem:[#allocation3 + $0x10e8] sm:$0xf]
        %v4828 = vld [vmem:[#allocation3 + $0x10f0] sm:$0xf]
        %v4829 = vld [vmem:[#allocation3 + $0x10f8] sm:$0xf]
        %v4830 = vld [vmem:[#allocation3 + $0x1100] sm:$0xf]
        %v4831 = vld [vmem:[#allocation3 + $0x1108] sm:$0xf]
        %v4832 = vld [vmem:[#allocation3 + $0x1110] sm:$0xf]
        %v4833 = vld [vmem:[#allocation3 + $0x1118] sm:$0xf]
        %v4834 = vld [vmem:[#allocation3 + $0x1120] sm:$0xf]
        %v4835 = vld [vmem:[#allocation3 + $0x1128] sm:$0xf]
        %v4836 = vld [vmem:[#allocation3 + $0x1130] sm:$0xf]
        %v4837 = vld [vmem:[#allocation3 + $0x1138] sm:$0xf]
        %v4838 = vld [vmem:[#allocation3 + $0x1140] sm:$0xf]
        %v4839 = vld [vmem:[#allocation3 + $0x1148] sm:$0xf]
        %v4840 = vld [vmem:[#allocation3 + $0x1150] sm:$0xf]
        %v4841 = vld [vmem:[#allocation3 + $0x1158] sm:$0xf]
        %v4842 = vld [vmem:[#allocation3 + $0x1160] sm:$0xf]
        %v4843 = vld [vmem:[#allocation3 + $0x1168] sm:$0xf]
        %v4844 = vld [vmem:[#allocation3 + $0x1170] sm:$0xf]
        %v4845 = vld [vmem:[#allocation3 + $0x1178] sm:$0xf]
        %v4846 = vld [vmem:[#allocation3 + $0x1180] sm:$0xf]
        %v4847 = vld [vmem:[#allocation3 + $0x1188] sm:$0xf]
        %v4848 = vld [vmem:[#allocation3 + $0x1190] sm:$0xf]
        %v4849 = vld [vmem:[#allocation3 + $0x1198] sm:$0xf]
        %v4850 = vld [vmem:[#allocation3 + $0x11a0] sm:$0xf]
        %v4851 = vld [vmem:[#allocation3 + $0x11a8] sm:$0xf]
        %v4852 = vld [vmem:[#allocation3 + $0x11b0] sm:$0xf]
        %v4853 = vld [vmem:[#allocation3 + $0x11b8] sm:$0xf]
        %v4854 = vld [vmem:[#allocation3 + $0x11c0] sm:$0xf]
        %v4855 = vld [vmem:[#allocation3 + $0x11c8] sm:$0xf]
        %v4856 = vld [vmem:[#allocation3 + $0x11d0] sm:$0xf]
        %v4857 = vld [vmem:[#allocation3 + $0x11d8] sm:$0xf]
        %v4858 = vld [vmem:[#allocation3 + $0x11e0] sm:$0xf]
        %v4859 = vld [vmem:[#allocation3 + $0x11e8] sm:$0xf]
        %v4860 = vld [vmem:[#allocation3 + $0x11f0] sm:$0xf]
        %v4861 = vld [vmem:[#allocation3 + $0x11f8] sm:$0xf]
        %s4862 = scalar_lea.vmem %s3, 96
        %v4863 = vld [vmem:[%s4862] sm:$0x77]
        %v4864 = vpack.c.bf16 %v4726, %v4726
        %v4865 = vpack.c.bf16 %v4727, %v4727
        %v4866 = vpack.c.bf16 %v4728, %v4728
        %v4867 = vpack.c.bf16 %v4729, %v4729
        %v4868 = vpack.c.bf16 %v4730, %v4730
        %v4869 = vpack.c.bf16 %v4731, %v4731
        %v4870 = vpack.c.bf16 %v4732, %v4732
        %v4871 = vpack.c.bf16 %v4733, %v4733
        %v4872 = vlaneseq
        %v4873 = vshrl.u32 %v4872, 7
        %v4874 = vsub.s32 0, %v4873
        %v4875 = vrot.slane %v4863, %v4874
        %v5004 = vunpack.c.l.b16 %v4734
        %v5005 = vunpack.c.l.b16 %v4735
        %v5006 = vunpack.c.l.b16 %v4736
        %v5007 = vunpack.c.l.b16 %v4737
        %v5008 = vunpack.c.l.b16 %v4738
        %v5009 = vunpack.c.l.b16 %v4739
        %v5010 = vunpack.c.l.b16 %v4740
        %v5011 = vunpack.c.l.b16 %v4741
        %v5012 = vunpack.c.l.b16 %v4742
        %v5013 = vunpack.c.l.b16 %v4743
        %v5014 = vunpack.c.l.b16 %v4744
        %v5015 = vunpack.c.l.b16 %v4745
        %v5016 = vunpack.c.l.b16 %v4746
        %v5017 = vunpack.c.l.b16 %v4747
        %v5018 = vunpack.c.l.b16 %v4748
        %v5019 = vunpack.c.l.b16 %v4749
        %v5020 = vunpack.c.l.b16 %v4750
        %v5021 = vunpack.c.l.b16 %v4751
        %v5022 = vunpack.c.l.b16 %v4752
        %v5023 = vunpack.c.l.b16 %v4753
        %v5024 = vunpack.c.l.b16 %v4754
        %v5025 = vunpack.c.l.b16 %v4755
        %v5026 = vunpack.c.l.b16 %v4756
        %v5027 = vunpack.c.l.b16 %v4757
        %v5028 = vunpack.c.l.b16 %v4758
        %v5029 = vunpack.c.l.b16 %v4759
        %v5030 = vunpack.c.l.b16 %v4760
        %v5031 = vunpack.c.l.b16 %v4761
        %v5032 = vunpack.c.l.b16 %v4762
        %v5033 = vunpack.c.l.b16 %v4763
        %v5034 = vunpack.c.l.b16 %v4764
        %v5035 = vunpack.c.l.b16 %v4765
        %v5036 = vunpack.c.l.b16 %v4766
        %v5037 = vunpack.c.l.b16 %v4767
        %v5038 = vunpack.c.l.b16 %v4768
        %v5039 = vunpack.c.l.b16 %v4769
        %v5040 = vunpack.c.l.b16 %v4770
        %v5041 = vunpack.c.l.b16 %v4771
        %v5042 = vunpack.c.l.b16 %v4772
        %v5043 = vunpack.c.l.b16 %v4773
        %v5044 = vunpack.c.l.b16 %v4774
        %v5045 = vunpack.c.l.b16 %v4775
        %v5046 = vunpack.c.l.b16 %v4776
        %v5047 = vunpack.c.l.b16 %v4777
        %v5048 = vunpack.c.l.b16 %v4778
        %v5049 = vunpack.c.l.b16 %v4779
        %v5050 = vunpack.c.l.b16 %v4780
        %v5051 = vunpack.c.l.b16 %v4781
        %v5052 = vunpack.c.l.b16 %v4782
        %v5053 = vunpack.c.l.b16 %v4783
        %v5054 = vunpack.c.l.b16 %v4784
        %v5055 = vunpack.c.l.b16 %v4785
        %v5056 = vunpack.c.l.b16 %v4786
        %v5057 = vunpack.c.l.b16 %v4787
        %v5058 = vunpack.c.l.b16 %v4788
        %v5059 = vunpack.c.l.b16 %v4789
        %v5060 = vunpack.c.l.b16 %v4790
        %v5061 = vunpack.c.l.b16 %v4791
        %v5062 = vunpack.c.l.b16 %v4792
        %v5063 = vunpack.c.l.b16 %v4793
        %v5064 = vunpack.c.l.b16 %v4794
        %v5065 = vunpack.c.l.b16 %v4795
        %v5066 = vunpack.c.l.b16 %v4796
        %v5067 = vunpack.c.l.b16 %v4797
        %v5068 = vunpack.c.l.b16 %v4798
        %v5069 = vunpack.c.l.b16 %v4799
        %v5070 = vunpack.c.l.b16 %v4800
        %v5071 = vunpack.c.l.b16 %v4801
        %v5072 = vunpack.c.l.b16 %v4802
        %v5073 = vunpack.c.l.b16 %v4803
        %v5074 = vunpack.c.l.b16 %v4804
        %v5075 = vunpack.c.l.b16 %v4805
        %v5076 = vunpack.c.l.b16 %v4806
        %v5077 = vunpack.c.l.b16 %v4807
        %v5078 = vunpack.c.l.b16 %v4808
        %v5079 = vunpack.c.l.b16 %v4809
        %v5080 = vunpack.c.l.b16 %v4810
        %v5081 = vunpack.c.l.b16 %v4811
        %v5082 = vunpack.c.l.b16 %v4812
        %v5083 = vunpack.c.l.b16 %v4813
        %v5084 = vunpack.c.l.b16 %v4814
        %v5085 = vunpack.c.l.b16 %v4815
        %v5086 = vunpack.c.l.b16 %v4816
        %v5087 = vunpack.c.l.b16 %v4817
        %v5088 = vunpack.c.l.b16 %v4818
        %v5089 = vunpack.c.l.b16 %v4819
        %v5090 = vunpack.c.l.b16 %v4820
        %v5091 = vunpack.c.l.b16 %v4821
        %v5092 = vunpack.c.l.b16 %v4822
        %v5093 = vunpack.c.l.b16 %v4823
        %v5094 = vunpack.c.l.b16 %v4824
        %v5095 = vunpack.c.l.b16 %v4825
        %v5096 = vunpack.c.l.b16 %v4826
        %v5097 = vunpack.c.l.b16 %v4827
        %v5098 = vunpack.c.l.b16 %v4828
        %v5099 = vunpack.c.l.b16 %v4829
        %v5100 = vunpack.c.l.b16 %v4830
        %v5101 = vunpack.c.l.b16 %v4831
        %v5102 = vunpack.c.l.b16 %v4832
        %v5103 = vunpack.c.l.b16 %v4833
        %v5104 = vunpack.c.l.b16 %v4834
        %v5105 = vunpack.c.l.b16 %v4835
        %v5106 = vunpack.c.l.b16 %v4836
        %v5107 = vunpack.c.l.b16 %v4837
        %v5108 = vunpack.c.l.b16 %v4838
        %v5109 = vunpack.c.l.b16 %v4839
        %v5110 = vunpack.c.l.b16 %v4840
        %v5111 = vunpack.c.l.b16 %v4841
        %v5112 = vunpack.c.l.b16 %v4842
        %v5113 = vunpack.c.l.b16 %v4843
        %v5114 = vunpack.c.l.b16 %v4844
        %v5115 = vunpack.c.l.b16 %v4845
        %v5116 = vunpack.c.l.b16 %v4846
        %v5117 = vunpack.c.l.b16 %v4847
        %v5118 = vunpack.c.l.b16 %v4848
        %v5119 = vunpack.c.l.b16 %v4849
        %v5120 = vunpack.c.l.b16 %v4850
        %v5121 = vunpack.c.l.b16 %v4851
        %v5122 = vunpack.c.l.b16 %v4852
        %v5123 = vunpack.c.l.b16 %v4853
        %v5124 = vunpack.c.l.b16 %v4854
        %v5125 = vunpack.c.l.b16 %v4855
        %v5126 = vunpack.c.l.b16 %v4856
        %v5127 = vunpack.c.l.b16 %v4857
        %v5128 = vunpack.c.l.b16 %v4858
        %v5129 = vunpack.c.l.b16 %v4859
        %v5130 = vunpack.c.l.b16 %v4860
        %v5131 = vunpack.c.l.b16 %v4861
        %v5132 = vpack.c.b16 %v5005, %v5004
        %v5133 = vpack.c.b16 %v5007, %v5006
        %v5134 = vpack.c.b16 %v5009, %v5008
        %v5135 = vpack.c.b16 %v5011, %v5010
        %v5136 = vpack.c.b16 %v5013, %v5012
        %v5137 = vpack.c.b16 %v5015, %v5014
        %v5138 = vpack.c.b16 %v5017, %v5016
        %v5139 = vpack.c.b16 %v5019, %v5018
        %v5140 = vpack.c.b16 %v5021, %v5020
        %v5141 = vpack.c.b16 %v5023, %v5022
        %v5142 = vpack.c.b16 %v5025, %v5024
        %v5143 = vpack.c.b16 %v5027, %v5026
        %v5144 = vpack.c.b16 %v5029, %v5028
        %v5145 = vpack.c.b16 %v5031, %v5030
        %v5146 = vpack.c.b16 %v5033, %v5032
        %v5147 = vpack.c.b16 %v5035, %v5034
        %v5148 = vpack.c.b16 %v5037, %v5036
        %v5149 = vpack.c.b16 %v5039, %v5038
        %v5150 = vpack.c.b16 %v5041, %v5040
        %v5151 = vpack.c.b16 %v5043, %v5042
        %v5152 = vpack.c.b16 %v5045, %v5044
        %v5153 = vpack.c.b16 %v5047, %v5046
        %v5154 = vpack.c.b16 %v5049, %v5048
        %v5155 = vpack.c.b16 %v5051, %v5050
        %v5156 = vpack.c.b16 %v5053, %v5052
        %v5157 = vpack.c.b16 %v5055, %v5054
        %v5158 = vpack.c.b16 %v5057, %v5056
        %v5159 = vpack.c.b16 %v5059, %v5058
        %v5160 = vpack.c.b16 %v5061, %v5060
        %v5161 = vpack.c.b16 %v5063, %v5062
        %v5162 = vpack.c.b16 %v5065, %v5064
        %v5163 = vpack.c.b16 %v5067, %v5066
        %v5164 = vpack.c.b16 %v5069, %v5068
        %v5165 = vpack.c.b16 %v5071, %v5070
        %v5166 = vpack.c.b16 %v5073, %v5072
        %v5167 = vpack.c.b16 %v5075, %v5074
        %v5168 = vpack.c.b16 %v5077, %v5076
        %v5169 = vpack.c.b16 %v5079, %v5078
        %v5170 = vpack.c.b16 %v5081, %v5080
        %v5171 = vpack.c.b16 %v5083, %v5082
        %v5172 = vpack.c.b16 %v5085, %v5084
        %v5173 = vpack.c.b16 %v5087, %v5086
        %v5174 = vpack.c.b16 %v5089, %v5088
        %v5175 = vpack.c.b16 %v5091, %v5090
        %v5176 = vpack.c.b16 %v5093, %v5092
        %v5177 = vpack.c.b16 %v5095, %v5094
        %v5178 = vpack.c.b16 %v5097, %v5096
        %v5179 = vpack.c.b16 %v5099, %v5098
        %v5180 = vpack.c.b16 %v5101, %v5100
        %v5181 = vpack.c.b16 %v5103, %v5102
        %v5182 = vpack.c.b16 %v5105, %v5104
        %v5183 = vpack.c.b16 %v5107, %v5106
        %v5184 = vpack.c.b16 %v5109, %v5108
        %v5185 = vpack.c.b16 %v5111, %v5110
        %v5186 = vpack.c.b16 %v5113, %v5112
        %v5187 = vpack.c.b16 %v5115, %v5114
        %v5188 = vpack.c.b16 %v5117, %v5116
        %v5189 = vpack.c.b16 %v5119, %v5118
        %v5190 = vpack.c.b16 %v5121, %v5120
        %v5191 = vpack.c.b16 %v5123, %v5122
        %v5192 = vpack.c.b16 %v5125, %v5124
        %v5193 = vpack.c.b16 %v5127, %v5126
        %v5194 = vpack.c.b16 %v5129, %v5128
        %v5195 = vpack.c.b16 %v5131, %v5130
        %5260 = vmatprep.subr.bf16.mxu0 0
        %5261 = vmatpush1.bf16.msra.mxu0 %v5139
        %5262 = vmatprep.subr.bf16.mxu0 0
        %5263 = vmatpush1.bf16.msra.mxu0 %v5138
        %5264 = vmatprep.subr.bf16.mxu0 0
        %5265 = vmatpush1.bf16.msra.mxu0 %v5137
        %5266 = vmatprep.subr.bf16.mxu0 0
        %5267 = vmatpush1.bf16.msra.mxu0 %v5136
        %5268 = vmatprep.subr.bf16.mxu0 0
        %5269 = vmatpush1.bf16.msra.mxu0 %v5135
        %5270 = vmatprep.subr.bf16.mxu0 0
        %5271 = vmatpush1.bf16.msra.mxu0 %v5134
        %5272 = vmatprep.subr.bf16.mxu0 0
        %5273 = vmatpush1.bf16.msra.mxu0 %v5133
        %5274 = vmatprep.subr.bf16.mxu0 0
        %5275 = vmatpush1.bf16.msra.mxu0 %v5132
        %5276 = vmatprep.subr.bf16.mxu0 0
        %5277 = vmatpush2.bf16.msra.mxu0 %v5147
        %5278 = vmatprep.subr.bf16.mxu0 0
        %5279 = vmatpush2.bf16.msra.mxu0 %v5146
        %5280 = vmatprep.subr.bf16.mxu0 0
        %5281 = vmatpush2.bf16.msra.mxu0 %v5145
        %5282 = vmatprep.subr.bf16.mxu0 0
        %5283 = vmatpush2.bf16.msra.mxu0 %v5144
        %5284 = vmatprep.subr.bf16.mxu0 0
        %5285 = vmatpush2.bf16.msra.mxu0 %v5143
        %5286 = vmatprep.subr.bf16.mxu0 0
        %5287 = vmatpush2.bf16.msra.mxu0 %v5142
        %5288 = vmatprep.subr.bf16.mxu0 0
        %5289 = vmatpush2.bf16.msra.mxu0 %v5141
        %5290 = vmatprep.subr.bf16.mxu0 0
        %5291 = vmatpush2.bf16.msra.mxu0 %v5140
        %5292 = vmatprep.mubr.bf16.mxu0 %v4865
        %5293 = vmatmul.mubr.bf16.gmra.mxu0 %v4864
        %v5294 = vpop.f32.mrf.mxu0
        %v5295 = vadd.f32 %v4875, %v5294
        %v5296 = vpop.f32.mrf.mxu0
        %v5297 = vpop.f32.mrf.mxu0
        %v5298 = vpop.f32.mrf.mxu0
        %5299 = vdwg.mxu0
        %5300 = vmatprep.subr.bf16.mxu0 0
        %5301 = vmatpush1.bf16.msra.mxu0 %v5155
        %5302 = vmatprep.subr.bf16.mxu0 0
        %5303 = vmatpush1.bf16.msra.mxu0 %v5154
        %5304 = vmatprep.subr.bf16.mxu0 0
        %5305 = vmatpush1.bf16.msra.mxu0 %v5153
        %5306 = vmatprep.subr.bf16.mxu0 0
        %5307 = vmatpush1.bf16.msra.mxu0 %v5152
        %5308 = vmatprep.subr.bf16.mxu0 0
        %5309 = vmatpush1.bf16.msra.mxu0 %v5151
        %5310 = vmatprep.subr.bf16.mxu0 0
        %5311 = vmatpush1.bf16.msra.mxu0 %v5150
        %5312 = vmatprep.subr.bf16.mxu0 0
        %5313 = vmatpush1.bf16.msra.mxu0 %v5149
        %5314 = vmatprep.subr.bf16.mxu0 0
        %5315 = vmatpush1.bf16.msra.mxu0 %v5148
        %5316 = vmatprep.subr.bf16.mxu0 0
        %5317 = vmatpush2.bf16.msra.mxu0 %v5163
        %5318 = vmatprep.subr.bf16.mxu0 0
        %5319 = vmatpush2.bf16.msra.mxu0 %v5162
        %5320 = vmatprep.subr.bf16.mxu0 0
        %5321 = vmatpush2.bf16.msra.mxu0 %v5161
        %5322 = vmatprep.subr.bf16.mxu0 0
        %5323 = vmatpush2.bf16.msra.mxu0 %v5160
        %5324 = vmatprep.subr.bf16.mxu0 0
        %5325 = vmatpush2.bf16.msra.mxu0 %v5159
        %5326 = vmatprep.subr.bf16.mxu0 0
        %5327 = vmatpush2.bf16.msra.mxu0 %v5158
        %5328 = vmatprep.subr.bf16.mxu0 0
        %5329 = vmatpush2.bf16.msra.mxu0 %v5157
        %5330 = vmatprep.subr.bf16.mxu0 0
        %5331 = vmatpush2.bf16.msra.mxu0 %v5156
        %5332 = vmatprep.mubr.bf16.mxu0 %v4867
        %5333 = vmatmul.mubr.bf16.gmra.mxu0 %v4866
        %v5334 = vpop.f32.mrf.mxu0
        %v5335 = vadd.f32 %v5295, %v5334
        %v5336 = vpop.f32.mrf.mxu0
        %v5337 = vpop.f32.mrf.mxu0
        %v5338 = vpop.f32.mrf.mxu0
        %5339 = vdwg.mxu0
        %5340 = vmatprep.subr.bf16.mxu0 0
        %5341 = vmatpush1.bf16.msra.mxu0 %v5171
        %5342 = vmatprep.subr.bf16.mxu0 0
        %5343 = vmatpush1.bf16.msra.mxu0 %v5170
        %5344 = vmatprep.subr.bf16.mxu0 0
        %5345 = vmatpush1.bf16.msra.mxu0 %v5169
        %5346 = vmatprep.subr.bf16.mxu0 0
        %5347 = vmatpush1.bf16.msra.mxu0 %v5168
        %5348 = vmatprep.subr.bf16.mxu0 0
        %5349 = vmatpush1.bf16.msra.mxu0 %v5167
        %5350 = vmatprep.subr.bf16.mxu0 0
        %5351 = vmatpush1.bf16.msra.mxu0 %v5166
        %5352 = vmatprep.subr.bf16.mxu0 0
        %5353 = vmatpush1.bf16.msra.mxu0 %v5165
        %5354 = vmatprep.subr.bf16.mxu0 0
        %5355 = vmatpush1.bf16.msra.mxu0 %v5164
        %5356 = vmatprep.subr.bf16.mxu0 0
        %5357 = vmatpush2.bf16.msra.mxu0 %v5179
        %5358 = vmatprep.subr.bf16.mxu0 0
        %5359 = vmatpush2.bf16.msra.mxu0 %v5178
        %5360 = vmatprep.subr.bf16.mxu0 0
        %5361 = vmatpush2.bf16.msra.mxu0 %v5177
        %5362 = vmatprep.subr.bf16.mxu0 0
        %5363 = vmatpush2.bf16.msra.mxu0 %v5176
        %5364 = vmatprep.subr.bf16.mxu0 0
        %5365 = vmatpush2.bf16.msra.mxu0 %v5175
        %5366 = vmatprep.subr.bf16.mxu0 0
        %5367 = vmatpush2.bf16.msra.mxu0 %v5174
        %5368 = vmatprep.subr.bf16.mxu0 0
        %5369 = vmatpush2.bf16.msra.mxu0 %v5173
        %5370 = vmatprep.subr.bf16.mxu0 0
        %5371 = vmatpush2.bf16.msra.mxu0 %v5172
        %5372 = vmatprep.mubr.bf16.mxu0 %v4869
        %5373 = vmatmul.mubr.bf16.gmra.mxu0 %v4868
        %v5374 = vpop.f32.mrf.mxu0
        %v5375 = vadd.f32 %v5335, %v5374
        %v5376 = vpop.f32.mrf.mxu0
        %v5377 = vpop.f32.mrf.mxu0
        %v5378 = vpop.f32.mrf.mxu0
        %5379 = vdwg.mxu0
        %5380 = vmatprep.subr.bf16.mxu0 0
        %5381 = vmatpush1.bf16.msra.mxu0 %v5187
        %5382 = vmatprep.subr.bf16.mxu0 0
        %5383 = vmatpush1.bf16.msra.mxu0 %v5186
        %5384 = vmatprep.subr.bf16.mxu0 0
        %5385 = vmatpush1.bf16.msra.mxu0 %v5185
        %5386 = vmatprep.subr.bf16.mxu0 0
        %5387 = vmatpush1.bf16.msra.mxu0 %v5184
        %5388 = vmatprep.subr.bf16.mxu0 0
        %5389 = vmatpush1.bf16.msra.mxu0 %v5183
        %5390 = vmatprep.subr.bf16.mxu0 0
        %5391 = vmatpush1.bf16.msra.mxu0 %v5182
        %5392 = vmatprep.subr.bf16.mxu0 0
        %5393 = vmatpush1.bf16.msra.mxu0 %v5181
        %5394 = vmatprep.subr.bf16.mxu0 0
        %5395 = vmatpush1.bf16.msra.mxu0 %v5180
        %5396 = vmatprep.subr.bf16.mxu0 0
        %5397 = vmatpush2.bf16.msra.mxu0 %v5195
        %5398 = vmatprep.subr.bf16.mxu0 0
        %5399 = vmatpush2.bf16.msra.mxu0 %v5194
        %5400 = vmatprep.subr.bf16.mxu0 0
        %5401 = vmatpush2.bf16.msra.mxu0 %v5193
        %5402 = vmatprep.subr.bf16.mxu0 0
        %5403 = vmatpush2.bf16.msra.mxu0 %v5192
        %5404 = vmatprep.subr.bf16.mxu0 0
        %5405 = vmatpush2.bf16.msra.mxu0 %v5191
        %5406 = vmatprep.subr.bf16.mxu0 0
        %5407 = vmatpush2.bf16.msra.mxu0 %v5190
        %5408 = vmatprep.subr.bf16.mxu0 0
        %5409 = vmatpush2.bf16.msra.mxu0 %v5189
        %5410 = vmatprep.subr.bf16.mxu0 0
        %5411 = vmatpush2.bf16.msra.mxu0 %v5188
        %5412 = vmatprep.mubr.bf16.mxu0 %v4871
        %5413 = vmatmul.mubr.bf16.gmra.mxu0 %v4870
        %v5414 = vpop.f32.mrf.mxu0
        %v5415 = vadd.f32 %v5375, %v5414
        %v5416 = vpop.f32.mrf.mxu0
        %v5417 = vpop.f32.mrf.mxu0
        %v5418 = vpop.f32.mrf.mxu0
        %5419 = vdwg.mxu0
        %vm5420 = vcmp.ge.f32.partialorder %v5415, 0.0
        %v5421 = vlaneseq
        %v5422 = vshrl.u32 %v5421, 7
        %v5423 = vsub.s32 1, %v5422
        %v5424 = vrot.slane %v4863, %v5423
        %v5425 = vmul.f32 %v5424, %v5415
        %v5426 = vsel %vm5420, %v5415, %v5425
        %v5427 = vlaneseq
        %v5428 = vshrl.u32 %v5427, 7
        %v5429 = vsub.s32 2, %v5428
        %v5430 = vrot.slane %v4863, %v5429
        %v5431 = vadd.f32 %v5426, %v5430
        %5432 = vst [vmem:[#allocation2] sm:$0xff] 0.0
        %5433 = vst [vmem:[#allocation2 + $0x8] sm:$0xff] 0.0
        %5434 = vst [vmem:[#allocation2 + $0x10] sm:$0xff] 0.0
        %5435 = vst [vmem:[#allocation2 + $0x18] sm:$0xff] 0.0
        %5436 = vst [vmem:[#allocation2 + $0x20] sm:$0xff] 0.0
        %5437 = vst [vmem:[#allocation2 + $0x28] sm:$0xff] 0.0
        %5438 = vst [vmem:[#allocation2 + $0x30] sm:$0xff] 0.0
        %5439 = vst [vmem:[#allocation2 + $0x38] sm:$0xff] 0.0
        %5440 = vst [vmem:[#allocation2 + $0x40] sm:$0xff] 0.0
        %5441 = vst [vmem:[#allocation2 + $0x48] sm:$0xff] 0.0
        %5442 = vst [vmem:[#allocation2 + $0x50] sm:$0xff] 0.0
        %5443 = vst [vmem:[#allocation2 + $0x58] sm:$0xff] 0.0
        %5444 = vst [vmem:[#allocation2 + $0x60] sm:$0xff] 0.0
        %5445 = vst [vmem:[#allocation2 + $0x68] sm:$0xff] 0.0
        %5446 = vst [vmem:[#allocation2 + $0x70] sm:$0xff] 0.0
        %5447 = vst [vmem:[#allocation2 + $0x78] sm:$0xff] 0.0
        %5448 = vst [vmem:[#allocation2 + $0x80] sm:$0xff] 0.0
        %5449 = vst [vmem:[#allocation2 + $0x3] sm:$0x3] %v5431
        %v5450 = vld [vmem:[#allocation2] ss:$2 sm:$0x1]
        %v5451 = vld [vmem:[%s296] ss:$2 sm:$0x1]
        %v5452 = vld [vmem:[%s312] ss:$2 sm:$0x1]
        %v5453 = vld [vmem:[%s328] ss:$2 sm:$0x1]
        %v5454 = vld [vmem:[%s344] ss:$2 sm:$0x1]
        %v5455 = vld [vmem:[%s360] ss:$2 sm:$0x1]
        %v5456 = vld [vmem:[%s376] ss:$2 sm:$0x1]
        %v5457 = vld [vmem:[%s392] ss:$2 sm:$0x1]
        %v5458 = vld [vmem:[#allocation3 + $0x1200] sm:$0xff]
        %v5459 = vld [vmem:[#allocation3 + $0x1208] sm:$0xff]
        %v5460 = vld [vmem:[#allocation3 + $0x1210] sm:$0xff]
        %v5461 = vld [vmem:[#allocation3 + $0x1218] sm:$0xff]
        %v5462 = vld [vmem:[#allocation3 + $0x1220] sm:$0xff]
        %v5463 = vld [vmem:[#allocation3 + $0x1228] sm:$0xff]
        %v5464 = vld [vmem:[#allocation3 + $0x1230] sm:$0xff]
        %v5465 = vld [vmem:[#allocation3 + $0x1238] sm:$0xff]
        %v5466 = vld [vmem:[#allocation3 + $0x1240] sm:$0xff]
        %v5467 = vld [vmem:[#allocation3 + $0x1248] sm:$0xff]
        %v5468 = vld [vmem:[#allocation3 + $0x1250] sm:$0xff]
        %v5469 = vld [vmem:[#allocation3 + $0x1258] sm:$0xff]
        %v5470 = vld [vmem:[#allocation3 + $0x1260] sm:$0xff]
        %v5471 = vld [vmem:[#allocation3 + $0x1268] sm:$0xff]
        %v5472 = vld [vmem:[#allocation3 + $0x1270] sm:$0xff]
        %v5473 = vld [vmem:[#allocation3 + $0x1278] sm:$0xff]
        %v5474 = vld [vmem:[#allocation3 + $0x1280] sm:$0xff]
        %v5475 = vld [vmem:[#allocation3 + $0x1288] sm:$0xff]
        %v5476 = vld [vmem:[#allocation3 + $0x1290] sm:$0xff]
        %v5477 = vld [vmem:[#allocation3 + $0x1298] sm:$0xff]
        %v5478 = vld [vmem:[#allocation3 + $0x12a0] sm:$0xff]
        %v5479 = vld [vmem:[#allocation3 + $0x12a8] sm:$0xff]
        %v5480 = vld [vmem:[#allocation3 + $0x12b0] sm:$0xff]
        %v5481 = vld [vmem:[#allocation3 + $0x12b8] sm:$0xff]
        %v5482 = vld [vmem:[#allocation3 + $0x12c0] sm:$0xff]
        %v5483 = vld [vmem:[#allocation3 + $0x12c8] sm:$0xff]
        %v5484 = vld [vmem:[#allocation3 + $0x12d0] sm:$0xff]
        %v5485 = vld [vmem:[#allocation3 + $0x12d8] sm:$0xff]
        %v5486 = vld [vmem:[#allocation3 + $0x12e0] sm:$0xff]
        %v5487 = vld [vmem:[#allocation3 + $0x12e8] sm:$0xff]
        %v5488 = vld [vmem:[#allocation3 + $0x12f0] sm:$0xff]
        %v5489 = vld [vmem:[#allocation3 + $0x12f8] sm:$0xff]
        %v5490 = vld [vmem:[#allocation3 + $0x1300] sm:$0xff]
        %v5491 = vld [vmem:[#allocation3 + $0x1308] sm:$0xff]
        %v5492 = vld [vmem:[#allocation3 + $0x1310] sm:$0xff]
        %v5493 = vld [vmem:[#allocation3 + $0x1318] sm:$0xff]
        %v5494 = vld [vmem:[#allocation3 + $0x1320] sm:$0xff]
        %v5495 = vld [vmem:[#allocation3 + $0x1328] sm:$0xff]
        %v5496 = vld [vmem:[#allocation3 + $0x1330] sm:$0xff]
        %v5497 = vld [vmem:[#allocation3 + $0x1338] sm:$0xff]
        %v5498 = vld [vmem:[#allocation3 + $0x1340] sm:$0xff]
        %v5499 = vld [vmem:[#allocation3 + $0x1348] sm:$0xff]
        %v5500 = vld [vmem:[#allocation3 + $0x1350] sm:$0xff]
        %v5501 = vld [vmem:[#allocation3 + $0x1358] sm:$0xff]
        %v5502 = vld [vmem:[#allocation3 + $0x1360] sm:$0xff]
        %v5503 = vld [vmem:[#allocation3 + $0x1368] sm:$0xff]
        %v5504 = vld [vmem:[#allocation3 + $0x1370] sm:$0xff]
        %v5505 = vld [vmem:[#allocation3 + $0x1378] sm:$0xff]
        %v5506 = vld [vmem:[#allocation3 + $0x1380] sm:$0xff]
        %v5507 = vld [vmem:[#allocation3 + $0x1388] sm:$0xff]
        %v5508 = vld [vmem:[#allocation3 + $0x1390] sm:$0xff]
        %v5509 = vld [vmem:[#allocation3 + $0x1398] sm:$0xff]
        %v5510 = vld [vmem:[#allocation3 + $0x13a0] sm:$0xff]
        %v5511 = vld [vmem:[#allocation3 + $0x13a8] sm:$0xff]
        %v5512 = vld [vmem:[#allocation3 + $0x13b0] sm:$0xff]
        %v5513 = vld [vmem:[#allocation3 + $0x13b8] sm:$0xff]
        %v5514 = vld [vmem:[#allocation3 + $0x13c0] sm:$0xff]
        %v5515 = vld [vmem:[#allocation3 + $0x13c8] sm:$0xff]
        %v5516 = vld [vmem:[#allocation3 + $0x13d0] sm:$0xff]
        %v5517 = vld [vmem:[#allocation3 + $0x13d8] sm:$0xff]
        %v5518 = vld [vmem:[#allocation3 + $0x13e0] sm:$0xff]
        %v5519 = vld [vmem:[#allocation3 + $0x13e8] sm:$0xff]
        %v5520 = vld [vmem:[#allocation3 + $0x13f0] sm:$0xff]
        %v5521 = vld [vmem:[#allocation3 + $0x13f8] sm:$0xff]
        %v5522 = vld [vmem:[#allocation3 + $0x1400] sm:$0xff]
        %v5523 = vld [vmem:[#allocation3 + $0x1408] sm:$0xff]
        %v5524 = vld [vmem:[#allocation3 + $0x1410] sm:$0xff]
        %v5525 = vld [vmem:[#allocation3 + $0x1418] sm:$0xff]
        %v5526 = vld [vmem:[#allocation3 + $0x1420] sm:$0xff]
        %v5527 = vld [vmem:[#allocation3 + $0x1428] sm:$0xff]
        %v5528 = vld [vmem:[#allocation3 + $0x1430] sm:$0xff]
        %v5529 = vld [vmem:[#allocation3 + $0x1438] sm:$0xff]
        %v5530 = vld [vmem:[#allocation3 + $0x1440] sm:$0xff]
        %v5531 = vld [vmem:[#allocation3 + $0x1448] sm:$0xff]
        %v5532 = vld [vmem:[#allocation3 + $0x1450] sm:$0xff]
        %v5533 = vld [vmem:[#allocation3 + $0x1458] sm:$0xff]
        %v5534 = vld [vmem:[#allocation3 + $0x1460] sm:$0xff]
        %v5535 = vld [vmem:[#allocation3 + $0x1468] sm:$0xff]
        %v5536 = vld [vmem:[#allocation3 + $0x1470] sm:$0xff]
        %v5537 = vld [vmem:[#allocation3 + $0x1478] sm:$0xff]
        %v5538 = vld [vmem:[#allocation3 + $0x1480] sm:$0xff]
        %v5539 = vld [vmem:[#allocation3 + $0x1488] sm:$0xff]
        %v5540 = vld [vmem:[#allocation3 + $0x1490] sm:$0xff]
        %v5541 = vld [vmem:[#allocation3 + $0x1498] sm:$0xff]
        %v5542 = vld [vmem:[#allocation3 + $0x14a0] sm:$0xff]
        %v5543 = vld [vmem:[#allocation3 + $0x14a8] sm:$0xff]
        %v5544 = vld [vmem:[#allocation3 + $0x14b0] sm:$0xff]
        %v5545 = vld [vmem:[#allocation3 + $0x14b8] sm:$0xff]
        %v5546 = vld [vmem:[#allocation3 + $0x14c0] sm:$0xff]
        %v5547 = vld [vmem:[#allocation3 + $0x14c8] sm:$0xff]
        %v5548 = vld [vmem:[#allocation3 + $0x14d0] sm:$0xff]
        %v5549 = vld [vmem:[#allocation3 + $0x14d8] sm:$0xff]
        %v5550 = vld [vmem:[#allocation3 + $0x14e0] sm:$0xff]
        %v5551 = vld [vmem:[#allocation3 + $0x14e8] sm:$0xff]
        %v5552 = vld [vmem:[#allocation3 + $0x14f0] sm:$0xff]
        %v5553 = vld [vmem:[#allocation3 + $0x14f8] sm:$0xff]
        %v5554 = vld [vmem:[#allocation3 + $0x1500] sm:$0xff]
        %v5555 = vld [vmem:[#allocation3 + $0x1508] sm:$0xff]
        %v5556 = vld [vmem:[#allocation3 + $0x1510] sm:$0xff]
        %v5557 = vld [vmem:[#allocation3 + $0x1518] sm:$0xff]
        %v5558 = vld [vmem:[#allocation3 + $0x1520] sm:$0xff]
        %v5559 = vld [vmem:[#allocation3 + $0x1528] sm:$0xff]
        %v5560 = vld [vmem:[#allocation3 + $0x1530] sm:$0xff]
        %v5561 = vld [vmem:[#allocation3 + $0x1538] sm:$0xff]
        %v5562 = vld [vmem:[#allocation3 + $0x1540] sm:$0xff]
        %v5563 = vld [vmem:[#allocation3 + $0x1548] sm:$0xff]
        %v5564 = vld [vmem:[#allocation3 + $0x1550] sm:$0xff]
        %v5565 = vld [vmem:[#allocation3 + $0x1558] sm:$0xff]
        %v5566 = vld [vmem:[#allocation3 + $0x1560] sm:$0xff]
        %v5567 = vld [vmem:[#allocation3 + $0x1568] sm:$0xff]
        %v5568 = vld [vmem:[#allocation3 + $0x1570] sm:$0xff]
        %v5569 = vld [vmem:[#allocation3 + $0x1578] sm:$0xff]
        %v5570 = vld [vmem:[#allocation3 + $0x1580] sm:$0xff]
        %v5571 = vld [vmem:[#allocation3 + $0x1588] sm:$0xff]
        %v5572 = vld [vmem:[#allocation3 + $0x1590] sm:$0xff]
        %v5573 = vld [vmem:[#allocation3 + $0x1598] sm:$0xff]
        %v5574 = vld [vmem:[#allocation3 + $0x15a0] sm:$0xff]
        %v5575 = vld [vmem:[#allocation3 + $0x15a8] sm:$0xff]
        %v5576 = vld [vmem:[#allocation3 + $0x15b0] sm:$0xff]
        %v5577 = vld [vmem:[#allocation3 + $0x15b8] sm:$0xff]
        %v5578 = vld [vmem:[#allocation3 + $0x15c0] sm:$0xff]
        %v5579 = vld [vmem:[#allocation3 + $0x15c8] sm:$0xff]
        %v5580 = vld [vmem:[#allocation3 + $0x15d0] sm:$0xff]
        %v5581 = vld [vmem:[#allocation3 + $0x15d8] sm:$0xff]
        %v5582 = vld [vmem:[#allocation3 + $0x15e0] sm:$0xff]
        %v5583 = vld [vmem:[#allocation3 + $0x15e8] sm:$0xff]
        %v5584 = vld [vmem:[#allocation3 + $0x15f0] sm:$0xff]
        %v5585 = vld [vmem:[#allocation3 + $0x15f8] sm:$0xff]
        %s5586 = scalar_lea.vmem %s3, 104
        %v5587 = vld [vmem:[%s5586] sm:$0x77]
        %v5588 = vpack.c.bf16 %v5450, %v5450
        %v5589 = vpack.c.bf16 %v5451, %v5451
        %v5590 = vpack.c.bf16 %v5452, %v5452
        %v5591 = vpack.c.bf16 %v5453, %v5453
        %v5592 = vpack.c.bf16 %v5454, %v5454
        %v5593 = vpack.c.bf16 %v5455, %v5455
        %v5594 = vpack.c.bf16 %v5456, %v5456
        %v5595 = vpack.c.bf16 %v5457, %v5457
        %v5724 = vunpack.c.l.b16 %v5458
        %v5725 = vunpack.c.h.b16 %v5458
        %v5726 = vunpack.c.l.b16 %v5459
        %v5727 = vunpack.c.h.b16 %v5459
        %v5728 = vunpack.c.l.b16 %v5460
        %v5729 = vunpack.c.h.b16 %v5460
        %v5730 = vunpack.c.l.b16 %v5461
        %v5731 = vunpack.c.h.b16 %v5461
        %v5732 = vunpack.c.l.b16 %v5462
        %v5733 = vunpack.c.h.b16 %v5462
        %v5734 = vunpack.c.l.b16 %v5463
        %v5735 = vunpack.c.h.b16 %v5463
        %v5736 = vunpack.c.l.b16 %v5464
        %v5737 = vunpack.c.h.b16 %v5464
        %v5738 = vunpack.c.l.b16 %v5465
        %v5739 = vunpack.c.h.b16 %v5465
        %v5740 = vunpack.c.l.b16 %v5466
        %v5741 = vunpack.c.h.b16 %v5466
        %v5742 = vunpack.c.l.b16 %v5467
        %v5743 = vunpack.c.h.b16 %v5467
        %v5744 = vunpack.c.l.b16 %v5468
        %v5745 = vunpack.c.h.b16 %v5468
        %v5746 = vunpack.c.l.b16 %v5469
        %v5747 = vunpack.c.h.b16 %v5469
        %v5748 = vunpack.c.l.b16 %v5470
        %v5749 = vunpack.c.h.b16 %v5470
        %v5750 = vunpack.c.l.b16 %v5471
        %v5751 = vunpack.c.h.b16 %v5471
        %v5752 = vunpack.c.l.b16 %v5472
        %v5753 = vunpack.c.h.b16 %v5472
        %v5754 = vunpack.c.l.b16 %v5473
        %v5755 = vunpack.c.h.b16 %v5473
        %v5756 = vunpack.c.l.b16 %v5474
        %v5757 = vunpack.c.h.b16 %v5474
        %v5758 = vunpack.c.l.b16 %v5475
        %v5759 = vunpack.c.h.b16 %v5475
        %v5760 = vunpack.c.l.b16 %v5476
        %v5761 = vunpack.c.h.b16 %v5476
        %v5762 = vunpack.c.l.b16 %v5477
        %v5763 = vunpack.c.h.b16 %v5477
        %v5764 = vunpack.c.l.b16 %v5478
        %v5765 = vunpack.c.h.b16 %v5478
        %v5766 = vunpack.c.l.b16 %v5479
        %v5767 = vunpack.c.h.b16 %v5479
        %v5768 = vunpack.c.l.b16 %v5480
        %v5769 = vunpack.c.h.b16 %v5480
        %v5770 = vunpack.c.l.b16 %v5481
        %v5771 = vunpack.c.h.b16 %v5481
        %v5772 = vunpack.c.l.b16 %v5482
        %v5773 = vunpack.c.h.b16 %v5482
        %v5774 = vunpack.c.l.b16 %v5483
        %v5775 = vunpack.c.h.b16 %v5483
        %v5776 = vunpack.c.l.b16 %v5484
        %v5777 = vunpack.c.h.b16 %v5484
        %v5778 = vunpack.c.l.b16 %v5485
        %v5779 = vunpack.c.h.b16 %v5485
        %v5780 = vunpack.c.l.b16 %v5486
        %v5781 = vunpack.c.h.b16 %v5486
        %v5782 = vunpack.c.l.b16 %v5487
        %v5783 = vunpack.c.h.b16 %v5487
        %v5784 = vunpack.c.l.b16 %v5488
        %v5785 = vunpack.c.h.b16 %v5488
        %v5786 = vunpack.c.l.b16 %v5489
        %v5787 = vunpack.c.h.b16 %v5489
        %v5788 = vunpack.c.l.b16 %v5490
        %v5789 = vunpack.c.h.b16 %v5490
        %v5790 = vunpack.c.l.b16 %v5491
        %v5791 = vunpack.c.h.b16 %v5491
        %v5792 = vunpack.c.l.b16 %v5492
        %v5793 = vunpack.c.h.b16 %v5492
        %v5794 = vunpack.c.l.b16 %v5493
        %v5795 = vunpack.c.h.b16 %v5493
        %v5796 = vunpack.c.l.b16 %v5494
        %v5797 = vunpack.c.h.b16 %v5494
        %v5798 = vunpack.c.l.b16 %v5495
        %v5799 = vunpack.c.h.b16 %v5495
        %v5800 = vunpack.c.l.b16 %v5496
        %v5801 = vunpack.c.h.b16 %v5496
        %v5802 = vunpack.c.l.b16 %v5497
        %v5803 = vunpack.c.h.b16 %v5497
        %v5804 = vunpack.c.l.b16 %v5498
        %v5805 = vunpack.c.h.b16 %v5498
        %v5806 = vunpack.c.l.b16 %v5499
        %v5807 = vunpack.c.h.b16 %v5499
        %v5808 = vunpack.c.l.b16 %v5500
        %v5809 = vunpack.c.h.b16 %v5500
        %v5810 = vunpack.c.l.b16 %v5501
        %v5811 = vunpack.c.h.b16 %v5501
        %v5812 = vunpack.c.l.b16 %v5502
        %v5813 = vunpack.c.h.b16 %v5502
        %v5814 = vunpack.c.l.b16 %v5503
        %v5815 = vunpack.c.h.b16 %v5503
        %v5816 = vunpack.c.l.b16 %v5504
        %v5817 = vunpack.c.h.b16 %v5504
        %v5818 = vunpack.c.l.b16 %v5505
        %v5819 = vunpack.c.h.b16 %v5505
        %v5820 = vunpack.c.l.b16 %v5506
        %v5821 = vunpack.c.h.b16 %v5506
        %v5822 = vunpack.c.l.b16 %v5507
        %v5823 = vunpack.c.h.b16 %v5507
        %v5824 = vunpack.c.l.b16 %v5508
        %v5825 = vunpack.c.h.b16 %v5508
        %v5826 = vunpack.c.l.b16 %v5509
        %v5827 = vunpack.c.h.b16 %v5509
        %v5828 = vunpack.c.l.b16 %v5510
        %v5829 = vunpack.c.h.b16 %v5510
        %v5830 = vunpack.c.l.b16 %v5511
        %v5831 = vunpack.c.h.b16 %v5511
        %v5832 = vunpack.c.l.b16 %v5512
        %v5833 = vunpack.c.h.b16 %v5512
        %v5834 = vunpack.c.l.b16 %v5513
        %v5835 = vunpack.c.h.b16 %v5513
        %v5836 = vunpack.c.l.b16 %v5514
        %v5837 = vunpack.c.h.b16 %v5514
        %v5838 = vunpack.c.l.b16 %v5515
        %v5839 = vunpack.c.h.b16 %v5515
        %v5840 = vunpack.c.l.b16 %v5516
        %v5841 = vunpack.c.h.b16 %v5516
        %v5842 = vunpack.c.l.b16 %v5517
        %v5843 = vunpack.c.h.b16 %v5517
        %v5844 = vunpack.c.l.b16 %v5518
        %v5845 = vunpack.c.h.b16 %v5518
        %v5846 = vunpack.c.l.b16 %v5519
        %v5847 = vunpack.c.h.b16 %v5519
        %v5848 = vunpack.c.l.b16 %v5520
        %v5849 = vunpack.c.h.b16 %v5520
        %v5850 = vunpack.c.l.b16 %v5521
        %v5851 = vunpack.c.h.b16 %v5521
        %v5852 = vunpack.c.l.b16 %v5522
        %v5853 = vunpack.c.h.b16 %v5522
        %v5854 = vunpack.c.l.b16 %v5523
        %v5855 = vunpack.c.h.b16 %v5523
        %v5856 = vunpack.c.l.b16 %v5524
        %v5857 = vunpack.c.h.b16 %v5524
        %v5858 = vunpack.c.l.b16 %v5525
        %v5859 = vunpack.c.h.b16 %v5525
        %v5860 = vunpack.c.l.b16 %v5526
        %v5861 = vunpack.c.h.b16 %v5526
        %v5862 = vunpack.c.l.b16 %v5527
        %v5863 = vunpack.c.h.b16 %v5527
        %v5864 = vunpack.c.l.b16 %v5528
        %v5865 = vunpack.c.h.b16 %v5528
        %v5866 = vunpack.c.l.b16 %v5529
        %v5867 = vunpack.c.h.b16 %v5529
        %v5868 = vunpack.c.l.b16 %v5530
        %v5869 = vunpack.c.h.b16 %v5530
        %v5870 = vunpack.c.l.b16 %v5531
        %v5871 = vunpack.c.h.b16 %v5531
        %v5872 = vunpack.c.l.b16 %v5532
        %v5873 = vunpack.c.h.b16 %v5532
        %v5874 = vunpack.c.l.b16 %v5533
        %v5875 = vunpack.c.h.b16 %v5533
        %v5876 = vunpack.c.l.b16 %v5534
        %v5877 = vunpack.c.h.b16 %v5534
        %v5878 = vunpack.c.l.b16 %v5535
        %v5879 = vunpack.c.h.b16 %v5535
        %v5880 = vunpack.c.l.b16 %v5536
        %v5881 = vunpack.c.h.b16 %v5536
        %v5882 = vunpack.c.l.b16 %v5537
        %v5883 = vunpack.c.h.b16 %v5537
        %v5884 = vunpack.c.l.b16 %v5538
        %v5885 = vunpack.c.h.b16 %v5538
        %v5886 = vunpack.c.l.b16 %v5539
        %v5887 = vunpack.c.h.b16 %v5539
        %v5888 = vunpack.c.l.b16 %v5540
        %v5889 = vunpack.c.h.b16 %v5540
        %v5890 = vunpack.c.l.b16 %v5541
        %v5891 = vunpack.c.h.b16 %v5541
        %v5892 = vunpack.c.l.b16 %v5542
        %v5893 = vunpack.c.h.b16 %v5542
        %v5894 = vunpack.c.l.b16 %v5543
        %v5895 = vunpack.c.h.b16 %v5543
        %v5896 = vunpack.c.l.b16 %v5544
        %v5897 = vunpack.c.h.b16 %v5544
        %v5898 = vunpack.c.l.b16 %v5545
        %v5899 = vunpack.c.h.b16 %v5545
        %v5900 = vunpack.c.l.b16 %v5546
        %v5901 = vunpack.c.h.b16 %v5546
        %v5902 = vunpack.c.l.b16 %v5547
        %v5903 = vunpack.c.h.b16 %v5547
        %v5904 = vunpack.c.l.b16 %v5548
        %v5905 = vunpack.c.h.b16 %v5548
        %v5906 = vunpack.c.l.b16 %v5549
        %v5907 = vunpack.c.h.b16 %v5549
        %v5908 = vunpack.c.l.b16 %v5550
        %v5909 = vunpack.c.h.b16 %v5550
        %v5910 = vunpack.c.l.b16 %v5551
        %v5911 = vunpack.c.h.b16 %v5551
        %v5912 = vunpack.c.l.b16 %v5552
        %v5913 = vunpack.c.h.b16 %v5552
        %v5914 = vunpack.c.l.b16 %v5553
        %v5915 = vunpack.c.h.b16 %v5553
        %v5916 = vunpack.c.l.b16 %v5554
        %v5917 = vunpack.c.h.b16 %v5554
        %v5918 = vunpack.c.l.b16 %v5555
        %v5919 = vunpack.c.h.b16 %v5555
        %v5920 = vunpack.c.l.b16 %v5556
        %v5921 = vunpack.c.h.b16 %v5556
        %v5922 = vunpack.c.l.b16 %v5557
        %v5923 = vunpack.c.h.b16 %v5557
        %v5924 = vunpack.c.l.b16 %v5558
        %v5925 = vunpack.c.h.b16 %v5558
        %v5926 = vunpack.c.l.b16 %v5559
        %v5927 = vunpack.c.h.b16 %v5559
        %v5928 = vunpack.c.l.b16 %v5560
        %v5929 = vunpack.c.h.b16 %v5560
        %v5930 = vunpack.c.l.b16 %v5561
        %v5931 = vunpack.c.h.b16 %v5561
        %v5932 = vunpack.c.l.b16 %v5562
        %v5933 = vunpack.c.h.b16 %v5562
        %v5934 = vunpack.c.l.b16 %v5563
        %v5935 = vunpack.c.h.b16 %v5563
        %v5936 = vunpack.c.l.b16 %v5564
        %v5937 = vunpack.c.h.b16 %v5564
        %v5938 = vunpack.c.l.b16 %v5565
        %v5939 = vunpack.c.h.b16 %v5565
        %v5940 = vunpack.c.l.b16 %v5566
        %v5941 = vunpack.c.h.b16 %v5566
        %v5942 = vunpack.c.l.b16 %v5567
        %v5943 = vunpack.c.h.b16 %v5567
        %v5944 = vunpack.c.l.b16 %v5568
        %v5945 = vunpack.c.h.b16 %v5568
        %v5946 = vunpack.c.l.b16 %v5569
        %v5947 = vunpack.c.h.b16 %v5569
        %v5948 = vunpack.c.l.b16 %v5570
        %v5949 = vunpack.c.h.b16 %v5570
        %v5950 = vunpack.c.l.b16 %v5571
        %v5951 = vunpack.c.h.b16 %v5571
        %v5952 = vunpack.c.l.b16 %v5572
        %v5953 = vunpack.c.h.b16 %v5572
        %v5954 = vunpack.c.l.b16 %v5573
        %v5955 = vunpack.c.h.b16 %v5573
        %v5956 = vunpack.c.l.b16 %v5574
        %v5957 = vunpack.c.h.b16 %v5574
        %v5958 = vunpack.c.l.b16 %v5575
        %v5959 = vunpack.c.h.b16 %v5575
        %v5960 = vunpack.c.l.b16 %v5576
        %v5961 = vunpack.c.h.b16 %v5576
        %v5962 = vunpack.c.l.b16 %v5577
        %v5963 = vunpack.c.h.b16 %v5577
        %v5964 = vunpack.c.l.b16 %v5578
        %v5965 = vunpack.c.h.b16 %v5578
        %v5966 = vunpack.c.l.b16 %v5579
        %v5967 = vunpack.c.h.b16 %v5579
        %v5968 = vunpack.c.l.b16 %v5580
        %v5969 = vunpack.c.h.b16 %v5580
        %v5970 = vunpack.c.l.b16 %v5581
        %v5971 = vunpack.c.h.b16 %v5581
        %v5972 = vunpack.c.l.b16 %v5582
        %v5973 = vunpack.c.h.b16 %v5582
        %v5974 = vunpack.c.l.b16 %v5583
        %v5975 = vunpack.c.h.b16 %v5583
        %v5976 = vunpack.c.l.b16 %v5584
        %v5977 = vunpack.c.h.b16 %v5584
        %v5978 = vunpack.c.l.b16 %v5585
        %v5979 = vunpack.c.h.b16 %v5585
        %v5980 = vpack.c.b16 %v5726, %v5724
        %v5981 = vpack.c.b16 %v5727, %v5725
        %v5982 = vpack.c.b16 %v5730, %v5728
        %v5983 = vpack.c.b16 %v5731, %v5729
        %v5984 = vpack.c.b16 %v5734, %v5732
        %v5985 = vpack.c.b16 %v5735, %v5733
        %v5986 = vpack.c.b16 %v5738, %v5736
        %v5987 = vpack.c.b16 %v5739, %v5737
        %v5988 = vpack.c.b16 %v5742, %v5740
        %v5989 = vpack.c.b16 %v5743, %v5741
        %v5990 = vpack.c.b16 %v5746, %v5744
        %v5991 = vpack.c.b16 %v5747, %v5745
        %v5992 = vpack.c.b16 %v5750, %v5748
        %v5993 = vpack.c.b16 %v5751, %v5749
        %v5994 = vpack.c.b16 %v5754, %v5752
        %v5995 = vpack.c.b16 %v5755, %v5753
        %v5996 = vpack.c.b16 %v5758, %v5756
        %v5997 = vpack.c.b16 %v5759, %v5757
        %v5998 = vpack.c.b16 %v5762, %v5760
        %v5999 = vpack.c.b16 %v5763, %v5761
        %v6000 = vpack.c.b16 %v5766, %v5764
        %v6001 = vpack.c.b16 %v5767, %v5765
        %v6002 = vpack.c.b16 %v5770, %v5768
        %v6003 = vpack.c.b16 %v5771, %v5769
        %v6004 = vpack.c.b16 %v5774, %v5772
        %v6005 = vpack.c.b16 %v5775, %v5773
        %v6006 = vpack.c.b16 %v5778, %v5776
        %v6007 = vpack.c.b16 %v5779, %v5777
        %v6008 = vpack.c.b16 %v5782, %v5780
        %v6009 = vpack.c.b16 %v5783, %v5781
        %v6010 = vpack.c.b16 %v5786, %v5784
        %v6011 = vpack.c.b16 %v5787, %v5785
        %v6012 = vpack.c.b16 %v5790, %v5788
        %v6013 = vpack.c.b16 %v5791, %v5789
        %v6014 = vpack.c.b16 %v5794, %v5792
        %v6015 = vpack.c.b16 %v5795, %v5793
        %v6016 = vpack.c.b16 %v5798, %v5796
        %v6017 = vpack.c.b16 %v5799, %v5797
        %v6018 = vpack.c.b16 %v5802, %v5800
        %v6019 = vpack.c.b16 %v5803, %v5801
        %v6020 = vpack.c.b16 %v5806, %v5804
        %v6021 = vpack.c.b16 %v5807, %v5805
        %v6022 = vpack.c.b16 %v5810, %v5808
        %v6023 = vpack.c.b16 %v5811, %v5809
        %v6024 = vpack.c.b16 %v5814, %v5812
        %v6025 = vpack.c.b16 %v5815, %v5813
        %v6026 = vpack.c.b16 %v5818, %v5816
        %v6027 = vpack.c.b16 %v5819, %v5817
        %v6028 = vpack.c.b16 %v5822, %v5820
        %v6029 = vpack.c.b16 %v5823, %v5821
        %v6030 = vpack.c.b16 %v5826, %v5824
        %v6031 = vpack.c.b16 %v5827, %v5825
        %v6032 = vpack.c.b16 %v5830, %v5828
        %v6033 = vpack.c.b16 %v5831, %v5829
        %v6034 = vpack.c.b16 %v5834, %v5832
        %v6035 = vpack.c.b16 %v5835, %v5833
        %v6036 = vpack.c.b16 %v5838, %v5836
        %v6037 = vpack.c.b16 %v5839, %v5837
        %v6038 = vpack.c.b16 %v5842, %v5840
        %v6039 = vpack.c.b16 %v5843, %v5841
        %v6040 = vpack.c.b16 %v5846, %v5844
        %v6041 = vpack.c.b16 %v5847, %v5845
        %v6042 = vpack.c.b16 %v5850, %v5848
        %v6043 = vpack.c.b16 %v5851, %v5849
        %v6044 = vpack.c.b16 %v5854, %v5852
        %v6045 = vpack.c.b16 %v5855, %v5853
        %v6046 = vpack.c.b16 %v5858, %v5856
        %v6047 = vpack.c.b16 %v5859, %v5857
        %v6048 = vpack.c.b16 %v5862, %v5860
        %v6049 = vpack.c.b16 %v5863, %v5861
        %v6050 = vpack.c.b16 %v5866, %v5864
        %v6051 = vpack.c.b16 %v5867, %v5865
        %v6052 = vpack.c.b16 %v5870, %v5868
        %v6053 = vpack.c.b16 %v5871, %v5869
        %v6054 = vpack.c.b16 %v5874, %v5872
        %v6055 = vpack.c.b16 %v5875, %v5873
        %v6056 = vpack.c.b16 %v5878, %v5876
        %v6057 = vpack.c.b16 %v5879, %v5877
        %v6058 = vpack.c.b16 %v5882, %v5880
        %v6059 = vpack.c.b16 %v5883, %v5881
        %v6060 = vpack.c.b16 %v5886, %v5884
        %v6061 = vpack.c.b16 %v5887, %v5885
        %v6062 = vpack.c.b16 %v5890, %v5888
        %v6063 = vpack.c.b16 %v5891, %v5889
        %v6064 = vpack.c.b16 %v5894, %v5892
        %v6065 = vpack.c.b16 %v5895, %v5893
        %v6066 = vpack.c.b16 %v5898, %v5896
        %v6067 = vpack.c.b16 %v5899, %v5897
        %v6068 = vpack.c.b16 %v5902, %v5900
        %v6069 = vpack.c.b16 %v5903, %v5901
        %v6070 = vpack.c.b16 %v5906, %v5904
        %v6071 = vpack.c.b16 %v5907, %v5905
        %v6072 = vpack.c.b16 %v5910, %v5908
        %v6073 = vpack.c.b16 %v5911, %v5909
        %v6074 = vpack.c.b16 %v5914, %v5912
        %v6075 = vpack.c.b16 %v5915, %v5913
        %v6076 = vpack.c.b16 %v5918, %v5916
        %v6077 = vpack.c.b16 %v5919, %v5917
        %v6078 = vpack.c.b16 %v5922, %v5920
        %v6079 = vpack.c.b16 %v5923, %v5921
        %v6080 = vpack.c.b16 %v5926, %v5924
        %v6081 = vpack.c.b16 %v5927, %v5925
        %v6082 = vpack.c.b16 %v5930, %v5928
        %v6083 = vpack.c.b16 %v5931, %v5929
        %v6084 = vpack.c.b16 %v5934, %v5932
        %v6085 = vpack.c.b16 %v5935, %v5933
        %v6086 = vpack.c.b16 %v5938, %v5936
        %v6087 = vpack.c.b16 %v5939, %v5937
        %v6088 = vpack.c.b16 %v5942, %v5940
        %v6089 = vpack.c.b16 %v5943, %v5941
        %v6090 = vpack.c.b16 %v5946, %v5944
        %v6091 = vpack.c.b16 %v5947, %v5945
        %v6092 = vpack.c.b16 %v5950, %v5948
        %v6093 = vpack.c.b16 %v5951, %v5949
        %v6094 = vpack.c.b16 %v5954, %v5952
        %v6095 = vpack.c.b16 %v5955, %v5953
        %v6096 = vpack.c.b16 %v5958, %v5956
        %v6097 = vpack.c.b16 %v5959, %v5957
        %v6098 = vpack.c.b16 %v5962, %v5960
        %v6099 = vpack.c.b16 %v5963, %v5961
        %v6100 = vpack.c.b16 %v5966, %v5964
        %v6101 = vpack.c.b16 %v5967, %v5965
        %v6102 = vpack.c.b16 %v5970, %v5968
        %v6103 = vpack.c.b16 %v5971, %v5969
        %v6104 = vpack.c.b16 %v5974, %v5972
        %v6105 = vpack.c.b16 %v5975, %v5973
        %v6106 = vpack.c.b16 %v5978, %v5976
        %v6107 = vpack.c.b16 %v5979, %v5977
        %v6237 = vlaneseq
        %v6238 = vshrl.u32 %v6237, 7
        %v6239 = vsub.s32 0, %v6238
        %v6240 = vrot.slane %v5587, %v6239
        %v6241 = vlaneseq
        %v6242 = vshrl.u32 %v6241, 7
        %v6243 = vsub.s32 4, %v6242
        %v6244 = vrot.slane %v5587, %v6243
        %6247 = vmatprep.subr.bf16.mxu0 %v5995
        %6248 = vmatpush1.bf16.msra.mxu0 %v5994
        %6249 = vmatprep.subr.bf16.mxu0 %v5993
        %6250 = vmatpush1.bf16.msra.mxu0 %v5992
        %6251 = vmatprep.subr.bf16.mxu0 %v5991
        %6252 = vmatpush1.bf16.msra.mxu0 %v5990
        %6253 = vmatprep.subr.bf16.mxu0 %v5989
        %6254 = vmatpush1.bf16.msra.mxu0 %v5988
        %6255 = vmatprep.subr.bf16.mxu0 %v5987
        %6256 = vmatpush1.bf16.msra.mxu0 %v5986
        %6257 = vmatprep.subr.bf16.mxu0 %v5985
        %6258 = vmatpush1.bf16.msra.mxu0 %v5984
        %6259 = vmatprep.subr.bf16.mxu0 %v5983
        %6260 = vmatpush1.bf16.msra.mxu0 %v5982
        %6261 = vmatprep.subr.bf16.mxu0 %v5981
        %6262 = vmatpush1.bf16.msra.mxu0 %v5980
        %6263 = vmatprep.subr.bf16.mxu0 %v6011
        %6264 = vmatpush2.bf16.msra.mxu0 %v6010
        %6265 = vmatprep.subr.bf16.mxu0 %v6009
        %6266 = vmatpush2.bf16.msra.mxu0 %v6008
        %6267 = vmatprep.subr.bf16.mxu0 %v6007
        %6268 = vmatpush2.bf16.msra.mxu0 %v6006
        %6269 = vmatprep.subr.bf16.mxu0 %v6005
        %6270 = vmatpush2.bf16.msra.mxu0 %v6004
        %6271 = vmatprep.subr.bf16.mxu0 %v6003
        %6272 = vmatpush2.bf16.msra.mxu0 %v6002
        %6273 = vmatprep.subr.bf16.mxu0 %v6001
        %6274 = vmatpush2.bf16.msra.mxu0 %v6000
        %6275 = vmatprep.subr.bf16.mxu0 %v5999
        %6276 = vmatpush2.bf16.msra.mxu0 %v5998
        %6277 = vmatprep.subr.bf16.mxu0 %v5997
        %6278 = vmatpush2.bf16.msra.mxu0 %v5996
        %6279 = vmatprep.mubr.bf16.mxu0 %v5589
        %6280 = vmatmul.mubr.bf16.gmra.mxu0 %v5588
        %v6281 = vpop.f32.mrf.mxu0
        %v6282 = vadd.f32 %v6240, %v6281
        %v6283 = vpop.f32.mrf.mxu0
        %v6284 = vadd.f32 %v6244, %v6283
        %v6285 = vpop.f32.mrf.mxu0
        %v6286 = vpop.f32.mrf.mxu0
        %6287 = vdwg.mxu0
        %6288 = vmatprep.subr.bf16.mxu0 %v6027
        %6289 = vmatpush1.bf16.msra.mxu0 %v6026
        %6290 = vmatprep.subr.bf16.mxu0 %v6025
        %6291 = vmatpush1.bf16.msra.mxu0 %v6024
        %6292 = vmatprep.subr.bf16.mxu0 %v6023
        %6293 = vmatpush1.bf16.msra.mxu0 %v6022
        %6294 = vmatprep.subr.bf16.mxu0 %v6021
        %6295 = vmatpush1.bf16.msra.mxu0 %v6020
        %6296 = vmatprep.subr.bf16.mxu0 %v6019
        %6297 = vmatpush1.bf16.msra.mxu0 %v6018
        %6298 = vmatprep.subr.bf16.mxu0 %v6017
        %6299 = vmatpush1.bf16.msra.mxu0 %v6016
        %6300 = vmatprep.subr.bf16.mxu0 %v6015
        %6301 = vmatpush1.bf16.msra.mxu0 %v6014
        %6302 = vmatprep.subr.bf16.mxu0 %v6013
        %6303 = vmatpush1.bf16.msra.mxu0 %v6012
        %6304 = vmatprep.subr.bf16.mxu0 %v6043
        %6305 = vmatpush2.bf16.msra.mxu0 %v6042
        %6306 = vmatprep.subr.bf16.mxu0 %v6041
        %6307 = vmatpush2.bf16.msra.mxu0 %v6040
        %6308 = vmatprep.subr.bf16.mxu0 %v6039
        %6309 = vmatpush2.bf16.msra.mxu0 %v6038
        %6310 = vmatprep.subr.bf16.mxu0 %v6037
        %6311 = vmatpush2.bf16.msra.mxu0 %v6036
        %6312 = vmatprep.subr.bf16.mxu0 %v6035
        %6313 = vmatpush2.bf16.msra.mxu0 %v6034
        %6314 = vmatprep.subr.bf16.mxu0 %v6033
        %6315 = vmatpush2.bf16.msra.mxu0 %v6032
        %6316 = vmatprep.subr.bf16.mxu0 %v6031
        %6317 = vmatpush2.bf16.msra.mxu0 %v6030
        %6318 = vmatprep.subr.bf16.mxu0 %v6029
        %6319 = vmatpush2.bf16.msra.mxu0 %v6028
        %6320 = vmatprep.mubr.bf16.mxu0 %v5591
        %6321 = vmatmul.mubr.bf16.gmra.mxu0 %v5590
        %v6322 = vpop.f32.mrf.mxu0
        %v6323 = vadd.f32 %v6282, %v6322
        %v6324 = vpop.f32.mrf.mxu0
        %v6325 = vadd.f32 %v6284, %v6324
        %v6326 = vpop.f32.mrf.mxu0
        %v6327 = vpop.f32.mrf.mxu0
        %6328 = vdwg.mxu0
        %6329 = vmatprep.subr.bf16.mxu0 %v6059
        %6330 = vmatpush1.bf16.msra.mxu0 %v6058
        %6331 = vmatprep.subr.bf16.mxu0 %v6057
        %6332 = vmatpush1.bf16.msra.mxu0 %v6056
        %6333 = vmatprep.subr.bf16.mxu0 %v6055
        %6334 = vmatpush1.bf16.msra.mxu0 %v6054
        %6335 = vmatprep.subr.bf16.mxu0 %v6053
        %6336 = vmatpush1.bf16.msra.mxu0 %v6052
        %6337 = vmatprep.subr.bf16.mxu0 %v6051
        %6338 = vmatpush1.bf16.msra.mxu0 %v6050
        %6339 = vmatprep.subr.bf16.mxu0 %v6049
        %6340 = vmatpush1.bf16.msra.mxu0 %v6048
        %6341 = vmatprep.subr.bf16.mxu0 %v6047
        %6342 = vmatpush1.bf16.msra.mxu0 %v6046
        %6343 = vmatprep.subr.bf16.mxu0 %v6045
        %6344 = vmatpush1.bf16.msra.mxu0 %v6044
        %6345 = vmatprep.subr.bf16.mxu0 %v6075
        %6346 = vmatpush2.bf16.msra.mxu0 %v6074
        %6347 = vmatprep.subr.bf16.mxu0 %v6073
        %6348 = vmatpush2.bf16.msra.mxu0 %v6072
        %6349 = vmatprep.subr.bf16.mxu0 %v6071
        %6350 = vmatpush2.bf16.msra.mxu0 %v6070
        %6351 = vmatprep.subr.bf16.mxu0 %v6069
        %6352 = vmatpush2.bf16.msra.mxu0 %v6068
        %6353 = vmatprep.subr.bf16.mxu0 %v6067
        %6354 = vmatpush2.bf16.msra.mxu0 %v6066
        %6355 = vmatprep.subr.bf16.mxu0 %v6065
        %6356 = vmatpush2.bf16.msra.mxu0 %v6064
        %6357 = vmatprep.subr.bf16.mxu0 %v6063
        %6358 = vmatpush2.bf16.msra.mxu0 %v6062
        %6359 = vmatprep.subr.bf16.mxu0 %v6061
        %6360 = vmatpush2.bf16.msra.mxu0 %v6060
        %6361 = vmatprep.mubr.bf16.mxu0 %v5593
        %6362 = vmatmul.mubr.bf16.gmra.mxu0 %v5592
        %v6363 = vpop.f32.mrf.mxu0
        %v6364 = vadd.f32 %v6323, %v6363
        %v6365 = vpop.f32.mrf.mxu0
        %v6366 = vadd.f32 %v6325, %v6365
        %v6367 = vpop.f32.mrf.mxu0
        %v6368 = vpop.f32.mrf.mxu0
        %6369 = vdwg.mxu0
        %6370 = vmatprep.subr.bf16.mxu0 %v6091
        %6371 = vmatpush1.bf16.msra.mxu0 %v6090
        %6372 = vmatprep.subr.bf16.mxu0 %v6089
        %6373 = vmatpush1.bf16.msra.mxu0 %v6088
        %6374 = vmatprep.subr.bf16.mxu0 %v6087
        %6375 = vmatpush1.bf16.msra.mxu0 %v6086
        %6376 = vmatprep.subr.bf16.mxu0 %v6085
        %6377 = vmatpush1.bf16.msra.mxu0 %v6084
        %6378 = vmatprep.subr.bf16.mxu0 %v6083
        %6379 = vmatpush1.bf16.msra.mxu0 %v6082
        %6380 = vmatprep.subr.bf16.mxu0 %v6081
        %6381 = vmatpush1.bf16.msra.mxu0 %v6080
        %6382 = vmatprep.subr.bf16.mxu0 %v6079
        %6383 = vmatpush1.bf16.msra.mxu0 %v6078
        %6384 = vmatprep.subr.bf16.mxu0 %v6077
        %6385 = vmatpush1.bf16.msra.mxu0 %v6076
        %6386 = vmatprep.subr.bf16.mxu0 %v6107
        %6387 = vmatpush2.bf16.msra.mxu0 %v6106
        %6388 = vmatprep.subr.bf16.mxu0 %v6105
        %6389 = vmatpush2.bf16.msra.mxu0 %v6104
        %6390 = vmatprep.subr.bf16.mxu0 %v6103
        %6391 = vmatpush2.bf16.msra.mxu0 %v6102
        %6392 = vmatprep.subr.bf16.mxu0 %v6101
        %6393 = vmatpush2.bf16.msra.mxu0 %v6100
        %6394 = vmatprep.subr.bf16.mxu0 %v6099
        %6395 = vmatpush2.bf16.msra.mxu0 %v6098
        %6396 = vmatprep.subr.bf16.mxu0 %v6097
        %6397 = vmatpush2.bf16.msra.mxu0 %v6096
        %6398 = vmatprep.subr.bf16.mxu0 %v6095
        %6399 = vmatpush2.bf16.msra.mxu0 %v6094
        %6400 = vmatprep.subr.bf16.mxu0 %v6093
        %6401 = vmatpush2.bf16.msra.mxu0 %v6092
        %6402 = vmatprep.mubr.bf16.mxu0 %v5595
        %6403 = vmatmul.mubr.bf16.gmra.mxu0 %v5594
        %v6404 = vpop.f32.mrf.mxu0
        %v6405 = vadd.f32 %v6364, %v6404
        %v6406 = vpop.f32.mrf.mxu0
        %v6407 = vadd.f32 %v6366, %v6406
        %v6408 = vpop.f32.mrf.mxu0
        %v6409 = vpop.f32.mrf.mxu0
        %6410 = vdwg.mxu0
        %vm6411 = vcmp.ge.f32.partialorder %v6405, 0.0
        %vm6412 = vcmp.ge.f32.partialorder %v6407, 0.0
        %v6415 = vcombine.low %v6405, %v6407
        %v6416 = vrot.slane %v6415, 7
        %v6418 = vmul.f32 %v5587, %v6416
        %v6420 = vlaneseq
        %v6421 = vshrl.u32 %v6420, 7
        %v6422 = vsub.s32 1, %v6421
        %v6423 = vrot.slane %v6418, %v6422
        %v6424 = vlaneseq
        %v6425 = vshrl.u32 %v6424, 7
        %v6426 = vsub.s32 5, %v6425
        %v6427 = vrot.slane %v6418, %v6426
        %v6430 = vsel %vm6411, %v6405, %v6423
        %v6431 = vsel %vm6412, %v6407, %v6427
        %v6432 = vlaneseq
        %v6433 = vshrl.u32 %v6432, 7
        %v6434 = vsub.s32 2, %v6433
        %v6435 = vrot.slane %v5587, %v6434
        %v6436 = vlaneseq
        %v6437 = vshrl.u32 %v6436, 7
        %v6438 = vsub.s32 6, %v6437
        %v6439 = vrot.slane %v5587, %v6438
        %v6442 = vadd.f32 %v6430, %v6435
        %v6443 = vadd.f32 %v6431, %v6439
        %v6444 = vld [vmem:[#allocation3 + $0x1600] sm:$0xf]
        %v6445 = vld [vmem:[#allocation3 + $0x1608] sm:$0xf]
        %v6446 = vld [vmem:[#allocation3 + $0x1610] sm:$0xf]
        %v6447 = vld [vmem:[#allocation3 + $0x1618] sm:$0xf]
        %v6448 = vld [vmem:[#allocation3 + $0x1620] sm:$0xf]
        %v6449 = vld [vmem:[#allocation3 + $0x1628] sm:$0xf]
        %v6450 = vld [vmem:[#allocation3 + $0x1630] sm:$0xf]
        %v6451 = vld [vmem:[#allocation3 + $0x1638] sm:$0xf]
        %v6452 = vld [vmem:[#allocation3 + $0x1640] sm:$0xf]
        %v6453 = vld [vmem:[#allocation3 + $0x1648] sm:$0xf]
        %v6454 = vld [vmem:[#allocation3 + $0x1650] sm:$0xf]
        %v6455 = vld [vmem:[#allocation3 + $0x1658] sm:$0xf]
        %v6456 = vld [vmem:[#allocation3 + $0x1660] sm:$0xf]
        %v6457 = vld [vmem:[#allocation3 + $0x1668] sm:$0xf]
        %v6458 = vld [vmem:[#allocation3 + $0x1670] sm:$0xf]
        %v6459 = vld [vmem:[#allocation3 + $0x1678] sm:$0xf]
        %v6460 = vld [vmem:[#allocation3 + $0x1680] sm:$0xf]
        %v6461 = vld [vmem:[#allocation3 + $0x1688] sm:$0xf]
        %v6462 = vld [vmem:[#allocation3 + $0x1690] sm:$0xf]
        %v6463 = vld [vmem:[#allocation3 + $0x1698] sm:$0xf]
        %v6464 = vld [vmem:[#allocation3 + $0x16a0] sm:$0xf]
        %v6465 = vld [vmem:[#allocation3 + $0x16a8] sm:$0xf]
        %v6466 = vld [vmem:[#allocation3 + $0x16b0] sm:$0xf]
        %v6467 = vld [vmem:[#allocation3 + $0x16b8] sm:$0xf]
        %v6468 = vld [vmem:[#allocation3 + $0x16c0] sm:$0xf]
        %v6469 = vld [vmem:[#allocation3 + $0x16c8] sm:$0xf]
        %v6470 = vld [vmem:[#allocation3 + $0x16d0] sm:$0xf]
        %v6471 = vld [vmem:[#allocation3 + $0x16d8] sm:$0xf]
        %v6472 = vld [vmem:[#allocation3 + $0x16e0] sm:$0xf]
        %v6473 = vld [vmem:[#allocation3 + $0x16e8] sm:$0xf]
        %v6474 = vld [vmem:[#allocation3 + $0x16f0] sm:$0xf]
        %v6475 = vld [vmem:[#allocation3 + $0x16f8] sm:$0xf]
        %s6476 = scalar_lea.vmem %s3, 112
        %v6477 = vld [vmem:[%s6476] sm:$0x77]
        %v6478 = vpack.c.bf16 %v3365, %v3365
        %v6479 = vpack.c.bf16 %v3366, %v3366
        %v6512 = vunpack.c.l.b16 %v6444
        %v6513 = vunpack.c.l.b16 %v6445
        %v6514 = vunpack.c.l.b16 %v6446
        %v6515 = vunpack.c.l.b16 %v6447
        %v6516 = vunpack.c.l.b16 %v6448
        %v6517 = vunpack.c.l.b16 %v6449
        %v6518 = vunpack.c.l.b16 %v6450
        %v6519 = vunpack.c.l.b16 %v6451
        %v6520 = vunpack.c.l.b16 %v6452
        %v6521 = vunpack.c.l.b16 %v6453
        %v6522 = vunpack.c.l.b16 %v6454
        %v6523 = vunpack.c.l.b16 %v6455
        %v6524 = vunpack.c.l.b16 %v6456
        %v6525 = vunpack.c.l.b16 %v6457
        %v6526 = vunpack.c.l.b16 %v6458
        %v6527 = vunpack.c.l.b16 %v6459
        %v6528 = vunpack.c.l.b16 %v6460
        %v6529 = vunpack.c.l.b16 %v6461
        %v6530 = vunpack.c.l.b16 %v6462
        %v6531 = vunpack.c.l.b16 %v6463
        %v6532 = vunpack.c.l.b16 %v6464
        %v6533 = vunpack.c.l.b16 %v6465
        %v6534 = vunpack.c.l.b16 %v6466
        %v6535 = vunpack.c.l.b16 %v6467
        %v6536 = vunpack.c.l.b16 %v6468
        %v6537 = vunpack.c.l.b16 %v6469
        %v6538 = vunpack.c.l.b16 %v6470
        %v6539 = vunpack.c.l.b16 %v6471
        %v6540 = vunpack.c.l.b16 %v6472
        %v6541 = vunpack.c.l.b16 %v6473
        %v6542 = vunpack.c.l.b16 %v6474
        %v6543 = vunpack.c.l.b16 %v6475
        %v6544 = vpack.c.b16 %v6513, %v6512
        %v6545 = vpack.c.b16 %v6515, %v6514
        %v6546 = vpack.c.b16 %v6517, %v6516
        %v6547 = vpack.c.b16 %v6519, %v6518
        %v6548 = vpack.c.b16 %v6521, %v6520
        %v6549 = vpack.c.b16 %v6523, %v6522
        %v6550 = vpack.c.b16 %v6525, %v6524
        %v6551 = vpack.c.b16 %v6527, %v6526
        %v6552 = vpack.c.b16 %v6529, %v6528
        %v6553 = vpack.c.b16 %v6531, %v6530
        %v6554 = vpack.c.b16 %v6533, %v6532
        %v6555 = vpack.c.b16 %v6535, %v6534
        %v6556 = vpack.c.b16 %v6537, %v6536
        %v6557 = vpack.c.b16 %v6539, %v6538
        %v6558 = vpack.c.b16 %v6541, %v6540
        %v6559 = vpack.c.b16 %v6543, %v6542
        %6576 = vmatprep.subr.bf16.mxu0 0
        %6577 = vmatpush1.bf16.msra.mxu0 %v6551
        %6578 = vmatprep.subr.bf16.mxu0 0
        %6579 = vmatpush1.bf16.msra.mxu0 %v6550
        %6580 = vmatprep.subr.bf16.mxu0 0
        %6581 = vmatpush1.bf16.msra.mxu0 %v6549
        %6582 = vmatprep.subr.bf16.mxu0 0
        %6583 = vmatpush1.bf16.msra.mxu0 %v6548
        %6584 = vmatprep.subr.bf16.mxu0 0
        %6585 = vmatpush1.bf16.msra.mxu0 %v6547
        %6586 = vmatprep.subr.bf16.mxu0 0
        %6587 = vmatpush1.bf16.msra.mxu0 %v6546
        %6588 = vmatprep.subr.bf16.mxu0 0
        %6589 = vmatpush1.bf16.msra.mxu0 %v6545
        %6590 = vmatprep.subr.bf16.mxu0 0
        %6591 = vmatpush1.bf16.msra.mxu0 %v6544
        %6592 = vmatprep.subr.bf16.mxu0 0
        %6593 = vmatpush2.bf16.msra.mxu0 %v6559
        %6594 = vmatprep.subr.bf16.mxu0 0
        %6595 = vmatpush2.bf16.msra.mxu0 %v6558
        %6596 = vmatprep.subr.bf16.mxu0 0
        %6597 = vmatpush2.bf16.msra.mxu0 %v6557
        %6598 = vmatprep.subr.bf16.mxu0 0
        %6599 = vmatpush2.bf16.msra.mxu0 %v6556
        %6600 = vmatprep.subr.bf16.mxu0 0
        %6601 = vmatpush2.bf16.msra.mxu0 %v6555
        %6602 = vmatprep.subr.bf16.mxu0 0
        %6603 = vmatpush2.bf16.msra.mxu0 %v6554
        %6604 = vmatprep.subr.bf16.mxu0 0
        %6605 = vmatpush2.bf16.msra.mxu0 %v6553
        %6606 = vmatprep.subr.bf16.mxu0 0
        %6607 = vmatpush2.bf16.msra.mxu0 %v6552
        %6608 = vmatprep.mubr.bf16.mxu0 %v6479
        %6609 = vmatmul.mubr.bf16.gmra.mxu0 %v6478
        %v6610 = vpop.f32.mrf.mxu0
        %v6611 = vadd.f32 %v6477, %v6610
        %v6612 = vpop.f32.mrf.mxu0
        %v6613 = vpop.f32.mrf.mxu0
        %v6614 = vpop.f32.mrf.mxu0
        %6615 = vdwg.mxu0
        %vm6616 = vcmp.ge.f32.partialorder %v6611, 0.0
        %v6618 = vrot.slane %v6611, 7
        %v6620 = vmul.f32 %v6477, %v6618
        %v6622 = vlaneseq
        %v6623 = vshrl.u32 %v6622, 7
        %v6624 = vsub.s32 1, %v6623
        %v6625 = vrot.slane %v6620, %v6624
        %v6627 = vsel %vm6616, %v6611, %v6625
        %v6629 = vlaneseq
        %v6630 = vshrl.u32 %v6629, 7
        %v6631 = vsub.s32 2, %v6630
        %v6632 = vrot.slane %v6477, %v6631
        %v6634 = vadd.f32 %v6627, %v6632
        %v6635 = vld [vmem:[#allocation3 + $0x1700] sm:$0xf]
        %v6636 = vld [vmem:[#allocation3 + $0x1708] sm:$0xf]
        %v6637 = vld [vmem:[#allocation3 + $0x1710] sm:$0xf]
        %v6638 = vld [vmem:[#allocation3 + $0x1718] sm:$0xf]
        %v6639 = vld [vmem:[#allocation3 + $0x1720] sm:$0xf]
        %v6640 = vld [vmem:[#allocation3 + $0x1728] sm:$0xf]
        %v6641 = vld [vmem:[#allocation3 + $0x1730] sm:$0xf]
        %v6642 = vld [vmem:[#allocation3 + $0x1738] sm:$0xf]
        %s6643 = scalar_lea.vmem %s3, 120
        %v6644 = vld [vmem:[%s6643] sm:$0x77]
        %v6645 = vpack.c.bf16 %v6634, %v6634
        %v6654 = vunpack.c.l.b16 %v6635
        %v6655 = vunpack.c.l.b16 %v6636
        %v6656 = vunpack.c.l.b16 %v6637
        %v6657 = vunpack.c.l.b16 %v6638
        %v6658 = vunpack.c.l.b16 %v6639
        %v6659 = vunpack.c.l.b16 %v6640
        %v6660 = vunpack.c.l.b16 %v6641
        %v6661 = vunpack.c.l.b16 %v6642
        %v6662 = vpack.c.b16 %v6655, %v6654
        %v6663 = vpack.c.b16 %v6657, %v6656
        %v6664 = vpack.c.b16 %v6659, %v6658
        %v6665 = vpack.c.b16 %v6661, %v6660
        %v6671 = vsel %vm958, %v6645, 0
        %6673 = vmatprep.subr.bf16.mxu0 0
        %6674 = vmatpush1.bf16.msra.mxu0 0
        %6675 = vmatprep.subr.bf16.mxu0 0
        %6676 = vmatpush1.bf16.msra.mxu0 0
        %6677 = vmatprep.subr.bf16.mxu0 0
        %6678 = vmatpush1.bf16.msra.mxu0 0
        %6679 = vmatprep.subr.bf16.mxu0 0
        %6680 = vmatpush1.bf16.msra.mxu0 0
        %6681 = vmatprep.subr.bf16.mxu0 0
        %6682 = vmatpush1.bf16.msra.mxu0 %v6665
        %6683 = vmatprep.subr.bf16.mxu0 0
        %6684 = vmatpush1.bf16.msra.mxu0 %v6664
        %6685 = vmatprep.subr.bf16.mxu0 0
        %6686 = vmatpush1.bf16.msra.mxu0 %v6663
        %6687 = vmatprep.subr.bf16.mxu0 0
        %6688 = vmatpush1.bf16.msra.mxu0 %v6662
        %6689 = vmatprep.subr.bf16.mxu0 0
        %6690 = vmatpush2.bf16.msra.mxu0 0
        %6691 = vmatprep.subr.bf16.mxu0 0
        %6692 = vmatpush2.bf16.msra.mxu0 0
        %6693 = vmatprep.subr.bf16.mxu0 0
        %6694 = vmatpush2.bf16.msra.mxu0 0
        %6695 = vmatprep.subr.bf16.mxu0 0
        %6696 = vmatpush2.bf16.msra.mxu0 0
        %6697 = vmatprep.subr.bf16.mxu0 0
        %6698 = vmatpush2.bf16.msra.mxu0 0
        %6699 = vmatprep.subr.bf16.mxu0 0
        %6700 = vmatpush2.bf16.msra.mxu0 0
        %6701 = vmatprep.subr.bf16.mxu0 0
        %6702 = vmatpush2.bf16.msra.mxu0 0
        %6703 = vmatprep.subr.bf16.mxu0 0
        %6704 = vmatpush2.bf16.msra.mxu0 0
        %6705 = vmatprep.mubr.bf16.mxu0 0
        %6706 = vmatmul.mubr.bf16.gmra.mxu0 %v6671
        %v6707 = vpop.f32.mrf.mxu0
        %v6708 = vadd.f32 %v6644, %v6707
        %v6709 = vpop.f32.mrf.mxu0
        %v6710 = vpop.f32.mrf.mxu0
        %v6711 = vpop.f32.mrf.mxu0
        %6712 = vdwg.mxu0
        %vm6713 = vcmp.ge.f32.partialorder %v6708, 0.0
        %v6715 = vrot.slane %v6708, 7
        %v6717 = vmul.f32 %v6644, %v6715
        %v6719 = vlaneseq
        %v6720 = vshrl.u32 %v6719, 7
        %v6721 = vsub.s32 1, %v6720
        %v6722 = vrot.slane %v6717, %v6721
        %v6724 = vsel %vm6713, %v6708, %v6722
        %v6726 = vlaneseq
        %v6727 = vshrl.u32 %v6726, 7
        %v6728 = vsub.s32 2, %v6727
        %v6729 = vrot.slane %v6644, %v6728
        %v6731 = vadd.f32 %v6724, %v6729
        %v6732 = vld [vmem:[#allocation3 + $0x1740] sm:$0xf]
        %v6733 = vld [vmem:[#allocation3 + $0x1748] sm:$0xf]
        %v6734 = vld [vmem:[#allocation3 + $0x1750] sm:$0xf]
        %v6735 = vld [vmem:[#allocation3 + $0x1758] sm:$0xf]
        %v6736 = vld [vmem:[#allocation3 + $0x1760] sm:$0xf]
        %v6737 = vld [vmem:[#allocation3 + $0x1768] sm:$0xf]
        %v6738 = vld [vmem:[#allocation3 + $0x1770] sm:$0xf]
        %v6739 = vld [vmem:[#allocation3 + $0x1778] sm:$0xf]
        %v6740 = vld [vmem:[#allocation3 + $0x1780] sm:$0xf]
        %v6741 = vld [vmem:[#allocation3 + $0x1788] sm:$0xf]
        %v6742 = vld [vmem:[#allocation3 + $0x1790] sm:$0xf]
        %v6743 = vld [vmem:[#allocation3 + $0x1798] sm:$0xf]
        %v6744 = vld [vmem:[#allocation3 + $0x17a0] sm:$0xf]
        %v6745 = vld [vmem:[#allocation3 + $0x17a8] sm:$0xf]
        %v6746 = vld [vmem:[#allocation3 + $0x17b0] sm:$0xf]
        %v6747 = vld [vmem:[#allocation3 + $0x17b8] sm:$0xf]
        %v6748 = vld [vmem:[#allocation3 + $0x17c0] sm:$0xf]
        %v6749 = vld [vmem:[#allocation3 + $0x17c8] sm:$0xf]
        %v6750 = vld [vmem:[#allocation3 + $0x17d0] sm:$0xf]
        %v6751 = vld [vmem:[#allocation3 + $0x17d8] sm:$0xf]
        %v6752 = vld [vmem:[#allocation3 + $0x17e0] sm:$0xf]
        %v6753 = vld [vmem:[#allocation3 + $0x17e8] sm:$0xf]
        %v6754 = vld [vmem:[#allocation3 + $0x17f0] sm:$0xf]
        %v6755 = vld [vmem:[#allocation3 + $0x17f8] sm:$0xf]
        %v6756 = vld [vmem:[#allocation3 + $0x1800] sm:$0xf]
        %v6757 = vld [vmem:[#allocation3 + $0x1808] sm:$0xf]
        %v6758 = vld [vmem:[#allocation3 + $0x1810] sm:$0xf]
        %v6759 = vld [vmem:[#allocation3 + $0x1818] sm:$0xf]
        %v6760 = vld [vmem:[#allocation3 + $0x1820] sm:$0xf]
        %v6761 = vld [vmem:[#allocation3 + $0x1828] sm:$0xf]
        %v6762 = vld [vmem:[#allocation3 + $0x1830] sm:$0xf]
        %v6763 = vld [vmem:[#allocation3 + $0x1838] sm:$0xf]
        %s6764 = scalar_lea.vmem %s3, 128
        %v6765 = vld [vmem:[%s6764] sm:$0x77]
        %v6766 = vpack.c.bf16 %v6442, %v6442
        %v6767 = vpack.c.bf16 %v6443, %v6443
        %v6800 = vunpack.c.l.b16 %v6732
        %v6801 = vunpack.c.l.b16 %v6733
        %v6802 = vunpack.c.l.b16 %v6734
        %v6803 = vunpack.c.l.b16 %v6735
        %v6804 = vunpack.c.l.b16 %v6736
        %v6805 = vunpack.c.l.b16 %v6737
        %v6806 = vunpack.c.l.b16 %v6738
        %v6807 = vunpack.c.l.b16 %v6739
        %v6808 = vunpack.c.l.b16 %v6740
        %v6809 = vunpack.c.l.b16 %v6741
        %v6810 = vunpack.c.l.b16 %v6742
        %v6811 = vunpack.c.l.b16 %v6743
        %v6812 = vunpack.c.l.b16 %v6744
        %v6813 = vunpack.c.l.b16 %v6745
        %v6814 = vunpack.c.l.b16 %v6746
        %v6815 = vunpack.c.l.b16 %v6747
        %v6816 = vunpack.c.l.b16 %v6748
        %v6817 = vunpack.c.l.b16 %v6749
        %v6818 = vunpack.c.l.b16 %v6750
        %v6819 = vunpack.c.l.b16 %v6751
        %v6820 = vunpack.c.l.b16 %v6752
        %v6821 = vunpack.c.l.b16 %v6753
        %v6822 = vunpack.c.l.b16 %v6754
        %v6823 = vunpack.c.l.b16 %v6755
        %v6824 = vunpack.c.l.b16 %v6756
        %v6825 = vunpack.c.l.b16 %v6757
        %v6826 = vunpack.c.l.b16 %v6758
        %v6827 = vunpack.c.l.b16 %v6759
        %v6828 = vunpack.c.l.b16 %v6760
        %v6829 = vunpack.c.l.b16 %v6761
        %v6830 = vunpack.c.l.b16 %v6762
        %v6831 = vunpack.c.l.b16 %v6763
        %v6832 = vpack.c.b16 %v6801, %v6800
        %v6833 = vpack.c.b16 %v6803, %v6802
        %v6834 = vpack.c.b16 %v6805, %v6804
        %v6835 = vpack.c.b16 %v6807, %v6806
        %v6836 = vpack.c.b16 %v6809, %v6808
        %v6837 = vpack.c.b16 %v6811, %v6810
        %v6838 = vpack.c.b16 %v6813, %v6812
        %v6839 = vpack.c.b16 %v6815, %v6814
        %v6840 = vpack.c.b16 %v6817, %v6816
        %v6841 = vpack.c.b16 %v6819, %v6818
        %v6842 = vpack.c.b16 %v6821, %v6820
        %v6843 = vpack.c.b16 %v6823, %v6822
        %v6844 = vpack.c.b16 %v6825, %v6824
        %v6845 = vpack.c.b16 %v6827, %v6826
        %v6846 = vpack.c.b16 %v6829, %v6828
        %v6847 = vpack.c.b16 %v6831, %v6830
        %6864 = vmatprep.subr.bf16.mxu0 0
        %6865 = vmatpush1.bf16.msra.mxu0 %v6839
        %6866 = vmatprep.subr.bf16.mxu0 0
        %6867 = vmatpush1.bf16.msra.mxu0 %v6838
        %6868 = vmatprep.subr.bf16.mxu0 0
        %6869 = vmatpush1.bf16.msra.mxu0 %v6837
        %6870 = vmatprep.subr.bf16.mxu0 0
        %6871 = vmatpush1.bf16.msra.mxu0 %v6836
        %6872 = vmatprep.subr.bf16.mxu0 0
        %6873 = vmatpush1.bf16.msra.mxu0 %v6835
        %6874 = vmatprep.subr.bf16.mxu0 0
        %6875 = vmatpush1.bf16.msra.mxu0 %v6834
        %6876 = vmatprep.subr.bf16.mxu0 0
        %6877 = vmatpush1.bf16.msra.mxu0 %v6833
        %6878 = vmatprep.subr.bf16.mxu0 0
        %6879 = vmatpush1.bf16.msra.mxu0 %v6832
        %6880 = vmatprep.subr.bf16.mxu0 0
        %6881 = vmatpush2.bf16.msra.mxu0 %v6847
        %6882 = vmatprep.subr.bf16.mxu0 0
        %6883 = vmatpush2.bf16.msra.mxu0 %v6846
        %6884 = vmatprep.subr.bf16.mxu0 0
        %6885 = vmatpush2.bf16.msra.mxu0 %v6845
        %6886 = vmatprep.subr.bf16.mxu0 0
        %6887 = vmatpush2.bf16.msra.mxu0 %v6844
        %6888 = vmatprep.subr.bf16.mxu0 0
        %6889 = vmatpush2.bf16.msra.mxu0 %v6843
        %6890 = vmatprep.subr.bf16.mxu0 0
        %6891 = vmatpush2.bf16.msra.mxu0 %v6842
        %6892 = vmatprep.subr.bf16.mxu0 0
        %6893 = vmatpush2.bf16.msra.mxu0 %v6841
        %6894 = vmatprep.subr.bf16.mxu0 0
        %6895 = vmatpush2.bf16.msra.mxu0 %v6840
        %6896 = vmatprep.mubr.bf16.mxu0 %v6767
        %6897 = vmatmul.mubr.bf16.gmra.mxu0 %v6766
        %v6898 = vpop.f32.mrf.mxu0
        %v6899 = vadd.f32 %v6765, %v6898
        %v6900 = vpop.f32.mrf.mxu0
        %v6901 = vpop.f32.mrf.mxu0
        %v6902 = vpop.f32.mrf.mxu0
        %6903 = vdwg.mxu0
        %vm6904 = vcmp.ge.f32.partialorder %v6899, 0.0
        %v6906 = vrot.slane %v6899, 7
        %v6908 = vmul.f32 %v6765, %v6906
        %v6910 = vlaneseq
        %v6911 = vshrl.u32 %v6910, 7
        %v6912 = vsub.s32 1, %v6911
        %v6913 = vrot.slane %v6908, %v6912
        %v6915 = vsel %vm6904, %v6899, %v6913
        %v6917 = vlaneseq
        %v6918 = vshrl.u32 %v6917, 7
        %v6919 = vsub.s32 2, %v6918
        %v6920 = vrot.slane %v6765, %v6919
        %v6922 = vadd.f32 %v6915, %v6920
        %v6923 = vld [vmem:[#allocation3 + $0x1840] sm:$0xf]
        %v6924 = vld [vmem:[#allocation3 + $0x1848] sm:$0xf]
        %v6925 = vld [vmem:[#allocation3 + $0x1850] sm:$0xf]
        %v6926 = vld [vmem:[#allocation3 + $0x1858] sm:$0xf]
        %v6927 = vld [vmem:[#allocation3 + $0x1860] sm:$0xf]
        %v6928 = vld [vmem:[#allocation3 + $0x1868] sm:$0xf]
        %v6929 = vld [vmem:[#allocation3 + $0x1870] sm:$0xf]
        %v6930 = vld [vmem:[#allocation3 + $0x1878] sm:$0xf]
        %s6931 = scalar_lea.vmem %s3, 136
        %v6932 = vld [vmem:[%s6931] sm:$0x77]
        %v6933 = vpack.c.bf16 %v6922, %v6922
        %v6942 = vunpack.c.l.b16 %v6923
        %v6943 = vunpack.c.l.b16 %v6924
        %v6944 = vunpack.c.l.b16 %v6925
        %v6945 = vunpack.c.l.b16 %v6926
        %v6946 = vunpack.c.l.b16 %v6927
        %v6947 = vunpack.c.l.b16 %v6928
        %v6948 = vunpack.c.l.b16 %v6929
        %v6949 = vunpack.c.l.b16 %v6930
        %v6950 = vpack.c.b16 %v6943, %v6942
        %v6951 = vpack.c.b16 %v6945, %v6944
        %v6952 = vpack.c.b16 %v6947, %v6946
        %v6953 = vpack.c.b16 %v6949, %v6948
        %v6959 = vsel %vm958, %v6933, 0
        %6961 = vmatprep.subr.bf16.mxu0 0
        %6962 = vmatpush1.bf16.msra.mxu0 0
        %6963 = vmatprep.subr.bf16.mxu0 0
        %6964 = vmatpush1.bf16.msra.mxu0 0
        %6965 = vmatprep.subr.bf16.mxu0 0
        %6966 = vmatpush1.bf16.msra.mxu0 0
        %6967 = vmatprep.subr.bf16.mxu0 0
        %6968 = vmatpush1.bf16.msra.mxu0 0
        %6969 = vmatprep.subr.bf16.mxu0 0
        %6970 = vmatpush1.bf16.msra.mxu0 %v6953
        %6971 = vmatprep.subr.bf16.mxu0 0
        %6972 = vmatpush1.bf16.msra.mxu0 %v6952
        %6973 = vmatprep.subr.bf16.mxu0 0
        %6974 = vmatpush1.bf16.msra.mxu0 %v6951
        %6975 = vmatprep.subr.bf16.mxu0 0
        %6976 = vmatpush1.bf16.msra.mxu0 %v6950
        %6977 = vmatprep.subr.bf16.mxu0 0
        %6978 = vmatpush2.bf16.msra.mxu0 0
        %6979 = vmatprep.subr.bf16.mxu0 0
        %6980 = vmatpush2.bf16.msra.mxu0 0
        %6981 = vmatprep.subr.bf16.mxu0 0
        %6982 = vmatpush2.bf16.msra.mxu0 0
        %6983 = vmatprep.subr.bf16.mxu0 0
        %6984 = vmatpush2.bf16.msra.mxu0 0
        %6985 = vmatprep.subr.bf16.mxu0 0
        %6986 = vmatpush2.bf16.msra.mxu0 0
        %6987 = vmatprep.subr.bf16.mxu0 0
        %6988 = vmatpush2.bf16.msra.mxu0 0
        %6989 = vmatprep.subr.bf16.mxu0 0
        %6990 = vmatpush2.bf16.msra.mxu0 0
        %6991 = vmatprep.subr.bf16.mxu0 0
        %6992 = vmatpush2.bf16.msra.mxu0 0
        %6993 = vmatprep.mubr.bf16.mxu0 0
        %6994 = vmatmul.mubr.bf16.gmra.mxu0 %v6959
        %v6995 = vpop.f32.mrf.mxu0
        %v6996 = vadd.f32 %v6932, %v6995
        %v6997 = vpop.f32.mrf.mxu0
        %v6998 = vpop.f32.mrf.mxu0
        %v6999 = vpop.f32.mrf.mxu0
        %7000 = vdwg.mxu0
        %vm7001 = vcmp.ge.f32.partialorder %v6996, 0.0
        %v7003 = vrot.slane %v6996, 7
        %v7005 = vmul.f32 %v6932, %v7003
        %v7007 = vlaneseq
        %v7008 = vshrl.u32 %v7007, 7
        %v7009 = vsub.s32 1, %v7008
        %v7010 = vrot.slane %v7005, %v7009
        %v7012 = vsel %vm7001, %v6996, %v7010
        %v7014 = vlaneseq
        %v7015 = vshrl.u32 %v7014, 7
        %v7016 = vsub.s32 2, %v7015
        %v7017 = vrot.slane %v6932, %v7016
        %v7019 = vadd.f32 %v7012, %v7017
        %7021 = vrot.lane.b32.xlu0 %v7019, 64
        %v7022 = vpop.permute.xlu0 %7021
        %v7024 = vsel %vm958, %v6731, %v7022
        %v7025 = vld [vmem:[#allocation3 + $0x1880] sm:$0xf]
        %v7026 = vld [vmem:[#allocation3 + $0x1888] sm:$0xf]
        %v7027 = vld [vmem:[#allocation3 + $0x1890] sm:$0xf]
        %v7028 = vld [vmem:[#allocation3 + $0x1898] sm:$0xf]
        %v7029 = vld [vmem:[#allocation3 + $0x18a0] sm:$0xf]
        %v7030 = vld [vmem:[#allocation3 + $0x18a8] sm:$0xf]
        %v7031 = vld [vmem:[#allocation3 + $0x18b0] sm:$0xf]
        %v7032 = vld [vmem:[#allocation3 + $0x18b8] sm:$0xf]
        %v7033 = vld [vmem:[#allocation3 + $0x18c0] sm:$0xf]
        %v7034 = vld [vmem:[#allocation3 + $0x18c8] sm:$0xf]
        %v7035 = vld [vmem:[#allocation3 + $0x18d0] sm:$0xf]
        %v7036 = vld [vmem:[#allocation3 + $0x18d8] sm:$0xf]
        %v7037 = vld [vmem:[#allocation3 + $0x18e0] sm:$0xf]
        %v7038 = vld [vmem:[#allocation3 + $0x18e8] sm:$0xf]
        %v7039 = vld [vmem:[#allocation3 + $0x18f0] sm:$0xf]
        %v7040 = vld [vmem:[#allocation3 + $0x18f8] sm:$0xf]
        %s7041 = scalar_lea.vmem %s3, 144
        %v7042 = vld [vmem:[%s7041] sm:$0x77]
        %v7043 = vpack.c.bf16 %v7024, %v7024
        %v7060 = vunpack.c.l.b16 %v7025
        %v7061 = vunpack.c.l.b16 %v7026
        %v7062 = vunpack.c.l.b16 %v7027
        %v7063 = vunpack.c.l.b16 %v7028
        %v7064 = vunpack.c.l.b16 %v7029
        %v7065 = vunpack.c.l.b16 %v7030
        %v7066 = vunpack.c.l.b16 %v7031
        %v7067 = vunpack.c.l.b16 %v7032
        %v7068 = vunpack.c.l.b16 %v7033
        %v7069 = vunpack.c.l.b16 %v7034
        %v7070 = vunpack.c.l.b16 %v7035
        %v7071 = vunpack.c.l.b16 %v7036
        %v7072 = vunpack.c.l.b16 %v7037
        %v7073 = vunpack.c.l.b16 %v7038
        %v7074 = vunpack.c.l.b16 %v7039
        %v7075 = vunpack.c.l.b16 %v7040
        %v7076 = vpack.c.b16 %v7061, %v7060
        %v7077 = vpack.c.b16 %v7063, %v7062
        %v7078 = vpack.c.b16 %v7065, %v7064
        %v7079 = vpack.c.b16 %v7067, %v7066
        %v7080 = vpack.c.b16 %v7069, %v7068
        %v7081 = vpack.c.b16 %v7071, %v7070
        %v7082 = vpack.c.b16 %v7073, %v7072
        %v7083 = vpack.c.b16 %v7075, %v7074
        %7092 = vmatprep.subr.bf16.mxu0 0
        %7093 = vmatpush1.bf16.msra.mxu0 %v7083
        %7094 = vmatprep.subr.bf16.mxu0 0
        %7095 = vmatpush1.bf16.msra.mxu0 %v7082
        %7096 = vmatprep.subr.bf16.mxu0 0
        %7097 = vmatpush1.bf16.msra.mxu0 %v7081
        %7098 = vmatprep.subr.bf16.mxu0 0
        %7099 = vmatpush1.bf16.msra.mxu0 %v7080
        %7100 = vmatprep.subr.bf16.mxu0 0
        %7101 = vmatpush1.bf16.msra.mxu0 %v7079
        %7102 = vmatprep.subr.bf16.mxu0 0
        %7103 = vmatpush1.bf16.msra.mxu0 %v7078
        %7104 = vmatprep.subr.bf16.mxu0 0
        %7105 = vmatpush1.bf16.msra.mxu0 %v7077
        %7106 = vmatprep.subr.bf16.mxu0 0
        %7107 = vmatpush1.bf16.msra.mxu0 %v7076
        %7108 = vmatprep.subr.bf16.mxu0 0
        %7109 = vmatpush2.bf16.msra.mxu0 0
        %7110 = vmatprep.subr.bf16.mxu0 0
        %7111 = vmatpush2.bf16.msra.mxu0 0
        %7112 = vmatprep.subr.bf16.mxu0 0
        %7113 = vmatpush2.bf16.msra.mxu0 0
        %7114 = vmatprep.subr.bf16.mxu0 0
        %7115 = vmatpush2.bf16.msra.mxu0 0
        %7116 = vmatprep.subr.bf16.mxu0 0
        %7117 = vmatpush2.bf16.msra.mxu0 0
        %7118 = vmatprep.subr.bf16.mxu0 0
        %7119 = vmatpush2.bf16.msra.mxu0 0
        %7120 = vmatprep.subr.bf16.mxu0 0
        %7121 = vmatpush2.bf16.msra.mxu0 0
        %7122 = vmatprep.subr.bf16.mxu0 0
        %7123 = vmatpush2.bf16.msra.mxu0 0
        %7124 = vmatprep.mubr.bf16.mxu0 0
        %7125 = vmatmul.mubr.bf16.gmra.mxu0 %v7043
        %v7126 = vpop.f32.mrf.mxu0
        %v7127 = vadd.f32 %v7042, %v7126
        %v7128 = vpop.f32.mrf.mxu0
        %v7129 = vpop.f32.mrf.mxu0
        %v7130 = vpop.f32.mrf.mxu0
        %7131 = vdwg.mxu0
        %vm7132 = vcmp.ge.f32.partialorder %v7127, 0.0
        %v7134 = vrot.slane %v7127, 7
        %v7136 = vmul.f32 %v7042, %v7134
        %v7138 = vlaneseq
        %v7139 = vshrl.u32 %v7138, 7
        %v7140 = vsub.s32 1, %v7139
        %v7141 = vrot.slane %v7136, %v7140
        %v7143 = vsel %vm7132, %v7127, %v7141
        %v7145 = vlaneseq
        %v7146 = vshrl.u32 %v7145, 7
        %v7147 = vsub.s32 2, %v7146
        %v7148 = vrot.slane %v7042, %v7147
        %v7150 = vadd.f32 %v7143, %v7148
        %v7151 = vld [vmem:[#allocation3 + $0x1900] sm:$0xf]
        %v7152 = vld [vmem:[#allocation3 + $0x1908] sm:$0xf]
        %v7153 = vld [vmem:[#allocation3 + $0x1910] sm:$0xf]
        %v7154 = vld [vmem:[#allocation3 + $0x1918] sm:$0xf]
        %v7155 = vld [vmem:[#allocation3 + $0x1920] sm:$0xf]
        %v7156 = vld [vmem:[#allocation3 + $0x1928] sm:$0xf]
        %v7157 = vld [vmem:[#allocation3 + $0x1930] sm:$0xf]
        %v7158 = vld [vmem:[#allocation3 + $0x1938] sm:$0xf]
        %s7159 = scalar_lea.vmem %s3, 152
        %v7160 = vld [vmem:[%s7159] sm:$0x77]
        %v7161 = vpack.c.bf16 %v7150, %v7150
        %v7170 = vunpack.c.l.b16 %v7151
        %v7171 = vunpack.c.l.b16 %v7152
        %v7172 = vunpack.c.l.b16 %v7153
        %v7173 = vunpack.c.l.b16 %v7154
        %v7174 = vunpack.c.l.b16 %v7155
        %v7175 = vunpack.c.l.b16 %v7156
        %v7176 = vunpack.c.l.b16 %v7157
        %v7177 = vunpack.c.l.b16 %v7158
        %v7178 = vpack.c.b16 %v7171, %v7170
        %v7179 = vpack.c.b16 %v7173, %v7172
        %v7180 = vpack.c.b16 %v7175, %v7174
        %v7181 = vpack.c.b16 %v7177, %v7176
        %v7187 = vsel %vm958, %v7161, 0
        %7189 = vmatprep.subr.bf16.mxu0 0
        %7190 = vmatpush1.bf16.msra.mxu0 0
        %7191 = vmatprep.subr.bf16.mxu0 0
        %7192 = vmatpush1.bf16.msra.mxu0 0
        %7193 = vmatprep.subr.bf16.mxu0 0
        %7194 = vmatpush1.bf16.msra.mxu0 0
        %7195 = vmatprep.subr.bf16.mxu0 0
        %7196 = vmatpush1.bf16.msra.mxu0 0
        %7197 = vmatprep.subr.bf16.mxu0 0
        %7198 = vmatpush1.bf16.msra.mxu0 %v7181
        %7199 = vmatprep.subr.bf16.mxu0 0
        %7200 = vmatpush1.bf16.msra.mxu0 %v7180
        %7201 = vmatprep.subr.bf16.mxu0 0
        %7202 = vmatpush1.bf16.msra.mxu0 %v7179
        %7203 = vmatprep.subr.bf16.mxu0 0
        %7204 = vmatpush1.bf16.msra.mxu0 %v7178
        %7205 = vmatprep.subr.bf16.mxu0 0
        %7206 = vmatpush2.bf16.msra.mxu0 0
        %7207 = vmatprep.subr.bf16.mxu0 0
        %7208 = vmatpush2.bf16.msra.mxu0 0
        %7209 = vmatprep.subr.bf16.mxu0 0
        %7210 = vmatpush2.bf16.msra.mxu0 0
        %7211 = vmatprep.subr.bf16.mxu0 0
        %7212 = vmatpush2.bf16.msra.mxu0 0
        %7213 = vmatprep.subr.bf16.mxu0 0
        %7214 = vmatpush2.bf16.msra.mxu0 0
        %7215 = vmatprep.subr.bf16.mxu0 0
        %7216 = vmatpush2.bf16.msra.mxu0 0
        %7217 = vmatprep.subr.bf16.mxu0 0
        %7218 = vmatpush2.bf16.msra.mxu0 0
        %7219 = vmatprep.subr.bf16.mxu0 0
        %7220 = vmatpush2.bf16.msra.mxu0 0
        %7221 = vmatprep.mubr.bf16.mxu0 0
        %7222 = vmatmul.mubr.bf16.gmra.mxu0 %v7187
        %v7223 = vpop.f32.mrf.mxu0
        %v7224 = vadd.f32 %v7160, %v7223
        %v7225 = vpop.f32.mrf.mxu0
        %v7226 = vpop.f32.mrf.mxu0
        %v7227 = vpop.f32.mrf.mxu0
        %7228 = vdwg.mxu0
        %vm7229 = vcmp.ge.f32.partialorder %v7224, 0.0
        %v7231 = vrot.slane %v7224, 7
        %v7233 = vmul.f32 %v7160, %v7231
        %v7235 = vlaneseq
        %v7236 = vshrl.u32 %v7235, 7
        %v7237 = vsub.s32 1, %v7236
        %v7238 = vrot.slane %v7233, %v7237
        %v7240 = vsel %vm7229, %v7224, %v7238
        %v7242 = vlaneseq
        %v7243 = vshrl.u32 %v7242, 7
        %v7244 = vsub.s32 2, %v7243
        %v7245 = vrot.slane %v7160, %v7244
        %v7247 = vadd.f32 %v7240, %v7245
        %vm7248 = vcmask 32768
        %7249 = vst.msk [vmem:[%s219] sm:$0x1] %vm7248, %v7247
        %s7250 = sand.u32 %s121, 1
        %s7251 = scalar_lea.sflag [#allocation5], %s7250
        %s7252 = sand.u32 %s121, 1
        %s7253 = scalar_lea.vmem [#allocation6], %s7252
        // Predicated region
        $region41: #{classifier_forward.1} parent=35 // pred_check
          %p7254 = pneg %p131
        $region42: #{classifier_forward.1} parent=35 // pred_check_branch
          %7256 = sbr.rel (%p7254) target = $region44
        $region43: #{classifier_forward.1} parent=35 // pred_region
          %s7258 = ssub.s32 16, 16
          %7259 = vsyncadd %s7251, %s7258
          %s7260 = smul.addr %s19, 16
          %s7261 = scalar_lea.hbm %s4, %s7260
          %s7263 = sshll.u32 %s7253, 4
          %s7264 = int_to_ptr.vmem [resolvable:$true] %s7263
          %7266 = dma.vmem_to_hbm [thread:$0]  %s7264, 16, %s7261, %s7251
        $region44: #{classifier_forward.1} parent=35 // pred_fallthru
          _
      $region36: #{classifier_forward.1} parent=5 // pred_fallthru
        _
      %p7267 = scmp.le.s32.totalorder 2, %s14
      // Predicated region
      $region45: #{classifier_forward.1} parent=5 // pred_check
        %p7268 = pneg %p7267
      $region46: #{classifier_forward.1} parent=5 // pred_check_branch
        %7270 = sbr.rel (%p7268) target = $region48
      $region47: #{classifier_forward.1} parent=5 // pred_region
        %s7271 = ssub.s32 %s14, 2
        // Predicated region
        $region49: #{classifier_forward.1} parent=47 // pred_check
          %p7272 = pneg %p137
        $region50: #{classifier_forward.1} parent=47 // pred_check_branch
          %7274 = sbr.rel (%p7272) target = $region52
        $region51: #{classifier_forward.1} parent=47 // pred_region
          %s7275 = sand.u32 %s122, 1
          %s7276 = scalar_lea.sflag [#allocation5], %s7275
          %s7277 = sand.u32 %s122, 1
          %s7278 = scalar_lea.vmem [#allocation6], %s7277
          %7279 = dma.done %s7276, 16
        $region52: #{classifier_forward.1} parent=47 // pred_fallthru
          _
      $region48: #{classifier_forward.1} parent=5 // pred_fallthru
        _
    $region6: #{classifier_forward.1} parent=1 // loop_footer
      %s18 = sadd.s32 1, %s14
    $region7: #{classifier_forward.1} parent=1 // loop_footer_branch
      %13 = sbr.rel target = $region3
    $region8: #{classifier_forward.1} parent=1 // loop_exit
      _
    %7280 = vsyncpa [#allocation4], 1
    %s7281 = scalar_lea.sflag [#allocation4], 1
    %7282 = vsyncpa %s7281, 1
    %7283 = vsyncpa [#allocation5], 1
    %s7284 = scalar_lea.sflag [#allocation5], 1
    %7285 = vsyncpa %s7284, 1

</llo_original>
